<compile_context>
chip_gen: v6e
topology: v6e:2x2x1
jax: 0.10.0
libtpu: 0.0.40
codegen_flags: <defaults>
</compile_context>

<pallas_src>
import functools

import jax
import jax.numpy as jnp
from jax.experimental import pallas as pl
from jax.experimental.pallas import tpu as pltpu


# ------------------------------- fused kernel ------------------------------ #

def _lenet_kernel(B,
                  pm1_ref, w1_ref, b1_ref, w2_ref, b2_ref,
                  fc1w_ref, fc1b_ref, fc2w_ref, fc2b_ref, fc3w_ref, fc3b_ref,
                  out_ref, p1_ref, c2_ref):
    f32 = jnp.float32
    bf16 = jnp.bfloat16

    # ---- Stage 1: conv1 + ReLU + maxpool(2) --------------------------------
    # pm1_ref[ph] is the conv1 patch matrix for pooling phase ph=(pi,pj):
    #   row = (m*12 + n)*B + b, col = di*5 + dj, value = x[b, 2m+pi+di, 2n+pj+dj]
    # pool1 == elementwise max over the 4 phase conv outputs (bias/ReLU commute
    # with max, so they are applied once after the max).
    w1 = w1_ref[...]                                            # [25, 6] bf16
    acc1 = None
    for ph in range(4):
        t = jnp.dot(pm1_ref[ph], w1, preferred_element_type=f32)  # [144B, 6]
        acc1 = t if acc1 is None else jnp.maximum(acc1, t)
    p1 = jnp.maximum(acc1 + b1_ref[...], 0.0)                   # [144B, 6] f32
    # rows (m*12 + n)*B + b  ->  (m, n*B + b, c)
    p1_ref[...] = p1.reshape(12, 12 * B, 6)

    # ---- Stage 2: conv2 + ReLU (in-kernel im2col via shifted VMEM windows) --
    acc2 = jnp.zeros((64 * B, 16), f32)                         # rows s*8B + t*B + b
    for di in range(5):
        for dj in range(5):
            win = p1_ref[di:di + 8, dj * B:(dj + 8) * B, :]     # [8, 8B, 6]
            lhs = win.reshape(64 * B, 6).astype(bf16)
            acc2 = acc2 + jnp.dot(lhs, w2_ref[di * 5 + dj],
                                  preferred_element_type=f32)   # [64B, 16]
    c2 = jnp.maximum(acc2 + b2_ref[...], 0.0)                   # [64B, 16] f32

    # ---- pool2 (part 1): max over the row-phase qi of the 8x8 conv2 grid ----
    r4 = c2.reshape(4, 2, 8 * B, 16)                            # (e, qi, t*B+b, d)
    c2_ref[...] = jnp.maximum(r4[:, 0], r4[:, 1])               # [4, 8B, 16]

    # ---- Stage 3: pool2 (part 2) + flatten + fc1 + ReLU ---------------------
    # fc1 accumulated as 16 per-spatial-position [B,16]@[16,120] matmuls; the
    # per-position weight slabs already encode PyTorch's (C,H,W) flatten order.
    accf = jnp.zeros((B, 120), f32)
    for e in range(4):
        for f in range(4):
            blk = c2_ref[e, 2 * f * B:2 * (f + 1) * B, :]       # [2B, 16]
            pos = jnp.maximum(blk[0:B, :], blk[B:2 * B, :])     # [B, 16] pooled
            accf = accf + jnp.dot(pos.astype(bf16), fc1w_ref[e * 4 + f],
                                  preferred_element_type=f32)   # [B, 120]
    h1 = jnp.maximum(accf + fc1b_ref[...], 0.0)

    # ---- fc2 + ReLU, fc3 + ReLU --------------------------------------------
    h2 = jnp.dot(h1.astype(bf16), fc2w_ref[...], preferred_element_type=f32)
    h2 = jnp.maximum(h2 + fc2b_ref[...], 0.0)
    h3 = jnp.dot(h2.astype(bf16), fc3w_ref[...], preferred_element_type=f32)
    out_ref[...] = jnp.maximum(h3 + fc3b_ref[...], 0.0)


# ------------------------------ host-side glue ------------------------------ #

def _full_spec(shape):
    zeros = (0,) * len(shape)
    return pl.BlockSpec(shape, lambda i: zeros)


def _build_conv1_patches(x, B):
    """x: [B, 28, 28] f32 -> [4, 144*B, 25] bf16 phase patch matrices.

    Phase ph = pi*2 + pj is the (pi, pj) offset inside each 2x2 pooling window;
    rows are ordered (m, n, b) so the in-kernel max over phases implements the
    2x2 max-pool; columns are the 25 conv taps (di*5 + dj).
    """
    phases = []
    for pi in range(2):
        for pj in range(2):
            taps = []
            for di in range(5):
                for dj in range(5):
                    r0, c0 = pi + di, pj + dj
                    taps.append(x[:, r0:r0 + 23:2, c0:c0 + 23:2])   # [B,12,12]
            t = jnp.stack(taps, axis=-1)                            # [B,12,12,25]
            t = jnp.transpose(t, (1, 2, 0, 3))                      # [12,12,B,25]
            phases.append(t.reshape(144 * B, 25))
    return jnp.stack(phases, axis=0).astype(jnp.bfloat16)


def prepare_params(p):
    """One-time re-layout of PyTorch-format params into kernel-friendly form."""
    w1 = jnp.transpose(p["conv1_w"][:, 0], (1, 2, 0)).reshape(25, 6)     # [tap, c]
    w2 = jnp.transpose(p["conv2_w"], (2, 3, 1, 0)).reshape(25, 6, 16)    # [tap, c, d]
    fc1w = jnp.transpose(p["fc1_w"].T.reshape(16, 16, 120), (1, 0, 2))   # [s, d, o]
    return {
        "w1": w1.astype(jnp.bfloat16),
        "b1": p["conv1_b"].reshape(1, 6).astype(jnp.float32),
        "w2": w2.astype(jnp.bfloat16),
        "b2": p["conv2_b"].reshape(1, 16).astype(jnp.float32),
        "fc1w": fc1w.astype(jnp.bfloat16),
        "fc1b": p["fc1_b"].reshape(1, 120).astype(jnp.float32),
        "fc2w": p["fc2_w"].T.astype(jnp.bfloat16),
        "fc2b": p["fc2_b"].reshape(1, 84).astype(jnp.float32),
        "fc3w": p["fc3_w"].T.astype(jnp.bfloat16),
        "fc3b": p["fc3_b"].reshape(1, 10).astype(jnp.float32),
    }


@jax.jit
def lenet_forward(x_nchw, kp):
    B = x_nchw.shape[0]
    assert B % 2 == 0, "kernel row layout assumes an even batch"
    x = x_nchw[:, 0, :, :].astype(jnp.float32)              # [B, 28, 28]
    pm1 = _build_conv1_patches(x, B)                         # [4, 144B, 25] bf16

    operands = (pm1, kp["w1"], kp["b1"], kp["w2"], kp["b2"],
                kp["fc1w"], kp["fc1b"], kp["fc2w"], kp["fc2b"],
                kp["fc3w"], kp["fc3b"])
    return pl.pallas_call(
        functools.partial(_lenet_kernel, B),
        out_shape=jax.ShapeDtypeStruct((B, 10), jnp.float32),
        grid=(1,),
        in_specs=[_full_spec(op.shape) for op in operands],
        out_specs=_full_spec((B, 10)),
        scratch_shapes=[
            pltpu.VMEM((12, 12 * B, 6), jnp.float32),   # pooled conv1 activation
            pltpu.VMEM((4, 8 * B, 16), jnp.float32),    # row-pooled conv2 activation
        ],
        compiler_params=pltpu.CompilerParams(
            dimension_semantics=("arbitrary",)),
    )(*operands)


# ------------------------------ reference model ----------------------------- #

def lenet_reference(x_nchw, p):
    dn = ("NCHW", "OIHW", "NCHW")
    y = jax.lax.conv_general_dilated(x_nchw, p["conv1_w"], (1, 1), "VALID",
                                     dimension_numbers=dn)
    y = jnp.maximum(y + p["conv1_b"].reshape(1, -1, 1, 1), 0.0)
    y = jax.lax.reduce_window(y, -jnp.inf, jax.lax.max,
                              (1, 1, 2, 2), (1, 1, 2, 2), "VALID")
    y = jax.lax.conv_general_dilated(y, p["conv2_w"], (1, 1), "VALID",
                                     dimension_numbers=dn)
    y = jnp.maximum(y + p["conv2_b"].reshape(1, -1, 1, 1), 0.0)
    y = jax.lax.reduce_window(y, -jnp.inf, jax.lax.max,
                              (1, 1, 2, 2), (1, 1, 2, 2), "VALID")
    y = y.reshape(y.shape[0], -1)
    y = jnp.maximum(y @ p["fc1_w"].T + p["fc1_b"], 0.0)
    y = jnp.maximum(y @ p["fc2_w"].T + p["fc2_b"], 0.0)
    y = jnp.maximum(y @ p["fc3_w"].T + p["fc3_b"], 0.0)
    return y


# --------------------------------- params ----------------------------------- #

def init_params(key):
    def uniform(key, shape, fan_in):
        bound = 1.0 / jnp.sqrt(jnp.float32(fan_in))
        return jax.random.uniform(key, shape, jnp.float32, -bound, bound)

    ks = jax.random.split(key, 10)
    return {
        "conv1_w": uniform(ks[0], (6, 1, 5, 5), 1 * 5 * 5),
        "conv1_b": uniform(ks[1], (6,), 1 * 5 * 5),
        "conv2_w": uniform(ks[2], (16, 6, 5, 5), 6 * 5 * 5),
        "conv2_b": uniform(ks[3], (16,), 6 * 5 * 5),
        "fc1_w": uniform(ks[4], (120, 256), 256),
        "fc1_b": uniform(ks[5], (120,), 256),
        "fc2_w": uniform(ks[6], (84, 120), 120),
        "fc2_b": uniform(ks[7], (84,), 120),
        "fc3_w": uniform(ks[8], (10, 84), 84),
        "fc3_b": uniform(ks[9], (10,), 84),
    }


# ----------------------------------- main ------------------------------------ #

if __name__ == "__main__":
    key = jax.random.PRNGKey(0)
    k_x, k_p = jax.random.split(key)
    x = jax.random.normal(k_x, (2, 1, 28, 28), dtype=jnp.float32)   # NCHW
    params = init_params(k_p)
    kparams = prepare_params(params)          # one-time weight re-layout

    out = jax.block_until_ready(lenet_forward(x, kparams))

    assert out.shape == (2, 10), out.shape
    assert out.dtype == jnp.float32
    assert bool(jnp.all(out >= 0.0))          # final ReLU
    assert bool(jnp.all(jnp.isfinite(out)))

    ref = lenet_reference(x, params)
    assert bool(jnp.allclose(out, ref, rtol=0.1, atol=1e-2)), (out, ref)
    print("KERNEL_OK")
</pallas_src>

<mosaic_0001>
module attributes {stable_mosaic.version = 11 : i64} {
  func.func @_lenet_kernel(%arg0: i32, %arg1: memref<4x288x25xbf16, #tpu.memory_space<vmem>>, %arg2: memref<25x6xbf16, #tpu.memory_space<vmem>>, %arg3: memref<1x6xf32, #tpu.memory_space<vmem>>, %arg4: memref<25x6x16xbf16, #tpu.memory_space<vmem>>, %arg5: memref<1x16xf32, #tpu.memory_space<vmem>>, %arg6: memref<16x16x120xbf16, #tpu.memory_space<vmem>>, %arg7: memref<1x120xf32, #tpu.memory_space<vmem>>, %arg8: memref<120x84xbf16, #tpu.memory_space<vmem>>, %arg9: memref<1x84xf32, #tpu.memory_space<vmem>>, %arg10: memref<84x10xbf16, #tpu.memory_space<vmem>>, %arg11: memref<1x10xf32, #tpu.memory_space<vmem>>, %arg12: memref<2x10xf32, #tpu.memory_space<vmem>>, %arg13: memref<12x24x6xf32, #tpu.memory_space<vmem>>, %arg14: memref<4x16x16xf32, #tpu.memory_space<vmem>>) attributes {dimension_semantics = [#tpu.dimension_semantics<arbitrary>], iteration_bounds = array<i64: 1>, scalar_prefetch = 0 : i64, scratch_operands = 2 : i64, tpu.core_type = #tpu.core_type<tc>, window_params = [{pipeline_mode = #tpu.pipeline_mode<synchronous>, transform_indices = @transform_0, window_bounds = array<i64: 4, 288, 25>}, {pipeline_mode = #tpu.pipeline_mode<synchronous>, transform_indices = @transform_1, window_bounds = array<i64: 25, 6>}, {pipeline_mode = #tpu.pipeline_mode<synchronous>, transform_indices = @transform_2, window_bounds = array<i64: 1, 6>}, {pipeline_mode = #tpu.pipeline_mode<synchronous>, transform_indices = @transform_3, window_bounds = array<i64: 25, 6, 16>}, {pipeline_mode = #tpu.pipeline_mode<synchronous>, transform_indices = @transform_4, window_bounds = array<i64: 1, 16>}, {pipeline_mode = #tpu.pipeline_mode<synchronous>, transform_indices = @transform_5, window_bounds = array<i64: 16, 16, 120>}, {pipeline_mode = #tpu.pipeline_mode<synchronous>, transform_indices = @transform_6, window_bounds = array<i64: 1, 120>}, {pipeline_mode = #tpu.pipeline_mode<synchronous>, transform_indices = @transform_7, window_bounds = array<i64: 120, 84>}, {pipeline_mode = #tpu.pipeline_mode<synchronous>, transform_indices = @transform_8, window_bounds = array<i64: 1, 84>}, {pipeline_mode = #tpu.pipeline_mode<synchronous>, transform_indices = @transform_9, window_bounds = array<i64: 84, 10>}, {pipeline_mode = #tpu.pipeline_mode<synchronous>, transform_indices = @transform_10, window_bounds = array<i64: 1, 10>}, {pipeline_mode = #tpu.pipeline_mode<synchronous>, transform_indices = @transform_11, window_bounds = array<i64: 2, 10>}]} {
    %c0 = arith.constant 0 : index
    %c0_0 = arith.constant 0 : index
    %0 = vector.load %arg2[%c0, %c0_0] : memref<25x6xbf16, #tpu.memory_space<vmem>>, vector<25x6xbf16>
    %c0_1 = arith.constant 0 : index
    %c0_2 = arith.constant 0 : index
    %c0_3 = arith.constant 0 : index
    %1 = vector.load %arg1[%c0_1, %c0_2, %c0_3] : memref<4x288x25xbf16, #tpu.memory_space<vmem>>, vector<1x288x25xbf16>
    %2 = vector.shape_cast %1 : vector<1x288x25xbf16> to vector<288x25xbf16>
    %cst = arith.constant dense<0.000000e+00> : vector<288x6xf32>
    %3 = tpu.matmul %2, %0, %cst {dimension_numbers = #tpu.dot_dimension_numbers<[1], [0], [0], [1], [0, 0, 1, 1], [], []>} : vector<288x25xbf16>, vector<25x6xbf16>, vector<288x6xf32> -> vector<288x6xf32>
    %c1 = arith.constant 1 : index
    %c0_4 = arith.constant 0 : index
    %c0_5 = arith.constant 0 : index
    %4 = vector.load %arg1[%c1, %c0_4, %c0_5] : memref<4x288x25xbf16, #tpu.memory_space<vmem>>, vector<1x288x25xbf16>
    %5 = vector.shape_cast %4 : vector<1x288x25xbf16> to vector<288x25xbf16>
    %cst_6 = arith.constant dense<0.000000e+00> : vector<288x6xf32>
    %6 = tpu.matmul %5, %0, %cst_6 {dimension_numbers = #tpu.dot_dimension_numbers<[1], [0], [0], [1], [0, 0, 1, 1], [], []>} : vector<288x25xbf16>, vector<25x6xbf16>, vector<288x6xf32> -> vector<288x6xf32>
    %7 = arith.maximumf %3, %6 : vector<288x6xf32>
    %c2 = arith.constant 2 : index
    %c0_7 = arith.constant 0 : index
    %c0_8 = arith.constant 0 : index
    %8 = vector.load %arg1[%c2, %c0_7, %c0_8] : memref<4x288x25xbf16, #tpu.memory_space<vmem>>, vector<1x288x25xbf16>
    %9 = vector.shape_cast %8 : vector<1x288x25xbf16> to vector<288x25xbf16>
    %cst_9 = arith.constant dense<0.000000e+00> : vector<288x6xf32>
    %10 = tpu.matmul %9, %0, %cst_9 {dimension_numbers = #tpu.dot_dimension_numbers<[1], [0], [0], [1], [0, 0, 1, 1], [], []>} : vector<288x25xbf16>, vector<25x6xbf16>, vector<288x6xf32> -> vector<288x6xf32>
    %11 = arith.maximumf %7, %10 : vector<288x6xf32>
    %c3 = arith.constant 3 : index
    %c0_10 = arith.constant 0 : index
    %c0_11 = arith.constant 0 : index
    %12 = vector.load %arg1[%c3, %c0_10, %c0_11] : memref<4x288x25xbf16, #tpu.memory_space<vmem>>, vector<1x288x25xbf16>
    %13 = vector.shape_cast %12 : vector<1x288x25xbf16> to vector<288x25xbf16>
    %cst_12 = arith.constant dense<0.000000e+00> : vector<288x6xf32>
    %14 = tpu.matmul %13, %0, %cst_12 {dimension_numbers = #tpu.dot_dimension_numbers<[1], [0], [0], [1], [0, 0, 1, 1], [], []>} : vector<288x25xbf16>, vector<25x6xbf16>, vector<288x6xf32> -> vector<288x6xf32>
    %15 = arith.maximumf %11, %14 : vector<288x6xf32>
    %c0_13 = arith.constant 0 : index
    %c0_14 = arith.constant 0 : index
    %16 = vector.load %arg3[%c0_13, %c0_14] : memref<1x6xf32, #tpu.memory_space<vmem>>, vector<1x6xf32>
    %17 = vector.broadcast %16 : vector<1x6xf32> to vector<288x6xf32>
    %18 = arith.addf %15, %17 : vector<288x6xf32>
    %cst_15 = arith.constant 0.000000e+00 : f32
    %19 = vector.broadcast %cst_15 : f32 to vector<288x6xf32>
    %20 = arith.maximumf %18, %19 : vector<288x6xf32>
    %21 = vector.shape_cast %20 : vector<288x6xf32> to vector<12x24x6xf32>
    %c0_16 = arith.constant 0 : index
    %c0_17 = arith.constant 0 : index
    %c0_18 = arith.constant 0 : index
    %22 = vector.load %arg13[%c0_16, %c0_17, %c0_18] : memref<12x24x6xf32, #tpu.memory_space<vmem>>, vector<12x24x6xf32>
    tpu.vector_store %arg13[%c0_16, %c0_17, %c0_18], %21 {strides = array<i32>} : memref<12x24x6xf32, #tpu.memory_space<vmem>>, vector<12x24x6xf32>,
    %cst_19 = arith.constant 0.000000e+00 : f32
    %23 = vector.broadcast %cst_19 : f32 to vector<128x16xf32>
    %c0_20 = arith.constant 0 : index
    %c0_21 = arith.constant 0 : index
    %c0_22 = arith.constant 0 : index
    %24 = vector.load %arg13[%c0_20, %c0_21, %c0_22] : memref<12x24x6xf32, #tpu.memory_space<vmem>>, vector<8x16x6xf32>
    %25 = vector.shape_cast %24 : vector<8x16x6xf32> to vector<128x6xf32>
    %26 = arith.truncf %25 : vector<128x6xf32> to vector<128x6xbf16>
    %c0_23 = arith.constant 0 : index
    %c0_24 = arith.constant 0 : index
    %c0_25 = arith.constant 0 : index
    %27 = vector.load %arg4[%c0_23, %c0_24, %c0_25] : memref<25x6x16xbf16, #tpu.memory_space<vmem>>, vector<1x6x16xbf16>
    %28 = vector.shape_cast %27 : vector<1x6x16xbf16> to vector<6x16xbf16>
    %cst_26 = arith.constant dense<0.000000e+00> : vector<128x16xf32>
    %29 = tpu.matmul %26, %28, %cst_26 {dimension_numbers = #tpu.dot_dimension_numbers<[1], [0], [0], [1], [0, 0, 1, 1], [], []>} : vector<128x6xbf16>, vector<6x16xbf16>, vector<128x16xf32> -> vector<128x16xf32>
    %30 = arith.addf %23, %29 : vector<128x16xf32>
    %c0_27 = arith.constant 0 : index
    %c2_28 = arith.constant 2 : index
    %c0_29 = arith.constant 0 : index
    %31 = vector.load %arg13[%c0_27, %c2_28, %c0_29] : memref<12x24x6xf32, #tpu.memory_space<vmem>>, vector<8x16x6xf32>
    %32 = vector.shape_cast %31 : vector<8x16x6xf32> to vector<128x6xf32>
    %33 = arith.truncf %32 : vector<128x6xf32> to vector<128x6xbf16>
    %c1_30 = arith.constant 1 : index
    %c0_31 = arith.constant 0 : index
    %c0_32 = arith.constant 0 : index
    %34 = vector.load %arg4[%c1_30, %c0_31, %c0_32] : memref<25x6x16xbf16, #tpu.memory_space<vmem>>, vector<1x6x16xbf16>
    %35 = vector.shape_cast %34 : vector<1x6x16xbf16> to vector<6x16xbf16>
    %cst_33 = arith.constant dense<0.000000e+00> : vector<128x16xf32>
    %36 = tpu.matmul %33, %35, %cst_33 {dimension_numbers = #tpu.dot_dimension_numbers<[1], [0], [0], [1], [0, 0, 1, 1], [], []>} : vector<128x6xbf16>, vector<6x16xbf16>, vector<128x16xf32> -> vector<128x16xf32>
    %37 = arith.addf %30, %36 : vector<128x16xf32>
    %c0_34 = arith.constant 0 : index
    %c4 = arith.constant 4 : index
    %c0_35 = arith.constant 0 : index
    %38 = vector.load %arg13[%c0_34, %c4, %c0_35] : memref<12x24x6xf32, #tpu.memory_space<vmem>>, vector<8x16x6xf32>
    %39 = vector.shape_cast %38 : vector<8x16x6xf32> to vector<128x6xf32>
    %40 = arith.truncf %39 : vector<128x6xf32> to vector<128x6xbf16>
    %c2_36 = arith.constant 2 : index
    %c0_37 = arith.constant 0 : index
    %c0_38 = arith.constant 0 : index
    %41 = vector.load %arg4[%c2_36, %c0_37, %c0_38] : memref<25x6x16xbf16, #tpu.memory_space<vmem>>, vector<1x6x16xbf16>
    %42 = vector.shape_cast %41 : vector<1x6x16xbf16> to vector<6x16xbf16>
    %cst_39 = arith.constant dense<0.000000e+00> : vector<128x16xf32>
    %43 = tpu.matmul %40, %42, %cst_39 {dimension_numbers = #tpu.dot_dimension_numbers<[1], [0], [0], [1], [0, 0, 1, 1], [], []>} : vector<128x6xbf16>, vector<6x16xbf16>, vector<128x16xf32> -> vector<128x16xf32>
    %44 = arith.addf %37, %43 : vector<128x16xf32>
    %c0_40 = arith.constant 0 : index
    %c6 = arith.constant 6 : index
    %c0_41 = arith.constant 0 : index
    %45 = vector.load %arg13[%c0_40, %c6, %c0_41] : memref<12x24x6xf32, #tpu.memory_space<vmem>>, vector<8x16x6xf32>
    %46 = vector.shape_cast %45 : vector<8x16x6xf32> to vector<128x6xf32>
    %47 = arith.truncf %46 : vector<128x6xf32> to vector<128x6xbf16>
    %c3_42 = arith.constant 3 : index
    %c0_43 = arith.constant 0 : index
    %c0_44 = arith.constant 0 : index
    %48 = vector.load %arg4[%c3_42, %c0_43, %c0_44] : memref<25x6x16xbf16, #tpu.memory_space<vmem>>, vector<1x6x16xbf16>
    %49 = vector.shape_cast %48 : vector<1x6x16xbf16> to vector<6x16xbf16>
    %cst_45 = arith.constant dense<0.000000e+00> : vector<128x16xf32>
    %50 = tpu.matmul %47, %49, %cst_45 {dimension_numbers = #tpu.dot_dimension_numbers<[1], [0], [0], [1], [0, 0, 1, 1], [], []>} : vector<128x6xbf16>, vector<6x16xbf16>, vector<128x16xf32> -> vector<128x16xf32>
    %51 = arith.addf %44, %50 : vector<128x16xf32>
    %c0_46 = arith.constant 0 : index
    %c8 = arith.constant 8 : index
    %c0_47 = arith.constant 0 : index
    %52 = vector.load %arg13[%c0_46, %c8, %c0_47] : memref<12x24x6xf32, #tpu.memory_space<vmem>>, vector<8x16x6xf32>
    %53 = vector.shape_cast %52 : vector<8x16x6xf32> to vector<128x6xf32>
    %54 = arith.truncf %53 : vector<128x6xf32> to vector<128x6xbf16>
    %c4_48 = arith.constant 4 : index
    %c0_49 = arith.constant 0 : index
    %c0_50 = arith.constant 0 : index
    %55 = vector.load %arg4[%c4_48, %c0_49, %c0_50] : memref<25x6x16xbf16, #tpu.memory_space<vmem>>, vector<1x6x16xbf16>
    %56 = vector.shape_cast %55 : vector<1x6x16xbf16> to vector<6x16xbf16>
    %cst_51 = arith.constant dense<0.000000e+00> : vector<128x16xf32>
    %57 = tpu.matmul %54, %56, %cst_51 {dimension_numbers = #tpu.dot_dimension_numbers<[1], [0], [0], [1], [0, 0, 1, 1], [], []>} : vector<128x6xbf16>, vector<6x16xbf16>, vector<128x16xf32> -> vector<128x16xf32>
    %58 = arith.addf %51, %57 : vector<128x16xf32>
    %c1_52 = arith.constant 1 : index
    %c0_53 = arith.constant 0 : index
    %c0_54 = arith.constant 0 : index
    %59 = vector.load %arg13[%c1_52, %c0_53, %c0_54] : memref<12x24x6xf32, #tpu.memory_space<vmem>>, vector<8x16x6xf32>
    %60 = vector.shape_cast %59 : vector<8x16x6xf32> to vector<128x6xf32>
    %61 = arith.truncf %60 : vector<128x6xf32> to vector<128x6xbf16>
    %c5 = arith.constant 5 : index
    %c0_55 = arith.constant 0 : index
    %c0_56 = arith.constant 0 : index
    %62 = vector.load %arg4[%c5, %c0_55, %c0_56] : memref<25x6x16xbf16, #tpu.memory_space<vmem>>, vector<1x6x16xbf16>
    %63 = vector.shape_cast %62 : vector<1x6x16xbf16> to vector<6x16xbf16>
    %cst_57 = arith.constant dense<0.000000e+00> : vector<128x16xf32>
    %64 = tpu.matmul %61, %63, %cst_57 {dimension_numbers = #tpu.dot_dimension_numbers<[1], [0], [0], [1], [0, 0, 1, 1], [], []>} : vector<128x6xbf16>, vector<6x16xbf16>, vector<128x16xf32> -> vector<128x16xf32>
    %65 = arith.addf %58, %64 : vector<128x16xf32>
    %c1_58 = arith.constant 1 : index
    %c2_59 = arith.constant 2 : index
    %c0_60 = arith.constant 0 : index
    %66 = vector.load %arg13[%c1_58, %c2_59, %c0_60] : memref<12x24x6xf32, #tpu.memory_space<vmem>>, vector<8x16x6xf32>
    %67 = vector.shape_cast %66 : vector<8x16x6xf32> to vector<128x6xf32>
    %68 = arith.truncf %67 : vector<128x6xf32> to vector<128x6xbf16>
    %c6_61 = arith.constant 6 : index
    %c0_62 = arith.constant 0 : index
    %c0_63 = arith.constant 0 : index
    %69 = vector.load %arg4[%c6_61, %c0_62, %c0_63] : memref<25x6x16xbf16, #tpu.memory_space<vmem>>, vector<1x6x16xbf16>
    %70 = vector.shape_cast %69 : vector<1x6x16xbf16> to vector<6x16xbf16>
    %cst_64 = arith.constant dense<0.000000e+00> : vector<128x16xf32>
    %71 = tpu.matmul %68, %70, %cst_64 {dimension_numbers = #tpu.dot_dimension_numbers<[1], [0], [0], [1], [0, 0, 1, 1], [], []>} : vector<128x6xbf16>, vector<6x16xbf16>, vector<128x16xf32> -> vector<128x16xf32>
    %72 = arith.addf %65, %71 : vector<128x16xf32>
    %c1_65 = arith.constant 1 : index
    %c4_66 = arith.constant 4 : index
    %c0_67 = arith.constant 0 : index
    %73 = vector.load %arg13[%c1_65, %c4_66, %c0_67] : memref<12x24x6xf32, #tpu.memory_space<vmem>>, vector<8x16x6xf32>
    %74 = vector.shape_cast %73 : vector<8x16x6xf32> to vector<128x6xf32>
    %75 = arith.truncf %74 : vector<128x6xf32> to vector<128x6xbf16>
    %c7 = arith.constant 7 : index
    %c0_68 = arith.constant 0 : index
    %c0_69 = arith.constant 0 : index
    %76 = vector.load %arg4[%c7, %c0_68, %c0_69] : memref<25x6x16xbf16, #tpu.memory_space<vmem>>, vector<1x6x16xbf16>
    %77 = vector.shape_cast %76 : vector<1x6x16xbf16> to vector<6x16xbf16>
    %cst_70 = arith.constant dense<0.000000e+00> : vector<128x16xf32>
    %78 = tpu.matmul %75, %77, %cst_70 {dimension_numbers = #tpu.dot_dimension_numbers<[1], [0], [0], [1], [0, 0, 1, 1], [], []>} : vector<128x6xbf16>, vector<6x16xbf16>, vector<128x16xf32> -> vector<128x16xf32>
    %79 = arith.addf %72, %78 : vector<128x16xf32>
    %c1_71 = arith.constant 1 : index
    %c6_72 = arith.constant 6 : index
    %c0_73 = arith.constant 0 : index
    %80 = vector.load %arg13[%c1_71, %c6_72, %c0_73] : memref<12x24x6xf32, #tpu.memory_space<vmem>>, vector<8x16x6xf32>
    %81 = vector.shape_cast %80 : vector<8x16x6xf32> to vector<128x6xf32>
    %82 = arith.truncf %81 : vector<128x6xf32> to vector<128x6xbf16>
    %c8_74 = arith.constant 8 : index
    %c0_75 = arith.constant 0 : index
    %c0_76 = arith.constant 0 : index
    %83 = vector.load %arg4[%c8_74, %c0_75, %c0_76] : memref<25x6x16xbf16, #tpu.memory_space<vmem>>, vector<1x6x16xbf16>
    %84 = vector.shape_cast %83 : vector<1x6x16xbf16> to vector<6x16xbf16>
    %cst_77 = arith.constant dense<0.000000e+00> : vector<128x16xf32>
    %85 = tpu.matmul %82, %84, %cst_77 {dimension_numbers = #tpu.dot_dimension_numbers<[1], [0], [0], [1], [0, 0, 1, 1], [], []>} : vector<128x6xbf16>, vector<6x16xbf16>, vector<128x16xf32> -> vector<128x16xf32>
    %86 = arith.addf %79, %85 : vector<128x16xf32>
    %c1_78 = arith.constant 1 : index
    %c8_79 = arith.constant 8 : index
    %c0_80 = arith.constant 0 : index
    %87 = vector.load %arg13[%c1_78, %c8_79, %c0_80] : memref<12x24x6xf32, #tpu.memory_space<vmem>>, vector<8x16x6xf32>
    %88 = vector.shape_cast %87 : vector<8x16x6xf32> to vector<128x6xf32>
    %89 = arith.truncf %88 : vector<128x6xf32> to vector<128x6xbf16>
    %c9 = arith.constant 9 : index
    %c0_81 = arith.constant 0 : index
    %c0_82 = arith.constant 0 : index
    %90 = vector.load %arg4[%c9, %c0_81, %c0_82] : memref<25x6x16xbf16, #tpu.memory_space<vmem>>, vector<1x6x16xbf16>
    %91 = vector.shape_cast %90 : vector<1x6x16xbf16> to vector<6x16xbf16>
    %cst_83 = arith.constant dense<0.000000e+00> : vector<128x16xf32>
    %92 = tpu.matmul %89, %91, %cst_83 {dimension_numbers = #tpu.dot_dimension_numbers<[1], [0], [0], [1], [0, 0, 1, 1], [], []>} : vector<128x6xbf16>, vector<6x16xbf16>, vector<128x16xf32> -> vector<128x16xf32>
    %93 = arith.addf %86, %92 : vector<128x16xf32>
    %c2_84 = arith.constant 2 : index
    %c0_85 = arith.constant 0 : index
    %c0_86 = arith.constant 0 : index
    %94 = vector.load %arg13[%c2_84, %c0_85, %c0_86] : memref<12x24x6xf32, #tpu.memory_space<vmem>>, vector<8x16x6xf32>
    %95 = vector.shape_cast %94 : vector<8x16x6xf32> to vector<128x6xf32>
    %96 = arith.truncf %95 : vector<128x6xf32> to vector<128x6xbf16>
    %c10 = arith.constant 10 : index
    %c0_87 = arith.constant 0 : index
    %c0_88 = arith.constant 0 : index
    %97 = vector.load %arg4[%c10, %c0_87, %c0_88] : memref<25x6x16xbf16, #tpu.memory_space<vmem>>, vector<1x6x16xbf16>
    %98 = vector.shape_cast %97 : vector<1x6x16xbf16> to vector<6x16xbf16>
    %cst_89 = arith.constant dense<0.000000e+00> : vector<128x16xf32>
    %99 = tpu.matmul %96, %98, %cst_89 {dimension_numbers = #tpu.dot_dimension_numbers<[1], [0], [0], [1], [0, 0, 1, 1], [], []>} : vector<128x6xbf16>, vector<6x16xbf16>, vector<128x16xf32> -> vector<128x16xf32>
    %100 = arith.addf %93, %99 : vector<128x16xf32>
    %c2_90 = arith.constant 2 : index
    %c2_91 = arith.constant 2 : index
    %c0_92 = arith.constant 0 : index
    %101 = vector.load %arg13[%c2_90, %c2_91, %c0_92] : memref<12x24x6xf32, #tpu.memory_space<vmem>>, vector<8x16x6xf32>
    %102 = vector.shape_cast %101 : vector<8x16x6xf32> to vector<128x6xf32>
    %103 = arith.truncf %102 : vector<128x6xf32> to vector<128x6xbf16>
    %c11 = arith.constant 11 : index
    %c0_93 = arith.constant 0 : index
    %c0_94 = arith.constant 0 : index
    %104 = vector.load %arg4[%c11, %c0_93, %c0_94] : memref<25x6x16xbf16, #tpu.memory_space<vmem>>, vector<1x6x16xbf16>
    %105 = vector.shape_cast %104 : vector<1x6x16xbf16> to vector<6x16xbf16>
    %cst_95 = arith.constant dense<0.000000e+00> : vector<128x16xf32>
    %106 = tpu.matmul %103, %105, %cst_95 {dimension_numbers = #tpu.dot_dimension_numbers<[1], [0], [0], [1], [0, 0, 1, 1], [], []>} : vector<128x6xbf16>, vector<6x16xbf16>, vector<128x16xf32> -> vector<128x16xf32>
    %107 = arith.addf %100, %106 : vector<128x16xf32>
    %c2_96 = arith.constant 2 : index
    %c4_97 = arith.constant 4 : index
    %c0_98 = arith.constant 0 : index
    %108 = vector.load %arg13[%c2_96, %c4_97, %c0_98] : memref<12x24x6xf32, #tpu.memory_space<vmem>>, vector<8x16x6xf32>
    %109 = vector.shape_cast %108 : vector<8x16x6xf32> to vector<128x6xf32>
    %110 = arith.truncf %109 : vector<128x6xf32> to vector<128x6xbf16>
    %c12 = arith.constant 12 : index
    %c0_99 = arith.constant 0 : index
    %c0_100 = arith.constant 0 : index
    %111 = vector.load %arg4[%c12, %c0_99, %c0_100] : memref<25x6x16xbf16, #tpu.memory_space<vmem>>, vector<1x6x16xbf16>
    %112 = vector.shape_cast %111 : vector<1x6x16xbf16> to vector<6x16xbf16>
    %cst_101 = arith.constant dense<0.000000e+00> : vector<128x16xf32>
    %113 = tpu.matmul %110, %112, %cst_101 {dimension_numbers = #tpu.dot_dimension_numbers<[1], [0], [0], [1], [0, 0, 1, 1], [], []>} : vector<128x6xbf16>, vector<6x16xbf16>, vector<128x16xf32> -> vector<128x16xf32>
    %114 = arith.addf %107, %113 : vector<128x16xf32>
    %c2_102 = arith.constant 2 : index
    %c6_103 = arith.constant 6 : index
    %c0_104 = arith.constant 0 : index
    %115 = vector.load %arg13[%c2_102, %c6_103, %c0_104] : memref<12x24x6xf32, #tpu.memory_space<vmem>>, vector<8x16x6xf32>
    %116 = vector.shape_cast %115 : vector<8x16x6xf32> to vector<128x6xf32>
    %117 = arith.truncf %116 : vector<128x6xf32> to vector<128x6xbf16>
    %c13 = arith.constant 13 : index
    %c0_105 = arith.constant 0 : index
    %c0_106 = arith.constant 0 : index
    %118 = vector.load %arg4[%c13, %c0_105, %c0_106] : memref<25x6x16xbf16, #tpu.memory_space<vmem>>, vector<1x6x16xbf16>
    %119 = vector.shape_cast %118 : vector<1x6x16xbf16> to vector<6x16xbf16>
    %cst_107 = arith.constant dense<0.000000e+00> : vector<128x16xf32>
    %120 = tpu.matmul %117, %119, %cst_107 {dimension_numbers = #tpu.dot_dimension_numbers<[1], [0], [0], [1], [0, 0, 1, 1], [], []>} : vector<128x6xbf16>, vector<6x16xbf16>, vector<128x16xf32> -> vector<128x16xf32>
    %121 = arith.addf %114, %120 : vector<128x16xf32>
    %c2_108 = arith.constant 2 : index
    %c8_109 = arith.constant 8 : index
    %c0_110 = arith.constant 0 : index
    %122 = vector.load %arg13[%c2_108, %c8_109, %c0_110] : memref<12x24x6xf32, #tpu.memory_space<vmem>>, vector<8x16x6xf32>
    %123 = vector.shape_cast %122 : vector<8x16x6xf32> to vector<128x6xf32>
    %124 = arith.truncf %123 : vector<128x6xf32> to vector<128x6xbf16>
    %c14 = arith.constant 14 : index
    %c0_111 = arith.constant 0 : index
    %c0_112 = arith.constant 0 : index
    %125 = vector.load %arg4[%c14, %c0_111, %c0_112] : memref<25x6x16xbf16, #tpu.memory_space<vmem>>, vector<1x6x16xbf16>
    %126 = vector.shape_cast %125 : vector<1x6x16xbf16> to vector<6x16xbf16>
    %cst_113 = arith.constant dense<0.000000e+00> : vector<128x16xf32>
    %127 = tpu.matmul %124, %126, %cst_113 {dimension_numbers = #tpu.dot_dimension_numbers<[1], [0], [0], [1], [0, 0, 1, 1], [], []>} : vector<128x6xbf16>, vector<6x16xbf16>, vector<128x16xf32> -> vector<128x16xf32>
    %128 = arith.addf %121, %127 : vector<128x16xf32>
    %c3_114 = arith.constant 3 : index
    %c0_115 = arith.constant 0 : index
    %c0_116 = arith.constant 0 : index
    %129 = vector.load %arg13[%c3_114, %c0_115, %c0_116] : memref<12x24x6xf32, #tpu.memory_space<vmem>>, vector<8x16x6xf32>
    %130 = vector.shape_cast %129 : vector<8x16x6xf32> to vector<128x6xf32>
    %131 = arith.truncf %130 : vector<128x6xf32> to vector<128x6xbf16>
    %c15 = arith.constant 15 : index
    %c0_117 = arith.constant 0 : index
    %c0_118 = arith.constant 0 : index
    %132 = vector.load %arg4[%c15, %c0_117, %c0_118] : memref<25x6x16xbf16, #tpu.memory_space<vmem>>, vector<1x6x16xbf16>
    %133 = vector.shape_cast %132 : vector<1x6x16xbf16> to vector<6x16xbf16>
    %cst_119 = arith.constant dense<0.000000e+00> : vector<128x16xf32>
    %134 = tpu.matmul %131, %133, %cst_119 {dimension_numbers = #tpu.dot_dimension_numbers<[1], [0], [0], [1], [0, 0, 1, 1], [], []>} : vector<128x6xbf16>, vector<6x16xbf16>, vector<128x16xf32> -> vector<128x16xf32>
    %135 = arith.addf %128, %134 : vector<128x16xf32>
    %c3_120 = arith.constant 3 : index
    %c2_121 = arith.constant 2 : index
    %c0_122 = arith.constant 0 : index
    %136 = vector.load %arg13[%c3_120, %c2_121, %c0_122] : memref<12x24x6xf32, #tpu.memory_space<vmem>>, vector<8x16x6xf32>
    %137 = vector.shape_cast %136 : vector<8x16x6xf32> to vector<128x6xf32>
    %138 = arith.truncf %137 : vector<128x6xf32> to vector<128x6xbf16>
    %c16 = arith.constant 16 : index
    %c0_123 = arith.constant 0 : index
    %c0_124 = arith.constant 0 : index
    %139 = vector.load %arg4[%c16, %c0_123, %c0_124] : memref<25x6x16xbf16, #tpu.memory_space<vmem>>, vector<1x6x16xbf16>
    %140 = vector.shape_cast %139 : vector<1x6x16xbf16> to vector<6x16xbf16>
    %cst_125 = arith.constant dense<0.000000e+00> : vector<128x16xf32>
    %141 = tpu.matmul %138, %140, %cst_125 {dimension_numbers = #tpu.dot_dimension_numbers<[1], [0], [0], [1], [0, 0, 1, 1], [], []>} : vector<128x6xbf16>, vector<6x16xbf16>, vector<128x16xf32> -> vector<128x16xf32>
    %142 = arith.addf %135, %141 : vector<128x16xf32>
    %c3_126 = arith.constant 3 : index
    %c4_127 = arith.constant 4 : index
    %c0_128 = arith.constant 0 : index
    %143 = vector.load %arg13[%c3_126, %c4_127, %c0_128] : memref<12x24x6xf32, #tpu.memory_space<vmem>>, vector<8x16x6xf32>
    %144 = vector.shape_cast %143 : vector<8x16x6xf32> to vector<128x6xf32>
    %145 = arith.truncf %144 : vector<128x6xf32> to vector<128x6xbf16>
    %c17 = arith.constant 17 : index
    %c0_129 = arith.constant 0 : index
    %c0_130 = arith.constant 0 : index
    %146 = vector.load %arg4[%c17, %c0_129, %c0_130] : memref<25x6x16xbf16, #tpu.memory_space<vmem>>, vector<1x6x16xbf16>
    %147 = vector.shape_cast %146 : vector<1x6x16xbf16> to vector<6x16xbf16>
    %cst_131 = arith.constant dense<0.000000e+00> : vector<128x16xf32>
    %148 = tpu.matmul %145, %147, %cst_131 {dimension_numbers = #tpu.dot_dimension_numbers<[1], [0], [0], [1], [0, 0, 1, 1], [], []>} : vector<128x6xbf16>, vector<6x16xbf16>, vector<128x16xf32> -> vector<128x16xf32>
    %149 = arith.addf %142, %148 : vector<128x16xf32>
    %c3_132 = arith.constant 3 : index
    %c6_133 = arith.constant 6 : index
    %c0_134 = arith.constant 0 : index
    %150 = vector.load %arg13[%c3_132, %c6_133, %c0_134] : memref<12x24x6xf32, #tpu.memory_space<vmem>>, vector<8x16x6xf32>
    %151 = vector.shape_cast %150 : vector<8x16x6xf32> to vector<128x6xf32>
    %152 = arith.truncf %151 : vector<128x6xf32> to vector<128x6xbf16>
    %c18 = arith.constant 18 : index
    %c0_135 = arith.constant 0 : index
    %c0_136 = arith.constant 0 : index
    %153 = vector.load %arg4[%c18, %c0_135, %c0_136] : memref<25x6x16xbf16, #tpu.memory_space<vmem>>, vector<1x6x16xbf16>
    %154 = vector.shape_cast %153 : vector<1x6x16xbf16> to vector<6x16xbf16>
    %cst_137 = arith.constant dense<0.000000e+00> : vector<128x16xf32>
    %155 = tpu.matmul %152, %154, %cst_137 {dimension_numbers = #tpu.dot_dimension_numbers<[1], [0], [0], [1], [0, 0, 1, 1], [], []>} : vector<128x6xbf16>, vector<6x16xbf16>, vector<128x16xf32> -> vector<128x16xf32>
    %156 = arith.addf %149, %155 : vector<128x16xf32>
    %c3_138 = arith.constant 3 : index
    %c8_139 = arith.constant 8 : index
    %c0_140 = arith.constant 0 : index
    %157 = vector.load %arg13[%c3_138, %c8_139, %c0_140] : memref<12x24x6xf32, #tpu.memory_space<vmem>>, vector<8x16x6xf32>
    %158 = vector.shape_cast %157 : vector<8x16x6xf32> to vector<128x6xf32>
    %159 = arith.truncf %158 : vector<128x6xf32> to vector<128x6xbf16>
    %c19 = arith.constant 19 : index
    %c0_141 = arith.constant 0 : index
    %c0_142 = arith.constant 0 : index
    %160 = vector.load %arg4[%c19, %c0_141, %c0_142] : memref<25x6x16xbf16, #tpu.memory_space<vmem>>, vector<1x6x16xbf16>
    %161 = vector.shape_cast %160 : vector<1x6x16xbf16> to vector<6x16xbf16>
    %cst_143 = arith.constant dense<0.000000e+00> : vector<128x16xf32>
    %162 = tpu.matmul %159, %161, %cst_143 {dimension_numbers = #tpu.dot_dimension_numbers<[1], [0], [0], [1], [0, 0, 1, 1], [], []>} : vector<128x6xbf16>, vector<6x16xbf16>, vector<128x16xf32> -> vector<128x16xf32>
    %163 = arith.addf %156, %162 : vector<128x16xf32>
    %c4_144 = arith.constant 4 : index
    %c0_145 = arith.constant 0 : index
    %c0_146 = arith.constant 0 : index
    %164 = vector.load %arg13[%c4_144, %c0_145, %c0_146] : memref<12x24x6xf32, #tpu.memory_space<vmem>>, vector<8x16x6xf32>
    %165 = vector.shape_cast %164 : vector<8x16x6xf32> to vector<128x6xf32>
    %166 = arith.truncf %165 : vector<128x6xf32> to vector<128x6xbf16>
    %c20 = arith.constant 20 : index
    %c0_147 = arith.constant 0 : index
    %c0_148 = arith.constant 0 : index
    %167 = vector.load %arg4[%c20, %c0_147, %c0_148] : memref<25x6x16xbf16, #tpu.memory_space<vmem>>, vector<1x6x16xbf16>
    %168 = vector.shape_cast %167 : vector<1x6x16xbf16> to vector<6x16xbf16>
    %cst_149 = arith.constant dense<0.000000e+00> : vector<128x16xf32>
    %169 = tpu.matmul %166, %168, %cst_149 {dimension_numbers = #tpu.dot_dimension_numbers<[1], [0], [0], [1], [0, 0, 1, 1], [], []>} : vector<128x6xbf16>, vector<6x16xbf16>, vector<128x16xf32> -> vector<128x16xf32>
    %170 = arith.addf %163, %169 : vector<128x16xf32>
    %c4_150 = arith.constant 4 : index
    %c2_151 = arith.constant 2 : index
    %c0_152 = arith.constant 0 : index
    %171 = vector.load %arg13[%c4_150, %c2_151, %c0_152] : memref<12x24x6xf32, #tpu.memory_space<vmem>>, vector<8x16x6xf32>
    %172 = vector.shape_cast %171 : vector<8x16x6xf32> to vector<128x6xf32>
    %173 = arith.truncf %172 : vector<128x6xf32> to vector<128x6xbf16>
    %c21 = arith.constant 21 : index
    %c0_153 = arith.constant 0 : index
    %c0_154 = arith.constant 0 : index
    %174 = vector.load %arg4[%c21, %c0_153, %c0_154] : memref<25x6x16xbf16, #tpu.memory_space<vmem>>, vector<1x6x16xbf16>
    %175 = vector.shape_cast %174 : vector<1x6x16xbf16> to vector<6x16xbf16>
    %cst_155 = arith.constant dense<0.000000e+00> : vector<128x16xf32>
    %176 = tpu.matmul %173, %175, %cst_155 {dimension_numbers = #tpu.dot_dimension_numbers<[1], [0], [0], [1], [0, 0, 1, 1], [], []>} : vector<128x6xbf16>, vector<6x16xbf16>, vector<128x16xf32> -> vector<128x16xf32>
    %177 = arith.addf %170, %176 : vector<128x16xf32>
    %c4_156 = arith.constant 4 : index
    %c4_157 = arith.constant 4 : index
    %c0_158 = arith.constant 0 : index
    %178 = vector.load %arg13[%c4_156, %c4_157, %c0_158] : memref<12x24x6xf32, #tpu.memory_space<vmem>>, vector<8x16x6xf32>
    %179 = vector.shape_cast %178 : vector<8x16x6xf32> to vector<128x6xf32>
    %180 = arith.truncf %179 : vector<128x6xf32> to vector<128x6xbf16>
    %c22 = arith.constant 22 : index
    %c0_159 = arith.constant 0 : index
    %c0_160 = arith.constant 0 : index
    %181 = vector.load %arg4[%c22, %c0_159, %c0_160] : memref<25x6x16xbf16, #tpu.memory_space<vmem>>, vector<1x6x16xbf16>
    %182 = vector.shape_cast %181 : vector<1x6x16xbf16> to vector<6x16xbf16>
    %cst_161 = arith.constant dense<0.000000e+00> : vector<128x16xf32>
    %183 = tpu.matmul %180, %182, %cst_161 {dimension_numbers = #tpu.dot_dimension_numbers<[1], [0], [0], [1], [0, 0, 1, 1], [], []>} : vector<128x6xbf16>, vector<6x16xbf16>, vector<128x16xf32> -> vector<128x16xf32>
    %184 = arith.addf %177, %183 : vector<128x16xf32>
    %c4_162 = arith.constant 4 : index
    %c6_163 = arith.constant 6 : index
    %c0_164 = arith.constant 0 : index
    %185 = vector.load %arg13[%c4_162, %c6_163, %c0_164] : memref<12x24x6xf32, #tpu.memory_space<vmem>>, vector<8x16x6xf32>
    %186 = vector.shape_cast %185 : vector<8x16x6xf32> to vector<128x6xf32>
    %187 = arith.truncf %186 : vector<128x6xf32> to vector<128x6xbf16>
    %c23 = arith.constant 23 : index
    %c0_165 = arith.constant 0 : index
    %c0_166 = arith.constant 0 : index
    %188 = vector.load %arg4[%c23, %c0_165, %c0_166] : memref<25x6x16xbf16, #tpu.memory_space<vmem>>, vector<1x6x16xbf16>
    %189 = vector.shape_cast %188 : vector<1x6x16xbf16> to vector<6x16xbf16>
    %cst_167 = arith.constant dense<0.000000e+00> : vector<128x16xf32>
    %190 = tpu.matmul %187, %189, %cst_167 {dimension_numbers = #tpu.dot_dimension_numbers<[1], [0], [0], [1], [0, 0, 1, 1], [], []>} : vector<128x6xbf16>, vector<6x16xbf16>, vector<128x16xf32> -> vector<128x16xf32>
    %191 = arith.addf %184, %190 : vector<128x16xf32>
    %c4_168 = arith.constant 4 : index
    %c8_169 = arith.constant 8 : index
    %c0_170 = arith.constant 0 : index
    %192 = vector.load %arg13[%c4_168, %c8_169, %c0_170] : memref<12x24x6xf32, #tpu.memory_space<vmem>>, vector<8x16x6xf32>
    %193 = vector.shape_cast %192 : vector<8x16x6xf32> to vector<128x6xf32>
    %194 = arith.truncf %193 : vector<128x6xf32> to vector<128x6xbf16>
    %c24 = arith.constant 24 : index
    %c0_171 = arith.constant 0 : index
    %c0_172 = arith.constant 0 : index
    %195 = vector.load %arg4[%c24, %c0_171, %c0_172] : memref<25x6x16xbf16, #tpu.memory_space<vmem>>, vector<1x6x16xbf16>
    %196 = vector.shape_cast %195 : vector<1x6x16xbf16> to vector<6x16xbf16>
    %cst_173 = arith.constant dense<0.000000e+00> : vector<128x16xf32>
    %197 = tpu.matmul %194, %196, %cst_173 {dimension_numbers = #tpu.dot_dimension_numbers<[1], [0], [0], [1], [0, 0, 1, 1], [], []>} : vector<128x6xbf16>, vector<6x16xbf16>, vector<128x16xf32> -> vector<128x16xf32>
    %198 = arith.addf %191, %197 : vector<128x16xf32>
    %c0_174 = arith.constant 0 : index
    %c0_175 = arith.constant 0 : index
    %199 = vector.load %arg5[%c0_174, %c0_175] : memref<1x16xf32, #tpu.memory_space<vmem>>, vector<1x16xf32>
    %200 = vector.broadcast %199 : vector<1x16xf32> to vector<128x16xf32>
    %201 = arith.addf %198, %200 : vector<128x16xf32>
    %cst_176 = arith.constant 0.000000e+00 : f32
    %202 = vector.broadcast %cst_176 : f32 to vector<128x16xf32>
    %203 = arith.maximumf %201, %202 : vector<128x16xf32>
    %204 = vector.shape_cast %203 : vector<128x16xf32> to vector<4x2x16x16xf32>
    %205 = vector.extract_strided_slice %204 {offsets = [0, 0, 0, 0], sizes = [4, 1, 16, 16], strides = [1, 1, 1, 1]} : vector<4x2x16x16xf32> to vector<4x1x16x16xf32>
    %206 = vector.shape_cast %205 : vector<4x1x16x16xf32> to vector<4x16x16xf32>
    %207 = vector.extract_strided_slice %204 {offsets = [0, 1, 0, 0], sizes = [4, 1, 16, 16], strides = [1, 1, 1, 1]} : vector<4x2x16x16xf32> to vector<4x1x16x16xf32>
    %208 = vector.shape_cast %207 : vector<4x1x16x16xf32> to vector<4x16x16xf32>
    %209 = arith.maximumf %206, %208 : vector<4x16x16xf32>
    %c0_177 = arith.constant 0 : index
    %c0_178 = arith.constant 0 : index
    %c0_179 = arith.constant 0 : index
    %210 = vector.load %arg14[%c0_177, %c0_178, %c0_179] : memref<4x16x16xf32, #tpu.memory_space<vmem>>, vector<4x16x16xf32>
    tpu.vector_store %arg14[%c0_177, %c0_178, %c0_179], %209 {strides = array<i32>} : memref<4x16x16xf32, #tpu.memory_space<vmem>>, vector<4x16x16xf32>,
    %cst_180 = arith.constant 0.000000e+00 : f32
    %211 = vector.broadcast %cst_180 : f32 to vector<2x120xf32>
    %c0_181 = arith.constant 0 : index
    %c0_182 = arith.constant 0 : index
    %c0_183 = arith.constant 0 : index
    %212 = vector.load %arg14[%c0_181, %c0_182, %c0_183] : memref<4x16x16xf32, #tpu.memory_space<vmem>>, vector<1x4x16xf32>
    %213 = vector.shape_cast %212 : vector<1x4x16xf32> to vector<4x16xf32>
    %214 = vector.extract_strided_slice %213 {offsets = [0, 0], sizes = [2, 16], strides = [1, 1]} : vector<4x16xf32> to vector<2x16xf32>
    %215 = vector.extract_strided_slice %213 {offsets = [2, 0], sizes = [2, 16], strides = [1, 1]} : vector<4x16xf32> to vector<2x16xf32>
    %216 = arith.maximumf %214, %215 : vector<2x16xf32>
    %217 = arith.truncf %216 : vector<2x16xf32> to vector<2x16xbf16>
    %c0_184 = arith.constant 0 : index
    %c0_185 = arith.constant 0 : index
    %c0_186 = arith.constant 0 : index
    %218 = vector.load %arg6[%c0_184, %c0_185, %c0_186] : memref<16x16x120xbf16, #tpu.memory_space<vmem>>, vector<1x16x120xbf16>
    %219 = vector.shape_cast %218 : vector<1x16x120xbf16> to vector<16x120xbf16>
    %cst_187 = arith.constant dense<0.000000e+00> : vector<2x120xf32>
    %220 = tpu.matmul %217, %219, %cst_187 {dimension_numbers = #tpu.dot_dimension_numbers<[1], [0], [0], [1], [0, 0, 1, 1], [], []>} : vector<2x16xbf16>, vector<16x120xbf16>, vector<2x120xf32> -> vector<2x120xf32>
    %221 = arith.addf %211, %220 : vector<2x120xf32>
    %c0_188 = arith.constant 0 : index
    %c4_189 = arith.constant 4 : index
    %c0_190 = arith.constant 0 : index
    %222 = vector.load %arg14[%c0_188, %c4_189, %c0_190] : memref<4x16x16xf32, #tpu.memory_space<vmem>>, vector<1x4x16xf32>
    %223 = vector.shape_cast %222 : vector<1x4x16xf32> to vector<4x16xf32>
    %224 = vector.extract_strided_slice %223 {offsets = [0, 0], sizes = [2, 16], strides = [1, 1]} : vector<4x16xf32> to vector<2x16xf32>
    %225 = vector.extract_strided_slice %223 {offsets = [2, 0], sizes = [2, 16], strides = [1, 1]} : vector<4x16xf32> to vector<2x16xf32>
    %226 = arith.maximumf %224, %225 : vector<2x16xf32>
    %227 = arith.truncf %226 : vector<2x16xf32> to vector<2x16xbf16>
    %c1_191 = arith.constant 1 : index
    %c0_192 = arith.constant 0 : index
    %c0_193 = arith.constant 0 : index
    %228 = vector.load %arg6[%c1_191, %c0_192, %c0_193] : memref<16x16x120xbf16, #tpu.memory_space<vmem>>, vector<1x16x120xbf16>
    %229 = vector.shape_cast %228 : vector<1x16x120xbf16> to vector<16x120xbf16>
    %cst_194 = arith.constant dense<0.000000e+00> : vector<2x120xf32>
    %230 = tpu.matmul %227, %229, %cst_194 {dimension_numbers = #tpu.dot_dimension_numbers<[1], [0], [0], [1], [0, 0, 1, 1], [], []>} : vector<2x16xbf16>, vector<16x120xbf16>, vector<2x120xf32> -> vector<2x120xf32>
    %231 = arith.addf %221, %230 : vector<2x120xf32>
    %c0_195 = arith.constant 0 : index
    %c8_196 = arith.constant 8 : index
    %c0_197 = arith.constant 0 : index
    %232 = vector.load %arg14[%c0_195, %c8_196, %c0_197] : memref<4x16x16xf32, #tpu.memory_space<vmem>>, vector<1x4x16xf32>
    %233 = vector.shape_cast %232 : vector<1x4x16xf32> to vector<4x16xf32>
    %234 = vector.extract_strided_slice %233 {offsets = [0, 0], sizes = [2, 16], strides = [1, 1]} : vector<4x16xf32> to vector<2x16xf32>
    %235 = vector.extract_strided_slice %233 {offsets = [2, 0], sizes = [2, 16], strides = [1, 1]} : vector<4x16xf32> to vector<2x16xf32>
    %236 = arith.maximumf %234, %235 : vector<2x16xf32>
    %237 = arith.truncf %236 : vector<2x16xf32> to vector<2x16xbf16>
    %c2_198 = arith.constant 2 : index
    %c0_199 = arith.constant 0 : index
    %c0_200 = arith.constant 0 : index
    %238 = vector.load %arg6[%c2_198, %c0_199, %c0_200] : memref<16x16x120xbf16, #tpu.memory_space<vmem>>, vector<1x16x120xbf16>
    %239 = vector.shape_cast %238 : vector<1x16x120xbf16> to vector<16x120xbf16>
    %cst_201 = arith.constant dense<0.000000e+00> : vector<2x120xf32>
    %240 = tpu.matmul %237, %239, %cst_201 {dimension_numbers = #tpu.dot_dimension_numbers<[1], [0], [0], [1], [0, 0, 1, 1], [], []>} : vector<2x16xbf16>, vector<16x120xbf16>, vector<2x120xf32> -> vector<2x120xf32>
    %241 = arith.addf %231, %240 : vector<2x120xf32>
    %c0_202 = arith.constant 0 : index
    %c12_203 = arith.constant 12 : index
    %c0_204 = arith.constant 0 : index
    %242 = vector.load %arg14[%c0_202, %c12_203, %c0_204] : memref<4x16x16xf32, #tpu.memory_space<vmem>>, vector<1x4x16xf32>
    %243 = vector.shape_cast %242 : vector<1x4x16xf32> to vector<4x16xf32>
    %244 = vector.extract_strided_slice %243 {offsets = [0, 0], sizes = [2, 16], strides = [1, 1]} : vector<4x16xf32> to vector<2x16xf32>
    %245 = vector.extract_strided_slice %243 {offsets = [2, 0], sizes = [2, 16], strides = [1, 1]} : vector<4x16xf32> to vector<2x16xf32>
    %246 = arith.maximumf %244, %245 : vector<2x16xf32>
    %247 = arith.truncf %246 : vector<2x16xf32> to vector<2x16xbf16>
    %c3_205 = arith.constant 3 : index
    %c0_206 = arith.constant 0 : index
    %c0_207 = arith.constant 0 : index
    %248 = vector.load %arg6[%c3_205, %c0_206, %c0_207] : memref<16x16x120xbf16, #tpu.memory_space<vmem>>, vector<1x16x120xbf16>
    %249 = vector.shape_cast %248 : vector<1x16x120xbf16> to vector<16x120xbf16>
    %cst_208 = arith.constant dense<0.000000e+00> : vector<2x120xf32>
    %250 = tpu.matmul %247, %249, %cst_208 {dimension_numbers = #tpu.dot_dimension_numbers<[1], [0], [0], [1], [0, 0, 1, 1], [], []>} : vector<2x16xbf16>, vector<16x120xbf16>, vector<2x120xf32> -> vector<2x120xf32>
    %251 = arith.addf %241, %250 : vector<2x120xf32>
    %c1_209 = arith.constant 1 : index
    %c0_210 = arith.constant 0 : index
    %c0_211 = arith.constant 0 : index
    %252 = vector.load %arg14[%c1_209, %c0_210, %c0_211] : memref<4x16x16xf32, #tpu.memory_space<vmem>>, vector<1x4x16xf32>
    %253 = vector.shape_cast %252 : vector<1x4x16xf32> to vector<4x16xf32>
    %254 = vector.extract_strided_slice %253 {offsets = [0, 0], sizes = [2, 16], strides = [1, 1]} : vector<4x16xf32> to vector<2x16xf32>
    %255 = vector.extract_strided_slice %253 {offsets = [2, 0], sizes = [2, 16], strides = [1, 1]} : vector<4x16xf32> to vector<2x16xf32>
    %256 = arith.maximumf %254, %255 : vector<2x16xf32>
    %257 = arith.truncf %256 : vector<2x16xf32> to vector<2x16xbf16>
    %c4_212 = arith.constant 4 : index
    %c0_213 = arith.constant 0 : index
    %c0_214 = arith.constant 0 : index
    %258 = vector.load %arg6[%c4_212, %c0_213, %c0_214] : memref<16x16x120xbf16, #tpu.memory_space<vmem>>, vector<1x16x120xbf16>
    %259 = vector.shape_cast %258 : vector<1x16x120xbf16> to vector<16x120xbf16>
    %cst_215 = arith.constant dense<0.000000e+00> : vector<2x120xf32>
    %260 = tpu.matmul %257, %259, %cst_215 {dimension_numbers = #tpu.dot_dimension_numbers<[1], [0], [0], [1], [0, 0, 1, 1], [], []>} : vector<2x16xbf16>, vector<16x120xbf16>, vector<2x120xf32> -> vector<2x120xf32>
    %261 = arith.addf %251, %260 : vector<2x120xf32>
    %c1_216 = arith.constant 1 : index
    %c4_217 = arith.constant 4 : index
    %c0_218 = arith.constant 0 : index
    %262 = vector.load %arg14[%c1_216, %c4_217, %c0_218] : memref<4x16x16xf32, #tpu.memory_space<vmem>>, vector<1x4x16xf32>
    %263 = vector.shape_cast %262 : vector<1x4x16xf32> to vector<4x16xf32>
    %264 = vector.extract_strided_slice %263 {offsets = [0, 0], sizes = [2, 16], strides = [1, 1]} : vector<4x16xf32> to vector<2x16xf32>
    %265 = vector.extract_strided_slice %263 {offsets = [2, 0], sizes = [2, 16], strides = [1, 1]} : vector<4x16xf32> to vector<2x16xf32>
    %266 = arith.maximumf %264, %265 : vector<2x16xf32>
    %267 = arith.truncf %266 : vector<2x16xf32> to vector<2x16xbf16>
    %c5_219 = arith.constant 5 : index
    %c0_220 = arith.constant 0 : index
    %c0_221 = arith.constant 0 : index
    %268 = vector.load %arg6[%c5_219, %c0_220, %c0_221] : memref<16x16x120xbf16, #tpu.memory_space<vmem>>, vector<1x16x120xbf16>
    %269 = vector.shape_cast %268 : vector<1x16x120xbf16> to vector<16x120xbf16>
    %cst_222 = arith.constant dense<0.000000e+00> : vector<2x120xf32>
    %270 = tpu.matmul %267, %269, %cst_222 {dimension_numbers = #tpu.dot_dimension_numbers<[1], [0], [0], [1], [0, 0, 1, 1], [], []>} : vector<2x16xbf16>, vector<16x120xbf16>, vector<2x120xf32> -> vector<2x120xf32>
    %271 = arith.addf %261, %270 : vector<2x120xf32>
    %c1_223 = arith.constant 1 : index
    %c8_224 = arith.constant 8 : index
    %c0_225 = arith.constant 0 : index
    %272 = vector.load %arg14[%c1_223, %c8_224, %c0_225] : memref<4x16x16xf32, #tpu.memory_space<vmem>>, vector<1x4x16xf32>
    %273 = vector.shape_cast %272 : vector<1x4x16xf32> to vector<4x16xf32>
    %274 = vector.extract_strided_slice %273 {offsets = [0, 0], sizes = [2, 16], strides = [1, 1]} : vector<4x16xf32> to vector<2x16xf32>
    %275 = vector.extract_strided_slice %273 {offsets = [2, 0], sizes = [2, 16], strides = [1, 1]} : vector<4x16xf32> to vector<2x16xf32>
    %276 = arith.maximumf %274, %275 : vector<2x16xf32>
    %277 = arith.truncf %276 : vector<2x16xf32> to vector<2x16xbf16>
    %c6_226 = arith.constant 6 : index
    %c0_227 = arith.constant 0 : index
    %c0_228 = arith.constant 0 : index
    %278 = vector.load %arg6[%c6_226, %c0_227, %c0_228] : memref<16x16x120xbf16, #tpu.memory_space<vmem>>, vector<1x16x120xbf16>
    %279 = vector.shape_cast %278 : vector<1x16x120xbf16> to vector<16x120xbf16>
    %cst_229 = arith.constant dense<0.000000e+00> : vector<2x120xf32>
    %280 = tpu.matmul %277, %279, %cst_229 {dimension_numbers = #tpu.dot_dimension_numbers<[1], [0], [0], [1], [0, 0, 1, 1], [], []>} : vector<2x16xbf16>, vector<16x120xbf16>, vector<2x120xf32> -> vector<2x120xf32>
    %281 = arith.addf %271, %280 : vector<2x120xf32>
    %c1_230 = arith.constant 1 : index
    %c12_231 = arith.constant 12 : index
    %c0_232 = arith.constant 0 : index
    %282 = vector.load %arg14[%c1_230, %c12_231, %c0_232] : memref<4x16x16xf32, #tpu.memory_space<vmem>>, vector<1x4x16xf32>
    %283 = vector.shape_cast %282 : vector<1x4x16xf32> to vector<4x16xf32>
    %284 = vector.extract_strided_slice %283 {offsets = [0, 0], sizes = [2, 16], strides = [1, 1]} : vector<4x16xf32> to vector<2x16xf32>
    %285 = vector.extract_strided_slice %283 {offsets = [2, 0], sizes = [2, 16], strides = [1, 1]} : vector<4x16xf32> to vector<2x16xf32>
    %286 = arith.maximumf %284, %285 : vector<2x16xf32>
    %287 = arith.truncf %286 : vector<2x16xf32> to vector<2x16xbf16>
    %c7_233 = arith.constant 7 : index
    %c0_234 = arith.constant 0 : index
    %c0_235 = arith.constant 0 : index
    %288 = vector.load %arg6[%c7_233, %c0_234, %c0_235] : memref<16x16x120xbf16, #tpu.memory_space<vmem>>, vector<1x16x120xbf16>
    %289 = vector.shape_cast %288 : vector<1x16x120xbf16> to vector<16x120xbf16>
    %cst_236 = arith.constant dense<0.000000e+00> : vector<2x120xf32>
    %290 = tpu.matmul %287, %289, %cst_236 {dimension_numbers = #tpu.dot_dimension_numbers<[1], [0], [0], [1], [0, 0, 1, 1], [], []>} : vector<2x16xbf16>, vector<16x120xbf16>, vector<2x120xf32> -> vector<2x120xf32>
    %291 = arith.addf %281, %290 : vector<2x120xf32>
    %c2_237 = arith.constant 2 : index
    %c0_238 = arith.constant 0 : index
    %c0_239 = arith.constant 0 : index
    %292 = vector.load %arg14[%c2_237, %c0_238, %c0_239] : memref<4x16x16xf32, #tpu.memory_space<vmem>>, vector<1x4x16xf32>
    %293 = vector.shape_cast %292 : vector<1x4x16xf32> to vector<4x16xf32>
    %294 = vector.extract_strided_slice %293 {offsets = [0, 0], sizes = [2, 16], strides = [1, 1]} : vector<4x16xf32> to vector<2x16xf32>
    %295 = vector.extract_strided_slice %293 {offsets = [2, 0], sizes = [2, 16], strides = [1, 1]} : vector<4x16xf32> to vector<2x16xf32>
    %296 = arith.maximumf %294, %295 : vector<2x16xf32>
    %297 = arith.truncf %296 : vector<2x16xf32> to vector<2x16xbf16>
    %c8_240 = arith.constant 8 : index
    %c0_241 = arith.constant 0 : index
    %c0_242 = arith.constant 0 : index
    %298 = vector.load %arg6[%c8_240, %c0_241, %c0_242] : memref<16x16x120xbf16, #tpu.memory_space<vmem>>, vector<1x16x120xbf16>
    %299 = vector.shape_cast %298 : vector<1x16x120xbf16> to vector<16x120xbf16>
    %cst_243 = arith.constant dense<0.000000e+00> : vector<2x120xf32>
    %300 = tpu.matmul %297, %299, %cst_243 {dimension_numbers = #tpu.dot_dimension_numbers<[1], [0], [0], [1], [0, 0, 1, 1], [], []>} : vector<2x16xbf16>, vector<16x120xbf16>, vector<2x120xf32> -> vector<2x120xf32>
    %301 = arith.addf %291, %300 : vector<2x120xf32>
    %c2_244 = arith.constant 2 : index
    %c4_245 = arith.constant 4 : index
    %c0_246 = arith.constant 0 : index
    %302 = vector.load %arg14[%c2_244, %c4_245, %c0_246] : memref<4x16x16xf32, #tpu.memory_space<vmem>>, vector<1x4x16xf32>
    %303 = vector.shape_cast %302 : vector<1x4x16xf32> to vector<4x16xf32>
    %304 = vector.extract_strided_slice %303 {offsets = [0, 0], sizes = [2, 16], strides = [1, 1]} : vector<4x16xf32> to vector<2x16xf32>
    %305 = vector.extract_strided_slice %303 {offsets = [2, 0], sizes = [2, 16], strides = [1, 1]} : vector<4x16xf32> to vector<2x16xf32>
    %306 = arith.maximumf %304, %305 : vector<2x16xf32>
    %307 = arith.truncf %306 : vector<2x16xf32> to vector<2x16xbf16>
    %c9_247 = arith.constant 9 : index
    %c0_248 = arith.constant 0 : index
    %c0_249 = arith.constant 0 : index
    %308 = vector.load %arg6[%c9_247, %c0_248, %c0_249] : memref<16x16x120xbf16, #tpu.memory_space<vmem>>, vector<1x16x120xbf16>
    %309 = vector.shape_cast %308 : vector<1x16x120xbf16> to vector<16x120xbf16>
    %cst_250 = arith.constant dense<0.000000e+00> : vector<2x120xf32>
    %310 = tpu.matmul %307, %309, %cst_250 {dimension_numbers = #tpu.dot_dimension_numbers<[1], [0], [0], [1], [0, 0, 1, 1], [], []>} : vector<2x16xbf16>, vector<16x120xbf16>, vector<2x120xf32> -> vector<2x120xf32>
    %311 = arith.addf %301, %310 : vector<2x120xf32>
    %c2_251 = arith.constant 2 : index
    %c8_252 = arith.constant 8 : index
    %c0_253 = arith.constant 0 : index
    %312 = vector.load %arg14[%c2_251, %c8_252, %c0_253] : memref<4x16x16xf32, #tpu.memory_space<vmem>>, vector<1x4x16xf32>
    %313 = vector.shape_cast %312 : vector<1x4x16xf32> to vector<4x16xf32>
    %314 = vector.extract_strided_slice %313 {offsets = [0, 0], sizes = [2, 16], strides = [1, 1]} : vector<4x16xf32> to vector<2x16xf32>
    %315 = vector.extract_strided_slice %313 {offsets = [2, 0], sizes = [2, 16], strides = [1, 1]} : vector<4x16xf32> to vector<2x16xf32>
    %316 = arith.maximumf %314, %315 : vector<2x16xf32>
    %317 = arith.truncf %316 : vector<2x16xf32> to vector<2x16xbf16>
    %c10_254 = arith.constant 10 : index
    %c0_255 = arith.constant 0 : index
    %c0_256 = arith.constant 0 : index
    %318 = vector.load %arg6[%c10_254, %c0_255, %c0_256] : memref<16x16x120xbf16, #tpu.memory_space<vmem>>, vector<1x16x120xbf16>
    %319 = vector.shape_cast %318 : vector<1x16x120xbf16> to vector<16x120xbf16>
    %cst_257 = arith.constant dense<0.000000e+00> : vector<2x120xf32>
    %320 = tpu.matmul %317, %319, %cst_257 {dimension_numbers = #tpu.dot_dimension_numbers<[1], [0], [0], [1], [0, 0, 1, 1], [], []>} : vector<2x16xbf16>, vector<16x120xbf16>, vector<2x120xf32> -> vector<2x120xf32>
    %321 = arith.addf %311, %320 : vector<2x120xf32>
    %c2_258 = arith.constant 2 : index
    %c12_259 = arith.constant 12 : index
    %c0_260 = arith.constant 0 : index
    %322 = vector.load %arg14[%c2_258, %c12_259, %c0_260] : memref<4x16x16xf32, #tpu.memory_space<vmem>>, vector<1x4x16xf32>
    %323 = vector.shape_cast %322 : vector<1x4x16xf32> to vector<4x16xf32>
    %324 = vector.extract_strided_slice %323 {offsets = [0, 0], sizes = [2, 16], strides = [1, 1]} : vector<4x16xf32> to vector<2x16xf32>
    %325 = vector.extract_strided_slice %323 {offsets = [2, 0], sizes = [2, 16], strides = [1, 1]} : vector<4x16xf32> to vector<2x16xf32>
    %326 = arith.maximumf %324, %325 : vector<2x16xf32>
    %327 = arith.truncf %326 : vector<2x16xf32> to vector<2x16xbf16>
    %c11_261 = arith.constant 11 : index
    %c0_262 = arith.constant 0 : index
    %c0_263 = arith.constant 0 : index
    %328 = vector.load %arg6[%c11_261, %c0_262, %c0_263] : memref<16x16x120xbf16, #tpu.memory_space<vmem>>, vector<1x16x120xbf16>
    %329 = vector.shape_cast %328 : vector<1x16x120xbf16> to vector<16x120xbf16>
    %cst_264 = arith.constant dense<0.000000e+00> : vector<2x120xf32>
    %330 = tpu.matmul %327, %329, %cst_264 {dimension_numbers = #tpu.dot_dimension_numbers<[1], [0], [0], [1], [0, 0, 1, 1], [], []>} : vector<2x16xbf16>, vector<16x120xbf16>, vector<2x120xf32> -> vector<2x120xf32>
    %331 = arith.addf %321, %330 : vector<2x120xf32>
    %c3_265 = arith.constant 3 : index
    %c0_266 = arith.constant 0 : index
    %c0_267 = arith.constant 0 : index
    %332 = vector.load %arg14[%c3_265, %c0_266, %c0_267] : memref<4x16x16xf32, #tpu.memory_space<vmem>>, vector<1x4x16xf32>
    %333 = vector.shape_cast %332 : vector<1x4x16xf32> to vector<4x16xf32>
    %334 = vector.extract_strided_slice %333 {offsets = [0, 0], sizes = [2, 16], strides = [1, 1]} : vector<4x16xf32> to vector<2x16xf32>
    %335 = vector.extract_strided_slice %333 {offsets = [2, 0], sizes = [2, 16], strides = [1, 1]} : vector<4x16xf32> to vector<2x16xf32>
    %336 = arith.maximumf %334, %335 : vector<2x16xf32>
    %337 = arith.truncf %336 : vector<2x16xf32> to vector<2x16xbf16>
    %c12_268 = arith.constant 12 : index
    %c0_269 = arith.constant 0 : index
    %c0_270 = arith.constant 0 : index
    %338 = vector.load %arg6[%c12_268, %c0_269, %c0_270] : memref<16x16x120xbf16, #tpu.memory_space<vmem>>, vector<1x16x120xbf16>
    %339 = vector.shape_cast %338 : vector<1x16x120xbf16> to vector<16x120xbf16>
    %cst_271 = arith.constant dense<0.000000e+00> : vector<2x120xf32>
    %340 = tpu.matmul %337, %339, %cst_271 {dimension_numbers = #tpu.dot_dimension_numbers<[1], [0], [0], [1], [0, 0, 1, 1], [], []>} : vector<2x16xbf16>, vector<16x120xbf16>, vector<2x120xf32> -> vector<2x120xf32>
    %341 = arith.addf %331, %340 : vector<2x120xf32>
    %c3_272 = arith.constant 3 : index
    %c4_273 = arith.constant 4 : index
    %c0_274 = arith.constant 0 : index
    %342 = vector.load %arg14[%c3_272, %c4_273, %c0_274] : memref<4x16x16xf32, #tpu.memory_space<vmem>>, vector<1x4x16xf32>
    %343 = vector.shape_cast %342 : vector<1x4x16xf32> to vector<4x16xf32>
    %344 = vector.extract_strided_slice %343 {offsets = [0, 0], sizes = [2, 16], strides = [1, 1]} : vector<4x16xf32> to vector<2x16xf32>
    %345 = vector.extract_strided_slice %343 {offsets = [2, 0], sizes = [2, 16], strides = [1, 1]} : vector<4x16xf32> to vector<2x16xf32>
    %346 = arith.maximumf %344, %345 : vector<2x16xf32>
    %347 = arith.truncf %346 : vector<2x16xf32> to vector<2x16xbf16>
    %c13_275 = arith.constant 13 : index
    %c0_276 = arith.constant 0 : index
    %c0_277 = arith.constant 0 : index
    %348 = vector.load %arg6[%c13_275, %c0_276, %c0_277] : memref<16x16x120xbf16, #tpu.memory_space<vmem>>, vector<1x16x120xbf16>
    %349 = vector.shape_cast %348 : vector<1x16x120xbf16> to vector<16x120xbf16>
    %cst_278 = arith.constant dense<0.000000e+00> : vector<2x120xf32>
    %350 = tpu.matmul %347, %349, %cst_278 {dimension_numbers = #tpu.dot_dimension_numbers<[1], [0], [0], [1], [0, 0, 1, 1], [], []>} : vector<2x16xbf16>, vector<16x120xbf16>, vector<2x120xf32> -> vector<2x120xf32>
    %351 = arith.addf %341, %350 : vector<2x120xf32>
    %c3_279 = arith.constant 3 : index
    %c8_280 = arith.constant 8 : index
    %c0_281 = arith.constant 0 : index
    %352 = vector.load %arg14[%c3_279, %c8_280, %c0_281] : memref<4x16x16xf32, #tpu.memory_space<vmem>>, vector<1x4x16xf32>
    %353 = vector.shape_cast %352 : vector<1x4x16xf32> to vector<4x16xf32>
    %354 = vector.extract_strided_slice %353 {offsets = [0, 0], sizes = [2, 16], strides = [1, 1]} : vector<4x16xf32> to vector<2x16xf32>
    %355 = vector.extract_strided_slice %353 {offsets = [2, 0], sizes = [2, 16], strides = [1, 1]} : vector<4x16xf32> to vector<2x16xf32>
    %356 = arith.maximumf %354, %355 : vector<2x16xf32>
    %357 = arith.truncf %356 : vector<2x16xf32> to vector<2x16xbf16>
    %c14_282 = arith.constant 14 : index
    %c0_283 = arith.constant 0 : index
    %c0_284 = arith.constant 0 : index
    %358 = vector.load %arg6[%c14_282, %c0_283, %c0_284] : memref<16x16x120xbf16, #tpu.memory_space<vmem>>, vector<1x16x120xbf16>
    %359 = vector.shape_cast %358 : vector<1x16x120xbf16> to vector<16x120xbf16>
    %cst_285 = arith.constant dense<0.000000e+00> : vector<2x120xf32>
    %360 = tpu.matmul %357, %359, %cst_285 {dimension_numbers = #tpu.dot_dimension_numbers<[1], [0], [0], [1], [0, 0, 1, 1], [], []>} : vector<2x16xbf16>, vector<16x120xbf16>, vector<2x120xf32> -> vector<2x120xf32>
    %361 = arith.addf %351, %360 : vector<2x120xf32>
    %c3_286 = arith.constant 3 : index
    %c12_287 = arith.constant 12 : index
    %c0_288 = arith.constant 0 : index
    %362 = vector.load %arg14[%c3_286, %c12_287, %c0_288] : memref<4x16x16xf32, #tpu.memory_space<vmem>>, vector<1x4x16xf32>
    %363 = vector.shape_cast %362 : vector<1x4x16xf32> to vector<4x16xf32>
    %364 = vector.extract_strided_slice %363 {offsets = [0, 0], sizes = [2, 16], strides = [1, 1]} : vector<4x16xf32> to vector<2x16xf32>
    %365 = vector.extract_strided_slice %363 {offsets = [2, 0], sizes = [2, 16], strides = [1, 1]} : vector<4x16xf32> to vector<2x16xf32>
    %366 = arith.maximumf %364, %365 : vector<2x16xf32>
    %367 = arith.truncf %366 : vector<2x16xf32> to vector<2x16xbf16>
    %c15_289 = arith.constant 15 : index
    %c0_290 = arith.constant 0 : index
    %c0_291 = arith.constant 0 : index
    %368 = vector.load %arg6[%c15_289, %c0_290, %c0_291] : memref<16x16x120xbf16, #tpu.memory_space<vmem>>, vector<1x16x120xbf16>
    %369 = vector.shape_cast %368 : vector<1x16x120xbf16> to vector<16x120xbf16>
    %cst_292 = arith.constant dense<0.000000e+00> : vector<2x120xf32>
    %370 = tpu.matmul %367, %369, %cst_292 {dimension_numbers = #tpu.dot_dimension_numbers<[1], [0], [0], [1], [0, 0, 1, 1], [], []>} : vector<2x16xbf16>, vector<16x120xbf16>, vector<2x120xf32> -> vector<2x120xf32>
    %371 = arith.addf %361, %370 : vector<2x120xf32>
    %c0_293 = arith.constant 0 : index
    %c0_294 = arith.constant 0 : index
    %372 = vector.load %arg7[%c0_293, %c0_294] : memref<1x120xf32, #tpu.memory_space<vmem>>, vector<1x120xf32>
    %373 = vector.broadcast %372 : vector<1x120xf32> to vector<2x120xf32>
    %374 = arith.addf %371, %373 : vector<2x120xf32>
    %cst_295 = arith.constant 0.000000e+00 : f32
    %375 = vector.broadcast %cst_295 : f32 to vector<2x120xf32>
    %376 = arith.maximumf %374, %375 : vector<2x120xf32>
    %377 = arith.truncf %376 : vector<2x120xf32> to vector<2x120xbf16>
    %c0_296 = arith.constant 0 : index
    %c0_297 = arith.constant 0 : index
    %378 = vector.load %arg8[%c0_296, %c0_297] : memref<120x84xbf16, #tpu.memory_space<vmem>>, vector<120x84xbf16>
    %cst_298 = arith.constant dense<0.000000e+00> : vector<2x84xf32>
    %379 = tpu.matmul %377, %378, %cst_298 {dimension_numbers = #tpu.dot_dimension_numbers<[1], [0], [0], [1], [0, 0, 1, 1], [], []>} : vector<2x120xbf16>, vector<120x84xbf16>, vector<2x84xf32> -> vector<2x84xf32>
    %c0_299 = arith.constant 0 : index
    %c0_300 = arith.constant 0 : index
    %380 = vector.load %arg9[%c0_299, %c0_300] : memref<1x84xf32, #tpu.memory_space<vmem>>, vector<1x84xf32>
    %381 = vector.broadcast %380 : vector<1x84xf32> to vector<2x84xf32>
    %382 = arith.addf %379, %381 : vector<2x84xf32>
    %cst_301 = arith.constant 0.000000e+00 : f32
    %383 = vector.broadcast %cst_301 : f32 to vector<2x84xf32>
    %384 = arith.maximumf %382, %383 : vector<2x84xf32>
    %385 = arith.truncf %384 : vector<2x84xf32> to vector<2x84xbf16>
    %c0_302 = arith.constant 0 : index
    %c0_303 = arith.constant 0 : index
    %386 = vector.load %arg10[%c0_302, %c0_303] : memref<84x10xbf16, #tpu.memory_space<vmem>>, vector<84x10xbf16>
    %cst_304 = arith.constant dense<0.000000e+00> : vector<2x10xf32>
    %387 = tpu.matmul %385, %386, %cst_304 {dimension_numbers = #tpu.dot_dimension_numbers<[1], [0], [0], [1], [0, 0, 1, 1], [], []>} : vector<2x84xbf16>, vector<84x10xbf16>, vector<2x10xf32> -> vector<2x10xf32>
    %c0_305 = arith.constant 0 : index
    %c0_306 = arith.constant 0 : index
    %388 = vector.load %arg11[%c0_305, %c0_306] : memref<1x10xf32, #tpu.memory_space<vmem>>, vector<1x10xf32>
    %389 = vector.broadcast %388 : vector<1x10xf32> to vector<2x10xf32>
    %390 = arith.addf %387, %389 : vector<2x10xf32>
    %cst_307 = arith.constant 0.000000e+00 : f32
    %391 = vector.broadcast %cst_307 : f32 to vector<2x10xf32>
    %392 = arith.maximumf %390, %391 : vector<2x10xf32>
    %c0_308 = arith.constant 0 : index
    %c0_309 = arith.constant 0 : index
    %393 = vector.load %arg12[%c0_308, %c0_309] : memref<2x10xf32, #tpu.memory_space<vmem>>, vector<2x10xf32>
    tpu.vector_store %arg12[%c0_308, %c0_309], %392 {strides = array<i32>} : memref<2x10xf32, #tpu.memory_space<vmem>>, vector<2x10xf32>,
    return
  }
  func.func @transform_0(%arg0: i32) -> (i32, i32, i32) {
    %c0_i32 = arith.constant 0 : i32
    %c0_i32_0 = arith.constant 0 : i32
    %c0_i32_1 = arith.constant 0 : i32
    %c0_i32_2 = arith.constant 0 : i32
    return %c0_i32, %c0_i32_0, %c0_i32_1 : i32, i32, i32
  }
  func.func @transform_1(%arg0: i32) -> (i32, i32) {
    %c0_i32 = arith.constant 0 : i32
    %c0_i32_0 = arith.constant 0 : i32
    %c0_i32_1 = arith.constant 0 : i32
    return %c0_i32, %c0_i32_0 : i32, i32
  }
  func.func @transform_2(%arg0: i32) -> (i32, i32) {
    %c0_i32 = arith.constant 0 : i32
    %c0_i32_0 = arith.constant 0 : i32
    %c0_i32_1 = arith.constant 0 : i32
    return %c0_i32, %c0_i32_0 : i32, i32
  }
  func.func @transform_3(%arg0: i32) -> (i32, i32, i32) {
    %c0_i32 = arith.constant 0 : i32
    %c0_i32_0 = arith.constant 0 : i32
    %c0_i32_1 = arith.constant 0 : i32
    %c0_i32_2 = arith.constant 0 : i32
    return %c0_i32, %c0_i32_0, %c0_i32_1 : i32, i32, i32
  }
  func.func @transform_4(%arg0: i32) -> (i32, i32) {
    %c0_i32 = arith.constant 0 : i32
    %c0_i32_0 = arith.constant 0 : i32
    %c0_i32_1 = arith.constant 0 : i32
    return %c0_i32, %c0_i32_0 : i32, i32
  }
  func.func @transform_5(%arg0: i32) -> (i32, i32, i32) {
    %c0_i32 = arith.constant 0 : i32
    %c0_i32_0 = arith.constant 0 : i32
    %c0_i32_1 = arith.constant 0 : i32
    %c0_i32_2 = arith.constant 0 : i32
    return %c0_i32, %c0_i32_0, %c0_i32_1 : i32, i32, i32
  }
  func.func @transform_6(%arg0: i32) -> (i32, i32) {
    %c0_i32 = arith.constant 0 : i32
    %c0_i32_0 = arith.constant 0 : i32
    %c0_i32_1 = arith.constant 0 : i32
    return %c0_i32, %c0_i32_0 : i32, i32
  }
  func.func @transform_7(%arg0: i32) -> (i32, i32) {
    %c0_i32 = arith.constant 0 : i32
    %c0_i32_0 = arith.constant 0 : i32
    %c0_i32_1 = arith.constant 0 : i32
    return %c0_i32, %c0_i32_0 : i32, i32
  }
  func.func @transform_8(%arg0: i32) -> (i32, i32) {
    %c0_i32 = arith.constant 0 : i32
    %c0_i32_0 = arith.constant 0 : i32
    %c0_i32_1 = arith.constant 0 : i32
    return %c0_i32, %c0_i32_0 : i32, i32
  }
  func.func @transform_9(%arg0: i32) -> (i32, i32) {
    %c0_i32 = arith.constant 0 : i32
    %c0_i32_0 = arith.constant 0 : i32
    %c0_i32_1 = arith.constant 0 : i32
    return %c0_i32, %c0_i32_0 : i32, i32
  }
  func.func @transform_10(%arg0: i32) -> (i32, i32) {
    %c0_i32 = arith.constant 0 : i32
    %c0_i32_0 = arith.constant 0 : i32
    %c0_i32_1 = arith.constant 0 : i32
    return %c0_i32, %c0_i32_0 : i32, i32
  }
  func.func @transform_11(%arg0: i32) -> (i32, i32) {
    %c0_i32 = arith.constant 0 : i32
    %c0_i32_0 = arith.constant 0 : i32
    %c0_i32_1 = arith.constant 0 : i32
    return %c0_i32, %c0_i32_0 : i32, i32
  }
}

</mosaic_0001>

<llo_original>
// kernel: lenet_forward.1
$region0: #{lenet_forward.1}
  #allocation0 [shape = 'u32[]', space=smem, size = 0x4, offset = 0x4, fixed_abs, tag = 'smem constant byte address 0x4 - core index']
  #allocation1 [shape = 'u32[144,128]{1,0:T(1,128)}', space=vmem, size = 0x12000, scoped, tag = 'internal scratch']
  #allocation2 [shape = 'f32[12,24,6]{2,1,0:T(8,128)}', space=vmem, size = 0x24000, scoped, tag = 'scratch operand']
  #allocation3 [shape = 'f32[4,16,16]{2,1,0:T(8,128)}', space=vmem, size = 0x8000, scoped, tag = 'scratch operand']
  %s0 = inlined_call_operand.vmem [shape: bf16[4,288,25], index: 0, kind: input, shape index: {}]
  %s1 = inlined_call_operand.vmem [shape: bf16[25,6], index: 1, kind: input, shape index: {}]
  %s2 = inlined_call_operand.vmem [shape: f32[1,6], index: 2, kind: input, shape index: {}]
  %s3 = inlined_call_operand.vmem [shape: bf16[25,6,16], index: 3, kind: input, shape index: {}]
  %s4 = inlined_call_operand.vmem [shape: f32[1,16], index: 4, kind: input, shape index: {}]
  %s5 = inlined_call_operand.vmem [shape: bf16[16,16,120], index: 5, kind: input, shape index: {}]
  %s6 = inlined_call_operand.vmem [shape: f32[1,120], index: 6, kind: input, shape index: {}]
  %s7 = inlined_call_operand.vmem [shape: bf16[120,84], index: 7, kind: input, shape index: {}]
  %s8 = inlined_call_operand.vmem [shape: f32[1,84], index: 8, kind: input, shape index: {}]
  %s9 = inlined_call_operand.vmem [shape: bf16[84,10], index: 9, kind: input, shape index: {}]
  %s10 = inlined_call_operand.vmem [shape: f32[1,10], index: 10, kind: input, shape index: {}]
  %s11 = inlined_call_operand.hbm [shape: f32[2,10], index: 11, kind: output, shape index: {}]
  %s12 = sld [smem:[#allocation0]]
  $region54: #{lenet_forward.1} parent=0
    _
  %s14 = ssub.s32 1, %s12
  %s15 = scalar_select 0, %s14, %s12
  $region1: #{lenet_forward.1} parent=0
    #allocation4 [shape = 'u8[1024]{0}', space=vmem, size = 0x400, scoped, tag = 'output window, operand 0, single buffered']
    #allocation5 [shape = 's32[1]{0}', space=sflag, size = 0x4, scoped, tag = 'scoped memory for lenet_forward.1']
    %16 = vsyncpa [#allocation5], 0
    // Predicated region
    $region2: #{lenet_forward.1} parent=1 // pred_check
      _
    $region3: #{lenet_forward.1} parent=1 // pred_check_branch
      %18 = sbr.rel (0) target = $region5
    $region4: #{lenet_forward.1} parent=1 // pred_region
      _
    $region5: #{lenet_forward.1} parent=1 // pred_fallthru
      _
    // Predicated region
    $region6: #{lenet_forward.1} parent=1 // pred_check
      _
    $region7: #{lenet_forward.1} parent=1 // pred_check_branch
      %20 = sbr.rel (0) target = $region9
    $region8: #{lenet_forward.1} parent=1 // pred_region
      _
    $region9: #{lenet_forward.1} parent=1 // pred_fallthru
      _
    // Predicated region
    $region10: #{lenet_forward.1} parent=1 // pred_check
      _
    $region11: #{lenet_forward.1} parent=1 // pred_check_branch
      %22 = sbr.rel (0) target = $region13
    $region12: #{lenet_forward.1} parent=1 // pred_region
      _
    $region13: #{lenet_forward.1} parent=1 // pred_fallthru
      _
    // Predicated region
    $region14: #{lenet_forward.1} parent=1 // pred_check
      _
    $region15: #{lenet_forward.1} parent=1 // pred_check_branch
      %24 = sbr.rel (0) target = $region17
    $region16: #{lenet_forward.1} parent=1 // pred_region
      _
    $region17: #{lenet_forward.1} parent=1 // pred_fallthru
      _
    // Predicated region
    $region18: #{lenet_forward.1} parent=1 // pred_check
      _
    $region19: #{lenet_forward.1} parent=1 // pred_check_branch
      %26 = sbr.rel (0) target = $region21
    $region20: #{lenet_forward.1} parent=1 // pred_region
      _
    $region21: #{lenet_forward.1} parent=1 // pred_fallthru
      _
    // Predicated region
    $region22: #{lenet_forward.1} parent=1 // pred_check
      _
    $region23: #{lenet_forward.1} parent=1 // pred_check_branch
      %28 = sbr.rel (0) target = $region25
    $region24: #{lenet_forward.1} parent=1 // pred_region
      _
    $region25: #{lenet_forward.1} parent=1 // pred_fallthru
      _
    // Predicated region
    $region26: #{lenet_forward.1} parent=1 // pred_check
      _
    $region27: #{lenet_forward.1} parent=1 // pred_check_branch
      %30 = sbr.rel (0) target = $region29
    $region28: #{lenet_forward.1} parent=1 // pred_region
      _
    $region29: #{lenet_forward.1} parent=1 // pred_fallthru
      _
    // Predicated region
    $region30: #{lenet_forward.1} parent=1 // pred_check
      _
    $region31: #{lenet_forward.1} parent=1 // pred_check_branch
      %32 = sbr.rel (0) target = $region33
    $region32: #{lenet_forward.1} parent=1 // pred_region
      _
    $region33: #{lenet_forward.1} parent=1 // pred_fallthru
      _
    // Predicated region
    $region34: #{lenet_forward.1} parent=1 // pred_check
      _
    $region35: #{lenet_forward.1} parent=1 // pred_check_branch
      %34 = sbr.rel (0) target = $region37
    $region36: #{lenet_forward.1} parent=1 // pred_region
      _
    $region37: #{lenet_forward.1} parent=1 // pred_fallthru
      _
    // Predicated region
    $region38: #{lenet_forward.1} parent=1 // pred_check
      _
    $region39: #{lenet_forward.1} parent=1 // pred_check_branch
      %36 = sbr.rel (0) target = $region41
    $region40: #{lenet_forward.1} parent=1 // pred_region
      _
    $region41: #{lenet_forward.1} parent=1 // pred_fallthru
      _
    // Predicated region
    $region42: #{lenet_forward.1} parent=1 // pred_check
      _
    $region43: #{lenet_forward.1} parent=1 // pred_check_branch
      %38 = sbr.rel (0) target = $region45
    $region44: #{lenet_forward.1} parent=1 // pred_region
      _
    $region45: #{lenet_forward.1} parent=1 // pred_fallthru
      _
    %v40 = vld [vmem:[%s1] sm:$0xf]
    %v41 = vld [vmem:[%s1 + $0x4] sm:$0xf]
    %v42 = vld [vmem:[%s1 + $0x8] sm:$0xf]
    %v43 = vld [vmem:[%s1 + $0xc] sm:$0x1]
    %v44 = vld [vmem:[%s0] sm:$0xf]
    %v45 = vld [vmem:[%s0 + $0x4] sm:$0xf]
    %v46 = vld [vmem:[%s0 + $0x8] sm:$0xf]
    %v47 = vld [vmem:[%s0 + $0xc] sm:$0xf]
    %v48 = vld [vmem:[%s0 + $0x10] sm:$0xf]
    %v49 = vld [vmem:[%s0 + $0x14] sm:$0xf]
    %v50 = vld [vmem:[%s0 + $0x18] sm:$0xf]
    %v51 = vld [vmem:[%s0 + $0x1c] sm:$0xf]
    %v52 = vld [vmem:[%s0 + $0x20] sm:$0xf]
    %v53 = vld [vmem:[%s0 + $0x24] sm:$0xf]
    %v54 = vld [vmem:[%s0 + $0x28] sm:$0xf]
    %v55 = vld [vmem:[%s0 + $0x2c] sm:$0xf]
    %v56 = vld [vmem:[%s0 + $0x30] sm:$0xf]
    %v57 = vld [vmem:[%s0 + $0x34] sm:$0xf]
    %v58 = vld [vmem:[%s0 + $0x38] sm:$0xf]
    %v59 = vld [vmem:[%s0 + $0x3c] sm:$0xf]
    %v60 = vld [vmem:[%s0 + $0x40] sm:$0xf]
    %v61 = vld [vmem:[%s0 + $0x44] sm:$0xf]
    %v62 = vld [vmem:[%s0 + $0x48] sm:$0xf]
    %v63 = vld [vmem:[%s0 + $0x4c] sm:$0xf]
    %v64 = vld [vmem:[%s0 + $0x50] sm:$0xf]
    %v65 = vld [vmem:[%s0 + $0x54] sm:$0xf]
    %v66 = vld [vmem:[%s0 + $0x58] sm:$0xf]
    %v67 = vld [vmem:[%s0 + $0x5c] sm:$0xf]
    %v68 = vld [vmem:[%s0 + $0x60] sm:$0xf]
    %v69 = vld [vmem:[%s0 + $0x64] sm:$0xf]
    %v70 = vld [vmem:[%s0 + $0x68] sm:$0xf]
    %v71 = vld [vmem:[%s0 + $0x6c] sm:$0xf]
    %v72 = vld [vmem:[%s0 + $0x70] sm:$0xf]
    %v73 = vld [vmem:[%s0 + $0x74] sm:$0xf]
    %v74 = vld [vmem:[%s0 + $0x78] sm:$0xf]
    %v75 = vld [vmem:[%s0 + $0x7c] sm:$0xf]
    %v76 = vld [vmem:[%s0 + $0x80] sm:$0xf]
    %v77 = vld [vmem:[%s0 + $0x84] sm:$0xf]
    %v78 = vld [vmem:[%s0 + $0x88] sm:$0xf]
    %v79 = vld [vmem:[%s0 + $0x8c] sm:$0xf]
    %v116 = vunpack.c.l.b16 %v44
    %v117 = vunpack.c.l.b16 %v45
    %v118 = vunpack.c.l.b16 %v46
    %v119 = vunpack.c.l.b16 %v47
    %v120 = vunpack.c.l.b16 %v48
    %v121 = vunpack.c.l.b16 %v49
    %v122 = vunpack.c.l.b16 %v50
    %v123 = vunpack.c.l.b16 %v51
    %v124 = vunpack.c.l.b16 %v52
    %v125 = vunpack.c.l.b16 %v53
    %v126 = vunpack.c.l.b16 %v54
    %v127 = vunpack.c.l.b16 %v55
    %v128 = vunpack.c.l.b16 %v56
    %v129 = vunpack.c.l.b16 %v57
    %v130 = vunpack.c.l.b16 %v58
    %v131 = vunpack.c.l.b16 %v59
    %v132 = vunpack.c.l.b16 %v60
    %v133 = vunpack.c.l.b16 %v61
    %v134 = vunpack.c.l.b16 %v62
    %v135 = vunpack.c.l.b16 %v63
    %v136 = vunpack.c.l.b16 %v64
    %v137 = vunpack.c.l.b16 %v65
    %v138 = vunpack.c.l.b16 %v66
    %v139 = vunpack.c.l.b16 %v67
    %v140 = vunpack.c.l.b16 %v68
    %v141 = vunpack.c.l.b16 %v69
    %v142 = vunpack.c.l.b16 %v70
    %v143 = vunpack.c.l.b16 %v71
    %v144 = vunpack.c.l.b16 %v72
    %v145 = vunpack.c.l.b16 %v73
    %v146 = vunpack.c.l.b16 %v74
    %v147 = vunpack.c.l.b16 %v75
    %v148 = vunpack.c.l.b16 %v76
    %v149 = vunpack.c.l.b16 %v77
    %v150 = vunpack.c.l.b16 %v78
    %v151 = vunpack.c.l.b16 %v79
    %v152 = vpack.c.b16 %v117, %v116
    %v153 = vpack.c.b16 %v119, %v118
    %v154 = vpack.c.b16 %v121, %v120
    %v155 = vpack.c.b16 %v123, %v122
    %v156 = vpack.c.b16 %v125, %v124
    %v157 = vpack.c.b16 %v127, %v126
    %v158 = vpack.c.b16 %v129, %v128
    %v159 = vpack.c.b16 %v131, %v130
    %v160 = vpack.c.b16 %v133, %v132
    %v161 = vpack.c.b16 %v135, %v134
    %v162 = vpack.c.b16 %v137, %v136
    %v163 = vpack.c.b16 %v139, %v138
    %v164 = vpack.c.b16 %v141, %v140
    %v165 = vpack.c.b16 %v143, %v142
    %v166 = vpack.c.b16 %v145, %v144
    %v167 = vpack.c.b16 %v147, %v146
    %v168 = vpack.c.b16 %v149, %v148
    %v169 = vpack.c.b16 %v151, %v150
    %v174 = vunpack.c.l.b16 %v40
    %v175 = vunpack.c.l.b16 %v41
    %v176 = vunpack.c.l.b16 %v42
    %v177 = vunpack.c.l.b16 %v43
    %v178 = vpack.c.b16 %v175, %v174
    %v179 = vpack.c.b16 %v177, %v176
    %vm181 = vcmask 203776
    %v183 = vsel %vm181, %v152, 0
    %v186 = vsel %vm181, %v153, 0
    %v189 = vsel %vm181, %v154, 0
    %v192 = vsel %vm181, %v155, 0
    %v195 = vsel %vm181, %v156, 0
    %v198 = vsel %vm181, %v157, 0
    %v201 = vsel %vm181, %v158, 0
    %v204 = vsel %vm181, %v159, 0
    %v207 = vsel %vm181, %v160, 0
    %v210 = vsel %vm181, %v161, 0
    %v213 = vsel %vm181, %v162, 0
    %v216 = vsel %vm181, %v163, 0
    %v219 = vsel %vm181, %v164, 0
    %v222 = vsel %vm181, %v165, 0
    %v225 = vsel %vm181, %v166, 0
    %v228 = vsel %vm181, %v167, 0
    %v231 = vsel %vm181, %v168, 0
    %v234 = vsel %vm181, %v169, 0
    %vm236 = vcmask 1043456
    %vm237 = vcmask 1044480
    %v238 = vsel %vm236, 4294967295, 65535
    %v239 = vsel %vm237, %v238, 0
    %v241 = vand.u32 %v179, %v239
    %243 = vmatprep.subr.bf16.mxu0 0
    %244 = vmatpush1.bf16.msra.mxu0 0
    %245 = vmatprep.subr.bf16.mxu0 0
    %246 = vmatpush1.bf16.msra.mxu0 0
    %247 = vmatprep.subr.bf16.mxu0 0
    %248 = vmatpush1.bf16.msra.mxu0 0
    %249 = vmatprep.subr.bf16.mxu0 0
    %250 = vmatpush1.bf16.msra.mxu0 0
    %251 = vmatprep.subr.bf16.mxu0 0
    %252 = vmatpush1.bf16.msra.mxu0 0
    %253 = vmatprep.subr.bf16.mxu0 0
    %254 = vmatpush1.bf16.msra.mxu0 0
    %255 = vmatprep.subr.bf16.mxu0 0
    %256 = vmatpush1.bf16.msra.mxu0 %v241
    %257 = vmatprep.subr.bf16.mxu0 0
    %258 = vmatpush1.bf16.msra.mxu0 %v178
    %259 = vmatprep.subr.bf16.mxu0 0
    %260 = vmatpush2.bf16.msra.mxu0 0
    %261 = vmatprep.subr.bf16.mxu0 0
    %262 = vmatpush2.bf16.msra.mxu0 0
    %263 = vmatprep.subr.bf16.mxu0 0
    %264 = vmatpush2.bf16.msra.mxu0 0
    %265 = vmatprep.subr.bf16.mxu0 0
    %266 = vmatpush2.bf16.msra.mxu0 0
    %267 = vmatprep.subr.bf16.mxu0 0
    %268 = vmatpush2.bf16.msra.mxu0 0
    %269 = vmatprep.subr.bf16.mxu0 0
    %270 = vmatpush2.bf16.msra.mxu0 0
    %271 = vmatprep.subr.bf16.mxu0 0
    %272 = vmatpush2.bf16.msra.mxu0 0
    %273 = vmatprep.subr.bf16.mxu0 0
    %274 = vmatpush2.bf16.msra.mxu0 0
    %275 = vmatprep.mubr.bf16.mxu0 0
    %276 = vmatmul.mubr.bf16.gmra.mxu0 %v183
    %v277 = vpop.f32.mrf.mxu0
    %v278 = vadd.f32 0.0, %v277
    %v279 = vpop.f32.mrf.mxu0
    %v280 = vpop.f32.mrf.mxu0
    %v281 = vadd.f32 0.0, %v280
    %v282 = vpop.f32.mrf.mxu0
    %283 = vmatprep.mubr.bf16.mxu0 0
    %284 = vmatmul.mubr.bf16.gmra.mxu0 %v186
    %v285 = vpop.f32.mrf.mxu0
    %v286 = vadd.f32 0.0, %v285
    %v287 = vpop.f32.mrf.mxu0
    %v288 = vpop.f32.mrf.mxu0
    %v289 = vadd.f32 0.0, %v288
    %v290 = vpop.f32.mrf.mxu0
    %291 = vmatprep.mubr.bf16.mxu0 0
    %292 = vmatmul.mubr.bf16.gmra.mxu0 %v189
    %v293 = vpop.f32.mrf.mxu0
    %v294 = vadd.f32 0.0, %v293
    %v295 = vpop.f32.mrf.mxu0
    %v296 = vpop.f32.mrf.mxu0
    %v297 = vadd.f32 0.0, %v296
    %v298 = vpop.f32.mrf.mxu0
    %299 = vmatprep.mubr.bf16.mxu0 0
    %300 = vmatmul.mubr.bf16.gmra.mxu0 %v192
    %v301 = vpop.f32.mrf.mxu0
    %v302 = vadd.f32 0.0, %v301
    %v303 = vpop.f32.mrf.mxu0
    %v304 = vpop.f32.mrf.mxu0
    %v305 = vadd.f32 0.0, %v304
    %v306 = vpop.f32.mrf.mxu0
    %307 = vmatprep.mubr.bf16.mxu0 0
    %308 = vmatmul.mubr.bf16.gmra.mxu0 %v195
    %v309 = vpop.f32.mrf.mxu0
    %v310 = vadd.f32 0.0, %v309
    %v311 = vpop.f32.mrf.mxu0
    %v312 = vpop.f32.mrf.mxu0
    %v313 = vadd.f32 0.0, %v312
    %v314 = vpop.f32.mrf.mxu0
    %315 = vmatprep.mubr.bf16.mxu0 0
    %316 = vmatmul.mubr.bf16.gmra.mxu0 %v198
    %v317 = vpop.f32.mrf.mxu0
    %v318 = vadd.f32 0.0, %v317
    %v319 = vpop.f32.mrf.mxu0
    %v320 = vpop.f32.mrf.mxu0
    %v321 = vadd.f32 0.0, %v320
    %v322 = vpop.f32.mrf.mxu0
    %323 = vmatprep.mubr.bf16.mxu0 0
    %324 = vmatmul.mubr.bf16.gmra.mxu0 %v201
    %v325 = vpop.f32.mrf.mxu0
    %v326 = vadd.f32 0.0, %v325
    %v327 = vpop.f32.mrf.mxu0
    %v328 = vpop.f32.mrf.mxu0
    %v329 = vadd.f32 0.0, %v328
    %v330 = vpop.f32.mrf.mxu0
    %331 = vmatprep.mubr.bf16.mxu0 0
    %332 = vmatmul.mubr.bf16.gmra.mxu0 %v204
    %v333 = vpop.f32.mrf.mxu0
    %v334 = vadd.f32 0.0, %v333
    %v335 = vpop.f32.mrf.mxu0
    %v336 = vpop.f32.mrf.mxu0
    %v337 = vadd.f32 0.0, %v336
    %v338 = vpop.f32.mrf.mxu0
    %339 = vmatprep.mubr.bf16.mxu0 0
    %340 = vmatmul.mubr.bf16.gmra.mxu0 %v207
    %v341 = vpop.f32.mrf.mxu0
    %v342 = vadd.f32 0.0, %v341
    %v343 = vpop.f32.mrf.mxu0
    %v344 = vpop.f32.mrf.mxu0
    %v345 = vadd.f32 0.0, %v344
    %v346 = vpop.f32.mrf.mxu0
    %347 = vmatprep.mubr.bf16.mxu0 0
    %348 = vmatmul.mubr.bf16.gmra.mxu0 %v210
    %v349 = vpop.f32.mrf.mxu0
    %v350 = vadd.f32 0.0, %v349
    %v351 = vpop.f32.mrf.mxu0
    %v352 = vpop.f32.mrf.mxu0
    %v353 = vadd.f32 0.0, %v352
    %v354 = vpop.f32.mrf.mxu0
    %355 = vmatprep.mubr.bf16.mxu0 0
    %356 = vmatmul.mubr.bf16.gmra.mxu0 %v213
    %v357 = vpop.f32.mrf.mxu0
    %v358 = vadd.f32 0.0, %v357
    %v359 = vpop.f32.mrf.mxu0
    %v360 = vpop.f32.mrf.mxu0
    %v361 = vadd.f32 0.0, %v360
    %v362 = vpop.f32.mrf.mxu0
    %363 = vmatprep.mubr.bf16.mxu0 0
    %364 = vmatmul.mubr.bf16.gmra.mxu0 %v216
    %v365 = vpop.f32.mrf.mxu0
    %v366 = vadd.f32 0.0, %v365
    %v367 = vpop.f32.mrf.mxu0
    %v368 = vpop.f32.mrf.mxu0
    %v369 = vadd.f32 0.0, %v368
    %v370 = vpop.f32.mrf.mxu0
    %371 = vmatprep.mubr.bf16.mxu0 0
    %372 = vmatmul.mubr.bf16.gmra.mxu0 %v219
    %v373 = vpop.f32.mrf.mxu0
    %v374 = vadd.f32 0.0, %v373
    %v375 = vpop.f32.mrf.mxu0
    %v376 = vpop.f32.mrf.mxu0
    %v377 = vadd.f32 0.0, %v376
    %v378 = vpop.f32.mrf.mxu0
    %379 = vmatprep.mubr.bf16.mxu0 0
    %380 = vmatmul.mubr.bf16.gmra.mxu0 %v222
    %v381 = vpop.f32.mrf.mxu0
    %v382 = vadd.f32 0.0, %v381
    %v383 = vpop.f32.mrf.mxu0
    %v384 = vpop.f32.mrf.mxu0
    %v385 = vadd.f32 0.0, %v384
    %v386 = vpop.f32.mrf.mxu0
    %387 = vmatprep.mubr.bf16.mxu0 0
    %388 = vmatmul.mubr.bf16.gmra.mxu0 %v225
    %v389 = vpop.f32.mrf.mxu0
    %v390 = vadd.f32 0.0, %v389
    %v391 = vpop.f32.mrf.mxu0
    %v392 = vpop.f32.mrf.mxu0
    %v393 = vadd.f32 0.0, %v392
    %v394 = vpop.f32.mrf.mxu0
    %395 = vmatprep.mubr.bf16.mxu0 0
    %396 = vmatmul.mubr.bf16.gmra.mxu0 %v228
    %v397 = vpop.f32.mrf.mxu0
    %v398 = vadd.f32 0.0, %v397
    %v399 = vpop.f32.mrf.mxu0
    %v400 = vpop.f32.mrf.mxu0
    %v401 = vadd.f32 0.0, %v400
    %v402 = vpop.f32.mrf.mxu0
    %403 = vmatprep.mubr.bf16.mxu0 0
    %404 = vmatmul.mubr.bf16.gmra.mxu0 %v231
    %v405 = vpop.f32.mrf.mxu0
    %v406 = vadd.f32 0.0, %v405
    %v407 = vpop.f32.mrf.mxu0
    %v408 = vpop.f32.mrf.mxu0
    %v409 = vadd.f32 0.0, %v408
    %v410 = vpop.f32.mrf.mxu0
    %411 = vmatprep.mubr.bf16.mxu0 0
    %412 = vmatmul.mubr.bf16.gmra.mxu0 %v234
    %v413 = vpop.f32.mrf.mxu0
    %v414 = vadd.f32 0.0, %v413
    %v415 = vpop.f32.mrf.mxu0
    %v416 = vpop.f32.mrf.mxu0
    %v417 = vadd.f32 0.0, %v416
    %v418 = vpop.f32.mrf.mxu0
    %419 = vdwg.mxu0
    %s420 = scalar_lea.vmem %s0, 144
    %v421 = vld [vmem:[%s420] sm:$0xf]
    %v422 = vld [vmem:[%s420 + $0x4] sm:$0xf]
    %v423 = vld [vmem:[%s420 + $0x8] sm:$0xf]
    %v424 = vld [vmem:[%s420 + $0xc] sm:$0xf]
    %v425 = vld [vmem:[%s420 + $0x10] sm:$0xf]
    %v426 = vld [vmem:[%s420 + $0x14] sm:$0xf]
    %v427 = vld [vmem:[%s420 + $0x18] sm:$0xf]
    %v428 = vld [vmem:[%s420 + $0x1c] sm:$0xf]
    %v429 = vld [vmem:[%s420 + $0x20] sm:$0xf]
    %v430 = vld [vmem:[%s420 + $0x24] sm:$0xf]
    %v431 = vld [vmem:[%s420 + $0x28] sm:$0xf]
    %v432 = vld [vmem:[%s420 + $0x2c] sm:$0xf]
    %v433 = vld [vmem:[%s420 + $0x30] sm:$0xf]
    %v434 = vld [vmem:[%s420 + $0x34] sm:$0xf]
    %v435 = vld [vmem:[%s420 + $0x38] sm:$0xf]
    %v436 = vld [vmem:[%s420 + $0x3c] sm:$0xf]
    %v437 = vld [vmem:[%s420 + $0x40] sm:$0xf]
    %v438 = vld [vmem:[%s420 + $0x44] sm:$0xf]
    %v439 = vld [vmem:[%s420 + $0x48] sm:$0xf]
    %v440 = vld [vmem:[%s420 + $0x4c] sm:$0xf]
    %v441 = vld [vmem:[%s420 + $0x50] sm:$0xf]
    %v442 = vld [vmem:[%s420 + $0x54] sm:$0xf]
    %v443 = vld [vmem:[%s420 + $0x58] sm:$0xf]
    %v444 = vld [vmem:[%s420 + $0x5c] sm:$0xf]
    %v445 = vld [vmem:[%s420 + $0x60] sm:$0xf]
    %v446 = vld [vmem:[%s420 + $0x64] sm:$0xf]
    %v447 = vld [vmem:[%s420 + $0x68] sm:$0xf]
    %v448 = vld [vmem:[%s420 + $0x6c] sm:$0xf]
    %v449 = vld [vmem:[%s420 + $0x70] sm:$0xf]
    %v450 = vld [vmem:[%s420 + $0x74] sm:$0xf]
    %v451 = vld [vmem:[%s420 + $0x78] sm:$0xf]
    %v452 = vld [vmem:[%s420 + $0x7c] sm:$0xf]
    %v453 = vld [vmem:[%s420 + $0x80] sm:$0xf]
    %v454 = vld [vmem:[%s420 + $0x84] sm:$0xf]
    %v455 = vld [vmem:[%s420 + $0x88] sm:$0xf]
    %v456 = vld [vmem:[%s420 + $0x8c] sm:$0xf]
    %v493 = vunpack.c.l.b16 %v421
    %v494 = vunpack.c.l.b16 %v422
    %v495 = vunpack.c.l.b16 %v423
    %v496 = vunpack.c.l.b16 %v424
    %v497 = vunpack.c.l.b16 %v425
    %v498 = vunpack.c.l.b16 %v426
    %v499 = vunpack.c.l.b16 %v427
    %v500 = vunpack.c.l.b16 %v428
    %v501 = vunpack.c.l.b16 %v429
    %v502 = vunpack.c.l.b16 %v430
    %v503 = vunpack.c.l.b16 %v431
    %v504 = vunpack.c.l.b16 %v432
    %v505 = vunpack.c.l.b16 %v433
    %v506 = vunpack.c.l.b16 %v434
    %v507 = vunpack.c.l.b16 %v435
    %v508 = vunpack.c.l.b16 %v436
    %v509 = vunpack.c.l.b16 %v437
    %v510 = vunpack.c.l.b16 %v438
    %v511 = vunpack.c.l.b16 %v439
    %v512 = vunpack.c.l.b16 %v440
    %v513 = vunpack.c.l.b16 %v441
    %v514 = vunpack.c.l.b16 %v442
    %v515 = vunpack.c.l.b16 %v443
    %v516 = vunpack.c.l.b16 %v444
    %v517 = vunpack.c.l.b16 %v445
    %v518 = vunpack.c.l.b16 %v446
    %v519 = vunpack.c.l.b16 %v447
    %v520 = vunpack.c.l.b16 %v448
    %v521 = vunpack.c.l.b16 %v449
    %v522 = vunpack.c.l.b16 %v450
    %v523 = vunpack.c.l.b16 %v451
    %v524 = vunpack.c.l.b16 %v452
    %v525 = vunpack.c.l.b16 %v453
    %v526 = vunpack.c.l.b16 %v454
    %v527 = vunpack.c.l.b16 %v455
    %v528 = vunpack.c.l.b16 %v456
    %v529 = vpack.c.b16 %v494, %v493
    %v530 = vpack.c.b16 %v496, %v495
    %v531 = vpack.c.b16 %v498, %v497
    %v532 = vpack.c.b16 %v500, %v499
    %v533 = vpack.c.b16 %v502, %v501
    %v534 = vpack.c.b16 %v504, %v503
    %v535 = vpack.c.b16 %v506, %v505
    %v536 = vpack.c.b16 %v508, %v507
    %v537 = vpack.c.b16 %v510, %v509
    %v538 = vpack.c.b16 %v512, %v511
    %v539 = vpack.c.b16 %v514, %v513
    %v540 = vpack.c.b16 %v516, %v515
    %v541 = vpack.c.b16 %v518, %v517
    %v542 = vpack.c.b16 %v520, %v519
    %v543 = vpack.c.b16 %v522, %v521
    %v544 = vpack.c.b16 %v524, %v523
    %v545 = vpack.c.b16 %v526, %v525
    %v546 = vpack.c.b16 %v528, %v527
    %v548 = vsel %vm181, %v529, 0
    %v551 = vsel %vm181, %v530, 0
    %v554 = vsel %vm181, %v531, 0
    %v557 = vsel %vm181, %v532, 0
    %v560 = vsel %vm181, %v533, 0
    %v563 = vsel %vm181, %v534, 0
    %v566 = vsel %vm181, %v535, 0
    %v569 = vsel %vm181, %v536, 0
    %v572 = vsel %vm181, %v537, 0
    %v575 = vsel %vm181, %v538, 0
    %v578 = vsel %vm181, %v539, 0
    %v581 = vsel %vm181, %v540, 0
    %v584 = vsel %vm181, %v541, 0
    %v587 = vsel %vm181, %v542, 0
    %v590 = vsel %vm181, %v543, 0
    %v593 = vsel %vm181, %v544, 0
    %v596 = vsel %vm181, %v545, 0
    %v599 = vsel %vm181, %v546, 0
    %601 = vmatprep.subr.bf16.mxu0 0
    %602 = vmatpush1.bf16.msra.mxu0 0
    %603 = vmatprep.subr.bf16.mxu0 0
    %604 = vmatpush1.bf16.msra.mxu0 0
    %605 = vmatprep.subr.bf16.mxu0 0
    %606 = vmatpush1.bf16.msra.mxu0 0
    %607 = vmatprep.subr.bf16.mxu0 0
    %608 = vmatpush1.bf16.msra.mxu0 0
    %609 = vmatprep.subr.bf16.mxu0 0
    %610 = vmatpush1.bf16.msra.mxu0 0
    %611 = vmatprep.subr.bf16.mxu0 0
    %612 = vmatpush1.bf16.msra.mxu0 0
    %613 = vmatprep.subr.bf16.mxu0 0
    %614 = vmatpush1.bf16.msra.mxu0 %v241
    %615 = vmatprep.subr.bf16.mxu0 0
    %616 = vmatpush1.bf16.msra.mxu0 %v178
    %617 = vmatprep.subr.bf16.mxu0 0
    %618 = vmatpush2.bf16.msra.mxu0 0
    %619 = vmatprep.subr.bf16.mxu0 0
    %620 = vmatpush2.bf16.msra.mxu0 0
    %621 = vmatprep.subr.bf16.mxu0 0
    %622 = vmatpush2.bf16.msra.mxu0 0
    %623 = vmatprep.subr.bf16.mxu0 0
    %624 = vmatpush2.bf16.msra.mxu0 0
    %625 = vmatprep.subr.bf16.mxu0 0
    %626 = vmatpush2.bf16.msra.mxu0 0
    %627 = vmatprep.subr.bf16.mxu0 0
    %628 = vmatpush2.bf16.msra.mxu0 0
    %629 = vmatprep.subr.bf16.mxu0 0
    %630 = vmatpush2.bf16.msra.mxu0 0
    %631 = vmatprep.subr.bf16.mxu0 0
    %632 = vmatpush2.bf16.msra.mxu0 0
    %633 = vmatprep.mubr.bf16.mxu0 0
    %634 = vmatmul.mubr.bf16.gmra.mxu0 %v548
    %v635 = vpop.f32.mrf.mxu0
    %v636 = vadd.f32 0.0, %v635
    %v637 = vpop.f32.mrf.mxu0
    %v638 = vpop.f32.mrf.mxu0
    %v639 = vadd.f32 0.0, %v638
    %v640 = vpop.f32.mrf.mxu0
    %641 = vmatprep.mubr.bf16.mxu0 0
    %642 = vmatmul.mubr.bf16.gmra.mxu0 %v551
    %v643 = vpop.f32.mrf.mxu0
    %v644 = vadd.f32 0.0, %v643
    %v645 = vpop.f32.mrf.mxu0
    %v646 = vpop.f32.mrf.mxu0
    %v647 = vadd.f32 0.0, %v646
    %v648 = vpop.f32.mrf.mxu0
    %649 = vmatprep.mubr.bf16.mxu0 0
    %650 = vmatmul.mubr.bf16.gmra.mxu0 %v554
    %v651 = vpop.f32.mrf.mxu0
    %v652 = vadd.f32 0.0, %v651
    %v653 = vpop.f32.mrf.mxu0
    %v654 = vpop.f32.mrf.mxu0
    %v655 = vadd.f32 0.0, %v654
    %v656 = vpop.f32.mrf.mxu0
    %657 = vmatprep.mubr.bf16.mxu0 0
    %658 = vmatmul.mubr.bf16.gmra.mxu0 %v557
    %v659 = vpop.f32.mrf.mxu0
    %v660 = vadd.f32 0.0, %v659
    %v661 = vpop.f32.mrf.mxu0
    %v662 = vpop.f32.mrf.mxu0
    %v663 = vadd.f32 0.0, %v662
    %v664 = vpop.f32.mrf.mxu0
    %665 = vmatprep.mubr.bf16.mxu0 0
    %666 = vmatmul.mubr.bf16.gmra.mxu0 %v560
    %v667 = vpop.f32.mrf.mxu0
    %v668 = vadd.f32 0.0, %v667
    %v669 = vpop.f32.mrf.mxu0
    %v670 = vpop.f32.mrf.mxu0
    %v671 = vadd.f32 0.0, %v670
    %v672 = vpop.f32.mrf.mxu0
    %673 = vmatprep.mubr.bf16.mxu0 0
    %674 = vmatmul.mubr.bf16.gmra.mxu0 %v563
    %v675 = vpop.f32.mrf.mxu0
    %v676 = vadd.f32 0.0, %v675
    %v677 = vpop.f32.mrf.mxu0
    %v678 = vpop.f32.mrf.mxu0
    %v679 = vadd.f32 0.0, %v678
    %v680 = vpop.f32.mrf.mxu0
    %681 = vmatprep.mubr.bf16.mxu0 0
    %682 = vmatmul.mubr.bf16.gmra.mxu0 %v566
    %v683 = vpop.f32.mrf.mxu0
    %v684 = vadd.f32 0.0, %v683
    %v685 = vpop.f32.mrf.mxu0
    %v686 = vpop.f32.mrf.mxu0
    %v687 = vadd.f32 0.0, %v686
    %v688 = vpop.f32.mrf.mxu0
    %689 = vmatprep.mubr.bf16.mxu0 0
    %690 = vmatmul.mubr.bf16.gmra.mxu0 %v569
    %v691 = vpop.f32.mrf.mxu0
    %v692 = vadd.f32 0.0, %v691
    %v693 = vpop.f32.mrf.mxu0
    %v694 = vpop.f32.mrf.mxu0
    %v695 = vadd.f32 0.0, %v694
    %v696 = vpop.f32.mrf.mxu0
    %697 = vmatprep.mubr.bf16.mxu0 0
    %698 = vmatmul.mubr.bf16.gmra.mxu0 %v572
    %v699 = vpop.f32.mrf.mxu0
    %v700 = vadd.f32 0.0, %v699
    %v701 = vpop.f32.mrf.mxu0
    %v702 = vpop.f32.mrf.mxu0
    %v703 = vadd.f32 0.0, %v702
    %v704 = vpop.f32.mrf.mxu0
    %705 = vmatprep.mubr.bf16.mxu0 0
    %706 = vmatmul.mubr.bf16.gmra.mxu0 %v575
    %v707 = vpop.f32.mrf.mxu0
    %v708 = vadd.f32 0.0, %v707
    %v709 = vpop.f32.mrf.mxu0
    %v710 = vpop.f32.mrf.mxu0
    %v711 = vadd.f32 0.0, %v710
    %v712 = vpop.f32.mrf.mxu0
    %713 = vmatprep.mubr.bf16.mxu0 0
    %714 = vmatmul.mubr.bf16.gmra.mxu0 %v578
    %v715 = vpop.f32.mrf.mxu0
    %v716 = vadd.f32 0.0, %v715
    %v717 = vpop.f32.mrf.mxu0
    %v718 = vpop.f32.mrf.mxu0
    %v719 = vadd.f32 0.0, %v718
    %v720 = vpop.f32.mrf.mxu0
    %721 = vmatprep.mubr.bf16.mxu0 0
    %722 = vmatmul.mubr.bf16.gmra.mxu0 %v581
    %v723 = vpop.f32.mrf.mxu0
    %v724 = vadd.f32 0.0, %v723
    %v725 = vpop.f32.mrf.mxu0
    %v726 = vpop.f32.mrf.mxu0
    %v727 = vadd.f32 0.0, %v726
    %v728 = vpop.f32.mrf.mxu0
    %729 = vmatprep.mubr.bf16.mxu0 0
    %730 = vmatmul.mubr.bf16.gmra.mxu0 %v584
    %v731 = vpop.f32.mrf.mxu0
    %v732 = vadd.f32 0.0, %v731
    %v733 = vpop.f32.mrf.mxu0
    %v734 = vpop.f32.mrf.mxu0
    %v735 = vadd.f32 0.0, %v734
    %v736 = vpop.f32.mrf.mxu0
    %737 = vmatprep.mubr.bf16.mxu0 0
    %738 = vmatmul.mubr.bf16.gmra.mxu0 %v587
    %v739 = vpop.f32.mrf.mxu0
    %v740 = vadd.f32 0.0, %v739
    %v741 = vpop.f32.mrf.mxu0
    %v742 = vpop.f32.mrf.mxu0
    %v743 = vadd.f32 0.0, %v742
    %v744 = vpop.f32.mrf.mxu0
    %745 = vmatprep.mubr.bf16.mxu0 0
    %746 = vmatmul.mubr.bf16.gmra.mxu0 %v590
    %v747 = vpop.f32.mrf.mxu0
    %v748 = vadd.f32 0.0, %v747
    %v749 = vpop.f32.mrf.mxu0
    %v750 = vpop.f32.mrf.mxu0
    %v751 = vadd.f32 0.0, %v750
    %v752 = vpop.f32.mrf.mxu0
    %753 = vmatprep.mubr.bf16.mxu0 0
    %754 = vmatmul.mubr.bf16.gmra.mxu0 %v593
    %v755 = vpop.f32.mrf.mxu0
    %v756 = vadd.f32 0.0, %v755
    %v757 = vpop.f32.mrf.mxu0
    %v758 = vpop.f32.mrf.mxu0
    %v759 = vadd.f32 0.0, %v758
    %v760 = vpop.f32.mrf.mxu0
    %761 = vmatprep.mubr.bf16.mxu0 0
    %762 = vmatmul.mubr.bf16.gmra.mxu0 %v596
    %v763 = vpop.f32.mrf.mxu0
    %v764 = vadd.f32 0.0, %v763
    %v765 = vpop.f32.mrf.mxu0
    %v766 = vpop.f32.mrf.mxu0
    %v767 = vadd.f32 0.0, %v766
    %v768 = vpop.f32.mrf.mxu0
    %769 = vmatprep.mubr.bf16.mxu0 0
    %770 = vmatmul.mubr.bf16.gmra.mxu0 %v599
    %v771 = vpop.f32.mrf.mxu0
    %v772 = vadd.f32 0.0, %v771
    %v773 = vpop.f32.mrf.mxu0
    %v774 = vpop.f32.mrf.mxu0
    %v775 = vadd.f32 0.0, %v774
    %v776 = vpop.f32.mrf.mxu0
    %777 = vdwg.mxu0
    %v778 = vmax.f32 %v278, %v636
    %v779 = vmax.f32 %v281, %v639
    %v780 = vmax.f32 %v286, %v644
    %v781 = vmax.f32 %v289, %v647
    %v782 = vmax.f32 %v294, %v652
    %v783 = vmax.f32 %v297, %v655
    %v784 = vmax.f32 %v302, %v660
    %v785 = vmax.f32 %v305, %v663
    %v786 = vmax.f32 %v310, %v668
    %v787 = vmax.f32 %v313, %v671
    %v788 = vmax.f32 %v318, %v676
    %v789 = vmax.f32 %v321, %v679
    %v790 = vmax.f32 %v326, %v684
    %v791 = vmax.f32 %v329, %v687
    %v792 = vmax.f32 %v334, %v692
    %v793 = vmax.f32 %v337, %v695
    %v794 = vmax.f32 %v342, %v700
    %v795 = vmax.f32 %v345, %v703
    %v796 = vmax.f32 %v350, %v708
    %v797 = vmax.f32 %v353, %v711
    %v798 = vmax.f32 %v358, %v716
    %v799 = vmax.f32 %v361, %v719
    %v800 = vmax.f32 %v366, %v724
    %v801 = vmax.f32 %v369, %v727
    %v802 = vmax.f32 %v374, %v732
    %v803 = vmax.f32 %v377, %v735
    %v804 = vmax.f32 %v382, %v740
    %v805 = vmax.f32 %v385, %v743
    %v806 = vmax.f32 %v390, %v748
    %v807 = vmax.f32 %v393, %v751
    %v808 = vmax.f32 %v398, %v756
    %v809 = vmax.f32 %v401, %v759
    %v810 = vmax.f32 %v406, %v764
    %v811 = vmax.f32 %v409, %v767
    %v812 = vmax.f32 %v414, %v772
    %v813 = vmax.f32 %v417, %v775
    %s814 = scalar_lea.vmem %s0, 288
    %v815 = vld [vmem:[%s814] sm:$0xf]
    %v816 = vld [vmem:[%s814 + $0x4] sm:$0xf]
    %v817 = vld [vmem:[%s814 + $0x8] sm:$0xf]
    %v818 = vld [vmem:[%s814 + $0xc] sm:$0xf]
    %v819 = vld [vmem:[%s814 + $0x10] sm:$0xf]
    %v820 = vld [vmem:[%s814 + $0x14] sm:$0xf]
    %v821 = vld [vmem:[%s814 + $0x18] sm:$0xf]
    %v822 = vld [vmem:[%s814 + $0x1c] sm:$0xf]
    %v823 = vld [vmem:[%s814 + $0x20] sm:$0xf]
    %v824 = vld [vmem:[%s814 + $0x24] sm:$0xf]
    %v825 = vld [vmem:[%s814 + $0x28] sm:$0xf]
    %v826 = vld [vmem:[%s814 + $0x2c] sm:$0xf]
    %v827 = vld [vmem:[%s814 + $0x30] sm:$0xf]
    %v828 = vld [vmem:[%s814 + $0x34] sm:$0xf]
    %v829 = vld [vmem:[%s814 + $0x38] sm:$0xf]
    %v830 = vld [vmem:[%s814 + $0x3c] sm:$0xf]
    %v831 = vld [vmem:[%s814 + $0x40] sm:$0xf]
    %v832 = vld [vmem:[%s814 + $0x44] sm:$0xf]
    %v833 = vld [vmem:[%s814 + $0x48] sm:$0xf]
    %v834 = vld [vmem:[%s814 + $0x4c] sm:$0xf]
    %v835 = vld [vmem:[%s814 + $0x50] sm:$0xf]
    %v836 = vld [vmem:[%s814 + $0x54] sm:$0xf]
    %v837 = vld [vmem:[%s814 + $0x58] sm:$0xf]
    %v838 = vld [vmem:[%s814 + $0x5c] sm:$0xf]
    %v839 = vld [vmem:[%s814 + $0x60] sm:$0xf]
    %v840 = vld [vmem:[%s814 + $0x64] sm:$0xf]
    %v841 = vld [vmem:[%s814 + $0x68] sm:$0xf]
    %v842 = vld [vmem:[%s814 + $0x6c] sm:$0xf]
    %v843 = vld [vmem:[%s814 + $0x70] sm:$0xf]
    %v844 = vld [vmem:[%s814 + $0x74] sm:$0xf]
    %v845 = vld [vmem:[%s814 + $0x78] sm:$0xf]
    %v846 = vld [vmem:[%s814 + $0x7c] sm:$0xf]
    %v847 = vld [vmem:[%s814 + $0x80] sm:$0xf]
    %v848 = vld [vmem:[%s814 + $0x84] sm:$0xf]
    %v849 = vld [vmem:[%s814 + $0x88] sm:$0xf]
    %v850 = vld [vmem:[%s814 + $0x8c] sm:$0xf]
    %v887 = vunpack.c.l.b16 %v815
    %v888 = vunpack.c.l.b16 %v816
    %v889 = vunpack.c.l.b16 %v817
    %v890 = vunpack.c.l.b16 %v818
    %v891 = vunpack.c.l.b16 %v819
    %v892 = vunpack.c.l.b16 %v820
    %v893 = vunpack.c.l.b16 %v821
    %v894 = vunpack.c.l.b16 %v822
    %v895 = vunpack.c.l.b16 %v823
    %v896 = vunpack.c.l.b16 %v824
    %v897 = vunpack.c.l.b16 %v825
    %v898 = vunpack.c.l.b16 %v826
    %v899 = vunpack.c.l.b16 %v827
    %v900 = vunpack.c.l.b16 %v828
    %v901 = vunpack.c.l.b16 %v829
    %v902 = vunpack.c.l.b16 %v830
    %v903 = vunpack.c.l.b16 %v831
    %v904 = vunpack.c.l.b16 %v832
    %v905 = vunpack.c.l.b16 %v833
    %v906 = vunpack.c.l.b16 %v834
    %v907 = vunpack.c.l.b16 %v835
    %v908 = vunpack.c.l.b16 %v836
    %v909 = vunpack.c.l.b16 %v837
    %v910 = vunpack.c.l.b16 %v838
    %v911 = vunpack.c.l.b16 %v839
    %v912 = vunpack.c.l.b16 %v840
    %v913 = vunpack.c.l.b16 %v841
    %v914 = vunpack.c.l.b16 %v842
    %v915 = vunpack.c.l.b16 %v843
    %v916 = vunpack.c.l.b16 %v844
    %v917 = vunpack.c.l.b16 %v845
    %v918 = vunpack.c.l.b16 %v846
    %v919 = vunpack.c.l.b16 %v847
    %v920 = vunpack.c.l.b16 %v848
    %v921 = vunpack.c.l.b16 %v849
    %v922 = vunpack.c.l.b16 %v850
    %v923 = vpack.c.b16 %v888, %v887
    %v924 = vpack.c.b16 %v890, %v889
    %v925 = vpack.c.b16 %v892, %v891
    %v926 = vpack.c.b16 %v894, %v893
    %v927 = vpack.c.b16 %v896, %v895
    %v928 = vpack.c.b16 %v898, %v897
    %v929 = vpack.c.b16 %v900, %v899
    %v930 = vpack.c.b16 %v902, %v901
    %v931 = vpack.c.b16 %v904, %v903
    %v932 = vpack.c.b16 %v906, %v905
    %v933 = vpack.c.b16 %v908, %v907
    %v934 = vpack.c.b16 %v910, %v909
    %v935 = vpack.c.b16 %v912, %v911
    %v936 = vpack.c.b16 %v914, %v913
    %v937 = vpack.c.b16 %v916, %v915
    %v938 = vpack.c.b16 %v918, %v917
    %v939 = vpack.c.b16 %v920, %v919
    %v940 = vpack.c.b16 %v922, %v921
    %v942 = vsel %vm181, %v923, 0
    %v945 = vsel %vm181, %v924, 0
    %v948 = vsel %vm181, %v925, 0
    %v951 = vsel %vm181, %v926, 0
    %v954 = vsel %vm181, %v927, 0
    %v957 = vsel %vm181, %v928, 0
    %v960 = vsel %vm181, %v929, 0
    %v963 = vsel %vm181, %v930, 0
    %v966 = vsel %vm181, %v931, 0
    %v969 = vsel %vm181, %v932, 0
    %v972 = vsel %vm181, %v933, 0
    %v975 = vsel %vm181, %v934, 0
    %v978 = vsel %vm181, %v935, 0
    %v981 = vsel %vm181, %v936, 0
    %v984 = vsel %vm181, %v937, 0
    %v987 = vsel %vm181, %v938, 0
    %v990 = vsel %vm181, %v939, 0
    %v993 = vsel %vm181, %v940, 0
    %995 = vmatprep.subr.bf16.mxu0 0
    %996 = vmatpush1.bf16.msra.mxu0 0
    %997 = vmatprep.subr.bf16.mxu0 0
    %998 = vmatpush1.bf16.msra.mxu0 0
    %999 = vmatprep.subr.bf16.mxu0 0
    %1000 = vmatpush1.bf16.msra.mxu0 0
    %1001 = vmatprep.subr.bf16.mxu0 0
    %1002 = vmatpush1.bf16.msra.mxu0 0
    %1003 = vmatprep.subr.bf16.mxu0 0
    %1004 = vmatpush1.bf16.msra.mxu0 0
    %1005 = vmatprep.subr.bf16.mxu0 0
    %1006 = vmatpush1.bf16.msra.mxu0 0
    %1007 = vmatprep.subr.bf16.mxu0 0
    %1008 = vmatpush1.bf16.msra.mxu0 %v241
    %1009 = vmatprep.subr.bf16.mxu0 0
    %1010 = vmatpush1.bf16.msra.mxu0 %v178
    %1011 = vmatprep.subr.bf16.mxu0 0
    %1012 = vmatpush2.bf16.msra.mxu0 0
    %1013 = vmatprep.subr.bf16.mxu0 0
    %1014 = vmatpush2.bf16.msra.mxu0 0
    %1015 = vmatprep.subr.bf16.mxu0 0
    %1016 = vmatpush2.bf16.msra.mxu0 0
    %1017 = vmatprep.subr.bf16.mxu0 0
    %1018 = vmatpush2.bf16.msra.mxu0 0
    %1019 = vmatprep.subr.bf16.mxu0 0
    %1020 = vmatpush2.bf16.msra.mxu0 0
    %1021 = vmatprep.subr.bf16.mxu0 0
    %1022 = vmatpush2.bf16.msra.mxu0 0
    %1023 = vmatprep.subr.bf16.mxu0 0
    %1024 = vmatpush2.bf16.msra.mxu0 0
    %1025 = vmatprep.subr.bf16.mxu0 0
    %1026 = vmatpush2.bf16.msra.mxu0 0
    %1027 = vmatprep.mubr.bf16.mxu0 0
    %1028 = vmatmul.mubr.bf16.gmra.mxu0 %v942
    %v1029 = vpop.f32.mrf.mxu0
    %v1030 = vadd.f32 0.0, %v1029
    %v1031 = vpop.f32.mrf.mxu0
    %v1032 = vpop.f32.mrf.mxu0
    %v1033 = vadd.f32 0.0, %v1032
    %v1034 = vpop.f32.mrf.mxu0
    %1035 = vmatprep.mubr.bf16.mxu0 0
    %1036 = vmatmul.mubr.bf16.gmra.mxu0 %v945
    %v1037 = vpop.f32.mrf.mxu0
    %v1038 = vadd.f32 0.0, %v1037
    %v1039 = vpop.f32.mrf.mxu0
    %v1040 = vpop.f32.mrf.mxu0
    %v1041 = vadd.f32 0.0, %v1040
    %v1042 = vpop.f32.mrf.mxu0
    %1043 = vmatprep.mubr.bf16.mxu0 0
    %1044 = vmatmul.mubr.bf16.gmra.mxu0 %v948
    %v1045 = vpop.f32.mrf.mxu0
    %v1046 = vadd.f32 0.0, %v1045
    %v1047 = vpop.f32.mrf.mxu0
    %v1048 = vpop.f32.mrf.mxu0
    %v1049 = vadd.f32 0.0, %v1048
    %v1050 = vpop.f32.mrf.mxu0
    %1051 = vmatprep.mubr.bf16.mxu0 0
    %1052 = vmatmul.mubr.bf16.gmra.mxu0 %v951
    %v1053 = vpop.f32.mrf.mxu0
    %v1054 = vadd.f32 0.0, %v1053
    %v1055 = vpop.f32.mrf.mxu0
    %v1056 = vpop.f32.mrf.mxu0
    %v1057 = vadd.f32 0.0, %v1056
    %v1058 = vpop.f32.mrf.mxu0
    %1059 = vmatprep.mubr.bf16.mxu0 0
    %1060 = vmatmul.mubr.bf16.gmra.mxu0 %v954
    %v1061 = vpop.f32.mrf.mxu0
    %v1062 = vadd.f32 0.0, %v1061
    %v1063 = vpop.f32.mrf.mxu0
    %v1064 = vpop.f32.mrf.mxu0
    %v1065 = vadd.f32 0.0, %v1064
    %v1066 = vpop.f32.mrf.mxu0
    %1067 = vmatprep.mubr.bf16.mxu0 0
    %1068 = vmatmul.mubr.bf16.gmra.mxu0 %v957
    %v1069 = vpop.f32.mrf.mxu0
    %v1070 = vadd.f32 0.0, %v1069
    %v1071 = vpop.f32.mrf.mxu0
    %v1072 = vpop.f32.mrf.mxu0
    %v1073 = vadd.f32 0.0, %v1072
    %v1074 = vpop.f32.mrf.mxu0
    %1075 = vmatprep.mubr.bf16.mxu0 0
    %1076 = vmatmul.mubr.bf16.gmra.mxu0 %v960
    %v1077 = vpop.f32.mrf.mxu0
    %v1078 = vadd.f32 0.0, %v1077
    %v1079 = vpop.f32.mrf.mxu0
    %v1080 = vpop.f32.mrf.mxu0
    %v1081 = vadd.f32 0.0, %v1080
    %v1082 = vpop.f32.mrf.mxu0
    %1083 = vmatprep.mubr.bf16.mxu0 0
    %1084 = vmatmul.mubr.bf16.gmra.mxu0 %v963
    %v1085 = vpop.f32.mrf.mxu0
    %v1086 = vadd.f32 0.0, %v1085
    %v1087 = vpop.f32.mrf.mxu0
    %v1088 = vpop.f32.mrf.mxu0
    %v1089 = vadd.f32 0.0, %v1088
    %v1090 = vpop.f32.mrf.mxu0
    %1091 = vmatprep.mubr.bf16.mxu0 0
    %1092 = vmatmul.mubr.bf16.gmra.mxu0 %v966
    %v1093 = vpop.f32.mrf.mxu0
    %v1094 = vadd.f32 0.0, %v1093
    %v1095 = vpop.f32.mrf.mxu0
    %v1096 = vpop.f32.mrf.mxu0
    %v1097 = vadd.f32 0.0, %v1096
    %v1098 = vpop.f32.mrf.mxu0
    %1099 = vmatprep.mubr.bf16.mxu0 0
    %1100 = vmatmul.mubr.bf16.gmra.mxu0 %v969
    %v1101 = vpop.f32.mrf.mxu0
    %v1102 = vadd.f32 0.0, %v1101
    %v1103 = vpop.f32.mrf.mxu0
    %v1104 = vpop.f32.mrf.mxu0
    %v1105 = vadd.f32 0.0, %v1104
    %v1106 = vpop.f32.mrf.mxu0
    %1107 = vmatprep.mubr.bf16.mxu0 0
    %1108 = vmatmul.mubr.bf16.gmra.mxu0 %v972
    %v1109 = vpop.f32.mrf.mxu0
    %v1110 = vadd.f32 0.0, %v1109
    %v1111 = vpop.f32.mrf.mxu0
    %v1112 = vpop.f32.mrf.mxu0
    %v1113 = vadd.f32 0.0, %v1112
    %v1114 = vpop.f32.mrf.mxu0
    %1115 = vmatprep.mubr.bf16.mxu0 0
    %1116 = vmatmul.mubr.bf16.gmra.mxu0 %v975
    %v1117 = vpop.f32.mrf.mxu0
    %v1118 = vadd.f32 0.0, %v1117
    %v1119 = vpop.f32.mrf.mxu0
    %v1120 = vpop.f32.mrf.mxu0
    %v1121 = vadd.f32 0.0, %v1120
    %v1122 = vpop.f32.mrf.mxu0
    %1123 = vmatprep.mubr.bf16.mxu0 0
    %1124 = vmatmul.mubr.bf16.gmra.mxu0 %v978
    %v1125 = vpop.f32.mrf.mxu0
    %v1126 = vadd.f32 0.0, %v1125
    %v1127 = vpop.f32.mrf.mxu0
    %v1128 = vpop.f32.mrf.mxu0
    %v1129 = vadd.f32 0.0, %v1128
    %v1130 = vpop.f32.mrf.mxu0
    %1131 = vmatprep.mubr.bf16.mxu0 0
    %1132 = vmatmul.mubr.bf16.gmra.mxu0 %v981
    %v1133 = vpop.f32.mrf.mxu0
    %v1134 = vadd.f32 0.0, %v1133
    %v1135 = vpop.f32.mrf.mxu0
    %v1136 = vpop.f32.mrf.mxu0
    %v1137 = vadd.f32 0.0, %v1136
    %v1138 = vpop.f32.mrf.mxu0
    %1139 = vmatprep.mubr.bf16.mxu0 0
    %1140 = vmatmul.mubr.bf16.gmra.mxu0 %v984
    %v1141 = vpop.f32.mrf.mxu0
    %v1142 = vadd.f32 0.0, %v1141
    %v1143 = vpop.f32.mrf.mxu0
    %v1144 = vpop.f32.mrf.mxu0
    %v1145 = vadd.f32 0.0, %v1144
    %v1146 = vpop.f32.mrf.mxu0
    %1147 = vmatprep.mubr.bf16.mxu0 0
    %1148 = vmatmul.mubr.bf16.gmra.mxu0 %v987
    %v1149 = vpop.f32.mrf.mxu0
    %v1150 = vadd.f32 0.0, %v1149
    %v1151 = vpop.f32.mrf.mxu0
    %v1152 = vpop.f32.mrf.mxu0
    %v1153 = vadd.f32 0.0, %v1152
    %v1154 = vpop.f32.mrf.mxu0
    %1155 = vmatprep.mubr.bf16.mxu0 0
    %1156 = vmatmul.mubr.bf16.gmra.mxu0 %v990
    %v1157 = vpop.f32.mrf.mxu0
    %v1158 = vadd.f32 0.0, %v1157
    %v1159 = vpop.f32.mrf.mxu0
    %v1160 = vpop.f32.mrf.mxu0
    %v1161 = vadd.f32 0.0, %v1160
    %v1162 = vpop.f32.mrf.mxu0
    %1163 = vmatprep.mubr.bf16.mxu0 0
    %1164 = vmatmul.mubr.bf16.gmra.mxu0 %v993
    %v1165 = vpop.f32.mrf.mxu0
    %v1166 = vadd.f32 0.0, %v1165
    %v1167 = vpop.f32.mrf.mxu0
    %v1168 = vpop.f32.mrf.mxu0
    %v1169 = vadd.f32 0.0, %v1168
    %v1170 = vpop.f32.mrf.mxu0
    %1171 = vdwg.mxu0
    %v1172 = vmax.f32 %v778, %v1030
    %v1173 = vmax.f32 %v779, %v1033
    %v1174 = vmax.f32 %v780, %v1038
    %v1175 = vmax.f32 %v781, %v1041
    %v1176 = vmax.f32 %v782, %v1046
    %v1177 = vmax.f32 %v783, %v1049
    %v1178 = vmax.f32 %v784, %v1054
    %v1179 = vmax.f32 %v785, %v1057
    %v1180 = vmax.f32 %v786, %v1062
    %v1181 = vmax.f32 %v787, %v1065
    %v1182 = vmax.f32 %v788, %v1070
    %v1183 = vmax.f32 %v789, %v1073
    %v1184 = vmax.f32 %v790, %v1078
    %v1185 = vmax.f32 %v791, %v1081
    %v1186 = vmax.f32 %v792, %v1086
    %v1187 = vmax.f32 %v793, %v1089
    %v1188 = vmax.f32 %v794, %v1094
    %v1189 = vmax.f32 %v795, %v1097
    %v1190 = vmax.f32 %v796, %v1102
    %v1191 = vmax.f32 %v797, %v1105
    %v1192 = vmax.f32 %v798, %v1110
    %v1193 = vmax.f32 %v799, %v1113
    %v1194 = vmax.f32 %v800, %v1118
    %v1195 = vmax.f32 %v801, %v1121
    %v1196 = vmax.f32 %v802, %v1126
    %v1197 = vmax.f32 %v803, %v1129
    %v1198 = vmax.f32 %v804, %v1134
    %v1199 = vmax.f32 %v805, %v1137
    %v1200 = vmax.f32 %v806, %v1142
    %v1201 = vmax.f32 %v807, %v1145
    %v1202 = vmax.f32 %v808, %v1150
    %v1203 = vmax.f32 %v809, %v1153
    %v1204 = vmax.f32 %v810, %v1158
    %v1205 = vmax.f32 %v811, %v1161
    %v1206 = vmax.f32 %v812, %v1166
    %v1207 = vmax.f32 %v813, %v1169
    %s1208 = scalar_lea.vmem %s0, 432
    %v1209 = vld [vmem:[%s1208] sm:$0xf]
    %v1210 = vld [vmem:[%s1208 + $0x4] sm:$0xf]
    %v1211 = vld [vmem:[%s1208 + $0x8] sm:$0xf]
    %v1212 = vld [vmem:[%s1208 + $0xc] sm:$0xf]
    %v1213 = vld [vmem:[%s1208 + $0x10] sm:$0xf]
    %v1214 = vld [vmem:[%s1208 + $0x14] sm:$0xf]
    %v1215 = vld [vmem:[%s1208 + $0x18] sm:$0xf]
    %v1216 = vld [vmem:[%s1208 + $0x1c] sm:$0xf]
    %v1217 = vld [vmem:[%s1208 + $0x20] sm:$0xf]
    %v1218 = vld [vmem:[%s1208 + $0x24] sm:$0xf]
    %v1219 = vld [vmem:[%s1208 + $0x28] sm:$0xf]
    %v1220 = vld [vmem:[%s1208 + $0x2c] sm:$0xf]
    %v1221 = vld [vmem:[%s1208 + $0x30] sm:$0xf]
    %v1222 = vld [vmem:[%s1208 + $0x34] sm:$0xf]
    %v1223 = vld [vmem:[%s1208 + $0x38] sm:$0xf]
    %v1224 = vld [vmem:[%s1208 + $0x3c] sm:$0xf]
    %v1225 = vld [vmem:[%s1208 + $0x40] sm:$0xf]
    %v1226 = vld [vmem:[%s1208 + $0x44] sm:$0xf]
    %v1227 = vld [vmem:[%s1208 + $0x48] sm:$0xf]
    %v1228 = vld [vmem:[%s1208 + $0x4c] sm:$0xf]
    %v1229 = vld [vmem:[%s1208 + $0x50] sm:$0xf]
    %v1230 = vld [vmem:[%s1208 + $0x54] sm:$0xf]
    %v1231 = vld [vmem:[%s1208 + $0x58] sm:$0xf]
    %v1232 = vld [vmem:[%s1208 + $0x5c] sm:$0xf]
    %v1233 = vld [vmem:[%s1208 + $0x60] sm:$0xf]
    %v1234 = vld [vmem:[%s1208 + $0x64] sm:$0xf]
    %v1235 = vld [vmem:[%s1208 + $0x68] sm:$0xf]
    %v1236 = vld [vmem:[%s1208 + $0x6c] sm:$0xf]
    %v1237 = vld [vmem:[%s1208 + $0x70] sm:$0xf]
    %v1238 = vld [vmem:[%s1208 + $0x74] sm:$0xf]
    %v1239 = vld [vmem:[%s1208 + $0x78] sm:$0xf]
    %v1240 = vld [vmem:[%s1208 + $0x7c] sm:$0xf]
    %v1241 = vld [vmem:[%s1208 + $0x80] sm:$0xf]
    %v1242 = vld [vmem:[%s1208 + $0x84] sm:$0xf]
    %v1243 = vld [vmem:[%s1208 + $0x88] sm:$0xf]
    %v1244 = vld [vmem:[%s1208 + $0x8c] sm:$0xf]
    %v1281 = vunpack.c.l.b16 %v1209
    %v1282 = vunpack.c.l.b16 %v1210
    %v1283 = vunpack.c.l.b16 %v1211
    %v1284 = vunpack.c.l.b16 %v1212
    %v1285 = vunpack.c.l.b16 %v1213
    %v1286 = vunpack.c.l.b16 %v1214
    %v1287 = vunpack.c.l.b16 %v1215
    %v1288 = vunpack.c.l.b16 %v1216
    %v1289 = vunpack.c.l.b16 %v1217
    %v1290 = vunpack.c.l.b16 %v1218
    %v1291 = vunpack.c.l.b16 %v1219
    %v1292 = vunpack.c.l.b16 %v1220
    %v1293 = vunpack.c.l.b16 %v1221
    %v1294 = vunpack.c.l.b16 %v1222
    %v1295 = vunpack.c.l.b16 %v1223
    %v1296 = vunpack.c.l.b16 %v1224
    %v1297 = vunpack.c.l.b16 %v1225
    %v1298 = vunpack.c.l.b16 %v1226
    %v1299 = vunpack.c.l.b16 %v1227
    %v1300 = vunpack.c.l.b16 %v1228
    %v1301 = vunpack.c.l.b16 %v1229
    %v1302 = vunpack.c.l.b16 %v1230
    %v1303 = vunpack.c.l.b16 %v1231
    %v1304 = vunpack.c.l.b16 %v1232
    %v1305 = vunpack.c.l.b16 %v1233
    %v1306 = vunpack.c.l.b16 %v1234
    %v1307 = vunpack.c.l.b16 %v1235
    %v1308 = vunpack.c.l.b16 %v1236
    %v1309 = vunpack.c.l.b16 %v1237
    %v1310 = vunpack.c.l.b16 %v1238
    %v1311 = vunpack.c.l.b16 %v1239
    %v1312 = vunpack.c.l.b16 %v1240
    %v1313 = vunpack.c.l.b16 %v1241
    %v1314 = vunpack.c.l.b16 %v1242
    %v1315 = vunpack.c.l.b16 %v1243
    %v1316 = vunpack.c.l.b16 %v1244
    %v1317 = vpack.c.b16 %v1282, %v1281
    %v1318 = vpack.c.b16 %v1284, %v1283
    %v1319 = vpack.c.b16 %v1286, %v1285
    %v1320 = vpack.c.b16 %v1288, %v1287
    %v1321 = vpack.c.b16 %v1290, %v1289
    %v1322 = vpack.c.b16 %v1292, %v1291
    %v1323 = vpack.c.b16 %v1294, %v1293
    %v1324 = vpack.c.b16 %v1296, %v1295
    %v1325 = vpack.c.b16 %v1298, %v1297
    %v1326 = vpack.c.b16 %v1300, %v1299
    %v1327 = vpack.c.b16 %v1302, %v1301
    %v1328 = vpack.c.b16 %v1304, %v1303
    %v1329 = vpack.c.b16 %v1306, %v1305
    %v1330 = vpack.c.b16 %v1308, %v1307
    %v1331 = vpack.c.b16 %v1310, %v1309
    %v1332 = vpack.c.b16 %v1312, %v1311
    %v1333 = vpack.c.b16 %v1314, %v1313
    %v1334 = vpack.c.b16 %v1316, %v1315
    %v1336 = vsel %vm181, %v1317, 0
    %v1339 = vsel %vm181, %v1318, 0
    %v1342 = vsel %vm181, %v1319, 0
    %v1345 = vsel %vm181, %v1320, 0
    %v1348 = vsel %vm181, %v1321, 0
    %v1351 = vsel %vm181, %v1322, 0
    %v1354 = vsel %vm181, %v1323, 0
    %v1357 = vsel %vm181, %v1324, 0
    %v1360 = vsel %vm181, %v1325, 0
    %v1363 = vsel %vm181, %v1326, 0
    %v1366 = vsel %vm181, %v1327, 0
    %v1369 = vsel %vm181, %v1328, 0
    %v1372 = vsel %vm181, %v1329, 0
    %v1375 = vsel %vm181, %v1330, 0
    %v1378 = vsel %vm181, %v1331, 0
    %v1381 = vsel %vm181, %v1332, 0
    %v1384 = vsel %vm181, %v1333, 0
    %v1387 = vsel %vm181, %v1334, 0
    %1389 = vmatprep.subr.bf16.mxu0 0
    %1390 = vmatpush1.bf16.msra.mxu0 0
    %1391 = vmatprep.subr.bf16.mxu0 0
    %1392 = vmatpush1.bf16.msra.mxu0 0
    %1393 = vmatprep.subr.bf16.mxu0 0
    %1394 = vmatpush1.bf16.msra.mxu0 0
    %1395 = vmatprep.subr.bf16.mxu0 0
    %1396 = vmatpush1.bf16.msra.mxu0 0
    %1397 = vmatprep.subr.bf16.mxu0 0
    %1398 = vmatpush1.bf16.msra.mxu0 0
    %1399 = vmatprep.subr.bf16.mxu0 0
    %1400 = vmatpush1.bf16.msra.mxu0 0
    %1401 = vmatprep.subr.bf16.mxu0 0
    %1402 = vmatpush1.bf16.msra.mxu0 %v241
    %1403 = vmatprep.subr.bf16.mxu0 0
    %1404 = vmatpush1.bf16.msra.mxu0 %v178
    %1405 = vmatprep.subr.bf16.mxu0 0
    %1406 = vmatpush2.bf16.msra.mxu0 0
    %1407 = vmatprep.subr.bf16.mxu0 0
    %1408 = vmatpush2.bf16.msra.mxu0 0
    %1409 = vmatprep.subr.bf16.mxu0 0
    %1410 = vmatpush2.bf16.msra.mxu0 0
    %1411 = vmatprep.subr.bf16.mxu0 0
    %1412 = vmatpush2.bf16.msra.mxu0 0
    %1413 = vmatprep.subr.bf16.mxu0 0
    %1414 = vmatpush2.bf16.msra.mxu0 0
    %1415 = vmatprep.subr.bf16.mxu0 0
    %1416 = vmatpush2.bf16.msra.mxu0 0
    %1417 = vmatprep.subr.bf16.mxu0 0
    %1418 = vmatpush2.bf16.msra.mxu0 0
    %1419 = vmatprep.subr.bf16.mxu0 0
    %1420 = vmatpush2.bf16.msra.mxu0 0
    %1421 = vmatprep.mubr.bf16.mxu0 0
    %1422 = vmatmul.mubr.bf16.gmra.mxu0 %v1336
    %v1423 = vpop.f32.mrf.mxu0
    %v1424 = vadd.f32 0.0, %v1423
    %v1425 = vpop.f32.mrf.mxu0
    %v1426 = vpop.f32.mrf.mxu0
    %v1427 = vadd.f32 0.0, %v1426
    %v1428 = vpop.f32.mrf.mxu0
    %1429 = vmatprep.mubr.bf16.mxu0 0
    %1430 = vmatmul.mubr.bf16.gmra.mxu0 %v1339
    %v1431 = vpop.f32.mrf.mxu0
    %v1432 = vadd.f32 0.0, %v1431
    %v1433 = vpop.f32.mrf.mxu0
    %v1434 = vpop.f32.mrf.mxu0
    %v1435 = vadd.f32 0.0, %v1434
    %v1436 = vpop.f32.mrf.mxu0
    %1437 = vmatprep.mubr.bf16.mxu0 0
    %1438 = vmatmul.mubr.bf16.gmra.mxu0 %v1342
    %v1439 = vpop.f32.mrf.mxu0
    %v1440 = vadd.f32 0.0, %v1439
    %v1441 = vpop.f32.mrf.mxu0
    %v1442 = vpop.f32.mrf.mxu0
    %v1443 = vadd.f32 0.0, %v1442
    %v1444 = vpop.f32.mrf.mxu0
    %1445 = vmatprep.mubr.bf16.mxu0 0
    %1446 = vmatmul.mubr.bf16.gmra.mxu0 %v1345
    %v1447 = vpop.f32.mrf.mxu0
    %v1448 = vadd.f32 0.0, %v1447
    %v1449 = vpop.f32.mrf.mxu0
    %v1450 = vpop.f32.mrf.mxu0
    %v1451 = vadd.f32 0.0, %v1450
    %v1452 = vpop.f32.mrf.mxu0
    %1453 = vmatprep.mubr.bf16.mxu0 0
    %1454 = vmatmul.mubr.bf16.gmra.mxu0 %v1348
    %v1455 = vpop.f32.mrf.mxu0
    %v1456 = vadd.f32 0.0, %v1455
    %v1457 = vpop.f32.mrf.mxu0
    %v1458 = vpop.f32.mrf.mxu0
    %v1459 = vadd.f32 0.0, %v1458
    %v1460 = vpop.f32.mrf.mxu0
    %1461 = vmatprep.mubr.bf16.mxu0 0
    %1462 = vmatmul.mubr.bf16.gmra.mxu0 %v1351
    %v1463 = vpop.f32.mrf.mxu0
    %v1464 = vadd.f32 0.0, %v1463
    %v1465 = vpop.f32.mrf.mxu0
    %v1466 = vpop.f32.mrf.mxu0
    %v1467 = vadd.f32 0.0, %v1466
    %v1468 = vpop.f32.mrf.mxu0
    %1469 = vmatprep.mubr.bf16.mxu0 0
    %1470 = vmatmul.mubr.bf16.gmra.mxu0 %v1354
    %v1471 = vpop.f32.mrf.mxu0
    %v1472 = vadd.f32 0.0, %v1471
    %v1473 = vpop.f32.mrf.mxu0
    %v1474 = vpop.f32.mrf.mxu0
    %v1475 = vadd.f32 0.0, %v1474
    %v1476 = vpop.f32.mrf.mxu0
    %1477 = vmatprep.mubr.bf16.mxu0 0
    %1478 = vmatmul.mubr.bf16.gmra.mxu0 %v1357
    %v1479 = vpop.f32.mrf.mxu0
    %v1480 = vadd.f32 0.0, %v1479
    %v1481 = vpop.f32.mrf.mxu0
    %v1482 = vpop.f32.mrf.mxu0
    %v1483 = vadd.f32 0.0, %v1482
    %v1484 = vpop.f32.mrf.mxu0
    %1485 = vmatprep.mubr.bf16.mxu0 0
    %1486 = vmatmul.mubr.bf16.gmra.mxu0 %v1360
    %v1487 = vpop.f32.mrf.mxu0
    %v1488 = vadd.f32 0.0, %v1487
    %v1489 = vpop.f32.mrf.mxu0
    %v1490 = vpop.f32.mrf.mxu0
    %v1491 = vadd.f32 0.0, %v1490
    %v1492 = vpop.f32.mrf.mxu0
    %1493 = vmatprep.mubr.bf16.mxu0 0
    %1494 = vmatmul.mubr.bf16.gmra.mxu0 %v1363
    %v1495 = vpop.f32.mrf.mxu0
    %v1496 = vadd.f32 0.0, %v1495
    %v1497 = vpop.f32.mrf.mxu0
    %v1498 = vpop.f32.mrf.mxu0
    %v1499 = vadd.f32 0.0, %v1498
    %v1500 = vpop.f32.mrf.mxu0
    %1501 = vmatprep.mubr.bf16.mxu0 0
    %1502 = vmatmul.mubr.bf16.gmra.mxu0 %v1366
    %v1503 = vpop.f32.mrf.mxu0
    %v1504 = vadd.f32 0.0, %v1503
    %v1505 = vpop.f32.mrf.mxu0
    %v1506 = vpop.f32.mrf.mxu0
    %v1507 = vadd.f32 0.0, %v1506
    %v1508 = vpop.f32.mrf.mxu0
    %1509 = vmatprep.mubr.bf16.mxu0 0
    %1510 = vmatmul.mubr.bf16.gmra.mxu0 %v1369
    %v1511 = vpop.f32.mrf.mxu0
    %v1512 = vadd.f32 0.0, %v1511
    %v1513 = vpop.f32.mrf.mxu0
    %v1514 = vpop.f32.mrf.mxu0
    %v1515 = vadd.f32 0.0, %v1514
    %v1516 = vpop.f32.mrf.mxu0
    %1517 = vmatprep.mubr.bf16.mxu0 0
    %1518 = vmatmul.mubr.bf16.gmra.mxu0 %v1372
    %v1519 = vpop.f32.mrf.mxu0
    %v1520 = vadd.f32 0.0, %v1519
    %v1521 = vpop.f32.mrf.mxu0
    %v1522 = vpop.f32.mrf.mxu0
    %v1523 = vadd.f32 0.0, %v1522
    %v1524 = vpop.f32.mrf.mxu0
    %1525 = vmatprep.mubr.bf16.mxu0 0
    %1526 = vmatmul.mubr.bf16.gmra.mxu0 %v1375
    %v1527 = vpop.f32.mrf.mxu0
    %v1528 = vadd.f32 0.0, %v1527
    %v1529 = vpop.f32.mrf.mxu0
    %v1530 = vpop.f32.mrf.mxu0
    %v1531 = vadd.f32 0.0, %v1530
    %v1532 = vpop.f32.mrf.mxu0
    %1533 = vmatprep.mubr.bf16.mxu0 0
    %1534 = vmatmul.mubr.bf16.gmra.mxu0 %v1378
    %v1535 = vpop.f32.mrf.mxu0
    %v1536 = vadd.f32 0.0, %v1535
    %v1537 = vpop.f32.mrf.mxu0
    %v1538 = vpop.f32.mrf.mxu0
    %v1539 = vadd.f32 0.0, %v1538
    %v1540 = vpop.f32.mrf.mxu0
    %1541 = vmatprep.mubr.bf16.mxu0 0
    %1542 = vmatmul.mubr.bf16.gmra.mxu0 %v1381
    %v1543 = vpop.f32.mrf.mxu0
    %v1544 = vadd.f32 0.0, %v1543
    %v1545 = vpop.f32.mrf.mxu0
    %v1546 = vpop.f32.mrf.mxu0
    %v1547 = vadd.f32 0.0, %v1546
    %v1548 = vpop.f32.mrf.mxu0
    %1549 = vmatprep.mubr.bf16.mxu0 0
    %1550 = vmatmul.mubr.bf16.gmra.mxu0 %v1384
    %v1551 = vpop.f32.mrf.mxu0
    %v1552 = vadd.f32 0.0, %v1551
    %v1553 = vpop.f32.mrf.mxu0
    %v1554 = vpop.f32.mrf.mxu0
    %v1555 = vadd.f32 0.0, %v1554
    %v1556 = vpop.f32.mrf.mxu0
    %1557 = vmatprep.mubr.bf16.mxu0 0
    %1558 = vmatmul.mubr.bf16.gmra.mxu0 %v1387
    %v1559 = vpop.f32.mrf.mxu0
    %v1560 = vadd.f32 0.0, %v1559
    %v1561 = vpop.f32.mrf.mxu0
    %v1562 = vpop.f32.mrf.mxu0
    %v1563 = vadd.f32 0.0, %v1562
    %v1564 = vpop.f32.mrf.mxu0
    %1565 = vdwg.mxu0
    %v1566 = vmax.f32 %v1172, %v1424
    %v1567 = vmax.f32 %v1173, %v1427
    %v1568 = vmax.f32 %v1174, %v1432
    %v1569 = vmax.f32 %v1175, %v1435
    %v1570 = vmax.f32 %v1176, %v1440
    %v1571 = vmax.f32 %v1177, %v1443
    %v1572 = vmax.f32 %v1178, %v1448
    %v1573 = vmax.f32 %v1179, %v1451
    %v1574 = vmax.f32 %v1180, %v1456
    %v1575 = vmax.f32 %v1181, %v1459
    %v1576 = vmax.f32 %v1182, %v1464
    %v1577 = vmax.f32 %v1183, %v1467
    %v1578 = vmax.f32 %v1184, %v1472
    %v1579 = vmax.f32 %v1185, %v1475
    %v1580 = vmax.f32 %v1186, %v1480
    %v1581 = vmax.f32 %v1187, %v1483
    %v1582 = vmax.f32 %v1188, %v1488
    %v1583 = vmax.f32 %v1189, %v1491
    %v1584 = vmax.f32 %v1190, %v1496
    %v1585 = vmax.f32 %v1191, %v1499
    %v1586 = vmax.f32 %v1192, %v1504
    %v1587 = vmax.f32 %v1193, %v1507
    %v1588 = vmax.f32 %v1194, %v1512
    %v1589 = vmax.f32 %v1195, %v1515
    %v1590 = vmax.f32 %v1196, %v1520
    %v1591 = vmax.f32 %v1197, %v1523
    %v1592 = vmax.f32 %v1198, %v1528
    %v1593 = vmax.f32 %v1199, %v1531
    %v1594 = vmax.f32 %v1200, %v1536
    %v1595 = vmax.f32 %v1201, %v1539
    %v1596 = vmax.f32 %v1202, %v1544
    %v1597 = vmax.f32 %v1203, %v1547
    %v1598 = vmax.f32 %v1204, %v1552
    %v1599 = vmax.f32 %v1205, %v1555
    %v1600 = vmax.f32 %v1206, %v1560
    %v1601 = vmax.f32 %v1207, %v1563
    %v1602 = vld [vmem:[%s2] sm:$0x1]
    %v1604 = vlaneseq
    %v1605 = vshrl.u32 %v1604, 7
    %v1606 = vsub.s32 0, %v1605
    %v1607 = vrot.slane %v1602, %v1606
    %v1609 = vadd.f32 %v1566, %v1607
    %v1610 = vadd.f32 %v1567, %v1607
    %v1611 = vadd.f32 %v1568, %v1607
    %v1612 = vadd.f32 %v1569, %v1607
    %v1613 = vadd.f32 %v1570, %v1607
    %v1614 = vadd.f32 %v1571, %v1607
    %v1615 = vadd.f32 %v1572, %v1607
    %v1616 = vadd.f32 %v1573, %v1607
    %v1617 = vadd.f32 %v1574, %v1607
    %v1618 = vadd.f32 %v1575, %v1607
    %v1619 = vadd.f32 %v1576, %v1607
    %v1620 = vadd.f32 %v1577, %v1607
    %v1621 = vadd.f32 %v1578, %v1607
    %v1622 = vadd.f32 %v1579, %v1607
    %v1623 = vadd.f32 %v1580, %v1607
    %v1624 = vadd.f32 %v1581, %v1607
    %v1625 = vadd.f32 %v1582, %v1607
    %v1626 = vadd.f32 %v1583, %v1607
    %v1627 = vadd.f32 %v1584, %v1607
    %v1628 = vadd.f32 %v1585, %v1607
    %v1629 = vadd.f32 %v1586, %v1607
    %v1630 = vadd.f32 %v1587, %v1607
    %v1631 = vadd.f32 %v1588, %v1607
    %v1632 = vadd.f32 %v1589, %v1607
    %v1633 = vadd.f32 %v1590, %v1607
    %v1634 = vadd.f32 %v1591, %v1607
    %v1635 = vadd.f32 %v1592, %v1607
    %v1636 = vadd.f32 %v1593, %v1607
    %v1637 = vadd.f32 %v1594, %v1607
    %v1638 = vadd.f32 %v1595, %v1607
    %v1639 = vadd.f32 %v1596, %v1607
    %v1640 = vadd.f32 %v1597, %v1607
    %v1641 = vadd.f32 %v1598, %v1607
    %v1642 = vadd.f32 %v1599, %v1607
    %v1643 = vadd.f32 %v1600, %v1607
    %v1644 = vadd.f32 %v1601, %v1607
    %v1645 = vmax.f32 %v1609, 0.0
    %v1646 = vmax.f32 %v1610, 0.0
    %v1647 = vmax.f32 %v1611, 0.0
    %v1648 = vmax.f32 %v1612, 0.0
    %v1649 = vmax.f32 %v1613, 0.0
    %v1650 = vmax.f32 %v1614, 0.0
    %v1651 = vmax.f32 %v1615, 0.0
    %v1652 = vmax.f32 %v1616, 0.0
    %v1653 = vmax.f32 %v1617, 0.0
    %v1654 = vmax.f32 %v1618, 0.0
    %v1655 = vmax.f32 %v1619, 0.0
    %v1656 = vmax.f32 %v1620, 0.0
    %v1657 = vmax.f32 %v1621, 0.0
    %v1658 = vmax.f32 %v1622, 0.0
    %v1659 = vmax.f32 %v1623, 0.0
    %v1660 = vmax.f32 %v1624, 0.0
    %v1661 = vmax.f32 %v1625, 0.0
    %v1662 = vmax.f32 %v1626, 0.0
    %v1663 = vmax.f32 %v1627, 0.0
    %v1664 = vmax.f32 %v1628, 0.0
    %v1665 = vmax.f32 %v1629, 0.0
    %v1666 = vmax.f32 %v1630, 0.0
    %v1667 = vmax.f32 %v1631, 0.0
    %v1668 = vmax.f32 %v1632, 0.0
    %v1669 = vmax.f32 %v1633, 0.0
    %v1670 = vmax.f32 %v1634, 0.0
    %v1671 = vmax.f32 %v1635, 0.0
    %v1672 = vmax.f32 %v1636, 0.0
    %v1673 = vmax.f32 %v1637, 0.0
    %v1674 = vmax.f32 %v1638, 0.0
    %v1675 = vmax.f32 %v1639, 0.0
    %v1676 = vmax.f32 %v1640, 0.0
    %v1677 = vmax.f32 %v1641, 0.0
    %v1678 = vmax.f32 %v1642, 0.0
    %v1679 = vmax.f32 %v1643, 0.0
    %v1680 = vmax.f32 %v1644, 0.0
    %vm1681 = vcmask 48128
    %1682 = vst.msk [vmem:[#allocation2] sm:$0xff] %vm1681, %v1645
    %1683 = vst.msk [vmem:[#allocation2 + $0x8] sm:$0xff] %vm1681, %v1646
    %1684 = vst.msk [vmem:[#allocation2 + $0x10] sm:$0xff] %vm1681, %v1647
    %1685 = vst.msk [vmem:[#allocation2 + $0x18] sm:$0xff] %vm1681, %v1648
    %1686 = vst.msk [vmem:[#allocation2 + $0x20] sm:$0xff] %vm1681, %v1649
    %1687 = vst.msk [vmem:[#allocation2 + $0x28] sm:$0xff] %vm1681, %v1650
    %1688 = vst.msk [vmem:[#allocation2 + $0x30] sm:$0xff] %vm1681, %v1651
    %1689 = vst.msk [vmem:[#allocation2 + $0x38] sm:$0xff] %vm1681, %v1652
    %1690 = vst.msk [vmem:[#allocation2 + $0x40] sm:$0xff] %vm1681, %v1653
    %1691 = vst.msk [vmem:[#allocation2 + $0x48] sm:$0xff] %vm1681, %v1654
    %1692 = vst.msk [vmem:[#allocation2 + $0x50] sm:$0xff] %vm1681, %v1655
    %1693 = vst.msk [vmem:[#allocation2 + $0x58] sm:$0xff] %vm1681, %v1656
    %1694 = vst.msk [vmem:[#allocation2 + $0x60] sm:$0xff] %vm1681, %v1657
    %1695 = vst.msk [vmem:[#allocation2 + $0x68] sm:$0xff] %vm1681, %v1658
    %1696 = vst.msk [vmem:[#allocation2 + $0x70] sm:$0xff] %vm1681, %v1659
    %1697 = vst.msk [vmem:[#allocation2 + $0x78] sm:$0xff] %vm1681, %v1660
    %1698 = vst.msk [vmem:[#allocation2 + $0x80] sm:$0xff] %vm1681, %v1661
    %1699 = vst.msk [vmem:[#allocation2 + $0x88] sm:$0xff] %vm1681, %v1662
    %1700 = vst.msk [vmem:[#allocation2 + $0x90] sm:$0xff] %vm1681, %v1663
    %1701 = vst.msk [vmem:[#allocation2 + $0x98] sm:$0xff] %vm1681, %v1664
    %1702 = vst.msk [vmem:[#allocation2 + $0xa0] sm:$0xff] %vm1681, %v1665
    %1703 = vst.msk [vmem:[#allocation2 + $0xa8] sm:$0xff] %vm1681, %v1666
    %1704 = vst.msk [vmem:[#allocation2 + $0xb0] sm:$0xff] %vm1681, %v1667
    %1705 = vst.msk [vmem:[#allocation2 + $0xb8] sm:$0xff] %vm1681, %v1668
    %1706 = vst.msk [vmem:[#allocation2 + $0xc0] sm:$0xff] %vm1681, %v1669
    %1707 = vst.msk [vmem:[#allocation2 + $0xc8] sm:$0xff] %vm1681, %v1670
    %1708 = vst.msk [vmem:[#allocation2 + $0xd0] sm:$0xff] %vm1681, %v1671
    %1709 = vst.msk [vmem:[#allocation2 + $0xd8] sm:$0xff] %vm1681, %v1672
    %1710 = vst.msk [vmem:[#allocation2 + $0xe0] sm:$0xff] %vm1681, %v1673
    %1711 = vst.msk [vmem:[#allocation2 + $0xe8] sm:$0xff] %vm1681, %v1674
    %1712 = vst.msk [vmem:[#allocation2 + $0xf0] sm:$0xff] %vm1681, %v1675
    %1713 = vst.msk [vmem:[#allocation2 + $0xf8] sm:$0xff] %vm1681, %v1676
    %1714 = vst.msk [vmem:[#allocation2 + $0x100] sm:$0xff] %vm1681, %v1677
    %1715 = vst.msk [vmem:[#allocation2 + $0x108] sm:$0xff] %vm1681, %v1678
    %1716 = vst.msk [vmem:[#allocation2 + $0x110] sm:$0xff] %vm1681, %v1679
    %1717 = vst.msk [vmem:[#allocation2 + $0x118] sm:$0xff] %vm1681, %v1680
    %v1718 = vld [vmem:[#allocation2] sm:$0xff]
    %v1719 = vld [vmem:[#allocation2 + $0x8] sm:$0xff]
    %v1720 = vld [vmem:[#allocation2 + $0x18] sm:$0xff]
    %v1721 = vld [vmem:[#allocation2 + $0x20] sm:$0xff]
    %v1722 = vld [vmem:[#allocation2 + $0x30] sm:$0xff]
    %v1723 = vld [vmem:[#allocation2 + $0x38] sm:$0xff]
    %v1724 = vld [vmem:[#allocation2 + $0x48] sm:$0xff]
    %v1725 = vld [vmem:[#allocation2 + $0x50] sm:$0xff]
    %v1726 = vld [vmem:[#allocation2 + $0x60] sm:$0xff]
    %v1727 = vld [vmem:[#allocation2 + $0x68] sm:$0xff]
    %v1728 = vld [vmem:[#allocation2 + $0x78] sm:$0xff]
    %v1729 = vld [vmem:[#allocation2 + $0x80] sm:$0xff]
    %v1730 = vld [vmem:[#allocation2 + $0x90] sm:$0xff]
    %v1731 = vld [vmem:[#allocation2 + $0x98] sm:$0xff]
    %v1732 = vld [vmem:[#allocation2 + $0xa8] sm:$0xff]
    %v1733 = vld [vmem:[#allocation2 + $0xb0] sm:$0xff]
    %v1734 = vpack.c.bf16 %v1719, %v1718
    %v1735 = vpack.c.bf16 %v1721, %v1720
    %v1736 = vpack.c.bf16 %v1723, %v1722
    %v1737 = vpack.c.bf16 %v1725, %v1724
    %v1738 = vpack.c.bf16 %v1727, %v1726
    %v1739 = vpack.c.bf16 %v1729, %v1728
    %v1740 = vpack.c.bf16 %v1731, %v1730
    %v1741 = vpack.c.bf16 %v1733, %v1732
    %v1742 = vld [vmem:[%s3] sm:$0x7]
    %v1743 = vld [vmem:[#allocation2 + $0x2] sm:$0xff]
    %v1744 = vld [vmem:[#allocation2 + $0xa] sm:$0xff]
    %v1745 = vld [vmem:[#allocation2 + $0x1a] sm:$0xff]
    %v1746 = vld [vmem:[#allocation2 + $0x22] sm:$0xff]
    %v1747 = vld [vmem:[#allocation2 + $0x32] sm:$0xff]
    %v1748 = vld [vmem:[#allocation2 + $0x3a] sm:$0xff]
    %v1749 = vld [vmem:[#allocation2 + $0x4a] sm:$0xff]
    %v1750 = vld [vmem:[#allocation2 + $0x52] sm:$0xff]
    %v1751 = vld [vmem:[#allocation2 + $0x62] sm:$0xff]
    %v1752 = vld [vmem:[#allocation2 + $0x6a] sm:$0xff]
    %v1753 = vld [vmem:[#allocation2 + $0x7a] sm:$0xff]
    %v1754 = vld [vmem:[#allocation2 + $0x82] sm:$0xff]
    %v1755 = vld [vmem:[#allocation2 + $0x92] sm:$0xff]
    %v1756 = vld [vmem:[#allocation2 + $0x9a] sm:$0xff]
    %v1757 = vld [vmem:[#allocation2 + $0xaa] sm:$0xff]
    %v1758 = vld [vmem:[#allocation2 + $0xb2] sm:$0xff]
    %v1759 = vpack.c.bf16 %v1744, %v1743
    %v1760 = vpack.c.bf16 %v1746, %v1745
    %v1761 = vpack.c.bf16 %v1748, %v1747
    %v1762 = vpack.c.bf16 %v1750, %v1749
    %v1763 = vpack.c.bf16 %v1752, %v1751
    %v1764 = vpack.c.bf16 %v1754, %v1753
    %v1765 = vpack.c.bf16 %v1756, %v1755
    %v1766 = vpack.c.bf16 %v1758, %v1757
    %s1767 = scalar_lea.vmem %s3, 4
    %v1768 = vld [vmem:[%s1767] sm:$0x7]
    %v1770 = vsel %vm1681, %v1759, 0
    %v1773 = vsel %vm1681, %v1760, 0
    %v1776 = vsel %vm1681, %v1761, 0
    %v1779 = vsel %vm1681, %v1762, 0
    %v1782 = vsel %vm1681, %v1763, 0
    %v1785 = vsel %vm1681, %v1764, 0
    %v1788 = vsel %vm1681, %v1765, 0
    %v1791 = vsel %vm1681, %v1766, 0
    %vm1793 = vcmask 1042432
    %v1795 = vsel %vm1793, %v1768, 0
    %1797 = vmatprep.subr.bf16.mxu0 0
    %1798 = vmatpush1.bf16.msra.mxu0 0
    %1799 = vmatprep.subr.bf16.mxu0 0
    %1800 = vmatpush1.bf16.msra.mxu0 0
    %1801 = vmatprep.subr.bf16.mxu0 0
    %1802 = vmatpush1.bf16.msra.mxu0 0
    %1803 = vmatprep.subr.bf16.mxu0 0
    %1804 = vmatpush1.bf16.msra.mxu0 0
    %1805 = vmatprep.subr.bf16.mxu0 0
    %1806 = vmatpush1.bf16.msra.mxu0 0
    %1807 = vmatprep.subr.bf16.mxu0 0
    %1808 = vmatpush1.bf16.msra.mxu0 0
    %1809 = vmatprep.subr.bf16.mxu0 0
    %1810 = vmatpush1.bf16.msra.mxu0 0
    %1811 = vmatprep.subr.bf16.mxu0 0
    %1812 = vmatpush1.bf16.msra.mxu0 %v1795
    %1813 = vmatprep.subr.bf16.mxu0 0
    %1814 = vmatpush2.bf16.msra.mxu0 0
    %1815 = vmatprep.subr.bf16.mxu0 0
    %1816 = vmatpush2.bf16.msra.mxu0 0
    %1817 = vmatprep.subr.bf16.mxu0 0
    %1818 = vmatpush2.bf16.msra.mxu0 0
    %1819 = vmatprep.subr.bf16.mxu0 0
    %1820 = vmatpush2.bf16.msra.mxu0 0
    %1821 = vmatprep.subr.bf16.mxu0 0
    %1822 = vmatpush2.bf16.msra.mxu0 0
    %1823 = vmatprep.subr.bf16.mxu0 0
    %1824 = vmatpush2.bf16.msra.mxu0 0
    %1825 = vmatprep.subr.bf16.mxu0 0
    %1826 = vmatpush2.bf16.msra.mxu0 0
    %1827 = vmatprep.subr.bf16.mxu0 0
    %1828 = vmatpush2.bf16.msra.mxu0 0
    %1829 = vmatprep.mubr.bf16.mxu0 0
    %1830 = vmatmul.mubr.bf16.gmra.mxu0 %v1770
    %v1831 = vpop.f32.mrf.mxu0
    %v1832 = vadd.f32 0.0, %v1831
    %v1833 = vpop.f32.mrf.mxu0
    %v1834 = vpop.f32.mrf.mxu0
    %v1835 = vadd.f32 0.0, %v1834
    %v1836 = vpop.f32.mrf.mxu0
    %1837 = vmatprep.mubr.bf16.mxu0 0
    %1838 = vmatmul.mubr.bf16.gmra.mxu0 %v1773
    %v1839 = vpop.f32.mrf.mxu0
    %v1840 = vadd.f32 0.0, %v1839
    %v1841 = vpop.f32.mrf.mxu0
    %v1842 = vpop.f32.mrf.mxu0
    %v1843 = vadd.f32 0.0, %v1842
    %v1844 = vpop.f32.mrf.mxu0
    %1845 = vmatprep.mubr.bf16.mxu0 0
    %1846 = vmatmul.mubr.bf16.gmra.mxu0 %v1776
    %v1847 = vpop.f32.mrf.mxu0
    %v1848 = vadd.f32 0.0, %v1847
    %v1849 = vpop.f32.mrf.mxu0
    %v1850 = vpop.f32.mrf.mxu0
    %v1851 = vadd.f32 0.0, %v1850
    %v1852 = vpop.f32.mrf.mxu0
    %1853 = vmatprep.mubr.bf16.mxu0 0
    %1854 = vmatmul.mubr.bf16.gmra.mxu0 %v1779
    %v1855 = vpop.f32.mrf.mxu0
    %v1856 = vadd.f32 0.0, %v1855
    %v1857 = vpop.f32.mrf.mxu0
    %v1858 = vpop.f32.mrf.mxu0
    %v1859 = vadd.f32 0.0, %v1858
    %v1860 = vpop.f32.mrf.mxu0
    %1861 = vmatprep.mubr.bf16.mxu0 0
    %1862 = vmatmul.mubr.bf16.gmra.mxu0 %v1782
    %v1863 = vpop.f32.mrf.mxu0
    %v1864 = vadd.f32 0.0, %v1863
    %v1865 = vpop.f32.mrf.mxu0
    %v1866 = vpop.f32.mrf.mxu0
    %v1867 = vadd.f32 0.0, %v1866
    %v1868 = vpop.f32.mrf.mxu0
    %1869 = vmatprep.mubr.bf16.mxu0 0
    %1870 = vmatmul.mubr.bf16.gmra.mxu0 %v1785
    %v1871 = vpop.f32.mrf.mxu0
    %v1872 = vadd.f32 0.0, %v1871
    %v1873 = vpop.f32.mrf.mxu0
    %v1874 = vpop.f32.mrf.mxu0
    %v1875 = vadd.f32 0.0, %v1874
    %v1876 = vpop.f32.mrf.mxu0
    %1877 = vmatprep.mubr.bf16.mxu0 0
    %1878 = vmatmul.mubr.bf16.gmra.mxu0 %v1788
    %v1879 = vpop.f32.mrf.mxu0
    %v1880 = vadd.f32 0.0, %v1879
    %v1881 = vpop.f32.mrf.mxu0
    %v1882 = vpop.f32.mrf.mxu0
    %v1883 = vadd.f32 0.0, %v1882
    %v1884 = vpop.f32.mrf.mxu0
    %1885 = vmatprep.mubr.bf16.mxu0 0
    %1886 = vmatmul.mubr.bf16.gmra.mxu0 %v1791
    %v1887 = vpop.f32.mrf.mxu0
    %v1888 = vadd.f32 0.0, %v1887
    %v1889 = vpop.f32.mrf.mxu0
    %v1890 = vpop.f32.mrf.mxu0
    %v1891 = vadd.f32 0.0, %v1890
    %v1892 = vpop.f32.mrf.mxu0
    %1893 = vdwg.mxu0
    %v1895 = vsel %vm1681, %v1734, 0
    %v1898 = vsel %vm1681, %v1735, 0
    %v1901 = vsel %vm1681, %v1736, 0
    %v1904 = vsel %vm1681, %v1737, 0
    %v1907 = vsel %vm1681, %v1738, 0
    %v1910 = vsel %vm1681, %v1739, 0
    %v1913 = vsel %vm1681, %v1740, 0
    %v1916 = vsel %vm1681, %v1741, 0
    %v1919 = vsel %vm1793, %v1742, 0
    %1921 = vmatprep.subr.bf16.mxu0 0
    %1922 = vmatpush1.bf16.msra.mxu0 0
    %1923 = vmatprep.subr.bf16.mxu0 0
    %1924 = vmatpush1.bf16.msra.mxu0 0
    %1925 = vmatprep.subr.bf16.mxu0 0
    %1926 = vmatpush1.bf16.msra.mxu0 0
    %1927 = vmatprep.subr.bf16.mxu0 0
    %1928 = vmatpush1.bf16.msra.mxu0 0
    %1929 = vmatprep.subr.bf16.mxu0 0
    %1930 = vmatpush1.bf16.msra.mxu0 0
    %1931 = vmatprep.subr.bf16.mxu0 0
    %1932 = vmatpush1.bf16.msra.mxu0 0
    %1933 = vmatprep.subr.bf16.mxu0 0
    %1934 = vmatpush1.bf16.msra.mxu0 0
    %1935 = vmatprep.subr.bf16.mxu0 0
    %1936 = vmatpush1.bf16.msra.mxu0 %v1919
    %1937 = vmatprep.subr.bf16.mxu0 0
    %1938 = vmatpush2.bf16.msra.mxu0 0
    %1939 = vmatprep.subr.bf16.mxu0 0
    %1940 = vmatpush2.bf16.msra.mxu0 0
    %1941 = vmatprep.subr.bf16.mxu0 0
    %1942 = vmatpush2.bf16.msra.mxu0 0
    %1943 = vmatprep.subr.bf16.mxu0 0
    %1944 = vmatpush2.bf16.msra.mxu0 0
    %1945 = vmatprep.subr.bf16.mxu0 0
    %1946 = vmatpush2.bf16.msra.mxu0 0
    %1947 = vmatprep.subr.bf16.mxu0 0
    %1948 = vmatpush2.bf16.msra.mxu0 0
    %1949 = vmatprep.subr.bf16.mxu0 0
    %1950 = vmatpush2.bf16.msra.mxu0 0
    %1951 = vmatprep.subr.bf16.mxu0 0
    %1952 = vmatpush2.bf16.msra.mxu0 0
    %1953 = vmatprep.mubr.bf16.mxu0 0
    %1954 = vmatmul.mubr.bf16.gmra.mxu0 %v1895
    %v1955 = vpop.f32.mrf.mxu0
    %v1956 = vadd.f32 %v1832, %v1955
    %v1957 = vpop.f32.mrf.mxu0
    %v1958 = vpop.f32.mrf.mxu0
    %v1959 = vadd.f32 %v1835, %v1958
    %v1960 = vpop.f32.mrf.mxu0
    %1961 = vmatprep.mubr.bf16.mxu0 0
    %1962 = vmatmul.mubr.bf16.gmra.mxu0 %v1898
    %v1963 = vpop.f32.mrf.mxu0
    %v1964 = vadd.f32 %v1840, %v1963
    %v1965 = vpop.f32.mrf.mxu0
    %v1966 = vpop.f32.mrf.mxu0
    %v1967 = vadd.f32 %v1843, %v1966
    %v1968 = vpop.f32.mrf.mxu0
    %1969 = vmatprep.mubr.bf16.mxu0 0
    %1970 = vmatmul.mubr.bf16.gmra.mxu0 %v1901
    %v1971 = vpop.f32.mrf.mxu0
    %v1972 = vadd.f32 %v1848, %v1971
    %v1973 = vpop.f32.mrf.mxu0
    %v1974 = vpop.f32.mrf.mxu0
    %v1975 = vadd.f32 %v1851, %v1974
    %v1976 = vpop.f32.mrf.mxu0
    %1977 = vmatprep.mubr.bf16.mxu0 0
    %1978 = vmatmul.mubr.bf16.gmra.mxu0 %v1904
    %v1979 = vpop.f32.mrf.mxu0
    %v1980 = vadd.f32 %v1856, %v1979
    %v1981 = vpop.f32.mrf.mxu0
    %v1982 = vpop.f32.mrf.mxu0
    %v1983 = vadd.f32 %v1859, %v1982
    %v1984 = vpop.f32.mrf.mxu0
    %1985 = vmatprep.mubr.bf16.mxu0 0
    %1986 = vmatmul.mubr.bf16.gmra.mxu0 %v1907
    %v1987 = vpop.f32.mrf.mxu0
    %v1988 = vadd.f32 %v1864, %v1987
    %v1989 = vpop.f32.mrf.mxu0
    %v1990 = vpop.f32.mrf.mxu0
    %v1991 = vadd.f32 %v1867, %v1990
    %v1992 = vpop.f32.mrf.mxu0
    %1993 = vmatprep.mubr.bf16.mxu0 0
    %1994 = vmatmul.mubr.bf16.gmra.mxu0 %v1910
    %v1995 = vpop.f32.mrf.mxu0
    %v1996 = vadd.f32 %v1872, %v1995
    %v1997 = vpop.f32.mrf.mxu0
    %v1998 = vpop.f32.mrf.mxu0
    %v1999 = vadd.f32 %v1875, %v1998
    %v2000 = vpop.f32.mrf.mxu0
    %2001 = vmatprep.mubr.bf16.mxu0 0
    %2002 = vmatmul.mubr.bf16.gmra.mxu0 %v1913
    %v2003 = vpop.f32.mrf.mxu0
    %v2004 = vadd.f32 %v1880, %v2003
    %v2005 = vpop.f32.mrf.mxu0
    %v2006 = vpop.f32.mrf.mxu0
    %v2007 = vadd.f32 %v1883, %v2006
    %v2008 = vpop.f32.mrf.mxu0
    %2009 = vmatprep.mubr.bf16.mxu0 0
    %2010 = vmatmul.mubr.bf16.gmra.mxu0 %v1916
    %v2011 = vpop.f32.mrf.mxu0
    %v2012 = vadd.f32 %v1888, %v2011
    %v2013 = vpop.f32.mrf.mxu0
    %v2014 = vpop.f32.mrf.mxu0
    %v2015 = vadd.f32 %v1891, %v2014
    %v2016 = vpop.f32.mrf.mxu0
    %2017 = vdwg.mxu0
    %v2018 = vld [vmem:[#allocation2 + $0x4] sm:$0xff]
    %v2019 = vld [vmem:[#allocation2 + $0xc] sm:$0xff]
    %v2020 = vld [vmem:[#allocation2 + $0x1c] sm:$0xff]
    %v2021 = vld [vmem:[#allocation2 + $0x24] sm:$0xff]
    %v2022 = vld [vmem:[#allocation2 + $0x34] sm:$0xff]
    %v2023 = vld [vmem:[#allocation2 + $0x3c] sm:$0xff]
    %v2024 = vld [vmem:[#allocation2 + $0x4c] sm:$0xff]
    %v2025 = vld [vmem:[#allocation2 + $0x54] sm:$0xff]
    %v2026 = vld [vmem:[#allocation2 + $0x64] sm:$0xff]
    %v2027 = vld [vmem:[#allocation2 + $0x6c] sm:$0xff]
    %v2028 = vld [vmem:[#allocation2 + $0x7c] sm:$0xff]
    %v2029 = vld [vmem:[#allocation2 + $0x84] sm:$0xff]
    %v2030 = vld [vmem:[#allocation2 + $0x94] sm:$0xff]
    %v2031 = vld [vmem:[#allocation2 + $0x9c] sm:$0xff]
    %v2032 = vld [vmem:[#allocation2 + $0xac] sm:$0xff]
    %v2033 = vld [vmem:[#allocation2 + $0xb4] sm:$0xff]
    %v2034 = vpack.c.bf16 %v2019, %v2018
    %v2035 = vpack.c.bf16 %v2021, %v2020
    %v2036 = vpack.c.bf16 %v2023, %v2022
    %v2037 = vpack.c.bf16 %v2025, %v2024
    %v2038 = vpack.c.bf16 %v2027, %v2026
    %v2039 = vpack.c.bf16 %v2029, %v2028
    %v2040 = vpack.c.bf16 %v2031, %v2030
    %v2041 = vpack.c.bf16 %v2033, %v2032
    %s2042 = scalar_lea.vmem %s3, 8
    %v2043 = vld [vmem:[%s2042] sm:$0x7]
    %v2045 = vsel %vm1681, %v2034, 0
    %v2048 = vsel %vm1681, %v2035, 0
    %v2051 = vsel %vm1681, %v2036, 0
    %v2054 = vsel %vm1681, %v2037, 0
    %v2057 = vsel %vm1681, %v2038, 0
    %v2060 = vsel %vm1681, %v2039, 0
    %v2063 = vsel %vm1681, %v2040, 0
    %v2066 = vsel %vm1681, %v2041, 0
    %v2069 = vsel %vm1793, %v2043, 0
    %2071 = vmatprep.subr.bf16.mxu0 0
    %2072 = vmatpush1.bf16.msra.mxu0 0
    %2073 = vmatprep.subr.bf16.mxu0 0
    %2074 = vmatpush1.bf16.msra.mxu0 0
    %2075 = vmatprep.subr.bf16.mxu0 0
    %2076 = vmatpush1.bf16.msra.mxu0 0
    %2077 = vmatprep.subr.bf16.mxu0 0
    %2078 = vmatpush1.bf16.msra.mxu0 0
    %2079 = vmatprep.subr.bf16.mxu0 0
    %2080 = vmatpush1.bf16.msra.mxu0 0
    %2081 = vmatprep.subr.bf16.mxu0 0
    %2082 = vmatpush1.bf16.msra.mxu0 0
    %2083 = vmatprep.subr.bf16.mxu0 0
    %2084 = vmatpush1.bf16.msra.mxu0 0
    %2085 = vmatprep.subr.bf16.mxu0 0
    %2086 = vmatpush1.bf16.msra.mxu0 %v2069
    %2087 = vmatprep.subr.bf16.mxu0 0
    %2088 = vmatpush2.bf16.msra.mxu0 0
    %2089 = vmatprep.subr.bf16.mxu0 0
    %2090 = vmatpush2.bf16.msra.mxu0 0
    %2091 = vmatprep.subr.bf16.mxu0 0
    %2092 = vmatpush2.bf16.msra.mxu0 0
    %2093 = vmatprep.subr.bf16.mxu0 0
    %2094 = vmatpush2.bf16.msra.mxu0 0
    %2095 = vmatprep.subr.bf16.mxu0 0
    %2096 = vmatpush2.bf16.msra.mxu0 0
    %2097 = vmatprep.subr.bf16.mxu0 0
    %2098 = vmatpush2.bf16.msra.mxu0 0
    %2099 = vmatprep.subr.bf16.mxu0 0
    %2100 = vmatpush2.bf16.msra.mxu0 0
    %2101 = vmatprep.subr.bf16.mxu0 0
    %2102 = vmatpush2.bf16.msra.mxu0 0
    %2103 = vmatprep.mubr.bf16.mxu0 0
    %2104 = vmatmul.mubr.bf16.gmra.mxu0 %v2045
    %v2105 = vpop.f32.mrf.mxu0
    %v2106 = vadd.f32 0.0, %v2105
    %v2107 = vpop.f32.mrf.mxu0
    %v2108 = vpop.f32.mrf.mxu0
    %v2109 = vadd.f32 0.0, %v2108
    %v2110 = vpop.f32.mrf.mxu0
    %2111 = vmatprep.mubr.bf16.mxu0 0
    %2112 = vmatmul.mubr.bf16.gmra.mxu0 %v2048
    %v2113 = vpop.f32.mrf.mxu0
    %v2114 = vadd.f32 0.0, %v2113
    %v2115 = vpop.f32.mrf.mxu0
    %v2116 = vpop.f32.mrf.mxu0
    %v2117 = vadd.f32 0.0, %v2116
    %v2118 = vpop.f32.mrf.mxu0
    %2119 = vmatprep.mubr.bf16.mxu0 0
    %2120 = vmatmul.mubr.bf16.gmra.mxu0 %v2051
    %v2121 = vpop.f32.mrf.mxu0
    %v2122 = vadd.f32 0.0, %v2121
    %v2123 = vpop.f32.mrf.mxu0
    %v2124 = vpop.f32.mrf.mxu0
    %v2125 = vadd.f32 0.0, %v2124
    %v2126 = vpop.f32.mrf.mxu0
    %2127 = vmatprep.mubr.bf16.mxu0 0
    %2128 = vmatmul.mubr.bf16.gmra.mxu0 %v2054
    %v2129 = vpop.f32.mrf.mxu0
    %v2130 = vadd.f32 0.0, %v2129
    %v2131 = vpop.f32.mrf.mxu0
    %v2132 = vpop.f32.mrf.mxu0
    %v2133 = vadd.f32 0.0, %v2132
    %v2134 = vpop.f32.mrf.mxu0
    %2135 = vmatprep.mubr.bf16.mxu0 0
    %2136 = vmatmul.mubr.bf16.gmra.mxu0 %v2057
    %v2137 = vpop.f32.mrf.mxu0
    %v2138 = vadd.f32 0.0, %v2137
    %v2139 = vpop.f32.mrf.mxu0
    %v2140 = vpop.f32.mrf.mxu0
    %v2141 = vadd.f32 0.0, %v2140
    %v2142 = vpop.f32.mrf.mxu0
    %2143 = vmatprep.mubr.bf16.mxu0 0
    %2144 = vmatmul.mubr.bf16.gmra.mxu0 %v2060
    %v2145 = vpop.f32.mrf.mxu0
    %v2146 = vadd.f32 0.0, %v2145
    %v2147 = vpop.f32.mrf.mxu0
    %v2148 = vpop.f32.mrf.mxu0
    %v2149 = vadd.f32 0.0, %v2148
    %v2150 = vpop.f32.mrf.mxu0
    %2151 = vmatprep.mubr.bf16.mxu0 0
    %2152 = vmatmul.mubr.bf16.gmra.mxu0 %v2063
    %v2153 = vpop.f32.mrf.mxu0
    %v2154 = vadd.f32 0.0, %v2153
    %v2155 = vpop.f32.mrf.mxu0
    %v2156 = vpop.f32.mrf.mxu0
    %v2157 = vadd.f32 0.0, %v2156
    %v2158 = vpop.f32.mrf.mxu0
    %2159 = vmatprep.mubr.bf16.mxu0 0
    %2160 = vmatmul.mubr.bf16.gmra.mxu0 %v2066
    %v2161 = vpop.f32.mrf.mxu0
    %v2162 = vadd.f32 0.0, %v2161
    %v2163 = vpop.f32.mrf.mxu0
    %v2164 = vpop.f32.mrf.mxu0
    %v2165 = vadd.f32 0.0, %v2164
    %v2166 = vpop.f32.mrf.mxu0
    %2167 = vdwg.mxu0
    %v2168 = vadd.f32 %v1956, %v2106
    %v2169 = vadd.f32 %v1959, %v2109
    %v2170 = vadd.f32 %v1964, %v2114
    %v2171 = vadd.f32 %v1967, %v2117
    %v2172 = vadd.f32 %v1972, %v2122
    %v2173 = vadd.f32 %v1975, %v2125
    %v2174 = vadd.f32 %v1980, %v2130
    %v2175 = vadd.f32 %v1983, %v2133
    %v2176 = vadd.f32 %v1988, %v2138
    %v2177 = vadd.f32 %v1991, %v2141
    %v2178 = vadd.f32 %v1996, %v2146
    %v2179 = vadd.f32 %v1999, %v2149
    %v2180 = vadd.f32 %v2004, %v2154
    %v2181 = vadd.f32 %v2007, %v2157
    %v2182 = vadd.f32 %v2012, %v2162
    %v2183 = vadd.f32 %v2015, %v2165
    %v2184 = vld [vmem:[#allocation2 + $0x6] sm:$0xff]
    %v2185 = vld [vmem:[#allocation2 + $0xe] sm:$0xff]
    %v2186 = vld [vmem:[#allocation2 + $0x1e] sm:$0xff]
    %v2187 = vld [vmem:[#allocation2 + $0x26] sm:$0xff]
    %v2188 = vld [vmem:[#allocation2 + $0x36] sm:$0xff]
    %v2189 = vld [vmem:[#allocation2 + $0x3e] sm:$0xff]
    %v2190 = vld [vmem:[#allocation2 + $0x4e] sm:$0xff]
    %v2191 = vld [vmem:[#allocation2 + $0x56] sm:$0xff]
    %v2192 = vld [vmem:[#allocation2 + $0x66] sm:$0xff]
    %v2193 = vld [vmem:[#allocation2 + $0x6e] sm:$0xff]
    %v2194 = vld [vmem:[#allocation2 + $0x7e] sm:$0xff]
    %v2195 = vld [vmem:[#allocation2 + $0x86] sm:$0xff]
    %v2196 = vld [vmem:[#allocation2 + $0x96] sm:$0xff]
    %v2197 = vld [vmem:[#allocation2 + $0x9e] sm:$0xff]
    %v2198 = vld [vmem:[#allocation2 + $0xae] sm:$0xff]
    %v2199 = vld [vmem:[#allocation2 + $0xb6] sm:$0xff]
    %v2200 = vpack.c.bf16 %v2185, %v2184
    %v2201 = vpack.c.bf16 %v2187, %v2186
    %v2202 = vpack.c.bf16 %v2189, %v2188
    %v2203 = vpack.c.bf16 %v2191, %v2190
    %v2204 = vpack.c.bf16 %v2193, %v2192
    %v2205 = vpack.c.bf16 %v2195, %v2194
    %v2206 = vpack.c.bf16 %v2197, %v2196
    %v2207 = vpack.c.bf16 %v2199, %v2198
    %s2208 = scalar_lea.vmem %s3, 12
    %v2209 = vld [vmem:[%s2208] sm:$0x7]
    %v2211 = vsel %vm1681, %v2200, 0
    %v2214 = vsel %vm1681, %v2201, 0
    %v2217 = vsel %vm1681, %v2202, 0
    %v2220 = vsel %vm1681, %v2203, 0
    %v2223 = vsel %vm1681, %v2204, 0
    %v2226 = vsel %vm1681, %v2205, 0
    %v2229 = vsel %vm1681, %v2206, 0
    %v2232 = vsel %vm1681, %v2207, 0
    %v2235 = vsel %vm1793, %v2209, 0
    %2237 = vmatprep.subr.bf16.mxu0 0
    %2238 = vmatpush1.bf16.msra.mxu0 0
    %2239 = vmatprep.subr.bf16.mxu0 0
    %2240 = vmatpush1.bf16.msra.mxu0 0
    %2241 = vmatprep.subr.bf16.mxu0 0
    %2242 = vmatpush1.bf16.msra.mxu0 0
    %2243 = vmatprep.subr.bf16.mxu0 0
    %2244 = vmatpush1.bf16.msra.mxu0 0
    %2245 = vmatprep.subr.bf16.mxu0 0
    %2246 = vmatpush1.bf16.msra.mxu0 0
    %2247 = vmatprep.subr.bf16.mxu0 0
    %2248 = vmatpush1.bf16.msra.mxu0 0
    %2249 = vmatprep.subr.bf16.mxu0 0
    %2250 = vmatpush1.bf16.msra.mxu0 0
    %2251 = vmatprep.subr.bf16.mxu0 0
    %2252 = vmatpush1.bf16.msra.mxu0 %v2235
    %2253 = vmatprep.subr.bf16.mxu0 0
    %2254 = vmatpush2.bf16.msra.mxu0 0
    %2255 = vmatprep.subr.bf16.mxu0 0
    %2256 = vmatpush2.bf16.msra.mxu0 0
    %2257 = vmatprep.subr.bf16.mxu0 0
    %2258 = vmatpush2.bf16.msra.mxu0 0
    %2259 = vmatprep.subr.bf16.mxu0 0
    %2260 = vmatpush2.bf16.msra.mxu0 0
    %2261 = vmatprep.subr.bf16.mxu0 0
    %2262 = vmatpush2.bf16.msra.mxu0 0
    %2263 = vmatprep.subr.bf16.mxu0 0
    %2264 = vmatpush2.bf16.msra.mxu0 0
    %2265 = vmatprep.subr.bf16.mxu0 0
    %2266 = vmatpush2.bf16.msra.mxu0 0
    %2267 = vmatprep.subr.bf16.mxu0 0
    %2268 = vmatpush2.bf16.msra.mxu0 0
    %2269 = vmatprep.mubr.bf16.mxu0 0
    %2270 = vmatmul.mubr.bf16.gmra.mxu0 %v2211
    %v2271 = vpop.f32.mrf.mxu0
    %v2272 = vadd.f32 0.0, %v2271
    %v2273 = vpop.f32.mrf.mxu0
    %v2274 = vpop.f32.mrf.mxu0
    %v2275 = vadd.f32 0.0, %v2274
    %v2276 = vpop.f32.mrf.mxu0
    %2277 = vmatprep.mubr.bf16.mxu0 0
    %2278 = vmatmul.mubr.bf16.gmra.mxu0 %v2214
    %v2279 = vpop.f32.mrf.mxu0
    %v2280 = vadd.f32 0.0, %v2279
    %v2281 = vpop.f32.mrf.mxu0
    %v2282 = vpop.f32.mrf.mxu0
    %v2283 = vadd.f32 0.0, %v2282
    %v2284 = vpop.f32.mrf.mxu0
    %2285 = vmatprep.mubr.bf16.mxu0 0
    %2286 = vmatmul.mubr.bf16.gmra.mxu0 %v2217
    %v2287 = vpop.f32.mrf.mxu0
    %v2288 = vadd.f32 0.0, %v2287
    %v2289 = vpop.f32.mrf.mxu0
    %v2290 = vpop.f32.mrf.mxu0
    %v2291 = vadd.f32 0.0, %v2290
    %v2292 = vpop.f32.mrf.mxu0
    %2293 = vmatprep.mubr.bf16.mxu0 0
    %2294 = vmatmul.mubr.bf16.gmra.mxu0 %v2220
    %v2295 = vpop.f32.mrf.mxu0
    %v2296 = vadd.f32 0.0, %v2295
    %v2297 = vpop.f32.mrf.mxu0
    %v2298 = vpop.f32.mrf.mxu0
    %v2299 = vadd.f32 0.0, %v2298
    %v2300 = vpop.f32.mrf.mxu0
    %2301 = vmatprep.mubr.bf16.mxu0 0
    %2302 = vmatmul.mubr.bf16.gmra.mxu0 %v2223
    %v2303 = vpop.f32.mrf.mxu0
    %v2304 = vadd.f32 0.0, %v2303
    %v2305 = vpop.f32.mrf.mxu0
    %v2306 = vpop.f32.mrf.mxu0
    %v2307 = vadd.f32 0.0, %v2306
    %v2308 = vpop.f32.mrf.mxu0
    %2309 = vmatprep.mubr.bf16.mxu0 0
    %2310 = vmatmul.mubr.bf16.gmra.mxu0 %v2226
    %v2311 = vpop.f32.mrf.mxu0
    %v2312 = vadd.f32 0.0, %v2311
    %v2313 = vpop.f32.mrf.mxu0
    %v2314 = vpop.f32.mrf.mxu0
    %v2315 = vadd.f32 0.0, %v2314
    %v2316 = vpop.f32.mrf.mxu0
    %2317 = vmatprep.mubr.bf16.mxu0 0
    %2318 = vmatmul.mubr.bf16.gmra.mxu0 %v2229
    %v2319 = vpop.f32.mrf.mxu0
    %v2320 = vadd.f32 0.0, %v2319
    %v2321 = vpop.f32.mrf.mxu0
    %v2322 = vpop.f32.mrf.mxu0
    %v2323 = vadd.f32 0.0, %v2322
    %v2324 = vpop.f32.mrf.mxu0
    %2325 = vmatprep.mubr.bf16.mxu0 0
    %2326 = vmatmul.mubr.bf16.gmra.mxu0 %v2232
    %v2327 = vpop.f32.mrf.mxu0
    %v2328 = vadd.f32 0.0, %v2327
    %v2329 = vpop.f32.mrf.mxu0
    %v2330 = vpop.f32.mrf.mxu0
    %v2331 = vadd.f32 0.0, %v2330
    %v2332 = vpop.f32.mrf.mxu0
    %2333 = vdwg.mxu0
    %v2334 = vadd.f32 %v2168, %v2272
    %v2335 = vadd.f32 %v2169, %v2275
    %v2336 = vadd.f32 %v2170, %v2280
    %v2337 = vadd.f32 %v2171, %v2283
    %v2338 = vadd.f32 %v2172, %v2288
    %v2339 = vadd.f32 %v2173, %v2291
    %v2340 = vadd.f32 %v2174, %v2296
    %v2341 = vadd.f32 %v2175, %v2299
    %v2342 = vadd.f32 %v2176, %v2304
    %v2343 = vadd.f32 %v2177, %v2307
    %v2344 = vadd.f32 %v2178, %v2312
    %v2345 = vadd.f32 %v2179, %v2315
    %v2346 = vadd.f32 %v2180, %v2320
    %v2347 = vadd.f32 %v2181, %v2323
    %v2348 = vadd.f32 %v2182, %v2328
    %v2349 = vadd.f32 %v2183, %v2331
    %v2350 = vld [vmem:[#allocation2 + $0x8] sm:$0xff]
    %v2351 = vld [vmem:[#allocation2 + $0x10] sm:$0xff]
    %v2352 = vld [vmem:[#allocation2 + $0x20] sm:$0xff]
    %v2353 = vld [vmem:[#allocation2 + $0x28] sm:$0xff]
    %v2354 = vld [vmem:[#allocation2 + $0x38] sm:$0xff]
    %v2355 = vld [vmem:[#allocation2 + $0x40] sm:$0xff]
    %v2356 = vld [vmem:[#allocation2 + $0x50] sm:$0xff]
    %v2357 = vld [vmem:[#allocation2 + $0x58] sm:$0xff]
    %v2358 = vld [vmem:[#allocation2 + $0x68] sm:$0xff]
    %v2359 = vld [vmem:[#allocation2 + $0x70] sm:$0xff]
    %v2360 = vld [vmem:[#allocation2 + $0x80] sm:$0xff]
    %v2361 = vld [vmem:[#allocation2 + $0x88] sm:$0xff]
    %v2362 = vld [vmem:[#allocation2 + $0x98] sm:$0xff]
    %v2363 = vld [vmem:[#allocation2 + $0xa0] sm:$0xff]
    %v2364 = vld [vmem:[#allocation2 + $0xb0] sm:$0xff]
    %v2365 = vld [vmem:[#allocation2 + $0xb8] sm:$0xff]
    %v2366 = vpack.c.bf16 %v2351, %v2350
    %v2367 = vpack.c.bf16 %v2353, %v2352
    %v2368 = vpack.c.bf16 %v2355, %v2354
    %v2369 = vpack.c.bf16 %v2357, %v2356
    %v2370 = vpack.c.bf16 %v2359, %v2358
    %v2371 = vpack.c.bf16 %v2361, %v2360
    %v2372 = vpack.c.bf16 %v2363, %v2362
    %v2373 = vpack.c.bf16 %v2365, %v2364
    %s2374 = scalar_lea.vmem %s3, 16
    %v2375 = vld [vmem:[%s2374] sm:$0x7]
    %v2377 = vsel %vm1681, %v2366, 0
    %v2380 = vsel %vm1681, %v2367, 0
    %v2383 = vsel %vm1681, %v2368, 0
    %v2386 = vsel %vm1681, %v2369, 0
    %v2389 = vsel %vm1681, %v2370, 0
    %v2392 = vsel %vm1681, %v2371, 0
    %v2395 = vsel %vm1681, %v2372, 0
    %v2398 = vsel %vm1681, %v2373, 0
    %v2401 = vsel %vm1793, %v2375, 0
    %2403 = vmatprep.subr.bf16.mxu0 0
    %2404 = vmatpush1.bf16.msra.mxu0 0
    %2405 = vmatprep.subr.bf16.mxu0 0
    %2406 = vmatpush1.bf16.msra.mxu0 0
    %2407 = vmatprep.subr.bf16.mxu0 0
    %2408 = vmatpush1.bf16.msra.mxu0 0
    %2409 = vmatprep.subr.bf16.mxu0 0
    %2410 = vmatpush1.bf16.msra.mxu0 0
    %2411 = vmatprep.subr.bf16.mxu0 0
    %2412 = vmatpush1.bf16.msra.mxu0 0
    %2413 = vmatprep.subr.bf16.mxu0 0
    %2414 = vmatpush1.bf16.msra.mxu0 0
    %2415 = vmatprep.subr.bf16.mxu0 0
    %2416 = vmatpush1.bf16.msra.mxu0 0
    %2417 = vmatprep.subr.bf16.mxu0 0
    %2418 = vmatpush1.bf16.msra.mxu0 %v2401
    %2419 = vmatprep.subr.bf16.mxu0 0
    %2420 = vmatpush2.bf16.msra.mxu0 0
    %2421 = vmatprep.subr.bf16.mxu0 0
    %2422 = vmatpush2.bf16.msra.mxu0 0
    %2423 = vmatprep.subr.bf16.mxu0 0
    %2424 = vmatpush2.bf16.msra.mxu0 0
    %2425 = vmatprep.subr.bf16.mxu0 0
    %2426 = vmatpush2.bf16.msra.mxu0 0
    %2427 = vmatprep.subr.bf16.mxu0 0
    %2428 = vmatpush2.bf16.msra.mxu0 0
    %2429 = vmatprep.subr.bf16.mxu0 0
    %2430 = vmatpush2.bf16.msra.mxu0 0
    %2431 = vmatprep.subr.bf16.mxu0 0
    %2432 = vmatpush2.bf16.msra.mxu0 0
    %2433 = vmatprep.subr.bf16.mxu0 0
    %2434 = vmatpush2.bf16.msra.mxu0 0
    %2435 = vmatprep.mubr.bf16.mxu0 0
    %2436 = vmatmul.mubr.bf16.gmra.mxu0 %v2377
    %v2437 = vpop.f32.mrf.mxu0
    %v2438 = vadd.f32 0.0, %v2437
    %v2439 = vpop.f32.mrf.mxu0
    %v2440 = vpop.f32.mrf.mxu0
    %v2441 = vadd.f32 0.0, %v2440
    %v2442 = vpop.f32.mrf.mxu0
    %2443 = vmatprep.mubr.bf16.mxu0 0
    %2444 = vmatmul.mubr.bf16.gmra.mxu0 %v2380
    %v2445 = vpop.f32.mrf.mxu0
    %v2446 = vadd.f32 0.0, %v2445
    %v2447 = vpop.f32.mrf.mxu0
    %v2448 = vpop.f32.mrf.mxu0
    %v2449 = vadd.f32 0.0, %v2448
    %v2450 = vpop.f32.mrf.mxu0
    %2451 = vmatprep.mubr.bf16.mxu0 0
    %2452 = vmatmul.mubr.bf16.gmra.mxu0 %v2383
    %v2453 = vpop.f32.mrf.mxu0
    %v2454 = vadd.f32 0.0, %v2453
    %v2455 = vpop.f32.mrf.mxu0
    %v2456 = vpop.f32.mrf.mxu0
    %v2457 = vadd.f32 0.0, %v2456
    %v2458 = vpop.f32.mrf.mxu0
    %2459 = vmatprep.mubr.bf16.mxu0 0
    %2460 = vmatmul.mubr.bf16.gmra.mxu0 %v2386
    %v2461 = vpop.f32.mrf.mxu0
    %v2462 = vadd.f32 0.0, %v2461
    %v2463 = vpop.f32.mrf.mxu0
    %v2464 = vpop.f32.mrf.mxu0
    %v2465 = vadd.f32 0.0, %v2464
    %v2466 = vpop.f32.mrf.mxu0
    %2467 = vmatprep.mubr.bf16.mxu0 0
    %2468 = vmatmul.mubr.bf16.gmra.mxu0 %v2389
    %v2469 = vpop.f32.mrf.mxu0
    %v2470 = vadd.f32 0.0, %v2469
    %v2471 = vpop.f32.mrf.mxu0
    %v2472 = vpop.f32.mrf.mxu0
    %v2473 = vadd.f32 0.0, %v2472
    %v2474 = vpop.f32.mrf.mxu0
    %2475 = vmatprep.mubr.bf16.mxu0 0
    %2476 = vmatmul.mubr.bf16.gmra.mxu0 %v2392
    %v2477 = vpop.f32.mrf.mxu0
    %v2478 = vadd.f32 0.0, %v2477
    %v2479 = vpop.f32.mrf.mxu0
    %v2480 = vpop.f32.mrf.mxu0
    %v2481 = vadd.f32 0.0, %v2480
    %v2482 = vpop.f32.mrf.mxu0
    %2483 = vmatprep.mubr.bf16.mxu0 0
    %2484 = vmatmul.mubr.bf16.gmra.mxu0 %v2395
    %v2485 = vpop.f32.mrf.mxu0
    %v2486 = vadd.f32 0.0, %v2485
    %v2487 = vpop.f32.mrf.mxu0
    %v2488 = vpop.f32.mrf.mxu0
    %v2489 = vadd.f32 0.0, %v2488
    %v2490 = vpop.f32.mrf.mxu0
    %2491 = vmatprep.mubr.bf16.mxu0 0
    %2492 = vmatmul.mubr.bf16.gmra.mxu0 %v2398
    %v2493 = vpop.f32.mrf.mxu0
    %v2494 = vadd.f32 0.0, %v2493
    %v2495 = vpop.f32.mrf.mxu0
    %v2496 = vpop.f32.mrf.mxu0
    %v2497 = vadd.f32 0.0, %v2496
    %v2498 = vpop.f32.mrf.mxu0
    %2499 = vdwg.mxu0
    %v2500 = vadd.f32 %v2334, %v2438
    %v2501 = vadd.f32 %v2335, %v2441
    %v2502 = vadd.f32 %v2336, %v2446
    %v2503 = vadd.f32 %v2337, %v2449
    %v2504 = vadd.f32 %v2338, %v2454
    %v2505 = vadd.f32 %v2339, %v2457
    %v2506 = vadd.f32 %v2340, %v2462
    %v2507 = vadd.f32 %v2341, %v2465
    %v2508 = vadd.f32 %v2342, %v2470
    %v2509 = vadd.f32 %v2343, %v2473
    %v2510 = vadd.f32 %v2344, %v2478
    %v2511 = vadd.f32 %v2345, %v2481
    %v2512 = vadd.f32 %v2346, %v2486
    %v2513 = vadd.f32 %v2347, %v2489
    %v2514 = vadd.f32 %v2348, %v2494
    %v2515 = vadd.f32 %v2349, %v2497
    %s2516 = scalar_lea.vmem [#allocation2], 24
    %v2517 = vld [vmem:[%s2516] sm:$0xff]
    %v2518 = vld [vmem:[%s2516 + $0x8] sm:$0xff]
    %v2519 = vld [vmem:[%s2516 + $0x18] sm:$0xff]
    %v2520 = vld [vmem:[%s2516 + $0x20] sm:$0xff]
    %v2521 = vld [vmem:[%s2516 + $0x30] sm:$0xff]
    %v2522 = vld [vmem:[%s2516 + $0x38] sm:$0xff]
    %v2523 = vld [vmem:[%s2516 + $0x48] sm:$0xff]
    %v2524 = vld [vmem:[%s2516 + $0x50] sm:$0xff]
    %v2525 = vld [vmem:[%s2516 + $0x60] sm:$0xff]
    %v2526 = vld [vmem:[%s2516 + $0x68] sm:$0xff]
    %v2527 = vld [vmem:[%s2516 + $0x78] sm:$0xff]
    %v2528 = vld [vmem:[%s2516 + $0x80] sm:$0xff]
    %v2529 = vld [vmem:[%s2516 + $0x90] sm:$0xff]
    %v2530 = vld [vmem:[%s2516 + $0x98] sm:$0xff]
    %v2531 = vld [vmem:[%s2516 + $0xa8] sm:$0xff]
    %v2532 = vld [vmem:[%s2516 + $0xb0] sm:$0xff]
    %v2533 = vpack.c.bf16 %v2518, %v2517
    %v2534 = vpack.c.bf16 %v2520, %v2519
    %v2535 = vpack.c.bf16 %v2522, %v2521
    %v2536 = vpack.c.bf16 %v2524, %v2523
    %v2537 = vpack.c.bf16 %v2526, %v2525
    %v2538 = vpack.c.bf16 %v2528, %v2527
    %v2539 = vpack.c.bf16 %v2530, %v2529
    %v2540 = vpack.c.bf16 %v2532, %v2531
    %s2541 = scalar_lea.vmem %s3, 20
    %v2542 = vld [vmem:[%s2541] sm:$0x7]
    %v2544 = vsel %vm1681, %v2533, 0
    %v2547 = vsel %vm1681, %v2534, 0
    %v2550 = vsel %vm1681, %v2535, 0
    %v2553 = vsel %vm1681, %v2536, 0
    %v2556 = vsel %vm1681, %v2537, 0
    %v2559 = vsel %vm1681, %v2538, 0
    %v2562 = vsel %vm1681, %v2539, 0
    %v2565 = vsel %vm1681, %v2540, 0
    %v2568 = vsel %vm1793, %v2542, 0
    %2570 = vmatprep.subr.bf16.mxu0 0
    %2571 = vmatpush1.bf16.msra.mxu0 0
    %2572 = vmatprep.subr.bf16.mxu0 0
    %2573 = vmatpush1.bf16.msra.mxu0 0
    %2574 = vmatprep.subr.bf16.mxu0 0
    %2575 = vmatpush1.bf16.msra.mxu0 0
    %2576 = vmatprep.subr.bf16.mxu0 0
    %2577 = vmatpush1.bf16.msra.mxu0 0
    %2578 = vmatprep.subr.bf16.mxu0 0
    %2579 = vmatpush1.bf16.msra.mxu0 0
    %2580 = vmatprep.subr.bf16.mxu0 0
    %2581 = vmatpush1.bf16.msra.mxu0 0
    %2582 = vmatprep.subr.bf16.mxu0 0
    %2583 = vmatpush1.bf16.msra.mxu0 0
    %2584 = vmatprep.subr.bf16.mxu0 0
    %2585 = vmatpush1.bf16.msra.mxu0 %v2568
    %2586 = vmatprep.subr.bf16.mxu0 0
    %2587 = vmatpush2.bf16.msra.mxu0 0
    %2588 = vmatprep.subr.bf16.mxu0 0
    %2589 = vmatpush2.bf16.msra.mxu0 0
    %2590 = vmatprep.subr.bf16.mxu0 0
    %2591 = vmatpush2.bf16.msra.mxu0 0
    %2592 = vmatprep.subr.bf16.mxu0 0
    %2593 = vmatpush2.bf16.msra.mxu0 0
    %2594 = vmatprep.subr.bf16.mxu0 0
    %2595 = vmatpush2.bf16.msra.mxu0 0
    %2596 = vmatprep.subr.bf16.mxu0 0
    %2597 = vmatpush2.bf16.msra.mxu0 0
    %2598 = vmatprep.subr.bf16.mxu0 0
    %2599 = vmatpush2.bf16.msra.mxu0 0
    %2600 = vmatprep.subr.bf16.mxu0 0
    %2601 = vmatpush2.bf16.msra.mxu0 0
    %2602 = vmatprep.mubr.bf16.mxu0 0
    %2603 = vmatmul.mubr.bf16.gmra.mxu0 %v2544
    %v2604 = vpop.f32.mrf.mxu0
    %v2605 = vadd.f32 0.0, %v2604
    %v2606 = vpop.f32.mrf.mxu0
    %v2607 = vpop.f32.mrf.mxu0
    %v2608 = vadd.f32 0.0, %v2607
    %v2609 = vpop.f32.mrf.mxu0
    %2610 = vmatprep.mubr.bf16.mxu0 0
    %2611 = vmatmul.mubr.bf16.gmra.mxu0 %v2547
    %v2612 = vpop.f32.mrf.mxu0
    %v2613 = vadd.f32 0.0, %v2612
    %v2614 = vpop.f32.mrf.mxu0
    %v2615 = vpop.f32.mrf.mxu0
    %v2616 = vadd.f32 0.0, %v2615
    %v2617 = vpop.f32.mrf.mxu0
    %2618 = vmatprep.mubr.bf16.mxu0 0
    %2619 = vmatmul.mubr.bf16.gmra.mxu0 %v2550
    %v2620 = vpop.f32.mrf.mxu0
    %v2621 = vadd.f32 0.0, %v2620
    %v2622 = vpop.f32.mrf.mxu0
    %v2623 = vpop.f32.mrf.mxu0
    %v2624 = vadd.f32 0.0, %v2623
    %v2625 = vpop.f32.mrf.mxu0
    %2626 = vmatprep.mubr.bf16.mxu0 0
    %2627 = vmatmul.mubr.bf16.gmra.mxu0 %v2553
    %v2628 = vpop.f32.mrf.mxu0
    %v2629 = vadd.f32 0.0, %v2628
    %v2630 = vpop.f32.mrf.mxu0
    %v2631 = vpop.f32.mrf.mxu0
    %v2632 = vadd.f32 0.0, %v2631
    %v2633 = vpop.f32.mrf.mxu0
    %2634 = vmatprep.mubr.bf16.mxu0 0
    %2635 = vmatmul.mubr.bf16.gmra.mxu0 %v2556
    %v2636 = vpop.f32.mrf.mxu0
    %v2637 = vadd.f32 0.0, %v2636
    %v2638 = vpop.f32.mrf.mxu0
    %v2639 = vpop.f32.mrf.mxu0
    %v2640 = vadd.f32 0.0, %v2639
    %v2641 = vpop.f32.mrf.mxu0
    %2642 = vmatprep.mubr.bf16.mxu0 0
    %2643 = vmatmul.mubr.bf16.gmra.mxu0 %v2559
    %v2644 = vpop.f32.mrf.mxu0
    %v2645 = vadd.f32 0.0, %v2644
    %v2646 = vpop.f32.mrf.mxu0
    %v2647 = vpop.f32.mrf.mxu0
    %v2648 = vadd.f32 0.0, %v2647
    %v2649 = vpop.f32.mrf.mxu0
    %2650 = vmatprep.mubr.bf16.mxu0 0
    %2651 = vmatmul.mubr.bf16.gmra.mxu0 %v2562
    %v2652 = vpop.f32.mrf.mxu0
    %v2653 = vadd.f32 0.0, %v2652
    %v2654 = vpop.f32.mrf.mxu0
    %v2655 = vpop.f32.mrf.mxu0
    %v2656 = vadd.f32 0.0, %v2655
    %v2657 = vpop.f32.mrf.mxu0
    %2658 = vmatprep.mubr.bf16.mxu0 0
    %2659 = vmatmul.mubr.bf16.gmra.mxu0 %v2565
    %v2660 = vpop.f32.mrf.mxu0
    %v2661 = vadd.f32 0.0, %v2660
    %v2662 = vpop.f32.mrf.mxu0
    %v2663 = vpop.f32.mrf.mxu0
    %v2664 = vadd.f32 0.0, %v2663
    %v2665 = vpop.f32.mrf.mxu0
    %2666 = vdwg.mxu0
    %v2667 = vadd.f32 %v2500, %v2605
    %v2668 = vadd.f32 %v2501, %v2608
    %v2669 = vadd.f32 %v2502, %v2613
    %v2670 = vadd.f32 %v2503, %v2616
    %v2671 = vadd.f32 %v2504, %v2621
    %v2672 = vadd.f32 %v2505, %v2624
    %v2673 = vadd.f32 %v2506, %v2629
    %v2674 = vadd.f32 %v2507, %v2632
    %v2675 = vadd.f32 %v2508, %v2637
    %v2676 = vadd.f32 %v2509, %v2640
    %v2677 = vadd.f32 %v2510, %v2645
    %v2678 = vadd.f32 %v2511, %v2648
    %v2679 = vadd.f32 %v2512, %v2653
    %v2680 = vadd.f32 %v2513, %v2656
    %v2681 = vadd.f32 %v2514, %v2661
    %v2682 = vadd.f32 %v2515, %v2664
    %v2683 = vld [vmem:[%s2516 + $0x2] sm:$0xff]
    %v2684 = vld [vmem:[%s2516 + $0xa] sm:$0xff]
    %v2685 = vld [vmem:[%s2516 + $0x1a] sm:$0xff]
    %v2686 = vld [vmem:[%s2516 + $0x22] sm:$0xff]
    %v2687 = vld [vmem:[%s2516 + $0x32] sm:$0xff]
    %v2688 = vld [vmem:[%s2516 + $0x3a] sm:$0xff]
    %v2689 = vld [vmem:[%s2516 + $0x4a] sm:$0xff]
    %v2690 = vld [vmem:[%s2516 + $0x52] sm:$0xff]
    %v2691 = vld [vmem:[%s2516 + $0x62] sm:$0xff]
    %v2692 = vld [vmem:[%s2516 + $0x6a] sm:$0xff]
    %v2693 = vld [vmem:[%s2516 + $0x7a] sm:$0xff]
    %v2694 = vld [vmem:[%s2516 + $0x82] sm:$0xff]
    %v2695 = vld [vmem:[%s2516 + $0x92] sm:$0xff]
    %v2696 = vld [vmem:[%s2516 + $0x9a] sm:$0xff]
    %v2697 = vld [vmem:[%s2516 + $0xaa] sm:$0xff]
    %v2698 = vld [vmem:[%s2516 + $0xb2] sm:$0xff]
    %v2699 = vpack.c.bf16 %v2684, %v2683
    %v2700 = vpack.c.bf16 %v2686, %v2685
    %v2701 = vpack.c.bf16 %v2688, %v2687
    %v2702 = vpack.c.bf16 %v2690, %v2689
    %v2703 = vpack.c.bf16 %v2692, %v2691
    %v2704 = vpack.c.bf16 %v2694, %v2693
    %v2705 = vpack.c.bf16 %v2696, %v2695
    %v2706 = vpack.c.bf16 %v2698, %v2697
    %s2707 = scalar_lea.vmem %s3, 24
    %v2708 = vld [vmem:[%s2707] sm:$0x7]
    %v2710 = vsel %vm1681, %v2699, 0
    %v2713 = vsel %vm1681, %v2700, 0
    %v2716 = vsel %vm1681, %v2701, 0
    %v2719 = vsel %vm1681, %v2702, 0
    %v2722 = vsel %vm1681, %v2703, 0
    %v2725 = vsel %vm1681, %v2704, 0
    %v2728 = vsel %vm1681, %v2705, 0
    %v2731 = vsel %vm1681, %v2706, 0
    %v2734 = vsel %vm1793, %v2708, 0
    %2736 = vmatprep.subr.bf16.mxu0 0
    %2737 = vmatpush1.bf16.msra.mxu0 0
    %2738 = vmatprep.subr.bf16.mxu0 0
    %2739 = vmatpush1.bf16.msra.mxu0 0
    %2740 = vmatprep.subr.bf16.mxu0 0
    %2741 = vmatpush1.bf16.msra.mxu0 0
    %2742 = vmatprep.subr.bf16.mxu0 0
    %2743 = vmatpush1.bf16.msra.mxu0 0
    %2744 = vmatprep.subr.bf16.mxu0 0
    %2745 = vmatpush1.bf16.msra.mxu0 0
    %2746 = vmatprep.subr.bf16.mxu0 0
    %2747 = vmatpush1.bf16.msra.mxu0 0
    %2748 = vmatprep.subr.bf16.mxu0 0
    %2749 = vmatpush1.bf16.msra.mxu0 0
    %2750 = vmatprep.subr.bf16.mxu0 0
    %2751 = vmatpush1.bf16.msra.mxu0 %v2734
    %2752 = vmatprep.subr.bf16.mxu0 0
    %2753 = vmatpush2.bf16.msra.mxu0 0
    %2754 = vmatprep.subr.bf16.mxu0 0
    %2755 = vmatpush2.bf16.msra.mxu0 0
    %2756 = vmatprep.subr.bf16.mxu0 0
    %2757 = vmatpush2.bf16.msra.mxu0 0
    %2758 = vmatprep.subr.bf16.mxu0 0
    %2759 = vmatpush2.bf16.msra.mxu0 0
    %2760 = vmatprep.subr.bf16.mxu0 0
    %2761 = vmatpush2.bf16.msra.mxu0 0
    %2762 = vmatprep.subr.bf16.mxu0 0
    %2763 = vmatpush2.bf16.msra.mxu0 0
    %2764 = vmatprep.subr.bf16.mxu0 0
    %2765 = vmatpush2.bf16.msra.mxu0 0
    %2766 = vmatprep.subr.bf16.mxu0 0
    %2767 = vmatpush2.bf16.msra.mxu0 0
    %2768 = vmatprep.mubr.bf16.mxu0 0
    %2769 = vmatmul.mubr.bf16.gmra.mxu0 %v2710
    %v2770 = vpop.f32.mrf.mxu0
    %v2771 = vadd.f32 0.0, %v2770
    %v2772 = vpop.f32.mrf.mxu0
    %v2773 = vpop.f32.mrf.mxu0
    %v2774 = vadd.f32 0.0, %v2773
    %v2775 = vpop.f32.mrf.mxu0
    %2776 = vmatprep.mubr.bf16.mxu0 0
    %2777 = vmatmul.mubr.bf16.gmra.mxu0 %v2713
    %v2778 = vpop.f32.mrf.mxu0
    %v2779 = vadd.f32 0.0, %v2778
    %v2780 = vpop.f32.mrf.mxu0
    %v2781 = vpop.f32.mrf.mxu0
    %v2782 = vadd.f32 0.0, %v2781
    %v2783 = vpop.f32.mrf.mxu0
    %2784 = vmatprep.mubr.bf16.mxu0 0
    %2785 = vmatmul.mubr.bf16.gmra.mxu0 %v2716
    %v2786 = vpop.f32.mrf.mxu0
    %v2787 = vadd.f32 0.0, %v2786
    %v2788 = vpop.f32.mrf.mxu0
    %v2789 = vpop.f32.mrf.mxu0
    %v2790 = vadd.f32 0.0, %v2789
    %v2791 = vpop.f32.mrf.mxu0
    %2792 = vmatprep.mubr.bf16.mxu0 0
    %2793 = vmatmul.mubr.bf16.gmra.mxu0 %v2719
    %v2794 = vpop.f32.mrf.mxu0
    %v2795 = vadd.f32 0.0, %v2794
    %v2796 = vpop.f32.mrf.mxu0
    %v2797 = vpop.f32.mrf.mxu0
    %v2798 = vadd.f32 0.0, %v2797
    %v2799 = vpop.f32.mrf.mxu0
    %2800 = vmatprep.mubr.bf16.mxu0 0
    %2801 = vmatmul.mubr.bf16.gmra.mxu0 %v2722
    %v2802 = vpop.f32.mrf.mxu0
    %v2803 = vadd.f32 0.0, %v2802
    %v2804 = vpop.f32.mrf.mxu0
    %v2805 = vpop.f32.mrf.mxu0
    %v2806 = vadd.f32 0.0, %v2805
    %v2807 = vpop.f32.mrf.mxu0
    %2808 = vmatprep.mubr.bf16.mxu0 0
    %2809 = vmatmul.mubr.bf16.gmra.mxu0 %v2725
    %v2810 = vpop.f32.mrf.mxu0
    %v2811 = vadd.f32 0.0, %v2810
    %v2812 = vpop.f32.mrf.mxu0
    %v2813 = vpop.f32.mrf.mxu0
    %v2814 = vadd.f32 0.0, %v2813
    %v2815 = vpop.f32.mrf.mxu0
    %2816 = vmatprep.mubr.bf16.mxu0 0
    %2817 = vmatmul.mubr.bf16.gmra.mxu0 %v2728
    %v2818 = vpop.f32.mrf.mxu0
    %v2819 = vadd.f32 0.0, %v2818
    %v2820 = vpop.f32.mrf.mxu0
    %v2821 = vpop.f32.mrf.mxu0
    %v2822 = vadd.f32 0.0, %v2821
    %v2823 = vpop.f32.mrf.mxu0
    %2824 = vmatprep.mubr.bf16.mxu0 0
    %2825 = vmatmul.mubr.bf16.gmra.mxu0 %v2731
    %v2826 = vpop.f32.mrf.mxu0
    %v2827 = vadd.f32 0.0, %v2826
    %v2828 = vpop.f32.mrf.mxu0
    %v2829 = vpop.f32.mrf.mxu0
    %v2830 = vadd.f32 0.0, %v2829
    %v2831 = vpop.f32.mrf.mxu0
    %2832 = vdwg.mxu0
    %v2833 = vadd.f32 %v2667, %v2771
    %v2834 = vadd.f32 %v2668, %v2774
    %v2835 = vadd.f32 %v2669, %v2779
    %v2836 = vadd.f32 %v2670, %v2782
    %v2837 = vadd.f32 %v2671, %v2787
    %v2838 = vadd.f32 %v2672, %v2790
    %v2839 = vadd.f32 %v2673, %v2795
    %v2840 = vadd.f32 %v2674, %v2798
    %v2841 = vadd.f32 %v2675, %v2803
    %v2842 = vadd.f32 %v2676, %v2806
    %v2843 = vadd.f32 %v2677, %v2811
    %v2844 = vadd.f32 %v2678, %v2814
    %v2845 = vadd.f32 %v2679, %v2819
    %v2846 = vadd.f32 %v2680, %v2822
    %v2847 = vadd.f32 %v2681, %v2827
    %v2848 = vadd.f32 %v2682, %v2830
    %v2849 = vld [vmem:[%s2516 + $0x4] sm:$0xff]
    %v2850 = vld [vmem:[%s2516 + $0xc] sm:$0xff]
    %v2851 = vld [vmem:[%s2516 + $0x1c] sm:$0xff]
    %v2852 = vld [vmem:[%s2516 + $0x24] sm:$0xff]
    %v2853 = vld [vmem:[%s2516 + $0x34] sm:$0xff]
    %v2854 = vld [vmem:[%s2516 + $0x3c] sm:$0xff]
    %v2855 = vld [vmem:[%s2516 + $0x4c] sm:$0xff]
    %v2856 = vld [vmem:[%s2516 + $0x54] sm:$0xff]
    %v2857 = vld [vmem:[%s2516 + $0x64] sm:$0xff]
    %v2858 = vld [vmem:[%s2516 + $0x6c] sm:$0xff]
    %v2859 = vld [vmem:[%s2516 + $0x7c] sm:$0xff]
    %v2860 = vld [vmem:[%s2516 + $0x84] sm:$0xff]
    %v2861 = vld [vmem:[%s2516 + $0x94] sm:$0xff]
    %v2862 = vld [vmem:[%s2516 + $0x9c] sm:$0xff]
    %v2863 = vld [vmem:[%s2516 + $0xac] sm:$0xff]
    %v2864 = vld [vmem:[%s2516 + $0xb4] sm:$0xff]
    %v2865 = vpack.c.bf16 %v2850, %v2849
    %v2866 = vpack.c.bf16 %v2852, %v2851
    %v2867 = vpack.c.bf16 %v2854, %v2853
    %v2868 = vpack.c.bf16 %v2856, %v2855
    %v2869 = vpack.c.bf16 %v2858, %v2857
    %v2870 = vpack.c.bf16 %v2860, %v2859
    %v2871 = vpack.c.bf16 %v2862, %v2861
    %v2872 = vpack.c.bf16 %v2864, %v2863
    %s2873 = scalar_lea.vmem %s3, 28
    %v2874 = vld [vmem:[%s2873] sm:$0x7]
    %v2876 = vsel %vm1681, %v2865, 0
    %v2879 = vsel %vm1681, %v2866, 0
    %v2882 = vsel %vm1681, %v2867, 0
    %v2885 = vsel %vm1681, %v2868, 0
    %v2888 = vsel %vm1681, %v2869, 0
    %v2891 = vsel %vm1681, %v2870, 0
    %v2894 = vsel %vm1681, %v2871, 0
    %v2897 = vsel %vm1681, %v2872, 0
    %v2900 = vsel %vm1793, %v2874, 0
    %2902 = vmatprep.subr.bf16.mxu0 0
    %2903 = vmatpush1.bf16.msra.mxu0 0
    %2904 = vmatprep.subr.bf16.mxu0 0
    %2905 = vmatpush1.bf16.msra.mxu0 0
    %2906 = vmatprep.subr.bf16.mxu0 0
    %2907 = vmatpush1.bf16.msra.mxu0 0
    %2908 = vmatprep.subr.bf16.mxu0 0
    %2909 = vmatpush1.bf16.msra.mxu0 0
    %2910 = vmatprep.subr.bf16.mxu0 0
    %2911 = vmatpush1.bf16.msra.mxu0 0
    %2912 = vmatprep.subr.bf16.mxu0 0
    %2913 = vmatpush1.bf16.msra.mxu0 0
    %2914 = vmatprep.subr.bf16.mxu0 0
    %2915 = vmatpush1.bf16.msra.mxu0 0
    %2916 = vmatprep.subr.bf16.mxu0 0
    %2917 = vmatpush1.bf16.msra.mxu0 %v2900
    %2918 = vmatprep.subr.bf16.mxu0 0
    %2919 = vmatpush2.bf16.msra.mxu0 0
    %2920 = vmatprep.subr.bf16.mxu0 0
    %2921 = vmatpush2.bf16.msra.mxu0 0
    %2922 = vmatprep.subr.bf16.mxu0 0
    %2923 = vmatpush2.bf16.msra.mxu0 0
    %2924 = vmatprep.subr.bf16.mxu0 0
    %2925 = vmatpush2.bf16.msra.mxu0 0
    %2926 = vmatprep.subr.bf16.mxu0 0
    %2927 = vmatpush2.bf16.msra.mxu0 0
    %2928 = vmatprep.subr.bf16.mxu0 0
    %2929 = vmatpush2.bf16.msra.mxu0 0
    %2930 = vmatprep.subr.bf16.mxu0 0
    %2931 = vmatpush2.bf16.msra.mxu0 0
    %2932 = vmatprep.subr.bf16.mxu0 0
    %2933 = vmatpush2.bf16.msra.mxu0 0
    %2934 = vmatprep.mubr.bf16.mxu0 0
    %2935 = vmatmul.mubr.bf16.gmra.mxu0 %v2876
    %v2936 = vpop.f32.mrf.mxu0
    %v2937 = vadd.f32 0.0, %v2936
    %v2938 = vpop.f32.mrf.mxu0
    %v2939 = vpop.f32.mrf.mxu0
    %v2940 = vadd.f32 0.0, %v2939
    %v2941 = vpop.f32.mrf.mxu0
    %2942 = vmatprep.mubr.bf16.mxu0 0
    %2943 = vmatmul.mubr.bf16.gmra.mxu0 %v2879
    %v2944 = vpop.f32.mrf.mxu0
    %v2945 = vadd.f32 0.0, %v2944
    %v2946 = vpop.f32.mrf.mxu0
    %v2947 = vpop.f32.mrf.mxu0
    %v2948 = vadd.f32 0.0, %v2947
    %v2949 = vpop.f32.mrf.mxu0
    %2950 = vmatprep.mubr.bf16.mxu0 0
    %2951 = vmatmul.mubr.bf16.gmra.mxu0 %v2882
    %v2952 = vpop.f32.mrf.mxu0
    %v2953 = vadd.f32 0.0, %v2952
    %v2954 = vpop.f32.mrf.mxu0
    %v2955 = vpop.f32.mrf.mxu0
    %v2956 = vadd.f32 0.0, %v2955
    %v2957 = vpop.f32.mrf.mxu0
    %2958 = vmatprep.mubr.bf16.mxu0 0
    %2959 = vmatmul.mubr.bf16.gmra.mxu0 %v2885
    %v2960 = vpop.f32.mrf.mxu0
    %v2961 = vadd.f32 0.0, %v2960
    %v2962 = vpop.f32.mrf.mxu0
    %v2963 = vpop.f32.mrf.mxu0
    %v2964 = vadd.f32 0.0, %v2963
    %v2965 = vpop.f32.mrf.mxu0
    %2966 = vmatprep.mubr.bf16.mxu0 0
    %2967 = vmatmul.mubr.bf16.gmra.mxu0 %v2888
    %v2968 = vpop.f32.mrf.mxu0
    %v2969 = vadd.f32 0.0, %v2968
    %v2970 = vpop.f32.mrf.mxu0
    %v2971 = vpop.f32.mrf.mxu0
    %v2972 = vadd.f32 0.0, %v2971
    %v2973 = vpop.f32.mrf.mxu0
    %2974 = vmatprep.mubr.bf16.mxu0 0
    %2975 = vmatmul.mubr.bf16.gmra.mxu0 %v2891
    %v2976 = vpop.f32.mrf.mxu0
    %v2977 = vadd.f32 0.0, %v2976
    %v2978 = vpop.f32.mrf.mxu0
    %v2979 = vpop.f32.mrf.mxu0
    %v2980 = vadd.f32 0.0, %v2979
    %v2981 = vpop.f32.mrf.mxu0
    %2982 = vmatprep.mubr.bf16.mxu0 0
    %2983 = vmatmul.mubr.bf16.gmra.mxu0 %v2894
    %v2984 = vpop.f32.mrf.mxu0
    %v2985 = vadd.f32 0.0, %v2984
    %v2986 = vpop.f32.mrf.mxu0
    %v2987 = vpop.f32.mrf.mxu0
    %v2988 = vadd.f32 0.0, %v2987
    %v2989 = vpop.f32.mrf.mxu0
    %2990 = vmatprep.mubr.bf16.mxu0 0
    %2991 = vmatmul.mubr.bf16.gmra.mxu0 %v2897
    %v2992 = vpop.f32.mrf.mxu0
    %v2993 = vadd.f32 0.0, %v2992
    %v2994 = vpop.f32.mrf.mxu0
    %v2995 = vpop.f32.mrf.mxu0
    %v2996 = vadd.f32 0.0, %v2995
    %v2997 = vpop.f32.mrf.mxu0
    %2998 = vdwg.mxu0
    %v2999 = vadd.f32 %v2833, %v2937
    %v3000 = vadd.f32 %v2834, %v2940
    %v3001 = vadd.f32 %v2835, %v2945
    %v3002 = vadd.f32 %v2836, %v2948
    %v3003 = vadd.f32 %v2837, %v2953
    %v3004 = vadd.f32 %v2838, %v2956
    %v3005 = vadd.f32 %v2839, %v2961
    %v3006 = vadd.f32 %v2840, %v2964
    %v3007 = vadd.f32 %v2841, %v2969
    %v3008 = vadd.f32 %v2842, %v2972
    %v3009 = vadd.f32 %v2843, %v2977
    %v3010 = vadd.f32 %v2844, %v2980
    %v3011 = vadd.f32 %v2845, %v2985
    %v3012 = vadd.f32 %v2846, %v2988
    %v3013 = vadd.f32 %v2847, %v2993
    %v3014 = vadd.f32 %v2848, %v2996
    %v3015 = vld [vmem:[%s2516 + $0x6] sm:$0xff]
    %v3016 = vld [vmem:[%s2516 + $0xe] sm:$0xff]
    %v3017 = vld [vmem:[%s2516 + $0x1e] sm:$0xff]
    %v3018 = vld [vmem:[%s2516 + $0x26] sm:$0xff]
    %v3019 = vld [vmem:[%s2516 + $0x36] sm:$0xff]
    %v3020 = vld [vmem:[%s2516 + $0x3e] sm:$0xff]
    %v3021 = vld [vmem:[%s2516 + $0x4e] sm:$0xff]
    %v3022 = vld [vmem:[%s2516 + $0x56] sm:$0xff]
    %v3023 = vld [vmem:[%s2516 + $0x66] sm:$0xff]
    %v3024 = vld [vmem:[%s2516 + $0x6e] sm:$0xff]
    %v3025 = vld [vmem:[%s2516 + $0x7e] sm:$0xff]
    %v3026 = vld [vmem:[%s2516 + $0x86] sm:$0xff]
    %v3027 = vld [vmem:[%s2516 + $0x96] sm:$0xff]
    %v3028 = vld [vmem:[%s2516 + $0x9e] sm:$0xff]
    %v3029 = vld [vmem:[%s2516 + $0xae] sm:$0xff]
    %v3030 = vld [vmem:[%s2516 + $0xb6] sm:$0xff]
    %v3031 = vpack.c.bf16 %v3016, %v3015
    %v3032 = vpack.c.bf16 %v3018, %v3017
    %v3033 = vpack.c.bf16 %v3020, %v3019
    %v3034 = vpack.c.bf16 %v3022, %v3021
    %v3035 = vpack.c.bf16 %v3024, %v3023
    %v3036 = vpack.c.bf16 %v3026, %v3025
    %v3037 = vpack.c.bf16 %v3028, %v3027
    %v3038 = vpack.c.bf16 %v3030, %v3029
    %s3039 = scalar_lea.vmem %s3, 32
    %v3040 = vld [vmem:[%s3039] sm:$0x7]
    %v3042 = vsel %vm1681, %v3031, 0
    %v3045 = vsel %vm1681, %v3032, 0
    %v3048 = vsel %vm1681, %v3033, 0
    %v3051 = vsel %vm1681, %v3034, 0
    %v3054 = vsel %vm1681, %v3035, 0
    %v3057 = vsel %vm1681, %v3036, 0
    %v3060 = vsel %vm1681, %v3037, 0
    %v3063 = vsel %vm1681, %v3038, 0
    %v3066 = vsel %vm1793, %v3040, 0
    %3068 = vmatprep.subr.bf16.mxu0 0
    %3069 = vmatpush1.bf16.msra.mxu0 0
    %3070 = vmatprep.subr.bf16.mxu0 0
    %3071 = vmatpush1.bf16.msra.mxu0 0
    %3072 = vmatprep.subr.bf16.mxu0 0
    %3073 = vmatpush1.bf16.msra.mxu0 0
    %3074 = vmatprep.subr.bf16.mxu0 0
    %3075 = vmatpush1.bf16.msra.mxu0 0
    %3076 = vmatprep.subr.bf16.mxu0 0
    %3077 = vmatpush1.bf16.msra.mxu0 0
    %3078 = vmatprep.subr.bf16.mxu0 0
    %3079 = vmatpush1.bf16.msra.mxu0 0
    %3080 = vmatprep.subr.bf16.mxu0 0
    %3081 = vmatpush1.bf16.msra.mxu0 0
    %3082 = vmatprep.subr.bf16.mxu0 0
    %3083 = vmatpush1.bf16.msra.mxu0 %v3066
    %3084 = vmatprep.subr.bf16.mxu0 0
    %3085 = vmatpush2.bf16.msra.mxu0 0
    %3086 = vmatprep.subr.bf16.mxu0 0
    %3087 = vmatpush2.bf16.msra.mxu0 0
    %3088 = vmatprep.subr.bf16.mxu0 0
    %3089 = vmatpush2.bf16.msra.mxu0 0
    %3090 = vmatprep.subr.bf16.mxu0 0
    %3091 = vmatpush2.bf16.msra.mxu0 0
    %3092 = vmatprep.subr.bf16.mxu0 0
    %3093 = vmatpush2.bf16.msra.mxu0 0
    %3094 = vmatprep.subr.bf16.mxu0 0
    %3095 = vmatpush2.bf16.msra.mxu0 0
    %3096 = vmatprep.subr.bf16.mxu0 0
    %3097 = vmatpush2.bf16.msra.mxu0 0
    %3098 = vmatprep.subr.bf16.mxu0 0
    %3099 = vmatpush2.bf16.msra.mxu0 0
    %3100 = vmatprep.mubr.bf16.mxu0 0
    %3101 = vmatmul.mubr.bf16.gmra.mxu0 %v3042
    %v3102 = vpop.f32.mrf.mxu0
    %v3103 = vadd.f32 0.0, %v3102
    %v3104 = vpop.f32.mrf.mxu0
    %v3105 = vpop.f32.mrf.mxu0
    %v3106 = vadd.f32 0.0, %v3105
    %v3107 = vpop.f32.mrf.mxu0
    %3108 = vmatprep.mubr.bf16.mxu0 0
    %3109 = vmatmul.mubr.bf16.gmra.mxu0 %v3045
    %v3110 = vpop.f32.mrf.mxu0
    %v3111 = vadd.f32 0.0, %v3110
    %v3112 = vpop.f32.mrf.mxu0
    %v3113 = vpop.f32.mrf.mxu0
    %v3114 = vadd.f32 0.0, %v3113
    %v3115 = vpop.f32.mrf.mxu0
    %3116 = vmatprep.mubr.bf16.mxu0 0
    %3117 = vmatmul.mubr.bf16.gmra.mxu0 %v3048
    %v3118 = vpop.f32.mrf.mxu0
    %v3119 = vadd.f32 0.0, %v3118
    %v3120 = vpop.f32.mrf.mxu0
    %v3121 = vpop.f32.mrf.mxu0
    %v3122 = vadd.f32 0.0, %v3121
    %v3123 = vpop.f32.mrf.mxu0
    %3124 = vmatprep.mubr.bf16.mxu0 0
    %3125 = vmatmul.mubr.bf16.gmra.mxu0 %v3051
    %v3126 = vpop.f32.mrf.mxu0
    %v3127 = vadd.f32 0.0, %v3126
    %v3128 = vpop.f32.mrf.mxu0
    %v3129 = vpop.f32.mrf.mxu0
    %v3130 = vadd.f32 0.0, %v3129
    %v3131 = vpop.f32.mrf.mxu0
    %3132 = vmatprep.mubr.bf16.mxu0 0
    %3133 = vmatmul.mubr.bf16.gmra.mxu0 %v3054
    %v3134 = vpop.f32.mrf.mxu0
    %v3135 = vadd.f32 0.0, %v3134
    %v3136 = vpop.f32.mrf.mxu0
    %v3137 = vpop.f32.mrf.mxu0
    %v3138 = vadd.f32 0.0, %v3137
    %v3139 = vpop.f32.mrf.mxu0
    %3140 = vmatprep.mubr.bf16.mxu0 0
    %3141 = vmatmul.mubr.bf16.gmra.mxu0 %v3057
    %v3142 = vpop.f32.mrf.mxu0
    %v3143 = vadd.f32 0.0, %v3142
    %v3144 = vpop.f32.mrf.mxu0
    %v3145 = vpop.f32.mrf.mxu0
    %v3146 = vadd.f32 0.0, %v3145
    %v3147 = vpop.f32.mrf.mxu0
    %3148 = vmatprep.mubr.bf16.mxu0 0
    %3149 = vmatmul.mubr.bf16.gmra.mxu0 %v3060
    %v3150 = vpop.f32.mrf.mxu0
    %v3151 = vadd.f32 0.0, %v3150
    %v3152 = vpop.f32.mrf.mxu0
    %v3153 = vpop.f32.mrf.mxu0
    %v3154 = vadd.f32 0.0, %v3153
    %v3155 = vpop.f32.mrf.mxu0
    %3156 = vmatprep.mubr.bf16.mxu0 0
    %3157 = vmatmul.mubr.bf16.gmra.mxu0 %v3063
    %v3158 = vpop.f32.mrf.mxu0
    %v3159 = vadd.f32 0.0, %v3158
    %v3160 = vpop.f32.mrf.mxu0
    %v3161 = vpop.f32.mrf.mxu0
    %v3162 = vadd.f32 0.0, %v3161
    %v3163 = vpop.f32.mrf.mxu0
    %3164 = vdwg.mxu0
    %v3165 = vadd.f32 %v2999, %v3103
    %v3166 = vadd.f32 %v3000, %v3106
    %v3167 = vadd.f32 %v3001, %v3111
    %v3168 = vadd.f32 %v3002, %v3114
    %v3169 = vadd.f32 %v3003, %v3119
    %v3170 = vadd.f32 %v3004, %v3122
    %v3171 = vadd.f32 %v3005, %v3127
    %v3172 = vadd.f32 %v3006, %v3130
    %v3173 = vadd.f32 %v3007, %v3135
    %v3174 = vadd.f32 %v3008, %v3138
    %v3175 = vadd.f32 %v3009, %v3143
    %v3176 = vadd.f32 %v3010, %v3146
    %v3177 = vadd.f32 %v3011, %v3151
    %v3178 = vadd.f32 %v3012, %v3154
    %v3179 = vadd.f32 %v3013, %v3159
    %v3180 = vadd.f32 %v3014, %v3162
    %v3181 = vld [vmem:[%s2516 + $0x8] sm:$0xff]
    %v3182 = vld [vmem:[%s2516 + $0x10] sm:$0xff]
    %v3183 = vld [vmem:[%s2516 + $0x20] sm:$0xff]
    %v3184 = vld [vmem:[%s2516 + $0x28] sm:$0xff]
    %v3185 = vld [vmem:[%s2516 + $0x38] sm:$0xff]
    %v3186 = vld [vmem:[%s2516 + $0x40] sm:$0xff]
    %v3187 = vld [vmem:[%s2516 + $0x50] sm:$0xff]
    %v3188 = vld [vmem:[%s2516 + $0x58] sm:$0xff]
    %v3189 = vld [vmem:[%s2516 + $0x68] sm:$0xff]
    %v3190 = vld [vmem:[%s2516 + $0x70] sm:$0xff]
    %v3191 = vld [vmem:[%s2516 + $0x80] sm:$0xff]
    %v3192 = vld [vmem:[%s2516 + $0x88] sm:$0xff]
    %v3193 = vld [vmem:[%s2516 + $0x98] sm:$0xff]
    %v3194 = vld [vmem:[%s2516 + $0xa0] sm:$0xff]
    %v3195 = vld [vmem:[%s2516 + $0xb0] sm:$0xff]
    %v3196 = vld [vmem:[%s2516 + $0xb8] sm:$0xff]
    %v3197 = vpack.c.bf16 %v3182, %v3181
    %v3198 = vpack.c.bf16 %v3184, %v3183
    %v3199 = vpack.c.bf16 %v3186, %v3185
    %v3200 = vpack.c.bf16 %v3188, %v3187
    %v3201 = vpack.c.bf16 %v3190, %v3189
    %v3202 = vpack.c.bf16 %v3192, %v3191
    %v3203 = vpack.c.bf16 %v3194, %v3193
    %v3204 = vpack.c.bf16 %v3196, %v3195
    %s3205 = scalar_lea.vmem %s3, 36
    %v3206 = vld [vmem:[%s3205] sm:$0x7]
    %v3208 = vsel %vm1681, %v3197, 0
    %v3211 = vsel %vm1681, %v3198, 0
    %v3214 = vsel %vm1681, %v3199, 0
    %v3217 = vsel %vm1681, %v3200, 0
    %v3220 = vsel %vm1681, %v3201, 0
    %v3223 = vsel %vm1681, %v3202, 0
    %v3226 = vsel %vm1681, %v3203, 0
    %v3229 = vsel %vm1681, %v3204, 0
    %v3232 = vsel %vm1793, %v3206, 0
    %3234 = vmatprep.subr.bf16.mxu0 0
    %3235 = vmatpush1.bf16.msra.mxu0 0
    %3236 = vmatprep.subr.bf16.mxu0 0
    %3237 = vmatpush1.bf16.msra.mxu0 0
    %3238 = vmatprep.subr.bf16.mxu0 0
    %3239 = vmatpush1.bf16.msra.mxu0 0
    %3240 = vmatprep.subr.bf16.mxu0 0
    %3241 = vmatpush1.bf16.msra.mxu0 0
    %3242 = vmatprep.subr.bf16.mxu0 0
    %3243 = vmatpush1.bf16.msra.mxu0 0
    %3244 = vmatprep.subr.bf16.mxu0 0
    %3245 = vmatpush1.bf16.msra.mxu0 0
    %3246 = vmatprep.subr.bf16.mxu0 0
    %3247 = vmatpush1.bf16.msra.mxu0 0
    %3248 = vmatprep.subr.bf16.mxu0 0
    %3249 = vmatpush1.bf16.msra.mxu0 %v3232
    %3250 = vmatprep.subr.bf16.mxu0 0
    %3251 = vmatpush2.bf16.msra.mxu0 0
    %3252 = vmatprep.subr.bf16.mxu0 0
    %3253 = vmatpush2.bf16.msra.mxu0 0
    %3254 = vmatprep.subr.bf16.mxu0 0
    %3255 = vmatpush2.bf16.msra.mxu0 0
    %3256 = vmatprep.subr.bf16.mxu0 0
    %3257 = vmatpush2.bf16.msra.mxu0 0
    %3258 = vmatprep.subr.bf16.mxu0 0
    %3259 = vmatpush2.bf16.msra.mxu0 0
    %3260 = vmatprep.subr.bf16.mxu0 0
    %3261 = vmatpush2.bf16.msra.mxu0 0
    %3262 = vmatprep.subr.bf16.mxu0 0
    %3263 = vmatpush2.bf16.msra.mxu0 0
    %3264 = vmatprep.subr.bf16.mxu0 0
    %3265 = vmatpush2.bf16.msra.mxu0 0
    %3266 = vmatprep.mubr.bf16.mxu0 0
    %3267 = vmatmul.mubr.bf16.gmra.mxu0 %v3208
    %v3268 = vpop.f32.mrf.mxu0
    %v3269 = vadd.f32 0.0, %v3268
    %v3270 = vpop.f32.mrf.mxu0
    %v3271 = vpop.f32.mrf.mxu0
    %v3272 = vadd.f32 0.0, %v3271
    %v3273 = vpop.f32.mrf.mxu0
    %3274 = vmatprep.mubr.bf16.mxu0 0
    %3275 = vmatmul.mubr.bf16.gmra.mxu0 %v3211
    %v3276 = vpop.f32.mrf.mxu0
    %v3277 = vadd.f32 0.0, %v3276
    %v3278 = vpop.f32.mrf.mxu0
    %v3279 = vpop.f32.mrf.mxu0
    %v3280 = vadd.f32 0.0, %v3279
    %v3281 = vpop.f32.mrf.mxu0
    %3282 = vmatprep.mubr.bf16.mxu0 0
    %3283 = vmatmul.mubr.bf16.gmra.mxu0 %v3214
    %v3284 = vpop.f32.mrf.mxu0
    %v3285 = vadd.f32 0.0, %v3284
    %v3286 = vpop.f32.mrf.mxu0
    %v3287 = vpop.f32.mrf.mxu0
    %v3288 = vadd.f32 0.0, %v3287
    %v3289 = vpop.f32.mrf.mxu0
    %3290 = vmatprep.mubr.bf16.mxu0 0
    %3291 = vmatmul.mubr.bf16.gmra.mxu0 %v3217
    %v3292 = vpop.f32.mrf.mxu0
    %v3293 = vadd.f32 0.0, %v3292
    %v3294 = vpop.f32.mrf.mxu0
    %v3295 = vpop.f32.mrf.mxu0
    %v3296 = vadd.f32 0.0, %v3295
    %v3297 = vpop.f32.mrf.mxu0
    %3298 = vmatprep.mubr.bf16.mxu0 0
    %3299 = vmatmul.mubr.bf16.gmra.mxu0 %v3220
    %v3300 = vpop.f32.mrf.mxu0
    %v3301 = vadd.f32 0.0, %v3300
    %v3302 = vpop.f32.mrf.mxu0
    %v3303 = vpop.f32.mrf.mxu0
    %v3304 = vadd.f32 0.0, %v3303
    %v3305 = vpop.f32.mrf.mxu0
    %3306 = vmatprep.mubr.bf16.mxu0 0
    %3307 = vmatmul.mubr.bf16.gmra.mxu0 %v3223
    %v3308 = vpop.f32.mrf.mxu0
    %v3309 = vadd.f32 0.0, %v3308
    %v3310 = vpop.f32.mrf.mxu0
    %v3311 = vpop.f32.mrf.mxu0
    %v3312 = vadd.f32 0.0, %v3311
    %v3313 = vpop.f32.mrf.mxu0
    %3314 = vmatprep.mubr.bf16.mxu0 0
    %3315 = vmatmul.mubr.bf16.gmra.mxu0 %v3226
    %v3316 = vpop.f32.mrf.mxu0
    %v3317 = vadd.f32 0.0, %v3316
    %v3318 = vpop.f32.mrf.mxu0
    %v3319 = vpop.f32.mrf.mxu0
    %v3320 = vadd.f32 0.0, %v3319
    %v3321 = vpop.f32.mrf.mxu0
    %3322 = vmatprep.mubr.bf16.mxu0 0
    %3323 = vmatmul.mubr.bf16.gmra.mxu0 %v3229
    %v3324 = vpop.f32.mrf.mxu0
    %v3325 = vadd.f32 0.0, %v3324
    %v3326 = vpop.f32.mrf.mxu0
    %v3327 = vpop.f32.mrf.mxu0
    %v3328 = vadd.f32 0.0, %v3327
    %v3329 = vpop.f32.mrf.mxu0
    %3330 = vdwg.mxu0
    %v3331 = vadd.f32 %v3165, %v3269
    %v3332 = vadd.f32 %v3166, %v3272
    %v3333 = vadd.f32 %v3167, %v3277
    %v3334 = vadd.f32 %v3168, %v3280
    %v3335 = vadd.f32 %v3169, %v3285
    %v3336 = vadd.f32 %v3170, %v3288
    %v3337 = vadd.f32 %v3171, %v3293
    %v3338 = vadd.f32 %v3172, %v3296
    %v3339 = vadd.f32 %v3173, %v3301
    %v3340 = vadd.f32 %v3174, %v3304
    %v3341 = vadd.f32 %v3175, %v3309
    %v3342 = vadd.f32 %v3176, %v3312
    %v3343 = vadd.f32 %v3177, %v3317
    %v3344 = vadd.f32 %v3178, %v3320
    %v3345 = vadd.f32 %v3179, %v3325
    %v3346 = vadd.f32 %v3180, %v3328
    %s3347 = scalar_lea.vmem [#allocation2], 48
    %v3348 = vld [vmem:[%s3347] sm:$0xff]
    %v3349 = vld [vmem:[%s3347 + $0x8] sm:$0xff]
    %v3350 = vld [vmem:[%s3347 + $0x18] sm:$0xff]
    %v3351 = vld [vmem:[%s3347 + $0x20] sm:$0xff]
    %v3352 = vld [vmem:[%s3347 + $0x30] sm:$0xff]
    %v3353 = vld [vmem:[%s3347 + $0x38] sm:$0xff]
    %v3354 = vld [vmem:[%s3347 + $0x48] sm:$0xff]
    %v3355 = vld [vmem:[%s3347 + $0x50] sm:$0xff]
    %v3356 = vld [vmem:[%s3347 + $0x60] sm:$0xff]
    %v3357 = vld [vmem:[%s3347 + $0x68] sm:$0xff]
    %v3358 = vld [vmem:[%s3347 + $0x78] sm:$0xff]
    %v3359 = vld [vmem:[%s3347 + $0x80] sm:$0xff]
    %v3360 = vld [vmem:[%s3347 + $0x90] sm:$0xff]
    %v3361 = vld [vmem:[%s3347 + $0x98] sm:$0xff]
    %v3362 = vld [vmem:[%s3347 + $0xa8] sm:$0xff]
    %v3363 = vld [vmem:[%s3347 + $0xb0] sm:$0xff]
    %v3364 = vpack.c.bf16 %v3349, %v3348
    %v3365 = vpack.c.bf16 %v3351, %v3350
    %v3366 = vpack.c.bf16 %v3353, %v3352
    %v3367 = vpack.c.bf16 %v3355, %v3354
    %v3368 = vpack.c.bf16 %v3357, %v3356
    %v3369 = vpack.c.bf16 %v3359, %v3358
    %v3370 = vpack.c.bf16 %v3361, %v3360
    %v3371 = vpack.c.bf16 %v3363, %v3362
    %s3372 = scalar_lea.vmem %s3, 40
    %v3373 = vld [vmem:[%s3372] sm:$0x7]
    %v3375 = vsel %vm1681, %v3364, 0
    %v3378 = vsel %vm1681, %v3365, 0
    %v3381 = vsel %vm1681, %v3366, 0
    %v3384 = vsel %vm1681, %v3367, 0
    %v3387 = vsel %vm1681, %v3368, 0
    %v3390 = vsel %vm1681, %v3369, 0
    %v3393 = vsel %vm1681, %v3370, 0
    %v3396 = vsel %vm1681, %v3371, 0
    %v3399 = vsel %vm1793, %v3373, 0
    %3401 = vmatprep.subr.bf16.mxu0 0
    %3402 = vmatpush1.bf16.msra.mxu0 0
    %3403 = vmatprep.subr.bf16.mxu0 0
    %3404 = vmatpush1.bf16.msra.mxu0 0
    %3405 = vmatprep.subr.bf16.mxu0 0
    %3406 = vmatpush1.bf16.msra.mxu0 0
    %3407 = vmatprep.subr.bf16.mxu0 0
    %3408 = vmatpush1.bf16.msra.mxu0 0
    %3409 = vmatprep.subr.bf16.mxu0 0
    %3410 = vmatpush1.bf16.msra.mxu0 0
    %3411 = vmatprep.subr.bf16.mxu0 0
    %3412 = vmatpush1.bf16.msra.mxu0 0
    %3413 = vmatprep.subr.bf16.mxu0 0
    %3414 = vmatpush1.bf16.msra.mxu0 0
    %3415 = vmatprep.subr.bf16.mxu0 0
    %3416 = vmatpush1.bf16.msra.mxu0 %v3399
    %3417 = vmatprep.subr.bf16.mxu0 0
    %3418 = vmatpush2.bf16.msra.mxu0 0
    %3419 = vmatprep.subr.bf16.mxu0 0
    %3420 = vmatpush2.bf16.msra.mxu0 0
    %3421 = vmatprep.subr.bf16.mxu0 0
    %3422 = vmatpush2.bf16.msra.mxu0 0
    %3423 = vmatprep.subr.bf16.mxu0 0
    %3424 = vmatpush2.bf16.msra.mxu0 0
    %3425 = vmatprep.subr.bf16.mxu0 0
    %3426 = vmatpush2.bf16.msra.mxu0 0
    %3427 = vmatprep.subr.bf16.mxu0 0
    %3428 = vmatpush2.bf16.msra.mxu0 0
    %3429 = vmatprep.subr.bf16.mxu0 0
    %3430 = vmatpush2.bf16.msra.mxu0 0
    %3431 = vmatprep.subr.bf16.mxu0 0
    %3432 = vmatpush2.bf16.msra.mxu0 0
    %3433 = vmatprep.mubr.bf16.mxu0 0
    %3434 = vmatmul.mubr.bf16.gmra.mxu0 %v3375
    %v3435 = vpop.f32.mrf.mxu0
    %v3436 = vadd.f32 0.0, %v3435
    %v3437 = vpop.f32.mrf.mxu0
    %v3438 = vpop.f32.mrf.mxu0
    %v3439 = vadd.f32 0.0, %v3438
    %v3440 = vpop.f32.mrf.mxu0
    %3441 = vmatprep.mubr.bf16.mxu0 0
    %3442 = vmatmul.mubr.bf16.gmra.mxu0 %v3378
    %v3443 = vpop.f32.mrf.mxu0
    %v3444 = vadd.f32 0.0, %v3443
    %v3445 = vpop.f32.mrf.mxu0
    %v3446 = vpop.f32.mrf.mxu0
    %v3447 = vadd.f32 0.0, %v3446
    %v3448 = vpop.f32.mrf.mxu0
    %3449 = vmatprep.mubr.bf16.mxu0 0
    %3450 = vmatmul.mubr.bf16.gmra.mxu0 %v3381
    %v3451 = vpop.f32.mrf.mxu0
    %v3452 = vadd.f32 0.0, %v3451
    %v3453 = vpop.f32.mrf.mxu0
    %v3454 = vpop.f32.mrf.mxu0
    %v3455 = vadd.f32 0.0, %v3454
    %v3456 = vpop.f32.mrf.mxu0
    %3457 = vmatprep.mubr.bf16.mxu0 0
    %3458 = vmatmul.mubr.bf16.gmra.mxu0 %v3384
    %v3459 = vpop.f32.mrf.mxu0
    %v3460 = vadd.f32 0.0, %v3459
    %v3461 = vpop.f32.mrf.mxu0
    %v3462 = vpop.f32.mrf.mxu0
    %v3463 = vadd.f32 0.0, %v3462
    %v3464 = vpop.f32.mrf.mxu0
    %3465 = vmatprep.mubr.bf16.mxu0 0
    %3466 = vmatmul.mubr.bf16.gmra.mxu0 %v3387
    %v3467 = vpop.f32.mrf.mxu0
    %v3468 = vadd.f32 0.0, %v3467
    %v3469 = vpop.f32.mrf.mxu0
    %v3470 = vpop.f32.mrf.mxu0
    %v3471 = vadd.f32 0.0, %v3470
    %v3472 = vpop.f32.mrf.mxu0
    %3473 = vmatprep.mubr.bf16.mxu0 0
    %3474 = vmatmul.mubr.bf16.gmra.mxu0 %v3390
    %v3475 = vpop.f32.mrf.mxu0
    %v3476 = vadd.f32 0.0, %v3475
    %v3477 = vpop.f32.mrf.mxu0
    %v3478 = vpop.f32.mrf.mxu0
    %v3479 = vadd.f32 0.0, %v3478
    %v3480 = vpop.f32.mrf.mxu0
    %3481 = vmatprep.mubr.bf16.mxu0 0
    %3482 = vmatmul.mubr.bf16.gmra.mxu0 %v3393
    %v3483 = vpop.f32.mrf.mxu0
    %v3484 = vadd.f32 0.0, %v3483
    %v3485 = vpop.f32.mrf.mxu0
    %v3486 = vpop.f32.mrf.mxu0
    %v3487 = vadd.f32 0.0, %v3486
    %v3488 = vpop.f32.mrf.mxu0
    %3489 = vmatprep.mubr.bf16.mxu0 0
    %3490 = vmatmul.mubr.bf16.gmra.mxu0 %v3396
    %v3491 = vpop.f32.mrf.mxu0
    %v3492 = vadd.f32 0.0, %v3491
    %v3493 = vpop.f32.mrf.mxu0
    %v3494 = vpop.f32.mrf.mxu0
    %v3495 = vadd.f32 0.0, %v3494
    %v3496 = vpop.f32.mrf.mxu0
    %3497 = vdwg.mxu0
    %v3498 = vadd.f32 %v3331, %v3436
    %v3499 = vadd.f32 %v3332, %v3439
    %v3500 = vadd.f32 %v3333, %v3444
    %v3501 = vadd.f32 %v3334, %v3447
    %v3502 = vadd.f32 %v3335, %v3452
    %v3503 = vadd.f32 %v3336, %v3455
    %v3504 = vadd.f32 %v3337, %v3460
    %v3505 = vadd.f32 %v3338, %v3463
    %v3506 = vadd.f32 %v3339, %v3468
    %v3507 = vadd.f32 %v3340, %v3471
    %v3508 = vadd.f32 %v3341, %v3476
    %v3509 = vadd.f32 %v3342, %v3479
    %v3510 = vadd.f32 %v3343, %v3484
    %v3511 = vadd.f32 %v3344, %v3487
    %v3512 = vadd.f32 %v3345, %v3492
    %v3513 = vadd.f32 %v3346, %v3495
    %v3514 = vld [vmem:[%s3347 + $0x2] sm:$0xff]
    %v3515 = vld [vmem:[%s3347 + $0xa] sm:$0xff]
    %v3516 = vld [vmem:[%s3347 + $0x1a] sm:$0xff]
    %v3517 = vld [vmem:[%s3347 + $0x22] sm:$0xff]
    %v3518 = vld [vmem:[%s3347 + $0x32] sm:$0xff]
    %v3519 = vld [vmem:[%s3347 + $0x3a] sm:$0xff]
    %v3520 = vld [vmem:[%s3347 + $0x4a] sm:$0xff]
    %v3521 = vld [vmem:[%s3347 + $0x52] sm:$0xff]
    %v3522 = vld [vmem:[%s3347 + $0x62] sm:$0xff]
    %v3523 = vld [vmem:[%s3347 + $0x6a] sm:$0xff]
    %v3524 = vld [vmem:[%s3347 + $0x7a] sm:$0xff]
    %v3525 = vld [vmem:[%s3347 + $0x82] sm:$0xff]
    %v3526 = vld [vmem:[%s3347 + $0x92] sm:$0xff]
    %v3527 = vld [vmem:[%s3347 + $0x9a] sm:$0xff]
    %v3528 = vld [vmem:[%s3347 + $0xaa] sm:$0xff]
    %v3529 = vld [vmem:[%s3347 + $0xb2] sm:$0xff]
    %v3530 = vpack.c.bf16 %v3515, %v3514
    %v3531 = vpack.c.bf16 %v3517, %v3516
    %v3532 = vpack.c.bf16 %v3519, %v3518
    %v3533 = vpack.c.bf16 %v3521, %v3520
    %v3534 = vpack.c.bf16 %v3523, %v3522
    %v3535 = vpack.c.bf16 %v3525, %v3524
    %v3536 = vpack.c.bf16 %v3527, %v3526
    %v3537 = vpack.c.bf16 %v3529, %v3528
    %s3538 = scalar_lea.vmem %s3, 44
    %v3539 = vld [vmem:[%s3538] sm:$0x7]
    %v3541 = vsel %vm1681, %v3530, 0
    %v3544 = vsel %vm1681, %v3531, 0
    %v3547 = vsel %vm1681, %v3532, 0
    %v3550 = vsel %vm1681, %v3533, 0
    %v3553 = vsel %vm1681, %v3534, 0
    %v3556 = vsel %vm1681, %v3535, 0
    %v3559 = vsel %vm1681, %v3536, 0
    %v3562 = vsel %vm1681, %v3537, 0
    %v3565 = vsel %vm1793, %v3539, 0
    %3567 = vmatprep.subr.bf16.mxu0 0
    %3568 = vmatpush1.bf16.msra.mxu0 0
    %3569 = vmatprep.subr.bf16.mxu0 0
    %3570 = vmatpush1.bf16.msra.mxu0 0
    %3571 = vmatprep.subr.bf16.mxu0 0
    %3572 = vmatpush1.bf16.msra.mxu0 0
    %3573 = vmatprep.subr.bf16.mxu0 0
    %3574 = vmatpush1.bf16.msra.mxu0 0
    %3575 = vmatprep.subr.bf16.mxu0 0
    %3576 = vmatpush1.bf16.msra.mxu0 0
    %3577 = vmatprep.subr.bf16.mxu0 0
    %3578 = vmatpush1.bf16.msra.mxu0 0
    %3579 = vmatprep.subr.bf16.mxu0 0
    %3580 = vmatpush1.bf16.msra.mxu0 0
    %3581 = vmatprep.subr.bf16.mxu0 0
    %3582 = vmatpush1.bf16.msra.mxu0 %v3565
    %3583 = vmatprep.subr.bf16.mxu0 0
    %3584 = vmatpush2.bf16.msra.mxu0 0
    %3585 = vmatprep.subr.bf16.mxu0 0
    %3586 = vmatpush2.bf16.msra.mxu0 0
    %3587 = vmatprep.subr.bf16.mxu0 0
    %3588 = vmatpush2.bf16.msra.mxu0 0
    %3589 = vmatprep.subr.bf16.mxu0 0
    %3590 = vmatpush2.bf16.msra.mxu0 0
    %3591 = vmatprep.subr.bf16.mxu0 0
    %3592 = vmatpush2.bf16.msra.mxu0 0
    %3593 = vmatprep.subr.bf16.mxu0 0
    %3594 = vmatpush2.bf16.msra.mxu0 0
    %3595 = vmatprep.subr.bf16.mxu0 0
    %3596 = vmatpush2.bf16.msra.mxu0 0
    %3597 = vmatprep.subr.bf16.mxu0 0
    %3598 = vmatpush2.bf16.msra.mxu0 0
    %3599 = vmatprep.mubr.bf16.mxu0 0
    %3600 = vmatmul.mubr.bf16.gmra.mxu0 %v3541
    %v3601 = vpop.f32.mrf.mxu0
    %v3602 = vadd.f32 0.0, %v3601
    %v3603 = vpop.f32.mrf.mxu0
    %v3604 = vpop.f32.mrf.mxu0
    %v3605 = vadd.f32 0.0, %v3604
    %v3606 = vpop.f32.mrf.mxu0
    %3607 = vmatprep.mubr.bf16.mxu0 0
    %3608 = vmatmul.mubr.bf16.gmra.mxu0 %v3544
    %v3609 = vpop.f32.mrf.mxu0
    %v3610 = vadd.f32 0.0, %v3609
    %v3611 = vpop.f32.mrf.mxu0
    %v3612 = vpop.f32.mrf.mxu0
    %v3613 = vadd.f32 0.0, %v3612
    %v3614 = vpop.f32.mrf.mxu0
    %3615 = vmatprep.mubr.bf16.mxu0 0
    %3616 = vmatmul.mubr.bf16.gmra.mxu0 %v3547
    %v3617 = vpop.f32.mrf.mxu0
    %v3618 = vadd.f32 0.0, %v3617
    %v3619 = vpop.f32.mrf.mxu0
    %v3620 = vpop.f32.mrf.mxu0
    %v3621 = vadd.f32 0.0, %v3620
    %v3622 = vpop.f32.mrf.mxu0
    %3623 = vmatprep.mubr.bf16.mxu0 0
    %3624 = vmatmul.mubr.bf16.gmra.mxu0 %v3550
    %v3625 = vpop.f32.mrf.mxu0
    %v3626 = vadd.f32 0.0, %v3625
    %v3627 = vpop.f32.mrf.mxu0
    %v3628 = vpop.f32.mrf.mxu0
    %v3629 = vadd.f32 0.0, %v3628
    %v3630 = vpop.f32.mrf.mxu0
    %3631 = vmatprep.mubr.bf16.mxu0 0
    %3632 = vmatmul.mubr.bf16.gmra.mxu0 %v3553
    %v3633 = vpop.f32.mrf.mxu0
    %v3634 = vadd.f32 0.0, %v3633
    %v3635 = vpop.f32.mrf.mxu0
    %v3636 = vpop.f32.mrf.mxu0
    %v3637 = vadd.f32 0.0, %v3636
    %v3638 = vpop.f32.mrf.mxu0
    %3639 = vmatprep.mubr.bf16.mxu0 0
    %3640 = vmatmul.mubr.bf16.gmra.mxu0 %v3556
    %v3641 = vpop.f32.mrf.mxu0
    %v3642 = vadd.f32 0.0, %v3641
    %v3643 = vpop.f32.mrf.mxu0
    %v3644 = vpop.f32.mrf.mxu0
    %v3645 = vadd.f32 0.0, %v3644
    %v3646 = vpop.f32.mrf.mxu0
    %3647 = vmatprep.mubr.bf16.mxu0 0
    %3648 = vmatmul.mubr.bf16.gmra.mxu0 %v3559
    %v3649 = vpop.f32.mrf.mxu0
    %v3650 = vadd.f32 0.0, %v3649
    %v3651 = vpop.f32.mrf.mxu0
    %v3652 = vpop.f32.mrf.mxu0
    %v3653 = vadd.f32 0.0, %v3652
    %v3654 = vpop.f32.mrf.mxu0
    %3655 = vmatprep.mubr.bf16.mxu0 0
    %3656 = vmatmul.mubr.bf16.gmra.mxu0 %v3562
    %v3657 = vpop.f32.mrf.mxu0
    %v3658 = vadd.f32 0.0, %v3657
    %v3659 = vpop.f32.mrf.mxu0
    %v3660 = vpop.f32.mrf.mxu0
    %v3661 = vadd.f32 0.0, %v3660
    %v3662 = vpop.f32.mrf.mxu0
    %3663 = vdwg.mxu0
    %v3664 = vadd.f32 %v3498, %v3602
    %v3665 = vadd.f32 %v3499, %v3605
    %v3666 = vadd.f32 %v3500, %v3610
    %v3667 = vadd.f32 %v3501, %v3613
    %v3668 = vadd.f32 %v3502, %v3618
    %v3669 = vadd.f32 %v3503, %v3621
    %v3670 = vadd.f32 %v3504, %v3626
    %v3671 = vadd.f32 %v3505, %v3629
    %v3672 = vadd.f32 %v3506, %v3634
    %v3673 = vadd.f32 %v3507, %v3637
    %v3674 = vadd.f32 %v3508, %v3642
    %v3675 = vadd.f32 %v3509, %v3645
    %v3676 = vadd.f32 %v3510, %v3650
    %v3677 = vadd.f32 %v3511, %v3653
    %v3678 = vadd.f32 %v3512, %v3658
    %v3679 = vadd.f32 %v3513, %v3661
    %v3680 = vld [vmem:[%s3347 + $0x4] sm:$0xff]
    %v3681 = vld [vmem:[%s3347 + $0xc] sm:$0xff]
    %v3682 = vld [vmem:[%s3347 + $0x1c] sm:$0xff]
    %v3683 = vld [vmem:[%s3347 + $0x24] sm:$0xff]
    %v3684 = vld [vmem:[%s3347 + $0x34] sm:$0xff]
    %v3685 = vld [vmem:[%s3347 + $0x3c] sm:$0xff]
    %v3686 = vld [vmem:[%s3347 + $0x4c] sm:$0xff]
    %v3687 = vld [vmem:[%s3347 + $0x54] sm:$0xff]
    %v3688 = vld [vmem:[%s3347 + $0x64] sm:$0xff]
    %v3689 = vld [vmem:[%s3347 + $0x6c] sm:$0xff]
    %v3690 = vld [vmem:[%s3347 + $0x7c] sm:$0xff]
    %v3691 = vld [vmem:[%s3347 + $0x84] sm:$0xff]
    %v3692 = vld [vmem:[%s3347 + $0x94] sm:$0xff]
    %v3693 = vld [vmem:[%s3347 + $0x9c] sm:$0xff]
    %v3694 = vld [vmem:[%s3347 + $0xac] sm:$0xff]
    %v3695 = vld [vmem:[%s3347 + $0xb4] sm:$0xff]
    %v3696 = vpack.c.bf16 %v3681, %v3680
    %v3697 = vpack.c.bf16 %v3683, %v3682
    %v3698 = vpack.c.bf16 %v3685, %v3684
    %v3699 = vpack.c.bf16 %v3687, %v3686
    %v3700 = vpack.c.bf16 %v3689, %v3688
    %v3701 = vpack.c.bf16 %v3691, %v3690
    %v3702 = vpack.c.bf16 %v3693, %v3692
    %v3703 = vpack.c.bf16 %v3695, %v3694
    %s3704 = scalar_lea.vmem %s3, 48
    %v3705 = vld [vmem:[%s3704] sm:$0x7]
    %v3707 = vsel %vm1681, %v3696, 0
    %v3710 = vsel %vm1681, %v3697, 0
    %v3713 = vsel %vm1681, %v3698, 0
    %v3716 = vsel %vm1681, %v3699, 0
    %v3719 = vsel %vm1681, %v3700, 0
    %v3722 = vsel %vm1681, %v3701, 0
    %v3725 = vsel %vm1681, %v3702, 0
    %v3728 = vsel %vm1681, %v3703, 0
    %v3731 = vsel %vm1793, %v3705, 0
    %3733 = vmatprep.subr.bf16.mxu0 0
    %3734 = vmatpush1.bf16.msra.mxu0 0
    %3735 = vmatprep.subr.bf16.mxu0 0
    %3736 = vmatpush1.bf16.msra.mxu0 0
    %3737 = vmatprep.subr.bf16.mxu0 0
    %3738 = vmatpush1.bf16.msra.mxu0 0
    %3739 = vmatprep.subr.bf16.mxu0 0
    %3740 = vmatpush1.bf16.msra.mxu0 0
    %3741 = vmatprep.subr.bf16.mxu0 0
    %3742 = vmatpush1.bf16.msra.mxu0 0
    %3743 = vmatprep.subr.bf16.mxu0 0
    %3744 = vmatpush1.bf16.msra.mxu0 0
    %3745 = vmatprep.subr.bf16.mxu0 0
    %3746 = vmatpush1.bf16.msra.mxu0 0
    %3747 = vmatprep.subr.bf16.mxu0 0
    %3748 = vmatpush1.bf16.msra.mxu0 %v3731
    %3749 = vmatprep.subr.bf16.mxu0 0
    %3750 = vmatpush2.bf16.msra.mxu0 0
    %3751 = vmatprep.subr.bf16.mxu0 0
    %3752 = vmatpush2.bf16.msra.mxu0 0
    %3753 = vmatprep.subr.bf16.mxu0 0
    %3754 = vmatpush2.bf16.msra.mxu0 0
    %3755 = vmatprep.subr.bf16.mxu0 0
    %3756 = vmatpush2.bf16.msra.mxu0 0
    %3757 = vmatprep.subr.bf16.mxu0 0
    %3758 = vmatpush2.bf16.msra.mxu0 0
    %3759 = vmatprep.subr.bf16.mxu0 0
    %3760 = vmatpush2.bf16.msra.mxu0 0
    %3761 = vmatprep.subr.bf16.mxu0 0
    %3762 = vmatpush2.bf16.msra.mxu0 0
    %3763 = vmatprep.subr.bf16.mxu0 0
    %3764 = vmatpush2.bf16.msra.mxu0 0
    %3765 = vmatprep.mubr.bf16.mxu0 0
    %3766 = vmatmul.mubr.bf16.gmra.mxu0 %v3707
    %v3767 = vpop.f32.mrf.mxu0
    %v3768 = vadd.f32 0.0, %v3767
    %v3769 = vpop.f32.mrf.mxu0
    %v3770 = vpop.f32.mrf.mxu0
    %v3771 = vadd.f32 0.0, %v3770
    %v3772 = vpop.f32.mrf.mxu0
    %3773 = vmatprep.mubr.bf16.mxu0 0
    %3774 = vmatmul.mubr.bf16.gmra.mxu0 %v3710
    %v3775 = vpop.f32.mrf.mxu0
    %v3776 = vadd.f32 0.0, %v3775
    %v3777 = vpop.f32.mrf.mxu0
    %v3778 = vpop.f32.mrf.mxu0
    %v3779 = vadd.f32 0.0, %v3778
    %v3780 = vpop.f32.mrf.mxu0
    %3781 = vmatprep.mubr.bf16.mxu0 0
    %3782 = vmatmul.mubr.bf16.gmra.mxu0 %v3713
    %v3783 = vpop.f32.mrf.mxu0
    %v3784 = vadd.f32 0.0, %v3783
    %v3785 = vpop.f32.mrf.mxu0
    %v3786 = vpop.f32.mrf.mxu0
    %v3787 = vadd.f32 0.0, %v3786
    %v3788 = vpop.f32.mrf.mxu0
    %3789 = vmatprep.mubr.bf16.mxu0 0
    %3790 = vmatmul.mubr.bf16.gmra.mxu0 %v3716
    %v3791 = vpop.f32.mrf.mxu0
    %v3792 = vadd.f32 0.0, %v3791
    %v3793 = vpop.f32.mrf.mxu0
    %v3794 = vpop.f32.mrf.mxu0
    %v3795 = vadd.f32 0.0, %v3794
    %v3796 = vpop.f32.mrf.mxu0
    %3797 = vmatprep.mubr.bf16.mxu0 0
    %3798 = vmatmul.mubr.bf16.gmra.mxu0 %v3719
    %v3799 = vpop.f32.mrf.mxu0
    %v3800 = vadd.f32 0.0, %v3799
    %v3801 = vpop.f32.mrf.mxu0
    %v3802 = vpop.f32.mrf.mxu0
    %v3803 = vadd.f32 0.0, %v3802
    %v3804 = vpop.f32.mrf.mxu0
    %3805 = vmatprep.mubr.bf16.mxu0 0
    %3806 = vmatmul.mubr.bf16.gmra.mxu0 %v3722
    %v3807 = vpop.f32.mrf.mxu0
    %v3808 = vadd.f32 0.0, %v3807
    %v3809 = vpop.f32.mrf.mxu0
    %v3810 = vpop.f32.mrf.mxu0
    %v3811 = vadd.f32 0.0, %v3810
    %v3812 = vpop.f32.mrf.mxu0
    %3813 = vmatprep.mubr.bf16.mxu0 0
    %3814 = vmatmul.mubr.bf16.gmra.mxu0 %v3725
    %v3815 = vpop.f32.mrf.mxu0
    %v3816 = vadd.f32 0.0, %v3815
    %v3817 = vpop.f32.mrf.mxu0
    %v3818 = vpop.f32.mrf.mxu0
    %v3819 = vadd.f32 0.0, %v3818
    %v3820 = vpop.f32.mrf.mxu0
    %3821 = vmatprep.mubr.bf16.mxu0 0
    %3822 = vmatmul.mubr.bf16.gmra.mxu0 %v3728
    %v3823 = vpop.f32.mrf.mxu0
    %v3824 = vadd.f32 0.0, %v3823
    %v3825 = vpop.f32.mrf.mxu0
    %v3826 = vpop.f32.mrf.mxu0
    %v3827 = vadd.f32 0.0, %v3826
    %v3828 = vpop.f32.mrf.mxu0
    %3829 = vdwg.mxu0
    %v3830 = vadd.f32 %v3664, %v3768
    %v3831 = vadd.f32 %v3665, %v3771
    %v3832 = vadd.f32 %v3666, %v3776
    %v3833 = vadd.f32 %v3667, %v3779
    %v3834 = vadd.f32 %v3668, %v3784
    %v3835 = vadd.f32 %v3669, %v3787
    %v3836 = vadd.f32 %v3670, %v3792
    %v3837 = vadd.f32 %v3671, %v3795
    %v3838 = vadd.f32 %v3672, %v3800
    %v3839 = vadd.f32 %v3673, %v3803
    %v3840 = vadd.f32 %v3674, %v3808
    %v3841 = vadd.f32 %v3675, %v3811
    %v3842 = vadd.f32 %v3676, %v3816
    %v3843 = vadd.f32 %v3677, %v3819
    %v3844 = vadd.f32 %v3678, %v3824
    %v3845 = vadd.f32 %v3679, %v3827
    %v3846 = vld [vmem:[%s3347 + $0x6] sm:$0xff]
    %v3847 = vld [vmem:[%s3347 + $0xe] sm:$0xff]
    %v3848 = vld [vmem:[%s3347 + $0x1e] sm:$0xff]
    %v3849 = vld [vmem:[%s3347 + $0x26] sm:$0xff]
    %v3850 = vld [vmem:[%s3347 + $0x36] sm:$0xff]
    %v3851 = vld [vmem:[%s3347 + $0x3e] sm:$0xff]
    %v3852 = vld [vmem:[%s3347 + $0x4e] sm:$0xff]
    %v3853 = vld [vmem:[%s3347 + $0x56] sm:$0xff]
    %v3854 = vld [vmem:[%s3347 + $0x66] sm:$0xff]
    %v3855 = vld [vmem:[%s3347 + $0x6e] sm:$0xff]
    %v3856 = vld [vmem:[%s3347 + $0x7e] sm:$0xff]
    %v3857 = vld [vmem:[%s3347 + $0x86] sm:$0xff]
    %v3858 = vld [vmem:[%s3347 + $0x96] sm:$0xff]
    %v3859 = vld [vmem:[%s3347 + $0x9e] sm:$0xff]
    %v3860 = vld [vmem:[%s3347 + $0xae] sm:$0xff]
    %v3861 = vld [vmem:[%s3347 + $0xb6] sm:$0xff]
    %v3862 = vpack.c.bf16 %v3847, %v3846
    %v3863 = vpack.c.bf16 %v3849, %v3848
    %v3864 = vpack.c.bf16 %v3851, %v3850
    %v3865 = vpack.c.bf16 %v3853, %v3852
    %v3866 = vpack.c.bf16 %v3855, %v3854
    %v3867 = vpack.c.bf16 %v3857, %v3856
    %v3868 = vpack.c.bf16 %v3859, %v3858
    %v3869 = vpack.c.bf16 %v3861, %v3860
    %s3870 = scalar_lea.vmem %s3, 52
    %v3871 = vld [vmem:[%s3870] sm:$0x7]
    %v3873 = vsel %vm1681, %v3862, 0
    %v3876 = vsel %vm1681, %v3863, 0
    %v3879 = vsel %vm1681, %v3864, 0
    %v3882 = vsel %vm1681, %v3865, 0
    %v3885 = vsel %vm1681, %v3866, 0
    %v3888 = vsel %vm1681, %v3867, 0
    %v3891 = vsel %vm1681, %v3868, 0
    %v3894 = vsel %vm1681, %v3869, 0
    %v3897 = vsel %vm1793, %v3871, 0
    %3899 = vmatprep.subr.bf16.mxu0 0
    %3900 = vmatpush1.bf16.msra.mxu0 0
    %3901 = vmatprep.subr.bf16.mxu0 0
    %3902 = vmatpush1.bf16.msra.mxu0 0
    %3903 = vmatprep.subr.bf16.mxu0 0
    %3904 = vmatpush1.bf16.msra.mxu0 0
    %3905 = vmatprep.subr.bf16.mxu0 0
    %3906 = vmatpush1.bf16.msra.mxu0 0
    %3907 = vmatprep.subr.bf16.mxu0 0
    %3908 = vmatpush1.bf16.msra.mxu0 0
    %3909 = vmatprep.subr.bf16.mxu0 0
    %3910 = vmatpush1.bf16.msra.mxu0 0
    %3911 = vmatprep.subr.bf16.mxu0 0
    %3912 = vmatpush1.bf16.msra.mxu0 0
    %3913 = vmatprep.subr.bf16.mxu0 0
    %3914 = vmatpush1.bf16.msra.mxu0 %v3897
    %3915 = vmatprep.subr.bf16.mxu0 0
    %3916 = vmatpush2.bf16.msra.mxu0 0
    %3917 = vmatprep.subr.bf16.mxu0 0
    %3918 = vmatpush2.bf16.msra.mxu0 0
    %3919 = vmatprep.subr.bf16.mxu0 0
    %3920 = vmatpush2.bf16.msra.mxu0 0
    %3921 = vmatprep.subr.bf16.mxu0 0
    %3922 = vmatpush2.bf16.msra.mxu0 0
    %3923 = vmatprep.subr.bf16.mxu0 0
    %3924 = vmatpush2.bf16.msra.mxu0 0
    %3925 = vmatprep.subr.bf16.mxu0 0
    %3926 = vmatpush2.bf16.msra.mxu0 0
    %3927 = vmatprep.subr.bf16.mxu0 0
    %3928 = vmatpush2.bf16.msra.mxu0 0
    %3929 = vmatprep.subr.bf16.mxu0 0
    %3930 = vmatpush2.bf16.msra.mxu0 0
    %3931 = vmatprep.mubr.bf16.mxu0 0
    %3932 = vmatmul.mubr.bf16.gmra.mxu0 %v3873
    %v3933 = vpop.f32.mrf.mxu0
    %v3934 = vadd.f32 0.0, %v3933
    %v3935 = vpop.f32.mrf.mxu0
    %v3936 = vpop.f32.mrf.mxu0
    %v3937 = vadd.f32 0.0, %v3936
    %v3938 = vpop.f32.mrf.mxu0
    %3939 = vmatprep.mubr.bf16.mxu0 0
    %3940 = vmatmul.mubr.bf16.gmra.mxu0 %v3876
    %v3941 = vpop.f32.mrf.mxu0
    %v3942 = vadd.f32 0.0, %v3941
    %v3943 = vpop.f32.mrf.mxu0
    %v3944 = vpop.f32.mrf.mxu0
    %v3945 = vadd.f32 0.0, %v3944
    %v3946 = vpop.f32.mrf.mxu0
    %3947 = vmatprep.mubr.bf16.mxu0 0
    %3948 = vmatmul.mubr.bf16.gmra.mxu0 %v3879
    %v3949 = vpop.f32.mrf.mxu0
    %v3950 = vadd.f32 0.0, %v3949
    %v3951 = vpop.f32.mrf.mxu0
    %v3952 = vpop.f32.mrf.mxu0
    %v3953 = vadd.f32 0.0, %v3952
    %v3954 = vpop.f32.mrf.mxu0
    %3955 = vmatprep.mubr.bf16.mxu0 0
    %3956 = vmatmul.mubr.bf16.gmra.mxu0 %v3882
    %v3957 = vpop.f32.mrf.mxu0
    %v3958 = vadd.f32 0.0, %v3957
    %v3959 = vpop.f32.mrf.mxu0
    %v3960 = vpop.f32.mrf.mxu0
    %v3961 = vadd.f32 0.0, %v3960
    %v3962 = vpop.f32.mrf.mxu0
    %3963 = vmatprep.mubr.bf16.mxu0 0
    %3964 = vmatmul.mubr.bf16.gmra.mxu0 %v3885
    %v3965 = vpop.f32.mrf.mxu0
    %v3966 = vadd.f32 0.0, %v3965
    %v3967 = vpop.f32.mrf.mxu0
    %v3968 = vpop.f32.mrf.mxu0
    %v3969 = vadd.f32 0.0, %v3968
    %v3970 = vpop.f32.mrf.mxu0
    %3971 = vmatprep.mubr.bf16.mxu0 0
    %3972 = vmatmul.mubr.bf16.gmra.mxu0 %v3888
    %v3973 = vpop.f32.mrf.mxu0
    %v3974 = vadd.f32 0.0, %v3973
    %v3975 = vpop.f32.mrf.mxu0
    %v3976 = vpop.f32.mrf.mxu0
    %v3977 = vadd.f32 0.0, %v3976
    %v3978 = vpop.f32.mrf.mxu0
    %3979 = vmatprep.mubr.bf16.mxu0 0
    %3980 = vmatmul.mubr.bf16.gmra.mxu0 %v3891
    %v3981 = vpop.f32.mrf.mxu0
    %v3982 = vadd.f32 0.0, %v3981
    %v3983 = vpop.f32.mrf.mxu0
    %v3984 = vpop.f32.mrf.mxu0
    %v3985 = vadd.f32 0.0, %v3984
    %v3986 = vpop.f32.mrf.mxu0
    %3987 = vmatprep.mubr.bf16.mxu0 0
    %3988 = vmatmul.mubr.bf16.gmra.mxu0 %v3894
    %v3989 = vpop.f32.mrf.mxu0
    %v3990 = vadd.f32 0.0, %v3989
    %v3991 = vpop.f32.mrf.mxu0
    %v3992 = vpop.f32.mrf.mxu0
    %v3993 = vadd.f32 0.0, %v3992
    %v3994 = vpop.f32.mrf.mxu0
    %3995 = vdwg.mxu0
    %v3996 = vadd.f32 %v3830, %v3934
    %v3997 = vadd.f32 %v3831, %v3937
    %v3998 = vadd.f32 %v3832, %v3942
    %v3999 = vadd.f32 %v3833, %v3945
    %v4000 = vadd.f32 %v3834, %v3950
    %v4001 = vadd.f32 %v3835, %v3953
    %v4002 = vadd.f32 %v3836, %v3958
    %v4003 = vadd.f32 %v3837, %v3961
    %v4004 = vadd.f32 %v3838, %v3966
    %v4005 = vadd.f32 %v3839, %v3969
    %v4006 = vadd.f32 %v3840, %v3974
    %v4007 = vadd.f32 %v3841, %v3977
    %v4008 = vadd.f32 %v3842, %v3982
    %v4009 = vadd.f32 %v3843, %v3985
    %v4010 = vadd.f32 %v3844, %v3990
    %v4011 = vadd.f32 %v3845, %v3993
    %v4012 = vld [vmem:[%s3347 + $0x8] sm:$0xff]
    %v4013 = vld [vmem:[%s3347 + $0x10] sm:$0xff]
    %v4014 = vld [vmem:[%s3347 + $0x20] sm:$0xff]
    %v4015 = vld [vmem:[%s3347 + $0x28] sm:$0xff]
    %v4016 = vld [vmem:[%s3347 + $0x38] sm:$0xff]
    %v4017 = vld [vmem:[%s3347 + $0x40] sm:$0xff]
    %v4018 = vld [vmem:[%s3347 + $0x50] sm:$0xff]
    %v4019 = vld [vmem:[%s3347 + $0x58] sm:$0xff]
    %v4020 = vld [vmem:[%s3347 + $0x68] sm:$0xff]
    %v4021 = vld [vmem:[%s3347 + $0x70] sm:$0xff]
    %v4022 = vld [vmem:[%s3347 + $0x80] sm:$0xff]
    %v4023 = vld [vmem:[%s3347 + $0x88] sm:$0xff]
    %v4024 = vld [vmem:[%s3347 + $0x98] sm:$0xff]
    %v4025 = vld [vmem:[%s3347 + $0xa0] sm:$0xff]
    %v4026 = vld [vmem:[%s3347 + $0xb0] sm:$0xff]
    %v4027 = vld [vmem:[%s3347 + $0xb8] sm:$0xff]
    %v4028 = vpack.c.bf16 %v4013, %v4012
    %v4029 = vpack.c.bf16 %v4015, %v4014
    %v4030 = vpack.c.bf16 %v4017, %v4016
    %v4031 = vpack.c.bf16 %v4019, %v4018
    %v4032 = vpack.c.bf16 %v4021, %v4020
    %v4033 = vpack.c.bf16 %v4023, %v4022
    %v4034 = vpack.c.bf16 %v4025, %v4024
    %v4035 = vpack.c.bf16 %v4027, %v4026
    %s4036 = scalar_lea.vmem %s3, 56
    %v4037 = vld [vmem:[%s4036] sm:$0x7]
    %v4039 = vsel %vm1681, %v4028, 0
    %v4042 = vsel %vm1681, %v4029, 0
    %v4045 = vsel %vm1681, %v4030, 0
    %v4048 = vsel %vm1681, %v4031, 0
    %v4051 = vsel %vm1681, %v4032, 0
    %v4054 = vsel %vm1681, %v4033, 0
    %v4057 = vsel %vm1681, %v4034, 0
    %v4060 = vsel %vm1681, %v4035, 0
    %v4063 = vsel %vm1793, %v4037, 0
    %4065 = vmatprep.subr.bf16.mxu0 0
    %4066 = vmatpush1.bf16.msra.mxu0 0
    %4067 = vmatprep.subr.bf16.mxu0 0
    %4068 = vmatpush1.bf16.msra.mxu0 0
    %4069 = vmatprep.subr.bf16.mxu0 0
    %4070 = vmatpush1.bf16.msra.mxu0 0
    %4071 = vmatprep.subr.bf16.mxu0 0
    %4072 = vmatpush1.bf16.msra.mxu0 0
    %4073 = vmatprep.subr.bf16.mxu0 0
    %4074 = vmatpush1.bf16.msra.mxu0 0
    %4075 = vmatprep.subr.bf16.mxu0 0
    %4076 = vmatpush1.bf16.msra.mxu0 0
    %4077 = vmatprep.subr.bf16.mxu0 0
    %4078 = vmatpush1.bf16.msra.mxu0 0
    %4079 = vmatprep.subr.bf16.mxu0 0
    %4080 = vmatpush1.bf16.msra.mxu0 %v4063
    %4081 = vmatprep.subr.bf16.mxu0 0
    %4082 = vmatpush2.bf16.msra.mxu0 0
    %4083 = vmatprep.subr.bf16.mxu0 0
    %4084 = vmatpush2.bf16.msra.mxu0 0
    %4085 = vmatprep.subr.bf16.mxu0 0
    %4086 = vmatpush2.bf16.msra.mxu0 0
    %4087 = vmatprep.subr.bf16.mxu0 0
    %4088 = vmatpush2.bf16.msra.mxu0 0
    %4089 = vmatprep.subr.bf16.mxu0 0
    %4090 = vmatpush2.bf16.msra.mxu0 0
    %4091 = vmatprep.subr.bf16.mxu0 0
    %4092 = vmatpush2.bf16.msra.mxu0 0
    %4093 = vmatprep.subr.bf16.mxu0 0
    %4094 = vmatpush2.bf16.msra.mxu0 0
    %4095 = vmatprep.subr.bf16.mxu0 0
    %4096 = vmatpush2.bf16.msra.mxu0 0
    %4097 = vmatprep.mubr.bf16.mxu0 0
    %4098 = vmatmul.mubr.bf16.gmra.mxu0 %v4039
    %v4099 = vpop.f32.mrf.mxu0
    %v4100 = vadd.f32 0.0, %v4099
    %v4101 = vpop.f32.mrf.mxu0
    %v4102 = vpop.f32.mrf.mxu0
    %v4103 = vadd.f32 0.0, %v4102
    %v4104 = vpop.f32.mrf.mxu0
    %4105 = vmatprep.mubr.bf16.mxu0 0
    %4106 = vmatmul.mubr.bf16.gmra.mxu0 %v4042
    %v4107 = vpop.f32.mrf.mxu0
    %v4108 = vadd.f32 0.0, %v4107
    %v4109 = vpop.f32.mrf.mxu0
    %v4110 = vpop.f32.mrf.mxu0
    %v4111 = vadd.f32 0.0, %v4110
    %v4112 = vpop.f32.mrf.mxu0
    %4113 = vmatprep.mubr.bf16.mxu0 0
    %4114 = vmatmul.mubr.bf16.gmra.mxu0 %v4045
    %v4115 = vpop.f32.mrf.mxu0
    %v4116 = vadd.f32 0.0, %v4115
    %v4117 = vpop.f32.mrf.mxu0
    %v4118 = vpop.f32.mrf.mxu0
    %v4119 = vadd.f32 0.0, %v4118
    %v4120 = vpop.f32.mrf.mxu0
    %4121 = vmatprep.mubr.bf16.mxu0 0
    %4122 = vmatmul.mubr.bf16.gmra.mxu0 %v4048
    %v4123 = vpop.f32.mrf.mxu0
    %v4124 = vadd.f32 0.0, %v4123
    %v4125 = vpop.f32.mrf.mxu0
    %v4126 = vpop.f32.mrf.mxu0
    %v4127 = vadd.f32 0.0, %v4126
    %v4128 = vpop.f32.mrf.mxu0
    %4129 = vmatprep.mubr.bf16.mxu0 0
    %4130 = vmatmul.mubr.bf16.gmra.mxu0 %v4051
    %v4131 = vpop.f32.mrf.mxu0
    %v4132 = vadd.f32 0.0, %v4131
    %v4133 = vpop.f32.mrf.mxu0
    %v4134 = vpop.f32.mrf.mxu0
    %v4135 = vadd.f32 0.0, %v4134
    %v4136 = vpop.f32.mrf.mxu0
    %4137 = vmatprep.mubr.bf16.mxu0 0
    %4138 = vmatmul.mubr.bf16.gmra.mxu0 %v4054
    %v4139 = vpop.f32.mrf.mxu0
    %v4140 = vadd.f32 0.0, %v4139
    %v4141 = vpop.f32.mrf.mxu0
    %v4142 = vpop.f32.mrf.mxu0
    %v4143 = vadd.f32 0.0, %v4142
    %v4144 = vpop.f32.mrf.mxu0
    %4145 = vmatprep.mubr.bf16.mxu0 0
    %4146 = vmatmul.mubr.bf16.gmra.mxu0 %v4057
    %v4147 = vpop.f32.mrf.mxu0
    %v4148 = vadd.f32 0.0, %v4147
    %v4149 = vpop.f32.mrf.mxu0
    %v4150 = vpop.f32.mrf.mxu0
    %v4151 = vadd.f32 0.0, %v4150
    %v4152 = vpop.f32.mrf.mxu0
    %4153 = vmatprep.mubr.bf16.mxu0 0
    %4154 = vmatmul.mubr.bf16.gmra.mxu0 %v4060
    %v4155 = vpop.f32.mrf.mxu0
    %v4156 = vadd.f32 0.0, %v4155
    %v4157 = vpop.f32.mrf.mxu0
    %v4158 = vpop.f32.mrf.mxu0
    %v4159 = vadd.f32 0.0, %v4158
    %v4160 = vpop.f32.mrf.mxu0
    %4161 = vdwg.mxu0
    %v4162 = vadd.f32 %v3996, %v4100
    %v4163 = vadd.f32 %v3997, %v4103
    %v4164 = vadd.f32 %v3998, %v4108
    %v4165 = vadd.f32 %v3999, %v4111
    %v4166 = vadd.f32 %v4000, %v4116
    %v4167 = vadd.f32 %v4001, %v4119
    %v4168 = vadd.f32 %v4002, %v4124
    %v4169 = vadd.f32 %v4003, %v4127
    %v4170 = vadd.f32 %v4004, %v4132
    %v4171 = vadd.f32 %v4005, %v4135
    %v4172 = vadd.f32 %v4006, %v4140
    %v4173 = vadd.f32 %v4007, %v4143
    %v4174 = vadd.f32 %v4008, %v4148
    %v4175 = vadd.f32 %v4009, %v4151
    %v4176 = vadd.f32 %v4010, %v4156
    %v4177 = vadd.f32 %v4011, %v4159
    %s4178 = scalar_lea.vmem [#allocation2], 72
    %v4179 = vld [vmem:[%s4178] sm:$0xff]
    %v4180 = vld [vmem:[%s4178 + $0x8] sm:$0xff]
    %v4181 = vld [vmem:[%s4178 + $0x18] sm:$0xff]
    %v4182 = vld [vmem:[%s4178 + $0x20] sm:$0xff]
    %v4183 = vld [vmem:[%s4178 + $0x30] sm:$0xff]
    %v4184 = vld [vmem:[%s4178 + $0x38] sm:$0xff]
    %v4185 = vld [vmem:[%s4178 + $0x48] sm:$0xff]
    %v4186 = vld [vmem:[%s4178 + $0x50] sm:$0xff]
    %v4187 = vld [vmem:[%s4178 + $0x60] sm:$0xff]
    %v4188 = vld [vmem:[%s4178 + $0x68] sm:$0xff]
    %v4189 = vld [vmem:[%s4178 + $0x78] sm:$0xff]
    %v4190 = vld [vmem:[%s4178 + $0x80] sm:$0xff]
    %v4191 = vld [vmem:[%s4178 + $0x90] sm:$0xff]
    %v4192 = vld [vmem:[%s4178 + $0x98] sm:$0xff]
    %v4193 = vld [vmem:[%s4178 + $0xa8] sm:$0xff]
    %v4194 = vld [vmem:[%s4178 + $0xb0] sm:$0xff]
    %v4195 = vpack.c.bf16 %v4180, %v4179
    %v4196 = vpack.c.bf16 %v4182, %v4181
    %v4197 = vpack.c.bf16 %v4184, %v4183
    %v4198 = vpack.c.bf16 %v4186, %v4185
    %v4199 = vpack.c.bf16 %v4188, %v4187
    %v4200 = vpack.c.bf16 %v4190, %v4189
    %v4201 = vpack.c.bf16 %v4192, %v4191
    %v4202 = vpack.c.bf16 %v4194, %v4193
    %s4203 = scalar_lea.vmem %s3, 60
    %v4204 = vld [vmem:[%s4203] sm:$0x7]
    %v4206 = vsel %vm1681, %v4195, 0
    %v4209 = vsel %vm1681, %v4196, 0
    %v4212 = vsel %vm1681, %v4197, 0
    %v4215 = vsel %vm1681, %v4198, 0
    %v4218 = vsel %vm1681, %v4199, 0
    %v4221 = vsel %vm1681, %v4200, 0
    %v4224 = vsel %vm1681, %v4201, 0
    %v4227 = vsel %vm1681, %v4202, 0
    %v4230 = vsel %vm1793, %v4204, 0
    %4232 = vmatprep.subr.bf16.mxu0 0
    %4233 = vmatpush1.bf16.msra.mxu0 0
    %4234 = vmatprep.subr.bf16.mxu0 0
    %4235 = vmatpush1.bf16.msra.mxu0 0
    %4236 = vmatprep.subr.bf16.mxu0 0
    %4237 = vmatpush1.bf16.msra.mxu0 0
    %4238 = vmatprep.subr.bf16.mxu0 0
    %4239 = vmatpush1.bf16.msra.mxu0 0
    %4240 = vmatprep.subr.bf16.mxu0 0
    %4241 = vmatpush1.bf16.msra.mxu0 0
    %4242 = vmatprep.subr.bf16.mxu0 0
    %4243 = vmatpush1.bf16.msra.mxu0 0
    %4244 = vmatprep.subr.bf16.mxu0 0
    %4245 = vmatpush1.bf16.msra.mxu0 0
    %4246 = vmatprep.subr.bf16.mxu0 0
    %4247 = vmatpush1.bf16.msra.mxu0 %v4230
    %4248 = vmatprep.subr.bf16.mxu0 0
    %4249 = vmatpush2.bf16.msra.mxu0 0
    %4250 = vmatprep.subr.bf16.mxu0 0
    %4251 = vmatpush2.bf16.msra.mxu0 0
    %4252 = vmatprep.subr.bf16.mxu0 0
    %4253 = vmatpush2.bf16.msra.mxu0 0
    %4254 = vmatprep.subr.bf16.mxu0 0
    %4255 = vmatpush2.bf16.msra.mxu0 0
    %4256 = vmatprep.subr.bf16.mxu0 0
    %4257 = vmatpush2.bf16.msra.mxu0 0
    %4258 = vmatprep.subr.bf16.mxu0 0
    %4259 = vmatpush2.bf16.msra.mxu0 0
    %4260 = vmatprep.subr.bf16.mxu0 0
    %4261 = vmatpush2.bf16.msra.mxu0 0
    %4262 = vmatprep.subr.bf16.mxu0 0
    %4263 = vmatpush2.bf16.msra.mxu0 0
    %4264 = vmatprep.mubr.bf16.mxu0 0
    %4265 = vmatmul.mubr.bf16.gmra.mxu0 %v4206
    %v4266 = vpop.f32.mrf.mxu0
    %v4267 = vadd.f32 0.0, %v4266
    %v4268 = vpop.f32.mrf.mxu0
    %v4269 = vpop.f32.mrf.mxu0
    %v4270 = vadd.f32 0.0, %v4269
    %v4271 = vpop.f32.mrf.mxu0
    %4272 = vmatprep.mubr.bf16.mxu0 0
    %4273 = vmatmul.mubr.bf16.gmra.mxu0 %v4209
    %v4274 = vpop.f32.mrf.mxu0
    %v4275 = vadd.f32 0.0, %v4274
    %v4276 = vpop.f32.mrf.mxu0
    %v4277 = vpop.f32.mrf.mxu0
    %v4278 = vadd.f32 0.0, %v4277
    %v4279 = vpop.f32.mrf.mxu0
    %4280 = vmatprep.mubr.bf16.mxu0 0
    %4281 = vmatmul.mubr.bf16.gmra.mxu0 %v4212
    %v4282 = vpop.f32.mrf.mxu0
    %v4283 = vadd.f32 0.0, %v4282
    %v4284 = vpop.f32.mrf.mxu0
    %v4285 = vpop.f32.mrf.mxu0
    %v4286 = vadd.f32 0.0, %v4285
    %v4287 = vpop.f32.mrf.mxu0
    %4288 = vmatprep.mubr.bf16.mxu0 0
    %4289 = vmatmul.mubr.bf16.gmra.mxu0 %v4215
    %v4290 = vpop.f32.mrf.mxu0
    %v4291 = vadd.f32 0.0, %v4290
    %v4292 = vpop.f32.mrf.mxu0
    %v4293 = vpop.f32.mrf.mxu0
    %v4294 = vadd.f32 0.0, %v4293
    %v4295 = vpop.f32.mrf.mxu0
    %4296 = vmatprep.mubr.bf16.mxu0 0
    %4297 = vmatmul.mubr.bf16.gmra.mxu0 %v4218
    %v4298 = vpop.f32.mrf.mxu0
    %v4299 = vadd.f32 0.0, %v4298
    %v4300 = vpop.f32.mrf.mxu0
    %v4301 = vpop.f32.mrf.mxu0
    %v4302 = vadd.f32 0.0, %v4301
    %v4303 = vpop.f32.mrf.mxu0
    %4304 = vmatprep.mubr.bf16.mxu0 0
    %4305 = vmatmul.mubr.bf16.gmra.mxu0 %v4221
    %v4306 = vpop.f32.mrf.mxu0
    %v4307 = vadd.f32 0.0, %v4306
    %v4308 = vpop.f32.mrf.mxu0
    %v4309 = vpop.f32.mrf.mxu0
    %v4310 = vadd.f32 0.0, %v4309
    %v4311 = vpop.f32.mrf.mxu0
    %4312 = vmatprep.mubr.bf16.mxu0 0
    %4313 = vmatmul.mubr.bf16.gmra.mxu0 %v4224
    %v4314 = vpop.f32.mrf.mxu0
    %v4315 = vadd.f32 0.0, %v4314
    %v4316 = vpop.f32.mrf.mxu0
    %v4317 = vpop.f32.mrf.mxu0
    %v4318 = vadd.f32 0.0, %v4317
    %v4319 = vpop.f32.mrf.mxu0
    %4320 = vmatprep.mubr.bf16.mxu0 0
    %4321 = vmatmul.mubr.bf16.gmra.mxu0 %v4227
    %v4322 = vpop.f32.mrf.mxu0
    %v4323 = vadd.f32 0.0, %v4322
    %v4324 = vpop.f32.mrf.mxu0
    %v4325 = vpop.f32.mrf.mxu0
    %v4326 = vadd.f32 0.0, %v4325
    %v4327 = vpop.f32.mrf.mxu0
    %4328 = vdwg.mxu0
    %v4329 = vadd.f32 %v4162, %v4267
    %v4330 = vadd.f32 %v4163, %v4270
    %v4331 = vadd.f32 %v4164, %v4275
    %v4332 = vadd.f32 %v4165, %v4278
    %v4333 = vadd.f32 %v4166, %v4283
    %v4334 = vadd.f32 %v4167, %v4286
    %v4335 = vadd.f32 %v4168, %v4291
    %v4336 = vadd.f32 %v4169, %v4294
    %v4337 = vadd.f32 %v4170, %v4299
    %v4338 = vadd.f32 %v4171, %v4302
    %v4339 = vadd.f32 %v4172, %v4307
    %v4340 = vadd.f32 %v4173, %v4310
    %v4341 = vadd.f32 %v4174, %v4315
    %v4342 = vadd.f32 %v4175, %v4318
    %v4343 = vadd.f32 %v4176, %v4323
    %v4344 = vadd.f32 %v4177, %v4326
    %v4345 = vld [vmem:[%s4178 + $0x2] sm:$0xff]
    %v4346 = vld [vmem:[%s4178 + $0xa] sm:$0xff]
    %v4347 = vld [vmem:[%s4178 + $0x1a] sm:$0xff]
    %v4348 = vld [vmem:[%s4178 + $0x22] sm:$0xff]
    %v4349 = vld [vmem:[%s4178 + $0x32] sm:$0xff]
    %v4350 = vld [vmem:[%s4178 + $0x3a] sm:$0xff]
    %v4351 = vld [vmem:[%s4178 + $0x4a] sm:$0xff]
    %v4352 = vld [vmem:[%s4178 + $0x52] sm:$0xff]
    %v4353 = vld [vmem:[%s4178 + $0x62] sm:$0xff]
    %v4354 = vld [vmem:[%s4178 + $0x6a] sm:$0xff]
    %v4355 = vld [vmem:[%s4178 + $0x7a] sm:$0xff]
    %v4356 = vld [vmem:[%s4178 + $0x82] sm:$0xff]
    %v4357 = vld [vmem:[%s4178 + $0x92] sm:$0xff]
    %v4358 = vld [vmem:[%s4178 + $0x9a] sm:$0xff]
    %v4359 = vld [vmem:[%s4178 + $0xaa] sm:$0xff]
    %v4360 = vld [vmem:[%s4178 + $0xb2] sm:$0xff]
    %v4361 = vpack.c.bf16 %v4346, %v4345
    %v4362 = vpack.c.bf16 %v4348, %v4347
    %v4363 = vpack.c.bf16 %v4350, %v4349
    %v4364 = vpack.c.bf16 %v4352, %v4351
    %v4365 = vpack.c.bf16 %v4354, %v4353
    %v4366 = vpack.c.bf16 %v4356, %v4355
    %v4367 = vpack.c.bf16 %v4358, %v4357
    %v4368 = vpack.c.bf16 %v4360, %v4359
    %s4369 = scalar_lea.vmem %s3, 64
    %v4370 = vld [vmem:[%s4369] sm:$0x7]
    %v4372 = vsel %vm1681, %v4361, 0
    %v4375 = vsel %vm1681, %v4362, 0
    %v4378 = vsel %vm1681, %v4363, 0
    %v4381 = vsel %vm1681, %v4364, 0
    %v4384 = vsel %vm1681, %v4365, 0
    %v4387 = vsel %vm1681, %v4366, 0
    %v4390 = vsel %vm1681, %v4367, 0
    %v4393 = vsel %vm1681, %v4368, 0
    %v4396 = vsel %vm1793, %v4370, 0
    %4398 = vmatprep.subr.bf16.mxu0 0
    %4399 = vmatpush1.bf16.msra.mxu0 0
    %4400 = vmatprep.subr.bf16.mxu0 0
    %4401 = vmatpush1.bf16.msra.mxu0 0
    %4402 = vmatprep.subr.bf16.mxu0 0
    %4403 = vmatpush1.bf16.msra.mxu0 0
    %4404 = vmatprep.subr.bf16.mxu0 0
    %4405 = vmatpush1.bf16.msra.mxu0 0
    %4406 = vmatprep.subr.bf16.mxu0 0
    %4407 = vmatpush1.bf16.msra.mxu0 0
    %4408 = vmatprep.subr.bf16.mxu0 0
    %4409 = vmatpush1.bf16.msra.mxu0 0
    %4410 = vmatprep.subr.bf16.mxu0 0
    %4411 = vmatpush1.bf16.msra.mxu0 0
    %4412 = vmatprep.subr.bf16.mxu0 0
    %4413 = vmatpush1.bf16.msra.mxu0 %v4396
    %4414 = vmatprep.subr.bf16.mxu0 0
    %4415 = vmatpush2.bf16.msra.mxu0 0
    %4416 = vmatprep.subr.bf16.mxu0 0
    %4417 = vmatpush2.bf16.msra.mxu0 0
    %4418 = vmatprep.subr.bf16.mxu0 0
    %4419 = vmatpush2.bf16.msra.mxu0 0
    %4420 = vmatprep.subr.bf16.mxu0 0
    %4421 = vmatpush2.bf16.msra.mxu0 0
    %4422 = vmatprep.subr.bf16.mxu0 0
    %4423 = vmatpush2.bf16.msra.mxu0 0
    %4424 = vmatprep.subr.bf16.mxu0 0
    %4425 = vmatpush2.bf16.msra.mxu0 0
    %4426 = vmatprep.subr.bf16.mxu0 0
    %4427 = vmatpush2.bf16.msra.mxu0 0
    %4428 = vmatprep.subr.bf16.mxu0 0
    %4429 = vmatpush2.bf16.msra.mxu0 0
    %4430 = vmatprep.mubr.bf16.mxu0 0
    %4431 = vmatmul.mubr.bf16.gmra.mxu0 %v4372
    %v4432 = vpop.f32.mrf.mxu0
    %v4433 = vadd.f32 0.0, %v4432
    %v4434 = vpop.f32.mrf.mxu0
    %v4435 = vpop.f32.mrf.mxu0
    %v4436 = vadd.f32 0.0, %v4435
    %v4437 = vpop.f32.mrf.mxu0
    %4438 = vmatprep.mubr.bf16.mxu0 0
    %4439 = vmatmul.mubr.bf16.gmra.mxu0 %v4375
    %v4440 = vpop.f32.mrf.mxu0
    %v4441 = vadd.f32 0.0, %v4440
    %v4442 = vpop.f32.mrf.mxu0
    %v4443 = vpop.f32.mrf.mxu0
    %v4444 = vadd.f32 0.0, %v4443
    %v4445 = vpop.f32.mrf.mxu0
    %4446 = vmatprep.mubr.bf16.mxu0 0
    %4447 = vmatmul.mubr.bf16.gmra.mxu0 %v4378
    %v4448 = vpop.f32.mrf.mxu0
    %v4449 = vadd.f32 0.0, %v4448
    %v4450 = vpop.f32.mrf.mxu0
    %v4451 = vpop.f32.mrf.mxu0
    %v4452 = vadd.f32 0.0, %v4451
    %v4453 = vpop.f32.mrf.mxu0
    %4454 = vmatprep.mubr.bf16.mxu0 0
    %4455 = vmatmul.mubr.bf16.gmra.mxu0 %v4381
    %v4456 = vpop.f32.mrf.mxu0
    %v4457 = vadd.f32 0.0, %v4456
    %v4458 = vpop.f32.mrf.mxu0
    %v4459 = vpop.f32.mrf.mxu0
    %v4460 = vadd.f32 0.0, %v4459
    %v4461 = vpop.f32.mrf.mxu0
    %4462 = vmatprep.mubr.bf16.mxu0 0
    %4463 = vmatmul.mubr.bf16.gmra.mxu0 %v4384
    %v4464 = vpop.f32.mrf.mxu0
    %v4465 = vadd.f32 0.0, %v4464
    %v4466 = vpop.f32.mrf.mxu0
    %v4467 = vpop.f32.mrf.mxu0
    %v4468 = vadd.f32 0.0, %v4467
    %v4469 = vpop.f32.mrf.mxu0
    %4470 = vmatprep.mubr.bf16.mxu0 0
    %4471 = vmatmul.mubr.bf16.gmra.mxu0 %v4387
    %v4472 = vpop.f32.mrf.mxu0
    %v4473 = vadd.f32 0.0, %v4472
    %v4474 = vpop.f32.mrf.mxu0
    %v4475 = vpop.f32.mrf.mxu0
    %v4476 = vadd.f32 0.0, %v4475
    %v4477 = vpop.f32.mrf.mxu0
    %4478 = vmatprep.mubr.bf16.mxu0 0
    %4479 = vmatmul.mubr.bf16.gmra.mxu0 %v4390
    %v4480 = vpop.f32.mrf.mxu0
    %v4481 = vadd.f32 0.0, %v4480
    %v4482 = vpop.f32.mrf.mxu0
    %v4483 = vpop.f32.mrf.mxu0
    %v4484 = vadd.f32 0.0, %v4483
    %v4485 = vpop.f32.mrf.mxu0
    %4486 = vmatprep.mubr.bf16.mxu0 0
    %4487 = vmatmul.mubr.bf16.gmra.mxu0 %v4393
    %v4488 = vpop.f32.mrf.mxu0
    %v4489 = vadd.f32 0.0, %v4488
    %v4490 = vpop.f32.mrf.mxu0
    %v4491 = vpop.f32.mrf.mxu0
    %v4492 = vadd.f32 0.0, %v4491
    %v4493 = vpop.f32.mrf.mxu0
    %4494 = vdwg.mxu0
    %v4495 = vadd.f32 %v4329, %v4433
    %v4496 = vadd.f32 %v4330, %v4436
    %v4497 = vadd.f32 %v4331, %v4441
    %v4498 = vadd.f32 %v4332, %v4444
    %v4499 = vadd.f32 %v4333, %v4449
    %v4500 = vadd.f32 %v4334, %v4452
    %v4501 = vadd.f32 %v4335, %v4457
    %v4502 = vadd.f32 %v4336, %v4460
    %v4503 = vadd.f32 %v4337, %v4465
    %v4504 = vadd.f32 %v4338, %v4468
    %v4505 = vadd.f32 %v4339, %v4473
    %v4506 = vadd.f32 %v4340, %v4476
    %v4507 = vadd.f32 %v4341, %v4481
    %v4508 = vadd.f32 %v4342, %v4484
    %v4509 = vadd.f32 %v4343, %v4489
    %v4510 = vadd.f32 %v4344, %v4492
    %v4511 = vld [vmem:[%s4178 + $0x4] sm:$0xff]
    %v4512 = vld [vmem:[%s4178 + $0xc] sm:$0xff]
    %v4513 = vld [vmem:[%s4178 + $0x1c] sm:$0xff]
    %v4514 = vld [vmem:[%s4178 + $0x24] sm:$0xff]
    %v4515 = vld [vmem:[%s4178 + $0x34] sm:$0xff]
    %v4516 = vld [vmem:[%s4178 + $0x3c] sm:$0xff]
    %v4517 = vld [vmem:[%s4178 + $0x4c] sm:$0xff]
    %v4518 = vld [vmem:[%s4178 + $0x54] sm:$0xff]
    %v4519 = vld [vmem:[%s4178 + $0x64] sm:$0xff]
    %v4520 = vld [vmem:[%s4178 + $0x6c] sm:$0xff]
    %v4521 = vld [vmem:[%s4178 + $0x7c] sm:$0xff]
    %v4522 = vld [vmem:[%s4178 + $0x84] sm:$0xff]
    %v4523 = vld [vmem:[%s4178 + $0x94] sm:$0xff]
    %v4524 = vld [vmem:[%s4178 + $0x9c] sm:$0xff]
    %v4525 = vld [vmem:[%s4178 + $0xac] sm:$0xff]
    %v4526 = vld [vmem:[%s4178 + $0xb4] sm:$0xff]
    %v4527 = vpack.c.bf16 %v4512, %v4511
    %v4528 = vpack.c.bf16 %v4514, %v4513
    %v4529 = vpack.c.bf16 %v4516, %v4515
    %v4530 = vpack.c.bf16 %v4518, %v4517
    %v4531 = vpack.c.bf16 %v4520, %v4519
    %v4532 = vpack.c.bf16 %v4522, %v4521
    %v4533 = vpack.c.bf16 %v4524, %v4523
    %v4534 = vpack.c.bf16 %v4526, %v4525
    %s4535 = scalar_lea.vmem %s3, 68
    %v4536 = vld [vmem:[%s4535] sm:$0x7]
    %v4538 = vsel %vm1681, %v4527, 0
    %v4541 = vsel %vm1681, %v4528, 0
    %v4544 = vsel %vm1681, %v4529, 0
    %v4547 = vsel %vm1681, %v4530, 0
    %v4550 = vsel %vm1681, %v4531, 0
    %v4553 = vsel %vm1681, %v4532, 0
    %v4556 = vsel %vm1681, %v4533, 0
    %v4559 = vsel %vm1681, %v4534, 0
    %v4562 = vsel %vm1793, %v4536, 0
    %4564 = vmatprep.subr.bf16.mxu0 0
    %4565 = vmatpush1.bf16.msra.mxu0 0
    %4566 = vmatprep.subr.bf16.mxu0 0
    %4567 = vmatpush1.bf16.msra.mxu0 0
    %4568 = vmatprep.subr.bf16.mxu0 0
    %4569 = vmatpush1.bf16.msra.mxu0 0
    %4570 = vmatprep.subr.bf16.mxu0 0
    %4571 = vmatpush1.bf16.msra.mxu0 0
    %4572 = vmatprep.subr.bf16.mxu0 0
    %4573 = vmatpush1.bf16.msra.mxu0 0
    %4574 = vmatprep.subr.bf16.mxu0 0
    %4575 = vmatpush1.bf16.msra.mxu0 0
    %4576 = vmatprep.subr.bf16.mxu0 0
    %4577 = vmatpush1.bf16.msra.mxu0 0
    %4578 = vmatprep.subr.bf16.mxu0 0
    %4579 = vmatpush1.bf16.msra.mxu0 %v4562
    %4580 = vmatprep.subr.bf16.mxu0 0
    %4581 = vmatpush2.bf16.msra.mxu0 0
    %4582 = vmatprep.subr.bf16.mxu0 0
    %4583 = vmatpush2.bf16.msra.mxu0 0
    %4584 = vmatprep.subr.bf16.mxu0 0
    %4585 = vmatpush2.bf16.msra.mxu0 0
    %4586 = vmatprep.subr.bf16.mxu0 0
    %4587 = vmatpush2.bf16.msra.mxu0 0
    %4588 = vmatprep.subr.bf16.mxu0 0
    %4589 = vmatpush2.bf16.msra.mxu0 0
    %4590 = vmatprep.subr.bf16.mxu0 0
    %4591 = vmatpush2.bf16.msra.mxu0 0
    %4592 = vmatprep.subr.bf16.mxu0 0
    %4593 = vmatpush2.bf16.msra.mxu0 0
    %4594 = vmatprep.subr.bf16.mxu0 0
    %4595 = vmatpush2.bf16.msra.mxu0 0
    %4596 = vmatprep.mubr.bf16.mxu0 0
    %4597 = vmatmul.mubr.bf16.gmra.mxu0 %v4538
    %v4598 = vpop.f32.mrf.mxu0
    %v4599 = vadd.f32 0.0, %v4598
    %v4600 = vpop.f32.mrf.mxu0
    %v4601 = vpop.f32.mrf.mxu0
    %v4602 = vadd.f32 0.0, %v4601
    %v4603 = vpop.f32.mrf.mxu0
    %4604 = vmatprep.mubr.bf16.mxu0 0
    %4605 = vmatmul.mubr.bf16.gmra.mxu0 %v4541
    %v4606 = vpop.f32.mrf.mxu0
    %v4607 = vadd.f32 0.0, %v4606
    %v4608 = vpop.f32.mrf.mxu0
    %v4609 = vpop.f32.mrf.mxu0
    %v4610 = vadd.f32 0.0, %v4609
    %v4611 = vpop.f32.mrf.mxu0
    %4612 = vmatprep.mubr.bf16.mxu0 0
    %4613 = vmatmul.mubr.bf16.gmra.mxu0 %v4544
    %v4614 = vpop.f32.mrf.mxu0
    %v4615 = vadd.f32 0.0, %v4614
    %v4616 = vpop.f32.mrf.mxu0
    %v4617 = vpop.f32.mrf.mxu0
    %v4618 = vadd.f32 0.0, %v4617
    %v4619 = vpop.f32.mrf.mxu0
    %4620 = vmatprep.mubr.bf16.mxu0 0
    %4621 = vmatmul.mubr.bf16.gmra.mxu0 %v4547
    %v4622 = vpop.f32.mrf.mxu0
    %v4623 = vadd.f32 0.0, %v4622
    %v4624 = vpop.f32.mrf.mxu0
    %v4625 = vpop.f32.mrf.mxu0
    %v4626 = vadd.f32 0.0, %v4625
    %v4627 = vpop.f32.mrf.mxu0
    %4628 = vmatprep.mubr.bf16.mxu0 0
    %4629 = vmatmul.mubr.bf16.gmra.mxu0 %v4550
    %v4630 = vpop.f32.mrf.mxu0
    %v4631 = vadd.f32 0.0, %v4630
    %v4632 = vpop.f32.mrf.mxu0
    %v4633 = vpop.f32.mrf.mxu0
    %v4634 = vadd.f32 0.0, %v4633
    %v4635 = vpop.f32.mrf.mxu0
    %4636 = vmatprep.mubr.bf16.mxu0 0
    %4637 = vmatmul.mubr.bf16.gmra.mxu0 %v4553
    %v4638 = vpop.f32.mrf.mxu0
    %v4639 = vadd.f32 0.0, %v4638
    %v4640 = vpop.f32.mrf.mxu0
    %v4641 = vpop.f32.mrf.mxu0
    %v4642 = vadd.f32 0.0, %v4641
    %v4643 = vpop.f32.mrf.mxu0
    %4644 = vmatprep.mubr.bf16.mxu0 0
    %4645 = vmatmul.mubr.bf16.gmra.mxu0 %v4556
    %v4646 = vpop.f32.mrf.mxu0
    %v4647 = vadd.f32 0.0, %v4646
    %v4648 = vpop.f32.mrf.mxu0
    %v4649 = vpop.f32.mrf.mxu0
    %v4650 = vadd.f32 0.0, %v4649
    %v4651 = vpop.f32.mrf.mxu0
    %4652 = vmatprep.mubr.bf16.mxu0 0
    %4653 = vmatmul.mubr.bf16.gmra.mxu0 %v4559
    %v4654 = vpop.f32.mrf.mxu0
    %v4655 = vadd.f32 0.0, %v4654
    %v4656 = vpop.f32.mrf.mxu0
    %v4657 = vpop.f32.mrf.mxu0
    %v4658 = vadd.f32 0.0, %v4657
    %v4659 = vpop.f32.mrf.mxu0
    %4660 = vdwg.mxu0
    %v4661 = vadd.f32 %v4495, %v4599
    %v4662 = vadd.f32 %v4496, %v4602
    %v4663 = vadd.f32 %v4497, %v4607
    %v4664 = vadd.f32 %v4498, %v4610
    %v4665 = vadd.f32 %v4499, %v4615
    %v4666 = vadd.f32 %v4500, %v4618
    %v4667 = vadd.f32 %v4501, %v4623
    %v4668 = vadd.f32 %v4502, %v4626
    %v4669 = vadd.f32 %v4503, %v4631
    %v4670 = vadd.f32 %v4504, %v4634
    %v4671 = vadd.f32 %v4505, %v4639
    %v4672 = vadd.f32 %v4506, %v4642
    %v4673 = vadd.f32 %v4507, %v4647
    %v4674 = vadd.f32 %v4508, %v4650
    %v4675 = vadd.f32 %v4509, %v4655
    %v4676 = vadd.f32 %v4510, %v4658
    %v4677 = vld [vmem:[%s4178 + $0x6] sm:$0xff]
    %v4678 = vld [vmem:[%s4178 + $0xe] sm:$0xff]
    %v4679 = vld [vmem:[%s4178 + $0x1e] sm:$0xff]
    %v4680 = vld [vmem:[%s4178 + $0x26] sm:$0xff]
    %v4681 = vld [vmem:[%s4178 + $0x36] sm:$0xff]
    %v4682 = vld [vmem:[%s4178 + $0x3e] sm:$0xff]
    %v4683 = vld [vmem:[%s4178 + $0x4e] sm:$0xff]
    %v4684 = vld [vmem:[%s4178 + $0x56] sm:$0xff]
    %v4685 = vld [vmem:[%s4178 + $0x66] sm:$0xff]
    %v4686 = vld [vmem:[%s4178 + $0x6e] sm:$0xff]
    %v4687 = vld [vmem:[%s4178 + $0x7e] sm:$0xff]
    %v4688 = vld [vmem:[%s4178 + $0x86] sm:$0xff]
    %v4689 = vld [vmem:[%s4178 + $0x96] sm:$0xff]
    %v4690 = vld [vmem:[%s4178 + $0x9e] sm:$0xff]
    %v4691 = vld [vmem:[%s4178 + $0xae] sm:$0xff]
    %v4692 = vld [vmem:[%s4178 + $0xb6] sm:$0xff]
    %v4693 = vpack.c.bf16 %v4678, %v4677
    %v4694 = vpack.c.bf16 %v4680, %v4679
    %v4695 = vpack.c.bf16 %v4682, %v4681
    %v4696 = vpack.c.bf16 %v4684, %v4683
    %v4697 = vpack.c.bf16 %v4686, %v4685
    %v4698 = vpack.c.bf16 %v4688, %v4687
    %v4699 = vpack.c.bf16 %v4690, %v4689
    %v4700 = vpack.c.bf16 %v4692, %v4691
    %s4701 = scalar_lea.vmem %s3, 72
    %v4702 = vld [vmem:[%s4701] sm:$0x7]
    %v4704 = vsel %vm1681, %v4693, 0
    %v4707 = vsel %vm1681, %v4694, 0
    %v4710 = vsel %vm1681, %v4695, 0
    %v4713 = vsel %vm1681, %v4696, 0
    %v4716 = vsel %vm1681, %v4697, 0
    %v4719 = vsel %vm1681, %v4698, 0
    %v4722 = vsel %vm1681, %v4699, 0
    %v4725 = vsel %vm1681, %v4700, 0
    %v4728 = vsel %vm1793, %v4702, 0
    %4730 = vmatprep.subr.bf16.mxu0 0
    %4731 = vmatpush1.bf16.msra.mxu0 0
    %4732 = vmatprep.subr.bf16.mxu0 0
    %4733 = vmatpush1.bf16.msra.mxu0 0
    %4734 = vmatprep.subr.bf16.mxu0 0
    %4735 = vmatpush1.bf16.msra.mxu0 0
    %4736 = vmatprep.subr.bf16.mxu0 0
    %4737 = vmatpush1.bf16.msra.mxu0 0
    %4738 = vmatprep.subr.bf16.mxu0 0
    %4739 = vmatpush1.bf16.msra.mxu0 0
    %4740 = vmatprep.subr.bf16.mxu0 0
    %4741 = vmatpush1.bf16.msra.mxu0 0
    %4742 = vmatprep.subr.bf16.mxu0 0
    %4743 = vmatpush1.bf16.msra.mxu0 0
    %4744 = vmatprep.subr.bf16.mxu0 0
    %4745 = vmatpush1.bf16.msra.mxu0 %v4728
    %4746 = vmatprep.subr.bf16.mxu0 0
    %4747 = vmatpush2.bf16.msra.mxu0 0
    %4748 = vmatprep.subr.bf16.mxu0 0
    %4749 = vmatpush2.bf16.msra.mxu0 0
    %4750 = vmatprep.subr.bf16.mxu0 0
    %4751 = vmatpush2.bf16.msra.mxu0 0
    %4752 = vmatprep.subr.bf16.mxu0 0
    %4753 = vmatpush2.bf16.msra.mxu0 0
    %4754 = vmatprep.subr.bf16.mxu0 0
    %4755 = vmatpush2.bf16.msra.mxu0 0
    %4756 = vmatprep.subr.bf16.mxu0 0
    %4757 = vmatpush2.bf16.msra.mxu0 0
    %4758 = vmatprep.subr.bf16.mxu0 0
    %4759 = vmatpush2.bf16.msra.mxu0 0
    %4760 = vmatprep.subr.bf16.mxu0 0
    %4761 = vmatpush2.bf16.msra.mxu0 0
    %4762 = vmatprep.mubr.bf16.mxu0 0
    %4763 = vmatmul.mubr.bf16.gmra.mxu0 %v4704
    %v4764 = vpop.f32.mrf.mxu0
    %v4765 = vadd.f32 0.0, %v4764
    %v4766 = vpop.f32.mrf.mxu0
    %v4767 = vpop.f32.mrf.mxu0
    %v4768 = vadd.f32 0.0, %v4767
    %v4769 = vpop.f32.mrf.mxu0
    %4770 = vmatprep.mubr.bf16.mxu0 0
    %4771 = vmatmul.mubr.bf16.gmra.mxu0 %v4707
    %v4772 = vpop.f32.mrf.mxu0
    %v4773 = vadd.f32 0.0, %v4772
    %v4774 = vpop.f32.mrf.mxu0
    %v4775 = vpop.f32.mrf.mxu0
    %v4776 = vadd.f32 0.0, %v4775
    %v4777 = vpop.f32.mrf.mxu0
    %4778 = vmatprep.mubr.bf16.mxu0 0
    %4779 = vmatmul.mubr.bf16.gmra.mxu0 %v4710
    %v4780 = vpop.f32.mrf.mxu0
    %v4781 = vadd.f32 0.0, %v4780
    %v4782 = vpop.f32.mrf.mxu0
    %v4783 = vpop.f32.mrf.mxu0
    %v4784 = vadd.f32 0.0, %v4783
    %v4785 = vpop.f32.mrf.mxu0
    %4786 = vmatprep.mubr.bf16.mxu0 0
    %4787 = vmatmul.mubr.bf16.gmra.mxu0 %v4713
    %v4788 = vpop.f32.mrf.mxu0
    %v4789 = vadd.f32 0.0, %v4788
    %v4790 = vpop.f32.mrf.mxu0
    %v4791 = vpop.f32.mrf.mxu0
    %v4792 = vadd.f32 0.0, %v4791
    %v4793 = vpop.f32.mrf.mxu0
    %4794 = vmatprep.mubr.bf16.mxu0 0
    %4795 = vmatmul.mubr.bf16.gmra.mxu0 %v4716
    %v4796 = vpop.f32.mrf.mxu0
    %v4797 = vadd.f32 0.0, %v4796
    %v4798 = vpop.f32.mrf.mxu0
    %v4799 = vpop.f32.mrf.mxu0
    %v4800 = vadd.f32 0.0, %v4799
    %v4801 = vpop.f32.mrf.mxu0
    %4802 = vmatprep.mubr.bf16.mxu0 0
    %4803 = vmatmul.mubr.bf16.gmra.mxu0 %v4719
    %v4804 = vpop.f32.mrf.mxu0
    %v4805 = vadd.f32 0.0, %v4804
    %v4806 = vpop.f32.mrf.mxu0
    %v4807 = vpop.f32.mrf.mxu0
    %v4808 = vadd.f32 0.0, %v4807
    %v4809 = vpop.f32.mrf.mxu0
    %4810 = vmatprep.mubr.bf16.mxu0 0
    %4811 = vmatmul.mubr.bf16.gmra.mxu0 %v4722
    %v4812 = vpop.f32.mrf.mxu0
    %v4813 = vadd.f32 0.0, %v4812
    %v4814 = vpop.f32.mrf.mxu0
    %v4815 = vpop.f32.mrf.mxu0
    %v4816 = vadd.f32 0.0, %v4815
    %v4817 = vpop.f32.mrf.mxu0
    %4818 = vmatprep.mubr.bf16.mxu0 0
    %4819 = vmatmul.mubr.bf16.gmra.mxu0 %v4725
    %v4820 = vpop.f32.mrf.mxu0
    %v4821 = vadd.f32 0.0, %v4820
    %v4822 = vpop.f32.mrf.mxu0
    %v4823 = vpop.f32.mrf.mxu0
    %v4824 = vadd.f32 0.0, %v4823
    %v4825 = vpop.f32.mrf.mxu0
    %4826 = vdwg.mxu0
    %v4827 = vadd.f32 %v4661, %v4765
    %v4828 = vadd.f32 %v4662, %v4768
    %v4829 = vadd.f32 %v4663, %v4773
    %v4830 = vadd.f32 %v4664, %v4776
    %v4831 = vadd.f32 %v4665, %v4781
    %v4832 = vadd.f32 %v4666, %v4784
    %v4833 = vadd.f32 %v4667, %v4789
    %v4834 = vadd.f32 %v4668, %v4792
    %v4835 = vadd.f32 %v4669, %v4797
    %v4836 = vadd.f32 %v4670, %v4800
    %v4837 = vadd.f32 %v4671, %v4805
    %v4838 = vadd.f32 %v4672, %v4808
    %v4839 = vadd.f32 %v4673, %v4813
    %v4840 = vadd.f32 %v4674, %v4816
    %v4841 = vadd.f32 %v4675, %v4821
    %v4842 = vadd.f32 %v4676, %v4824
    %v4843 = vld [vmem:[%s4178 + $0x8] sm:$0xff]
    %v4844 = vld [vmem:[%s4178 + $0x10] sm:$0xff]
    %v4845 = vld [vmem:[%s4178 + $0x20] sm:$0xff]
    %v4846 = vld [vmem:[%s4178 + $0x28] sm:$0xff]
    %v4847 = vld [vmem:[%s4178 + $0x38] sm:$0xff]
    %v4848 = vld [vmem:[%s4178 + $0x40] sm:$0xff]
    %v4849 = vld [vmem:[%s4178 + $0x50] sm:$0xff]
    %v4850 = vld [vmem:[%s4178 + $0x58] sm:$0xff]
    %v4851 = vld [vmem:[%s4178 + $0x68] sm:$0xff]
    %v4852 = vld [vmem:[%s4178 + $0x70] sm:$0xff]
    %v4853 = vld [vmem:[%s4178 + $0x80] sm:$0xff]
    %v4854 = vld [vmem:[%s4178 + $0x88] sm:$0xff]
    %v4855 = vld [vmem:[%s4178 + $0x98] sm:$0xff]
    %v4856 = vld [vmem:[%s4178 + $0xa0] sm:$0xff]
    %v4857 = vld [vmem:[%s4178 + $0xb0] sm:$0xff]
    %v4858 = vld [vmem:[%s4178 + $0xb8] sm:$0xff]
    %v4859 = vpack.c.bf16 %v4844, %v4843
    %v4860 = vpack.c.bf16 %v4846, %v4845
    %v4861 = vpack.c.bf16 %v4848, %v4847
    %v4862 = vpack.c.bf16 %v4850, %v4849
    %v4863 = vpack.c.bf16 %v4852, %v4851
    %v4864 = vpack.c.bf16 %v4854, %v4853
    %v4865 = vpack.c.bf16 %v4856, %v4855
    %v4866 = vpack.c.bf16 %v4858, %v4857
    %s4867 = scalar_lea.vmem %s3, 76
    %v4868 = vld [vmem:[%s4867] sm:$0x7]
    %v4870 = vsel %vm1681, %v4859, 0
    %v4873 = vsel %vm1681, %v4860, 0
    %v4876 = vsel %vm1681, %v4861, 0
    %v4879 = vsel %vm1681, %v4862, 0
    %v4882 = vsel %vm1681, %v4863, 0
    %v4885 = vsel %vm1681, %v4864, 0
    %v4888 = vsel %vm1681, %v4865, 0
    %v4891 = vsel %vm1681, %v4866, 0
    %v4894 = vsel %vm1793, %v4868, 0
    %4896 = vmatprep.subr.bf16.mxu0 0
    %4897 = vmatpush1.bf16.msra.mxu0 0
    %4898 = vmatprep.subr.bf16.mxu0 0
    %4899 = vmatpush1.bf16.msra.mxu0 0
    %4900 = vmatprep.subr.bf16.mxu0 0
    %4901 = vmatpush1.bf16.msra.mxu0 0
    %4902 = vmatprep.subr.bf16.mxu0 0
    %4903 = vmatpush1.bf16.msra.mxu0 0
    %4904 = vmatprep.subr.bf16.mxu0 0
    %4905 = vmatpush1.bf16.msra.mxu0 0
    %4906 = vmatprep.subr.bf16.mxu0 0
    %4907 = vmatpush1.bf16.msra.mxu0 0
    %4908 = vmatprep.subr.bf16.mxu0 0
    %4909 = vmatpush1.bf16.msra.mxu0 0
    %4910 = vmatprep.subr.bf16.mxu0 0
    %4911 = vmatpush1.bf16.msra.mxu0 %v4894
    %4912 = vmatprep.subr.bf16.mxu0 0
    %4913 = vmatpush2.bf16.msra.mxu0 0
    %4914 = vmatprep.subr.bf16.mxu0 0
    %4915 = vmatpush2.bf16.msra.mxu0 0
    %4916 = vmatprep.subr.bf16.mxu0 0
    %4917 = vmatpush2.bf16.msra.mxu0 0
    %4918 = vmatprep.subr.bf16.mxu0 0
    %4919 = vmatpush2.bf16.msra.mxu0 0
    %4920 = vmatprep.subr.bf16.mxu0 0
    %4921 = vmatpush2.bf16.msra.mxu0 0
    %4922 = vmatprep.subr.bf16.mxu0 0
    %4923 = vmatpush2.bf16.msra.mxu0 0
    %4924 = vmatprep.subr.bf16.mxu0 0
    %4925 = vmatpush2.bf16.msra.mxu0 0
    %4926 = vmatprep.subr.bf16.mxu0 0
    %4927 = vmatpush2.bf16.msra.mxu0 0
    %4928 = vmatprep.mubr.bf16.mxu0 0
    %4929 = vmatmul.mubr.bf16.gmra.mxu0 %v4870
    %v4930 = vpop.f32.mrf.mxu0
    %v4931 = vadd.f32 0.0, %v4930
    %v4932 = vpop.f32.mrf.mxu0
    %v4933 = vpop.f32.mrf.mxu0
    %v4934 = vadd.f32 0.0, %v4933
    %v4935 = vpop.f32.mrf.mxu0
    %4936 = vmatprep.mubr.bf16.mxu0 0
    %4937 = vmatmul.mubr.bf16.gmra.mxu0 %v4873
    %v4938 = vpop.f32.mrf.mxu0
    %v4939 = vadd.f32 0.0, %v4938
    %v4940 = vpop.f32.mrf.mxu0
    %v4941 = vpop.f32.mrf.mxu0
    %v4942 = vadd.f32 0.0, %v4941
    %v4943 = vpop.f32.mrf.mxu0
    %4944 = vmatprep.mubr.bf16.mxu0 0
    %4945 = vmatmul.mubr.bf16.gmra.mxu0 %v4876
    %v4946 = vpop.f32.mrf.mxu0
    %v4947 = vadd.f32 0.0, %v4946
    %v4948 = vpop.f32.mrf.mxu0
    %v4949 = vpop.f32.mrf.mxu0
    %v4950 = vadd.f32 0.0, %v4949
    %v4951 = vpop.f32.mrf.mxu0
    %4952 = vmatprep.mubr.bf16.mxu0 0
    %4953 = vmatmul.mubr.bf16.gmra.mxu0 %v4879
    %v4954 = vpop.f32.mrf.mxu0
    %v4955 = vadd.f32 0.0, %v4954
    %v4956 = vpop.f32.mrf.mxu0
    %v4957 = vpop.f32.mrf.mxu0
    %v4958 = vadd.f32 0.0, %v4957
    %v4959 = vpop.f32.mrf.mxu0
    %4960 = vmatprep.mubr.bf16.mxu0 0
    %4961 = vmatmul.mubr.bf16.gmra.mxu0 %v4882
    %v4962 = vpop.f32.mrf.mxu0
    %v4963 = vadd.f32 0.0, %v4962
    %v4964 = vpop.f32.mrf.mxu0
    %v4965 = vpop.f32.mrf.mxu0
    %v4966 = vadd.f32 0.0, %v4965
    %v4967 = vpop.f32.mrf.mxu0
    %4968 = vmatprep.mubr.bf16.mxu0 0
    %4969 = vmatmul.mubr.bf16.gmra.mxu0 %v4885
    %v4970 = vpop.f32.mrf.mxu0
    %v4971 = vadd.f32 0.0, %v4970
    %v4972 = vpop.f32.mrf.mxu0
    %v4973 = vpop.f32.mrf.mxu0
    %v4974 = vadd.f32 0.0, %v4973
    %v4975 = vpop.f32.mrf.mxu0
    %4976 = vmatprep.mubr.bf16.mxu0 0
    %4977 = vmatmul.mubr.bf16.gmra.mxu0 %v4888
    %v4978 = vpop.f32.mrf.mxu0
    %v4979 = vadd.f32 0.0, %v4978
    %v4980 = vpop.f32.mrf.mxu0
    %v4981 = vpop.f32.mrf.mxu0
    %v4982 = vadd.f32 0.0, %v4981
    %v4983 = vpop.f32.mrf.mxu0
    %4984 = vmatprep.mubr.bf16.mxu0 0
    %4985 = vmatmul.mubr.bf16.gmra.mxu0 %v4891
    %v4986 = vpop.f32.mrf.mxu0
    %v4987 = vadd.f32 0.0, %v4986
    %v4988 = vpop.f32.mrf.mxu0
    %v4989 = vpop.f32.mrf.mxu0
    %v4990 = vadd.f32 0.0, %v4989
    %v4991 = vpop.f32.mrf.mxu0
    %4992 = vdwg.mxu0
    %v4993 = vadd.f32 %v4827, %v4931
    %v4994 = vadd.f32 %v4828, %v4934
    %v4995 = vadd.f32 %v4829, %v4939
    %v4996 = vadd.f32 %v4830, %v4942
    %v4997 = vadd.f32 %v4831, %v4947
    %v4998 = vadd.f32 %v4832, %v4950
    %v4999 = vadd.f32 %v4833, %v4955
    %v5000 = vadd.f32 %v4834, %v4958
    %v5001 = vadd.f32 %v4835, %v4963
    %v5002 = vadd.f32 %v4836, %v4966
    %v5003 = vadd.f32 %v4837, %v4971
    %v5004 = vadd.f32 %v4838, %v4974
    %v5005 = vadd.f32 %v4839, %v4979
    %v5006 = vadd.f32 %v4840, %v4982
    %v5007 = vadd.f32 %v4841, %v4987
    %v5008 = vadd.f32 %v4842, %v4990
    %s5009 = scalar_lea.vmem [#allocation2], 96
    %v5010 = vld [vmem:[%s5009] sm:$0xff]
    %v5011 = vld [vmem:[%s5009 + $0x8] sm:$0xff]
    %v5012 = vld [vmem:[%s5009 + $0x18] sm:$0xff]
    %v5013 = vld [vmem:[%s5009 + $0x20] sm:$0xff]
    %v5014 = vld [vmem:[%s5009 + $0x30] sm:$0xff]
    %v5015 = vld [vmem:[%s5009 + $0x38] sm:$0xff]
    %v5016 = vld [vmem:[%s5009 + $0x48] sm:$0xff]
    %v5017 = vld [vmem:[%s5009 + $0x50] sm:$0xff]
    %v5018 = vld [vmem:[%s5009 + $0x60] sm:$0xff]
    %v5019 = vld [vmem:[%s5009 + $0x68] sm:$0xff]
    %v5020 = vld [vmem:[%s5009 + $0x78] sm:$0xff]
    %v5021 = vld [vmem:[%s5009 + $0x80] sm:$0xff]
    %v5022 = vld [vmem:[%s5009 + $0x90] sm:$0xff]
    %v5023 = vld [vmem:[%s5009 + $0x98] sm:$0xff]
    %v5024 = vld [vmem:[%s5009 + $0xa8] sm:$0xff]
    %v5025 = vld [vmem:[%s5009 + $0xb0] sm:$0xff]
    %v5026 = vpack.c.bf16 %v5011, %v5010
    %v5027 = vpack.c.bf16 %v5013, %v5012
    %v5028 = vpack.c.bf16 %v5015, %v5014
    %v5029 = vpack.c.bf16 %v5017, %v5016
    %v5030 = vpack.c.bf16 %v5019, %v5018
    %v5031 = vpack.c.bf16 %v5021, %v5020
    %v5032 = vpack.c.bf16 %v5023, %v5022
    %v5033 = vpack.c.bf16 %v5025, %v5024
    %s5034 = scalar_lea.vmem %s3, 80
    %v5035 = vld [vmem:[%s5034] sm:$0x7]
    %v5037 = vsel %vm1681, %v5026, 0
    %v5040 = vsel %vm1681, %v5027, 0
    %v5043 = vsel %vm1681, %v5028, 0
    %v5046 = vsel %vm1681, %v5029, 0
    %v5049 = vsel %vm1681, %v5030, 0
    %v5052 = vsel %vm1681, %v5031, 0
    %v5055 = vsel %vm1681, %v5032, 0
    %v5058 = vsel %vm1681, %v5033, 0
    %v5061 = vsel %vm1793, %v5035, 0
    %5063 = vmatprep.subr.bf16.mxu0 0
    %5064 = vmatpush1.bf16.msra.mxu0 0
    %5065 = vmatprep.subr.bf16.mxu0 0
    %5066 = vmatpush1.bf16.msra.mxu0 0
    %5067 = vmatprep.subr.bf16.mxu0 0
    %5068 = vmatpush1.bf16.msra.mxu0 0
    %5069 = vmatprep.subr.bf16.mxu0 0
    %5070 = vmatpush1.bf16.msra.mxu0 0
    %5071 = vmatprep.subr.bf16.mxu0 0
    %5072 = vmatpush1.bf16.msra.mxu0 0
    %5073 = vmatprep.subr.bf16.mxu0 0
    %5074 = vmatpush1.bf16.msra.mxu0 0
    %5075 = vmatprep.subr.bf16.mxu0 0
    %5076 = vmatpush1.bf16.msra.mxu0 0
    %5077 = vmatprep.subr.bf16.mxu0 0
    %5078 = vmatpush1.bf16.msra.mxu0 %v5061
    %5079 = vmatprep.subr.bf16.mxu0 0
    %5080 = vmatpush2.bf16.msra.mxu0 0
    %5081 = vmatprep.subr.bf16.mxu0 0
    %5082 = vmatpush2.bf16.msra.mxu0 0
    %5083 = vmatprep.subr.bf16.mxu0 0
    %5084 = vmatpush2.bf16.msra.mxu0 0
    %5085 = vmatprep.subr.bf16.mxu0 0
    %5086 = vmatpush2.bf16.msra.mxu0 0
    %5087 = vmatprep.subr.bf16.mxu0 0
    %5088 = vmatpush2.bf16.msra.mxu0 0
    %5089 = vmatprep.subr.bf16.mxu0 0
    %5090 = vmatpush2.bf16.msra.mxu0 0
    %5091 = vmatprep.subr.bf16.mxu0 0
    %5092 = vmatpush2.bf16.msra.mxu0 0
    %5093 = vmatprep.subr.bf16.mxu0 0
    %5094 = vmatpush2.bf16.msra.mxu0 0
    %5095 = vmatprep.mubr.bf16.mxu0 0
    %5096 = vmatmul.mubr.bf16.gmra.mxu0 %v5037
    %v5097 = vpop.f32.mrf.mxu0
    %v5098 = vadd.f32 0.0, %v5097
    %v5099 = vpop.f32.mrf.mxu0
    %v5100 = vpop.f32.mrf.mxu0
    %v5101 = vadd.f32 0.0, %v5100
    %v5102 = vpop.f32.mrf.mxu0
    %5103 = vmatprep.mubr.bf16.mxu0 0
    %5104 = vmatmul.mubr.bf16.gmra.mxu0 %v5040
    %v5105 = vpop.f32.mrf.mxu0
    %v5106 = vadd.f32 0.0, %v5105
    %v5107 = vpop.f32.mrf.mxu0
    %v5108 = vpop.f32.mrf.mxu0
    %v5109 = vadd.f32 0.0, %v5108
    %v5110 = vpop.f32.mrf.mxu0
    %5111 = vmatprep.mubr.bf16.mxu0 0
    %5112 = vmatmul.mubr.bf16.gmra.mxu0 %v5043
    %v5113 = vpop.f32.mrf.mxu0
    %v5114 = vadd.f32 0.0, %v5113
    %v5115 = vpop.f32.mrf.mxu0
    %v5116 = vpop.f32.mrf.mxu0
    %v5117 = vadd.f32 0.0, %v5116
    %v5118 = vpop.f32.mrf.mxu0
    %5119 = vmatprep.mubr.bf16.mxu0 0
    %5120 = vmatmul.mubr.bf16.gmra.mxu0 %v5046
    %v5121 = vpop.f32.mrf.mxu0
    %v5122 = vadd.f32 0.0, %v5121
    %v5123 = vpop.f32.mrf.mxu0
    %v5124 = vpop.f32.mrf.mxu0
    %v5125 = vadd.f32 0.0, %v5124
    %v5126 = vpop.f32.mrf.mxu0
    %5127 = vmatprep.mubr.bf16.mxu0 0
    %5128 = vmatmul.mubr.bf16.gmra.mxu0 %v5049
    %v5129 = vpop.f32.mrf.mxu0
    %v5130 = vadd.f32 0.0, %v5129
    %v5131 = vpop.f32.mrf.mxu0
    %v5132 = vpop.f32.mrf.mxu0
    %v5133 = vadd.f32 0.0, %v5132
    %v5134 = vpop.f32.mrf.mxu0
    %5135 = vmatprep.mubr.bf16.mxu0 0
    %5136 = vmatmul.mubr.bf16.gmra.mxu0 %v5052
    %v5137 = vpop.f32.mrf.mxu0
    %v5138 = vadd.f32 0.0, %v5137
    %v5139 = vpop.f32.mrf.mxu0
    %v5140 = vpop.f32.mrf.mxu0
    %v5141 = vadd.f32 0.0, %v5140
    %v5142 = vpop.f32.mrf.mxu0
    %5143 = vmatprep.mubr.bf16.mxu0 0
    %5144 = vmatmul.mubr.bf16.gmra.mxu0 %v5055
    %v5145 = vpop.f32.mrf.mxu0
    %v5146 = vadd.f32 0.0, %v5145
    %v5147 = vpop.f32.mrf.mxu0
    %v5148 = vpop.f32.mrf.mxu0
    %v5149 = vadd.f32 0.0, %v5148
    %v5150 = vpop.f32.mrf.mxu0
    %5151 = vmatprep.mubr.bf16.mxu0 0
    %5152 = vmatmul.mubr.bf16.gmra.mxu0 %v5058
    %v5153 = vpop.f32.mrf.mxu0
    %v5154 = vadd.f32 0.0, %v5153
    %v5155 = vpop.f32.mrf.mxu0
    %v5156 = vpop.f32.mrf.mxu0
    %v5157 = vadd.f32 0.0, %v5156
    %v5158 = vpop.f32.mrf.mxu0
    %5159 = vdwg.mxu0
    %v5160 = vadd.f32 %v4993, %v5098
    %v5161 = vadd.f32 %v4994, %v5101
    %v5162 = vadd.f32 %v4995, %v5106
    %v5163 = vadd.f32 %v4996, %v5109
    %v5164 = vadd.f32 %v4997, %v5114
    %v5165 = vadd.f32 %v4998, %v5117
    %v5166 = vadd.f32 %v4999, %v5122
    %v5167 = vadd.f32 %v5000, %v5125
    %v5168 = vadd.f32 %v5001, %v5130
    %v5169 = vadd.f32 %v5002, %v5133
    %v5170 = vadd.f32 %v5003, %v5138
    %v5171 = vadd.f32 %v5004, %v5141
    %v5172 = vadd.f32 %v5005, %v5146
    %v5173 = vadd.f32 %v5006, %v5149
    %v5174 = vadd.f32 %v5007, %v5154
    %v5175 = vadd.f32 %v5008, %v5157
    %v5176 = vld [vmem:[%s5009 + $0x2] sm:$0xff]
    %v5177 = vld [vmem:[%s5009 + $0xa] sm:$0xff]
    %v5178 = vld [vmem:[%s5009 + $0x1a] sm:$0xff]
    %v5179 = vld [vmem:[%s5009 + $0x22] sm:$0xff]
    %v5180 = vld [vmem:[%s5009 + $0x32] sm:$0xff]
    %v5181 = vld [vmem:[%s5009 + $0x3a] sm:$0xff]
    %v5182 = vld [vmem:[%s5009 + $0x4a] sm:$0xff]
    %v5183 = vld [vmem:[%s5009 + $0x52] sm:$0xff]
    %v5184 = vld [vmem:[%s5009 + $0x62] sm:$0xff]
    %v5185 = vld [vmem:[%s5009 + $0x6a] sm:$0xff]
    %v5186 = vld [vmem:[%s5009 + $0x7a] sm:$0xff]
    %v5187 = vld [vmem:[%s5009 + $0x82] sm:$0xff]
    %v5188 = vld [vmem:[%s5009 + $0x92] sm:$0xff]
    %v5189 = vld [vmem:[%s5009 + $0x9a] sm:$0xff]
    %v5190 = vld [vmem:[%s5009 + $0xaa] sm:$0xff]
    %v5191 = vld [vmem:[%s5009 + $0xb2] sm:$0xff]
    %v5192 = vpack.c.bf16 %v5177, %v5176
    %v5193 = vpack.c.bf16 %v5179, %v5178
    %v5194 = vpack.c.bf16 %v5181, %v5180
    %v5195 = vpack.c.bf16 %v5183, %v5182
    %v5196 = vpack.c.bf16 %v5185, %v5184
    %v5197 = vpack.c.bf16 %v5187, %v5186
    %v5198 = vpack.c.bf16 %v5189, %v5188
    %v5199 = vpack.c.bf16 %v5191, %v5190
    %s5200 = scalar_lea.vmem %s3, 84
    %v5201 = vld [vmem:[%s5200] sm:$0x7]
    %v5203 = vsel %vm1681, %v5192, 0
    %v5206 = vsel %vm1681, %v5193, 0
    %v5209 = vsel %vm1681, %v5194, 0
    %v5212 = vsel %vm1681, %v5195, 0
    %v5215 = vsel %vm1681, %v5196, 0
    %v5218 = vsel %vm1681, %v5197, 0
    %v5221 = vsel %vm1681, %v5198, 0
    %v5224 = vsel %vm1681, %v5199, 0
    %v5227 = vsel %vm1793, %v5201, 0
    %5229 = vmatprep.subr.bf16.mxu0 0
    %5230 = vmatpush1.bf16.msra.mxu0 0
    %5231 = vmatprep.subr.bf16.mxu0 0
    %5232 = vmatpush1.bf16.msra.mxu0 0
    %5233 = vmatprep.subr.bf16.mxu0 0
    %5234 = vmatpush1.bf16.msra.mxu0 0
    %5235 = vmatprep.subr.bf16.mxu0 0
    %5236 = vmatpush1.bf16.msra.mxu0 0
    %5237 = vmatprep.subr.bf16.mxu0 0
    %5238 = vmatpush1.bf16.msra.mxu0 0
    %5239 = vmatprep.subr.bf16.mxu0 0
    %5240 = vmatpush1.bf16.msra.mxu0 0
    %5241 = vmatprep.subr.bf16.mxu0 0
    %5242 = vmatpush1.bf16.msra.mxu0 0
    %5243 = vmatprep.subr.bf16.mxu0 0
    %5244 = vmatpush1.bf16.msra.mxu0 %v5227
    %5245 = vmatprep.subr.bf16.mxu0 0
    %5246 = vmatpush2.bf16.msra.mxu0 0
    %5247 = vmatprep.subr.bf16.mxu0 0
    %5248 = vmatpush2.bf16.msra.mxu0 0
    %5249 = vmatprep.subr.bf16.mxu0 0
    %5250 = vmatpush2.bf16.msra.mxu0 0
    %5251 = vmatprep.subr.bf16.mxu0 0
    %5252 = vmatpush2.bf16.msra.mxu0 0
    %5253 = vmatprep.subr.bf16.mxu0 0
    %5254 = vmatpush2.bf16.msra.mxu0 0
    %5255 = vmatprep.subr.bf16.mxu0 0
    %5256 = vmatpush2.bf16.msra.mxu0 0
    %5257 = vmatprep.subr.bf16.mxu0 0
    %5258 = vmatpush2.bf16.msra.mxu0 0
    %5259 = vmatprep.subr.bf16.mxu0 0
    %5260 = vmatpush2.bf16.msra.mxu0 0
    %5261 = vmatprep.mubr.bf16.mxu0 0
    %5262 = vmatmul.mubr.bf16.gmra.mxu0 %v5203
    %v5263 = vpop.f32.mrf.mxu0
    %v5264 = vadd.f32 0.0, %v5263
    %v5265 = vpop.f32.mrf.mxu0
    %v5266 = vpop.f32.mrf.mxu0
    %v5267 = vadd.f32 0.0, %v5266
    %v5268 = vpop.f32.mrf.mxu0
    %5269 = vmatprep.mubr.bf16.mxu0 0
    %5270 = vmatmul.mubr.bf16.gmra.mxu0 %v5206
    %v5271 = vpop.f32.mrf.mxu0
    %v5272 = vadd.f32 0.0, %v5271
    %v5273 = vpop.f32.mrf.mxu0
    %v5274 = vpop.f32.mrf.mxu0
    %v5275 = vadd.f32 0.0, %v5274
    %v5276 = vpop.f32.mrf.mxu0
    %5277 = vmatprep.mubr.bf16.mxu0 0
    %5278 = vmatmul.mubr.bf16.gmra.mxu0 %v5209
    %v5279 = vpop.f32.mrf.mxu0
    %v5280 = vadd.f32 0.0, %v5279
    %v5281 = vpop.f32.mrf.mxu0
    %v5282 = vpop.f32.mrf.mxu0
    %v5283 = vadd.f32 0.0, %v5282
    %v5284 = vpop.f32.mrf.mxu0
    %5285 = vmatprep.mubr.bf16.mxu0 0
    %5286 = vmatmul.mubr.bf16.gmra.mxu0 %v5212
    %v5287 = vpop.f32.mrf.mxu0
    %v5288 = vadd.f32 0.0, %v5287
    %v5289 = vpop.f32.mrf.mxu0
    %v5290 = vpop.f32.mrf.mxu0
    %v5291 = vadd.f32 0.0, %v5290
    %v5292 = vpop.f32.mrf.mxu0
    %5293 = vmatprep.mubr.bf16.mxu0 0
    %5294 = vmatmul.mubr.bf16.gmra.mxu0 %v5215
    %v5295 = vpop.f32.mrf.mxu0
    %v5296 = vadd.f32 0.0, %v5295
    %v5297 = vpop.f32.mrf.mxu0
    %v5298 = vpop.f32.mrf.mxu0
    %v5299 = vadd.f32 0.0, %v5298
    %v5300 = vpop.f32.mrf.mxu0
    %5301 = vmatprep.mubr.bf16.mxu0 0
    %5302 = vmatmul.mubr.bf16.gmra.mxu0 %v5218
    %v5303 = vpop.f32.mrf.mxu0
    %v5304 = vadd.f32 0.0, %v5303
    %v5305 = vpop.f32.mrf.mxu0
    %v5306 = vpop.f32.mrf.mxu0
    %v5307 = vadd.f32 0.0, %v5306
    %v5308 = vpop.f32.mrf.mxu0
    %5309 = vmatprep.mubr.bf16.mxu0 0
    %5310 = vmatmul.mubr.bf16.gmra.mxu0 %v5221
    %v5311 = vpop.f32.mrf.mxu0
    %v5312 = vadd.f32 0.0, %v5311
    %v5313 = vpop.f32.mrf.mxu0
    %v5314 = vpop.f32.mrf.mxu0
    %v5315 = vadd.f32 0.0, %v5314
    %v5316 = vpop.f32.mrf.mxu0
    %5317 = vmatprep.mubr.bf16.mxu0 0
    %5318 = vmatmul.mubr.bf16.gmra.mxu0 %v5224
    %v5319 = vpop.f32.mrf.mxu0
    %v5320 = vadd.f32 0.0, %v5319
    %v5321 = vpop.f32.mrf.mxu0
    %v5322 = vpop.f32.mrf.mxu0
    %v5323 = vadd.f32 0.0, %v5322
    %v5324 = vpop.f32.mrf.mxu0
    %5325 = vdwg.mxu0
    %v5326 = vadd.f32 %v5160, %v5264
    %v5327 = vadd.f32 %v5161, %v5267
    %v5328 = vadd.f32 %v5162, %v5272
    %v5329 = vadd.f32 %v5163, %v5275
    %v5330 = vadd.f32 %v5164, %v5280
    %v5331 = vadd.f32 %v5165, %v5283
    %v5332 = vadd.f32 %v5166, %v5288
    %v5333 = vadd.f32 %v5167, %v5291
    %v5334 = vadd.f32 %v5168, %v5296
    %v5335 = vadd.f32 %v5169, %v5299
    %v5336 = vadd.f32 %v5170, %v5304
    %v5337 = vadd.f32 %v5171, %v5307
    %v5338 = vadd.f32 %v5172, %v5312
    %v5339 = vadd.f32 %v5173, %v5315
    %v5340 = vadd.f32 %v5174, %v5320
    %v5341 = vadd.f32 %v5175, %v5323
    %v5342 = vld [vmem:[%s5009 + $0x4] sm:$0xff]
    %v5343 = vld [vmem:[%s5009 + $0xc] sm:$0xff]
    %v5344 = vld [vmem:[%s5009 + $0x1c] sm:$0xff]
    %v5345 = vld [vmem:[%s5009 + $0x24] sm:$0xff]
    %v5346 = vld [vmem:[%s5009 + $0x34] sm:$0xff]
    %v5347 = vld [vmem:[%s5009 + $0x3c] sm:$0xff]
    %v5348 = vld [vmem:[%s5009 + $0x4c] sm:$0xff]
    %v5349 = vld [vmem:[%s5009 + $0x54] sm:$0xff]
    %v5350 = vld [vmem:[%s5009 + $0x64] sm:$0xff]
    %v5351 = vld [vmem:[%s5009 + $0x6c] sm:$0xff]
    %v5352 = vld [vmem:[%s5009 + $0x7c] sm:$0xff]
    %v5353 = vld [vmem:[%s5009 + $0x84] sm:$0xff]
    %v5354 = vld [vmem:[%s5009 + $0x94] sm:$0xff]
    %v5355 = vld [vmem:[%s5009 + $0x9c] sm:$0xff]
    %v5356 = vld [vmem:[%s5009 + $0xac] sm:$0xff]
    %v5357 = vld [vmem:[%s5009 + $0xb4] sm:$0xff]
    %v5358 = vpack.c.bf16 %v5343, %v5342
    %v5359 = vpack.c.bf16 %v5345, %v5344
    %v5360 = vpack.c.bf16 %v5347, %v5346
    %v5361 = vpack.c.bf16 %v5349, %v5348
    %v5362 = vpack.c.bf16 %v5351, %v5350
    %v5363 = vpack.c.bf16 %v5353, %v5352
    %v5364 = vpack.c.bf16 %v5355, %v5354
    %v5365 = vpack.c.bf16 %v5357, %v5356
    %s5366 = scalar_lea.vmem %s3, 88
    %v5367 = vld [vmem:[%s5366] sm:$0x7]
    %v5369 = vsel %vm1681, %v5358, 0
    %v5372 = vsel %vm1681, %v5359, 0
    %v5375 = vsel %vm1681, %v5360, 0
    %v5378 = vsel %vm1681, %v5361, 0
    %v5381 = vsel %vm1681, %v5362, 0
    %v5384 = vsel %vm1681, %v5363, 0
    %v5387 = vsel %vm1681, %v5364, 0
    %v5390 = vsel %vm1681, %v5365, 0
    %v5393 = vsel %vm1793, %v5367, 0
    %5395 = vmatprep.subr.bf16.mxu0 0
    %5396 = vmatpush1.bf16.msra.mxu0 0
    %5397 = vmatprep.subr.bf16.mxu0 0
    %5398 = vmatpush1.bf16.msra.mxu0 0
    %5399 = vmatprep.subr.bf16.mxu0 0
    %5400 = vmatpush1.bf16.msra.mxu0 0
    %5401 = vmatprep.subr.bf16.mxu0 0
    %5402 = vmatpush1.bf16.msra.mxu0 0
    %5403 = vmatprep.subr.bf16.mxu0 0
    %5404 = vmatpush1.bf16.msra.mxu0 0
    %5405 = vmatprep.subr.bf16.mxu0 0
    %5406 = vmatpush1.bf16.msra.mxu0 0
    %5407 = vmatprep.subr.bf16.mxu0 0
    %5408 = vmatpush1.bf16.msra.mxu0 0
    %5409 = vmatprep.subr.bf16.mxu0 0
    %5410 = vmatpush1.bf16.msra.mxu0 %v5393
    %5411 = vmatprep.subr.bf16.mxu0 0
    %5412 = vmatpush2.bf16.msra.mxu0 0
    %5413 = vmatprep.subr.bf16.mxu0 0
    %5414 = vmatpush2.bf16.msra.mxu0 0
    %5415 = vmatprep.subr.bf16.mxu0 0
    %5416 = vmatpush2.bf16.msra.mxu0 0
    %5417 = vmatprep.subr.bf16.mxu0 0
    %5418 = vmatpush2.bf16.msra.mxu0 0
    %5419 = vmatprep.subr.bf16.mxu0 0
    %5420 = vmatpush2.bf16.msra.mxu0 0
    %5421 = vmatprep.subr.bf16.mxu0 0
    %5422 = vmatpush2.bf16.msra.mxu0 0
    %5423 = vmatprep.subr.bf16.mxu0 0
    %5424 = vmatpush2.bf16.msra.mxu0 0
    %5425 = vmatprep.subr.bf16.mxu0 0
    %5426 = vmatpush2.bf16.msra.mxu0 0
    %5427 = vmatprep.mubr.bf16.mxu0 0
    %5428 = vmatmul.mubr.bf16.gmra.mxu0 %v5369
    %v5429 = vpop.f32.mrf.mxu0
    %v5430 = vadd.f32 0.0, %v5429
    %v5431 = vpop.f32.mrf.mxu0
    %v5432 = vpop.f32.mrf.mxu0
    %v5433 = vadd.f32 0.0, %v5432
    %v5434 = vpop.f32.mrf.mxu0
    %5435 = vmatprep.mubr.bf16.mxu0 0
    %5436 = vmatmul.mubr.bf16.gmra.mxu0 %v5372
    %v5437 = vpop.f32.mrf.mxu0
    %v5438 = vadd.f32 0.0, %v5437
    %v5439 = vpop.f32.mrf.mxu0
    %v5440 = vpop.f32.mrf.mxu0
    %v5441 = vadd.f32 0.0, %v5440
    %v5442 = vpop.f32.mrf.mxu0
    %5443 = vmatprep.mubr.bf16.mxu0 0
    %5444 = vmatmul.mubr.bf16.gmra.mxu0 %v5375
    %v5445 = vpop.f32.mrf.mxu0
    %v5446 = vadd.f32 0.0, %v5445
    %v5447 = vpop.f32.mrf.mxu0
    %v5448 = vpop.f32.mrf.mxu0
    %v5449 = vadd.f32 0.0, %v5448
    %v5450 = vpop.f32.mrf.mxu0
    %5451 = vmatprep.mubr.bf16.mxu0 0
    %5452 = vmatmul.mubr.bf16.gmra.mxu0 %v5378
    %v5453 = vpop.f32.mrf.mxu0
    %v5454 = vadd.f32 0.0, %v5453
    %v5455 = vpop.f32.mrf.mxu0
    %v5456 = vpop.f32.mrf.mxu0
    %v5457 = vadd.f32 0.0, %v5456
    %v5458 = vpop.f32.mrf.mxu0
    %5459 = vmatprep.mubr.bf16.mxu0 0
    %5460 = vmatmul.mubr.bf16.gmra.mxu0 %v5381
    %v5461 = vpop.f32.mrf.mxu0
    %v5462 = vadd.f32 0.0, %v5461
    %v5463 = vpop.f32.mrf.mxu0
    %v5464 = vpop.f32.mrf.mxu0
    %v5465 = vadd.f32 0.0, %v5464
    %v5466 = vpop.f32.mrf.mxu0
    %5467 = vmatprep.mubr.bf16.mxu0 0
    %5468 = vmatmul.mubr.bf16.gmra.mxu0 %v5384
    %v5469 = vpop.f32.mrf.mxu0
    %v5470 = vadd.f32 0.0, %v5469
    %v5471 = vpop.f32.mrf.mxu0
    %v5472 = vpop.f32.mrf.mxu0
    %v5473 = vadd.f32 0.0, %v5472
    %v5474 = vpop.f32.mrf.mxu0
    %5475 = vmatprep.mubr.bf16.mxu0 0
    %5476 = vmatmul.mubr.bf16.gmra.mxu0 %v5387
    %v5477 = vpop.f32.mrf.mxu0
    %v5478 = vadd.f32 0.0, %v5477
    %v5479 = vpop.f32.mrf.mxu0
    %v5480 = vpop.f32.mrf.mxu0
    %v5481 = vadd.f32 0.0, %v5480
    %v5482 = vpop.f32.mrf.mxu0
    %5483 = vmatprep.mubr.bf16.mxu0 0
    %5484 = vmatmul.mubr.bf16.gmra.mxu0 %v5390
    %v5485 = vpop.f32.mrf.mxu0
    %v5486 = vadd.f32 0.0, %v5485
    %v5487 = vpop.f32.mrf.mxu0
    %v5488 = vpop.f32.mrf.mxu0
    %v5489 = vadd.f32 0.0, %v5488
    %v5490 = vpop.f32.mrf.mxu0
    %5491 = vdwg.mxu0
    %v5492 = vadd.f32 %v5326, %v5430
    %v5493 = vadd.f32 %v5327, %v5433
    %v5494 = vadd.f32 %v5328, %v5438
    %v5495 = vadd.f32 %v5329, %v5441
    %v5496 = vadd.f32 %v5330, %v5446
    %v5497 = vadd.f32 %v5331, %v5449
    %v5498 = vadd.f32 %v5332, %v5454
    %v5499 = vadd.f32 %v5333, %v5457
    %v5500 = vadd.f32 %v5334, %v5462
    %v5501 = vadd.f32 %v5335, %v5465
    %v5502 = vadd.f32 %v5336, %v5470
    %v5503 = vadd.f32 %v5337, %v5473
    %v5504 = vadd.f32 %v5338, %v5478
    %v5505 = vadd.f32 %v5339, %v5481
    %v5506 = vadd.f32 %v5340, %v5486
    %v5507 = vadd.f32 %v5341, %v5489
    %v5508 = vld [vmem:[%s5009 + $0x6] sm:$0xff]
    %v5509 = vld [vmem:[%s5009 + $0xe] sm:$0xff]
    %v5510 = vld [vmem:[%s5009 + $0x1e] sm:$0xff]
    %v5511 = vld [vmem:[%s5009 + $0x26] sm:$0xff]
    %v5512 = vld [vmem:[%s5009 + $0x36] sm:$0xff]
    %v5513 = vld [vmem:[%s5009 + $0x3e] sm:$0xff]
    %v5514 = vld [vmem:[%s5009 + $0x4e] sm:$0xff]
    %v5515 = vld [vmem:[%s5009 + $0x56] sm:$0xff]
    %v5516 = vld [vmem:[%s5009 + $0x66] sm:$0xff]
    %v5517 = vld [vmem:[%s5009 + $0x6e] sm:$0xff]
    %v5518 = vld [vmem:[%s5009 + $0x7e] sm:$0xff]
    %v5519 = vld [vmem:[%s5009 + $0x86] sm:$0xff]
    %v5520 = vld [vmem:[%s5009 + $0x96] sm:$0xff]
    %v5521 = vld [vmem:[%s5009 + $0x9e] sm:$0xff]
    %v5522 = vld [vmem:[%s5009 + $0xae] sm:$0xff]
    %v5523 = vld [vmem:[%s5009 + $0xb6] sm:$0xff]
    %v5524 = vpack.c.bf16 %v5509, %v5508
    %v5525 = vpack.c.bf16 %v5511, %v5510
    %v5526 = vpack.c.bf16 %v5513, %v5512
    %v5527 = vpack.c.bf16 %v5515, %v5514
    %v5528 = vpack.c.bf16 %v5517, %v5516
    %v5529 = vpack.c.bf16 %v5519, %v5518
    %v5530 = vpack.c.bf16 %v5521, %v5520
    %v5531 = vpack.c.bf16 %v5523, %v5522
    %s5532 = scalar_lea.vmem %s3, 92
    %v5533 = vld [vmem:[%s5532] sm:$0x7]
    %v5535 = vsel %vm1681, %v5524, 0
    %v5538 = vsel %vm1681, %v5525, 0
    %v5541 = vsel %vm1681, %v5526, 0
    %v5544 = vsel %vm1681, %v5527, 0
    %v5547 = vsel %vm1681, %v5528, 0
    %v5550 = vsel %vm1681, %v5529, 0
    %v5553 = vsel %vm1681, %v5530, 0
    %v5556 = vsel %vm1681, %v5531, 0
    %v5559 = vsel %vm1793, %v5533, 0
    %5561 = vmatprep.subr.bf16.mxu0 0
    %5562 = vmatpush1.bf16.msra.mxu0 0
    %5563 = vmatprep.subr.bf16.mxu0 0
    %5564 = vmatpush1.bf16.msra.mxu0 0
    %5565 = vmatprep.subr.bf16.mxu0 0
    %5566 = vmatpush1.bf16.msra.mxu0 0
    %5567 = vmatprep.subr.bf16.mxu0 0
    %5568 = vmatpush1.bf16.msra.mxu0 0
    %5569 = vmatprep.subr.bf16.mxu0 0
    %5570 = vmatpush1.bf16.msra.mxu0 0
    %5571 = vmatprep.subr.bf16.mxu0 0
    %5572 = vmatpush1.bf16.msra.mxu0 0
    %5573 = vmatprep.subr.bf16.mxu0 0
    %5574 = vmatpush1.bf16.msra.mxu0 0
    %5575 = vmatprep.subr.bf16.mxu0 0
    %5576 = vmatpush1.bf16.msra.mxu0 %v5559
    %5577 = vmatprep.subr.bf16.mxu0 0
    %5578 = vmatpush2.bf16.msra.mxu0 0
    %5579 = vmatprep.subr.bf16.mxu0 0
    %5580 = vmatpush2.bf16.msra.mxu0 0
    %5581 = vmatprep.subr.bf16.mxu0 0
    %5582 = vmatpush2.bf16.msra.mxu0 0
    %5583 = vmatprep.subr.bf16.mxu0 0
    %5584 = vmatpush2.bf16.msra.mxu0 0
    %5585 = vmatprep.subr.bf16.mxu0 0
    %5586 = vmatpush2.bf16.msra.mxu0 0
    %5587 = vmatprep.subr.bf16.mxu0 0
    %5588 = vmatpush2.bf16.msra.mxu0 0
    %5589 = vmatprep.subr.bf16.mxu0 0
    %5590 = vmatpush2.bf16.msra.mxu0 0
    %5591 = vmatprep.subr.bf16.mxu0 0
    %5592 = vmatpush2.bf16.msra.mxu0 0
    %5593 = vmatprep.mubr.bf16.mxu0 0
    %5594 = vmatmul.mubr.bf16.gmra.mxu0 %v5535
    %v5595 = vpop.f32.mrf.mxu0
    %v5596 = vadd.f32 0.0, %v5595
    %v5597 = vpop.f32.mrf.mxu0
    %v5598 = vpop.f32.mrf.mxu0
    %v5599 = vadd.f32 0.0, %v5598
    %v5600 = vpop.f32.mrf.mxu0
    %5601 = vmatprep.mubr.bf16.mxu0 0
    %5602 = vmatmul.mubr.bf16.gmra.mxu0 %v5538
    %v5603 = vpop.f32.mrf.mxu0
    %v5604 = vadd.f32 0.0, %v5603
    %v5605 = vpop.f32.mrf.mxu0
    %v5606 = vpop.f32.mrf.mxu0
    %v5607 = vadd.f32 0.0, %v5606
    %v5608 = vpop.f32.mrf.mxu0
    %5609 = vmatprep.mubr.bf16.mxu0 0
    %5610 = vmatmul.mubr.bf16.gmra.mxu0 %v5541
    %v5611 = vpop.f32.mrf.mxu0
    %v5612 = vadd.f32 0.0, %v5611
    %v5613 = vpop.f32.mrf.mxu0
    %v5614 = vpop.f32.mrf.mxu0
    %v5615 = vadd.f32 0.0, %v5614
    %v5616 = vpop.f32.mrf.mxu0
    %5617 = vmatprep.mubr.bf16.mxu0 0
    %5618 = vmatmul.mubr.bf16.gmra.mxu0 %v5544
    %v5619 = vpop.f32.mrf.mxu0
    %v5620 = vadd.f32 0.0, %v5619
    %v5621 = vpop.f32.mrf.mxu0
    %v5622 = vpop.f32.mrf.mxu0
    %v5623 = vadd.f32 0.0, %v5622
    %v5624 = vpop.f32.mrf.mxu0
    %5625 = vmatprep.mubr.bf16.mxu0 0
    %5626 = vmatmul.mubr.bf16.gmra.mxu0 %v5547
    %v5627 = vpop.f32.mrf.mxu0
    %v5628 = vadd.f32 0.0, %v5627
    %v5629 = vpop.f32.mrf.mxu0
    %v5630 = vpop.f32.mrf.mxu0
    %v5631 = vadd.f32 0.0, %v5630
    %v5632 = vpop.f32.mrf.mxu0
    %5633 = vmatprep.mubr.bf16.mxu0 0
    %5634 = vmatmul.mubr.bf16.gmra.mxu0 %v5550
    %v5635 = vpop.f32.mrf.mxu0
    %v5636 = vadd.f32 0.0, %v5635
    %v5637 = vpop.f32.mrf.mxu0
    %v5638 = vpop.f32.mrf.mxu0
    %v5639 = vadd.f32 0.0, %v5638
    %v5640 = vpop.f32.mrf.mxu0
    %5641 = vmatprep.mubr.bf16.mxu0 0
    %5642 = vmatmul.mubr.bf16.gmra.mxu0 %v5553
    %v5643 = vpop.f32.mrf.mxu0
    %v5644 = vadd.f32 0.0, %v5643
    %v5645 = vpop.f32.mrf.mxu0
    %v5646 = vpop.f32.mrf.mxu0
    %v5647 = vadd.f32 0.0, %v5646
    %v5648 = vpop.f32.mrf.mxu0
    %5649 = vmatprep.mubr.bf16.mxu0 0
    %5650 = vmatmul.mubr.bf16.gmra.mxu0 %v5556
    %v5651 = vpop.f32.mrf.mxu0
    %v5652 = vadd.f32 0.0, %v5651
    %v5653 = vpop.f32.mrf.mxu0
    %v5654 = vpop.f32.mrf.mxu0
    %v5655 = vadd.f32 0.0, %v5654
    %v5656 = vpop.f32.mrf.mxu0
    %5657 = vdwg.mxu0
    %v5658 = vadd.f32 %v5492, %v5596
    %v5659 = vadd.f32 %v5493, %v5599
    %v5660 = vadd.f32 %v5494, %v5604
    %v5661 = vadd.f32 %v5495, %v5607
    %v5662 = vadd.f32 %v5496, %v5612
    %v5663 = vadd.f32 %v5497, %v5615
    %v5664 = vadd.f32 %v5498, %v5620
    %v5665 = vadd.f32 %v5499, %v5623
    %v5666 = vadd.f32 %v5500, %v5628
    %v5667 = vadd.f32 %v5501, %v5631
    %v5668 = vadd.f32 %v5502, %v5636
    %v5669 = vadd.f32 %v5503, %v5639
    %v5670 = vadd.f32 %v5504, %v5644
    %v5671 = vadd.f32 %v5505, %v5647
    %v5672 = vadd.f32 %v5506, %v5652
    %v5673 = vadd.f32 %v5507, %v5655
    %v5674 = vld [vmem:[%s5009 + $0x8] sm:$0xff]
    %v5675 = vld [vmem:[%s5009 + $0x10] sm:$0xff]
    %v5676 = vld [vmem:[%s5009 + $0x20] sm:$0xff]
    %v5677 = vld [vmem:[%s5009 + $0x28] sm:$0xff]
    %v5678 = vld [vmem:[%s5009 + $0x38] sm:$0xff]
    %v5679 = vld [vmem:[%s5009 + $0x40] sm:$0xff]
    %v5680 = vld [vmem:[%s5009 + $0x50] sm:$0xff]
    %v5681 = vld [vmem:[%s5009 + $0x58] sm:$0xff]
    %v5682 = vld [vmem:[%s5009 + $0x68] sm:$0xff]
    %v5683 = vld [vmem:[%s5009 + $0x70] sm:$0xff]
    %v5684 = vld [vmem:[%s5009 + $0x80] sm:$0xff]
    %v5685 = vld [vmem:[%s5009 + $0x88] sm:$0xff]
    %v5686 = vld [vmem:[%s5009 + $0x98] sm:$0xff]
    %v5687 = vld [vmem:[%s5009 + $0xa0] sm:$0xff]
    %v5688 = vld [vmem:[%s5009 + $0xb0] sm:$0xff]
    %v5689 = vld [vmem:[%s5009 + $0xb8] sm:$0xff]
    %v5690 = vpack.c.bf16 %v5675, %v5674
    %v5691 = vpack.c.bf16 %v5677, %v5676
    %v5692 = vpack.c.bf16 %v5679, %v5678
    %v5693 = vpack.c.bf16 %v5681, %v5680
    %v5694 = vpack.c.bf16 %v5683, %v5682
    %v5695 = vpack.c.bf16 %v5685, %v5684
    %v5696 = vpack.c.bf16 %v5687, %v5686
    %v5697 = vpack.c.bf16 %v5689, %v5688
    %s5698 = scalar_lea.vmem %s3, 96
    %v5699 = vld [vmem:[%s5698] sm:$0x7]
    %v5701 = vsel %vm1681, %v5690, 0
    %v5704 = vsel %vm1681, %v5691, 0
    %v5707 = vsel %vm1681, %v5692, 0
    %v5710 = vsel %vm1681, %v5693, 0
    %v5713 = vsel %vm1681, %v5694, 0
    %v5716 = vsel %vm1681, %v5695, 0
    %v5719 = vsel %vm1681, %v5696, 0
    %v5722 = vsel %vm1681, %v5697, 0
    %v5725 = vsel %vm1793, %v5699, 0
    %5727 = vmatprep.subr.bf16.mxu0 0
    %5728 = vmatpush1.bf16.msra.mxu0 0
    %5729 = vmatprep.subr.bf16.mxu0 0
    %5730 = vmatpush1.bf16.msra.mxu0 0
    %5731 = vmatprep.subr.bf16.mxu0 0
    %5732 = vmatpush1.bf16.msra.mxu0 0
    %5733 = vmatprep.subr.bf16.mxu0 0
    %5734 = vmatpush1.bf16.msra.mxu0 0
    %5735 = vmatprep.subr.bf16.mxu0 0
    %5736 = vmatpush1.bf16.msra.mxu0 0
    %5737 = vmatprep.subr.bf16.mxu0 0
    %5738 = vmatpush1.bf16.msra.mxu0 0
    %5739 = vmatprep.subr.bf16.mxu0 0
    %5740 = vmatpush1.bf16.msra.mxu0 0
    %5741 = vmatprep.subr.bf16.mxu0 0
    %5742 = vmatpush1.bf16.msra.mxu0 %v5725
    %5743 = vmatprep.subr.bf16.mxu0 0
    %5744 = vmatpush2.bf16.msra.mxu0 0
    %5745 = vmatprep.subr.bf16.mxu0 0
    %5746 = vmatpush2.bf16.msra.mxu0 0
    %5747 = vmatprep.subr.bf16.mxu0 0
    %5748 = vmatpush2.bf16.msra.mxu0 0
    %5749 = vmatprep.subr.bf16.mxu0 0
    %5750 = vmatpush2.bf16.msra.mxu0 0
    %5751 = vmatprep.subr.bf16.mxu0 0
    %5752 = vmatpush2.bf16.msra.mxu0 0
    %5753 = vmatprep.subr.bf16.mxu0 0
    %5754 = vmatpush2.bf16.msra.mxu0 0
    %5755 = vmatprep.subr.bf16.mxu0 0
    %5756 = vmatpush2.bf16.msra.mxu0 0
    %5757 = vmatprep.subr.bf16.mxu0 0
    %5758 = vmatpush2.bf16.msra.mxu0 0
    %5759 = vmatprep.mubr.bf16.mxu0 0
    %5760 = vmatmul.mubr.bf16.gmra.mxu0 %v5701
    %v5761 = vpop.f32.mrf.mxu0
    %v5762 = vadd.f32 0.0, %v5761
    %v5763 = vpop.f32.mrf.mxu0
    %v5764 = vpop.f32.mrf.mxu0
    %v5765 = vadd.f32 0.0, %v5764
    %v5766 = vpop.f32.mrf.mxu0
    %5767 = vmatprep.mubr.bf16.mxu0 0
    %5768 = vmatmul.mubr.bf16.gmra.mxu0 %v5704
    %v5769 = vpop.f32.mrf.mxu0
    %v5770 = vadd.f32 0.0, %v5769
    %v5771 = vpop.f32.mrf.mxu0
    %v5772 = vpop.f32.mrf.mxu0
    %v5773 = vadd.f32 0.0, %v5772
    %v5774 = vpop.f32.mrf.mxu0
    %5775 = vmatprep.mubr.bf16.mxu0 0
    %5776 = vmatmul.mubr.bf16.gmra.mxu0 %v5707
    %v5777 = vpop.f32.mrf.mxu0
    %v5778 = vadd.f32 0.0, %v5777
    %v5779 = vpop.f32.mrf.mxu0
    %v5780 = vpop.f32.mrf.mxu0
    %v5781 = vadd.f32 0.0, %v5780
    %v5782 = vpop.f32.mrf.mxu0
    %5783 = vmatprep.mubr.bf16.mxu0 0
    %5784 = vmatmul.mubr.bf16.gmra.mxu0 %v5710
    %v5785 = vpop.f32.mrf.mxu0
    %v5786 = vadd.f32 0.0, %v5785
    %v5787 = vpop.f32.mrf.mxu0
    %v5788 = vpop.f32.mrf.mxu0
    %v5789 = vadd.f32 0.0, %v5788
    %v5790 = vpop.f32.mrf.mxu0
    %5791 = vmatprep.mubr.bf16.mxu0 0
    %5792 = vmatmul.mubr.bf16.gmra.mxu0 %v5713
    %v5793 = vpop.f32.mrf.mxu0
    %v5794 = vadd.f32 0.0, %v5793
    %v5795 = vpop.f32.mrf.mxu0
    %v5796 = vpop.f32.mrf.mxu0
    %v5797 = vadd.f32 0.0, %v5796
    %v5798 = vpop.f32.mrf.mxu0
    %5799 = vmatprep.mubr.bf16.mxu0 0
    %5800 = vmatmul.mubr.bf16.gmra.mxu0 %v5716
    %v5801 = vpop.f32.mrf.mxu0
    %v5802 = vadd.f32 0.0, %v5801
    %v5803 = vpop.f32.mrf.mxu0
    %v5804 = vpop.f32.mrf.mxu0
    %v5805 = vadd.f32 0.0, %v5804
    %v5806 = vpop.f32.mrf.mxu0
    %5807 = vmatprep.mubr.bf16.mxu0 0
    %5808 = vmatmul.mubr.bf16.gmra.mxu0 %v5719
    %v5809 = vpop.f32.mrf.mxu0
    %v5810 = vadd.f32 0.0, %v5809
    %v5811 = vpop.f32.mrf.mxu0
    %v5812 = vpop.f32.mrf.mxu0
    %v5813 = vadd.f32 0.0, %v5812
    %v5814 = vpop.f32.mrf.mxu0
    %5815 = vmatprep.mubr.bf16.mxu0 0
    %5816 = vmatmul.mubr.bf16.gmra.mxu0 %v5722
    %v5817 = vpop.f32.mrf.mxu0
    %v5818 = vadd.f32 0.0, %v5817
    %v5819 = vpop.f32.mrf.mxu0
    %v5820 = vpop.f32.mrf.mxu0
    %v5821 = vadd.f32 0.0, %v5820
    %v5822 = vpop.f32.mrf.mxu0
    %5823 = vdwg.mxu0
    %v5824 = vadd.f32 %v5658, %v5762
    %v5825 = vadd.f32 %v5659, %v5765
    %v5826 = vadd.f32 %v5660, %v5770
    %v5827 = vadd.f32 %v5661, %v5773
    %v5828 = vadd.f32 %v5662, %v5778
    %v5829 = vadd.f32 %v5663, %v5781
    %v5830 = vadd.f32 %v5664, %v5786
    %v5831 = vadd.f32 %v5665, %v5789
    %v5832 = vadd.f32 %v5666, %v5794
    %v5833 = vadd.f32 %v5667, %v5797
    %v5834 = vadd.f32 %v5668, %v5802
    %v5835 = vadd.f32 %v5669, %v5805
    %v5836 = vadd.f32 %v5670, %v5810
    %v5837 = vadd.f32 %v5671, %v5813
    %v5838 = vadd.f32 %v5672, %v5818
    %v5839 = vadd.f32 %v5673, %v5821
    %v5840 = vld [vmem:[%s4] sm:$0x1]
    %v5842 = vlaneseq
    %v5843 = vshrl.u32 %v5842, 7
    %v5844 = vsub.s32 0, %v5843
    %v5845 = vrot.slane %v5840, %v5844
    %v5847 = vadd.f32 %v5824, %v5845
    %v5848 = vadd.f32 %v5825, %v5845
    %v5849 = vadd.f32 %v5826, %v5845
    %v5850 = vadd.f32 %v5827, %v5845
    %v5851 = vadd.f32 %v5828, %v5845
    %v5852 = vadd.f32 %v5829, %v5845
    %v5853 = vadd.f32 %v5830, %v5845
    %v5854 = vadd.f32 %v5831, %v5845
    %v5855 = vadd.f32 %v5832, %v5845
    %v5856 = vadd.f32 %v5833, %v5845
    %v5857 = vadd.f32 %v5834, %v5845
    %v5858 = vadd.f32 %v5835, %v5845
    %v5859 = vadd.f32 %v5836, %v5845
    %v5860 = vadd.f32 %v5837, %v5845
    %v5861 = vadd.f32 %v5838, %v5845
    %v5862 = vadd.f32 %v5839, %v5845
    %v5863 = vmax.f32 %v5847, 0.0
    %v5864 = vmax.f32 %v5848, 0.0
    %v5865 = vmax.f32 %v5849, 0.0
    %v5866 = vmax.f32 %v5850, 0.0
    %v5867 = vmax.f32 %v5851, 0.0
    %v5868 = vmax.f32 %v5852, 0.0
    %v5869 = vmax.f32 %v5853, 0.0
    %v5870 = vmax.f32 %v5854, 0.0
    %v5871 = vmax.f32 %v5855, 0.0
    %v5872 = vmax.f32 %v5856, 0.0
    %v5873 = vmax.f32 %v5857, 0.0
    %v5874 = vmax.f32 %v5858, 0.0
    %v5875 = vmax.f32 %v5859, 0.0
    %v5876 = vmax.f32 %v5860, 0.0
    %v5877 = vmax.f32 %v5861, 0.0
    %v5878 = vmax.f32 %v5862, 0.0
    %v5879 = vmax.f32 %v5863, %v5865
    %v5880 = vmax.f32 %v5864, %v5866
    %v5881 = vmax.f32 %v5867, %v5869
    %v5882 = vmax.f32 %v5868, %v5870
    %v5883 = vmax.f32 %v5871, %v5873
    %v5884 = vmax.f32 %v5872, %v5874
    %v5885 = vmax.f32 %v5875, %v5877
    %v5886 = vmax.f32 %v5876, %v5878
    %vm5887 = vcmask 130048
    %5888 = vst.msk [vmem:[#allocation3] sm:$0xff] %vm5887, %v5879
    %5889 = vst.msk [vmem:[#allocation3 + $0x8] sm:$0xff] %vm5887, %v5880
    %5890 = vst.msk [vmem:[#allocation3 + $0x10] sm:$0xff] %vm5887, %v5881
    %5891 = vst.msk [vmem:[#allocation3 + $0x18] sm:$0xff] %vm5887, %v5882
    %5892 = vst.msk [vmem:[#allocation3 + $0x20] sm:$0xff] %vm5887, %v5883
    %5893 = vst.msk [vmem:[#allocation3 + $0x28] sm:$0xff] %vm5887, %v5884
    %5894 = vst.msk [vmem:[#allocation3 + $0x30] sm:$0xff] %vm5887, %v5885
    %5895 = vst.msk [vmem:[#allocation3 + $0x38] sm:$0xff] %vm5887, %v5886
    %v5896 = vld [vmem:[#allocation3] sm:$0xf]
    %v5898 = vrot.slane %v5896, 2
    %v5900 = vmax.f32 %v5896, %v5898
    %v5901 = vpack.c.bf16 %v5900, %v5900
    %v5902 = vld [vmem:[%s5] sm:$0xf]
    %v5903 = vld [vmem:[%s5 + $0x4] sm:$0xf]
    %v5904 = vld [vmem:[#allocation3 + $0x4] sm:$0xf]
    %v5906 = vrot.slane %v5904, 2
    %v5908 = vmax.f32 %v5904, %v5906
    %v5909 = vpack.c.bf16 %v5908, %v5908
    %s5910 = scalar_lea.vmem %s5, 8
    %v5911 = vld [vmem:[%s5910] sm:$0xf]
    %v5912 = vld [vmem:[%s5910 + $0x4] sm:$0xf]
    %v5915 = vunpack.c.l.b16 %v5911
    %v5916 = vunpack.c.l.b16 %v5912
    %v5917 = vpack.c.b16 %v5916, %v5915
    %v5920 = vsel %vm5887, %v5909, 0
    %5922 = vmatprep.subr.bf16.mxu0 0
    %5923 = vmatpush1.bf16.msra.mxu0 0
    %5924 = vmatprep.subr.bf16.mxu0 0
    %5925 = vmatpush1.bf16.msra.mxu0 0
    %5926 = vmatprep.subr.bf16.mxu0 0
    %5927 = vmatpush1.bf16.msra.mxu0 0
    %5928 = vmatprep.subr.bf16.mxu0 0
    %5929 = vmatpush1.bf16.msra.mxu0 0
    %5930 = vmatprep.subr.bf16.mxu0 0
    %5931 = vmatpush1.bf16.msra.mxu0 0
    %5932 = vmatprep.subr.bf16.mxu0 0
    %5933 = vmatpush1.bf16.msra.mxu0 0
    %5934 = vmatprep.subr.bf16.mxu0 0
    %5935 = vmatpush1.bf16.msra.mxu0 0
    %5936 = vmatprep.subr.bf16.mxu0 0
    %5937 = vmatpush1.bf16.msra.mxu0 %v5917
    %5938 = vmatprep.subr.bf16.mxu0 0
    %5939 = vmatpush2.bf16.msra.mxu0 0
    %5940 = vmatprep.subr.bf16.mxu0 0
    %5941 = vmatpush2.bf16.msra.mxu0 0
    %5942 = vmatprep.subr.bf16.mxu0 0
    %5943 = vmatpush2.bf16.msra.mxu0 0
    %5944 = vmatprep.subr.bf16.mxu0 0
    %5945 = vmatpush2.bf16.msra.mxu0 0
    %5946 = vmatprep.subr.bf16.mxu0 0
    %5947 = vmatpush2.bf16.msra.mxu0 0
    %5948 = vmatprep.subr.bf16.mxu0 0
    %5949 = vmatpush2.bf16.msra.mxu0 0
    %5950 = vmatprep.subr.bf16.mxu0 0
    %5951 = vmatpush2.bf16.msra.mxu0 0
    %5952 = vmatprep.subr.bf16.mxu0 0
    %5953 = vmatpush2.bf16.msra.mxu0 0
    %5954 = vmatprep.mubr.bf16.mxu0 0
    %5955 = vmatmul.mubr.bf16.gmra.mxu0 %v5920
    %v5956 = vpop.f32.mrf.mxu0
    %v5957 = vadd.f32 0.0, %v5956
    %v5958 = vpop.f32.mrf.mxu0
    %v5959 = vpop.f32.mrf.mxu0
    %v5960 = vpop.f32.mrf.mxu0
    %5961 = vdwg.mxu0
    %v5964 = vunpack.c.l.b16 %v5902
    %v5965 = vunpack.c.l.b16 %v5903
    %v5966 = vpack.c.b16 %v5965, %v5964
    %v5969 = vsel %vm5887, %v5901, 0
    %5971 = vmatprep.subr.bf16.mxu0 0
    %5972 = vmatpush1.bf16.msra.mxu0 0
    %5973 = vmatprep.subr.bf16.mxu0 0
    %5974 = vmatpush1.bf16.msra.mxu0 0
    %5975 = vmatprep.subr.bf16.mxu0 0
    %5976 = vmatpush1.bf16.msra.mxu0 0
    %5977 = vmatprep.subr.bf16.mxu0 0
    %5978 = vmatpush1.bf16.msra.mxu0 0
    %5979 = vmatprep.subr.bf16.mxu0 0
    %5980 = vmatpush1.bf16.msra.mxu0 0
    %5981 = vmatprep.subr.bf16.mxu0 0
    %5982 = vmatpush1.bf16.msra.mxu0 0
    %5983 = vmatprep.subr.bf16.mxu0 0
    %5984 = vmatpush1.bf16.msra.mxu0 0
    %5985 = vmatprep.subr.bf16.mxu0 0
    %5986 = vmatpush1.bf16.msra.mxu0 %v5966
    %5987 = vmatprep.subr.bf16.mxu0 0
    %5988 = vmatpush2.bf16.msra.mxu0 0
    %5989 = vmatprep.subr.bf16.mxu0 0
    %5990 = vmatpush2.bf16.msra.mxu0 0
    %5991 = vmatprep.subr.bf16.mxu0 0
    %5992 = vmatpush2.bf16.msra.mxu0 0
    %5993 = vmatprep.subr.bf16.mxu0 0
    %5994 = vmatpush2.bf16.msra.mxu0 0
    %5995 = vmatprep.subr.bf16.mxu0 0
    %5996 = vmatpush2.bf16.msra.mxu0 0
    %5997 = vmatprep.subr.bf16.mxu0 0
    %5998 = vmatpush2.bf16.msra.mxu0 0
    %5999 = vmatprep.subr.bf16.mxu0 0
    %6000 = vmatpush2.bf16.msra.mxu0 0
    %6001 = vmatprep.subr.bf16.mxu0 0
    %6002 = vmatpush2.bf16.msra.mxu0 0
    %6003 = vmatprep.mubr.bf16.mxu0 0
    %6004 = vmatmul.mubr.bf16.gmra.mxu0 %v5969
    %v6005 = vpop.f32.mrf.mxu0
    %v6006 = vadd.f32 %v5957, %v6005
    %v6007 = vpop.f32.mrf.mxu0
    %v6008 = vpop.f32.mrf.mxu0
    %v6009 = vpop.f32.mrf.mxu0
    %6010 = vdwg.mxu0
    %v6011 = vld [vmem:[#allocation3 + $0x8] sm:$0xf]
    %v6013 = vrot.slane %v6011, 2
    %v6015 = vmax.f32 %v6011, %v6013
    %v6016 = vpack.c.bf16 %v6015, %v6015
    %s6017 = scalar_lea.vmem %s5, 16
    %v6018 = vld [vmem:[%s6017] sm:$0xf]
    %v6019 = vld [vmem:[%s6017 + $0x4] sm:$0xf]
    %v6022 = vunpack.c.l.b16 %v6018
    %v6023 = vunpack.c.l.b16 %v6019
    %v6024 = vpack.c.b16 %v6023, %v6022
    %v6027 = vsel %vm5887, %v6016, 0
    %6029 = vmatprep.subr.bf16.mxu0 0
    %6030 = vmatpush1.bf16.msra.mxu0 0
    %6031 = vmatprep.subr.bf16.mxu0 0
    %6032 = vmatpush1.bf16.msra.mxu0 0
    %6033 = vmatprep.subr.bf16.mxu0 0
    %6034 = vmatpush1.bf16.msra.mxu0 0
    %6035 = vmatprep.subr.bf16.mxu0 0
    %6036 = vmatpush1.bf16.msra.mxu0 0
    %6037 = vmatprep.subr.bf16.mxu0 0
    %6038 = vmatpush1.bf16.msra.mxu0 0
    %6039 = vmatprep.subr.bf16.mxu0 0
    %6040 = vmatpush1.bf16.msra.mxu0 0
    %6041 = vmatprep.subr.bf16.mxu0 0
    %6042 = vmatpush1.bf16.msra.mxu0 0
    %6043 = vmatprep.subr.bf16.mxu0 0
    %6044 = vmatpush1.bf16.msra.mxu0 %v6024
    %6045 = vmatprep.subr.bf16.mxu0 0
    %6046 = vmatpush2.bf16.msra.mxu0 0
    %6047 = vmatprep.subr.bf16.mxu0 0
    %6048 = vmatpush2.bf16.msra.mxu0 0
    %6049 = vmatprep.subr.bf16.mxu0 0
    %6050 = vmatpush2.bf16.msra.mxu0 0
    %6051 = vmatprep.subr.bf16.mxu0 0
    %6052 = vmatpush2.bf16.msra.mxu0 0
    %6053 = vmatprep.subr.bf16.mxu0 0
    %6054 = vmatpush2.bf16.msra.mxu0 0
    %6055 = vmatprep.subr.bf16.mxu0 0
    %6056 = vmatpush2.bf16.msra.mxu0 0
    %6057 = vmatprep.subr.bf16.mxu0 0
    %6058 = vmatpush2.bf16.msra.mxu0 0
    %6059 = vmatprep.subr.bf16.mxu0 0
    %6060 = vmatpush2.bf16.msra.mxu0 0
    %6061 = vmatprep.mubr.bf16.mxu0 0
    %6062 = vmatmul.mubr.bf16.gmra.mxu0 %v6027
    %v6063 = vpop.f32.mrf.mxu0
    %v6064 = vadd.f32 0.0, %v6063
    %v6065 = vpop.f32.mrf.mxu0
    %v6066 = vpop.f32.mrf.mxu0
    %v6067 = vpop.f32.mrf.mxu0
    %6068 = vdwg.mxu0
    %v6069 = vadd.f32 %v6006, %v6064
    %v6070 = vld [vmem:[#allocation3 + $0xc] sm:$0xf]
    %v6072 = vrot.slane %v6070, 2
    %v6074 = vmax.f32 %v6070, %v6072
    %v6075 = vpack.c.bf16 %v6074, %v6074
    %s6076 = scalar_lea.vmem %s5, 24
    %v6077 = vld [vmem:[%s6076] sm:$0xf]
    %v6078 = vld [vmem:[%s6076 + $0x4] sm:$0xf]
    %v6081 = vunpack.c.l.b16 %v6077
    %v6082 = vunpack.c.l.b16 %v6078
    %v6083 = vpack.c.b16 %v6082, %v6081
    %v6086 = vsel %vm5887, %v6075, 0
    %6088 = vmatprep.subr.bf16.mxu0 0
    %6089 = vmatpush1.bf16.msra.mxu0 0
    %6090 = vmatprep.subr.bf16.mxu0 0
    %6091 = vmatpush1.bf16.msra.mxu0 0
    %6092 = vmatprep.subr.bf16.mxu0 0
    %6093 = vmatpush1.bf16.msra.mxu0 0
    %6094 = vmatprep.subr.bf16.mxu0 0
    %6095 = vmatpush1.bf16.msra.mxu0 0
    %6096 = vmatprep.subr.bf16.mxu0 0
    %6097 = vmatpush1.bf16.msra.mxu0 0
    %6098 = vmatprep.subr.bf16.mxu0 0
    %6099 = vmatpush1.bf16.msra.mxu0 0
    %6100 = vmatprep.subr.bf16.mxu0 0
    %6101 = vmatpush1.bf16.msra.mxu0 0
    %6102 = vmatprep.subr.bf16.mxu0 0
    %6103 = vmatpush1.bf16.msra.mxu0 %v6083
    %6104 = vmatprep.subr.bf16.mxu0 0
    %6105 = vmatpush2.bf16.msra.mxu0 0
    %6106 = vmatprep.subr.bf16.mxu0 0
    %6107 = vmatpush2.bf16.msra.mxu0 0
    %6108 = vmatprep.subr.bf16.mxu0 0
    %6109 = vmatpush2.bf16.msra.mxu0 0
    %6110 = vmatprep.subr.bf16.mxu0 0
    %6111 = vmatpush2.bf16.msra.mxu0 0
    %6112 = vmatprep.subr.bf16.mxu0 0
    %6113 = vmatpush2.bf16.msra.mxu0 0
    %6114 = vmatprep.subr.bf16.mxu0 0
    %6115 = vmatpush2.bf16.msra.mxu0 0
    %6116 = vmatprep.subr.bf16.mxu0 0
    %6117 = vmatpush2.bf16.msra.mxu0 0
    %6118 = vmatprep.subr.bf16.mxu0 0
    %6119 = vmatpush2.bf16.msra.mxu0 0
    %6120 = vmatprep.mubr.bf16.mxu0 0
    %6121 = vmatmul.mubr.bf16.gmra.mxu0 %v6086
    %v6122 = vpop.f32.mrf.mxu0
    %v6123 = vadd.f32 0.0, %v6122
    %v6124 = vpop.f32.mrf.mxu0
    %v6125 = vpop.f32.mrf.mxu0
    %v6126 = vpop.f32.mrf.mxu0
    %6127 = vdwg.mxu0
    %v6128 = vadd.f32 %v6069, %v6123
    %s6129 = scalar_lea.vmem [#allocation3], 16
    %v6130 = vld [vmem:[%s6129] sm:$0xf]
    %v6132 = vrot.slane %v6130, 2
    %v6134 = vmax.f32 %v6130, %v6132
    %v6135 = vpack.c.bf16 %v6134, %v6134
    %s6136 = scalar_lea.vmem %s5, 32
    %v6137 = vld [vmem:[%s6136] sm:$0xf]
    %v6138 = vld [vmem:[%s6136 + $0x4] sm:$0xf]
    %v6141 = vunpack.c.l.b16 %v6137
    %v6142 = vunpack.c.l.b16 %v6138
    %v6143 = vpack.c.b16 %v6142, %v6141
    %v6146 = vsel %vm5887, %v6135, 0
    %6148 = vmatprep.subr.bf16.mxu0 0
    %6149 = vmatpush1.bf16.msra.mxu0 0
    %6150 = vmatprep.subr.bf16.mxu0 0
    %6151 = vmatpush1.bf16.msra.mxu0 0
    %6152 = vmatprep.subr.bf16.mxu0 0
    %6153 = vmatpush1.bf16.msra.mxu0 0
    %6154 = vmatprep.subr.bf16.mxu0 0
    %6155 = vmatpush1.bf16.msra.mxu0 0
    %6156 = vmatprep.subr.bf16.mxu0 0
    %6157 = vmatpush1.bf16.msra.mxu0 0
    %6158 = vmatprep.subr.bf16.mxu0 0
    %6159 = vmatpush1.bf16.msra.mxu0 0
    %6160 = vmatprep.subr.bf16.mxu0 0
    %6161 = vmatpush1.bf16.msra.mxu0 0
    %6162 = vmatprep.subr.bf16.mxu0 0
    %6163 = vmatpush1.bf16.msra.mxu0 %v6143
    %6164 = vmatprep.subr.bf16.mxu0 0
    %6165 = vmatpush2.bf16.msra.mxu0 0
    %6166 = vmatprep.subr.bf16.mxu0 0
    %6167 = vmatpush2.bf16.msra.mxu0 0
    %6168 = vmatprep.subr.bf16.mxu0 0
    %6169 = vmatpush2.bf16.msra.mxu0 0
    %6170 = vmatprep.subr.bf16.mxu0 0
    %6171 = vmatpush2.bf16.msra.mxu0 0
    %6172 = vmatprep.subr.bf16.mxu0 0
    %6173 = vmatpush2.bf16.msra.mxu0 0
    %6174 = vmatprep.subr.bf16.mxu0 0
    %6175 = vmatpush2.bf16.msra.mxu0 0
    %6176 = vmatprep.subr.bf16.mxu0 0
    %6177 = vmatpush2.bf16.msra.mxu0 0
    %6178 = vmatprep.subr.bf16.mxu0 0
    %6179 = vmatpush2.bf16.msra.mxu0 0
    %6180 = vmatprep.mubr.bf16.mxu0 0
    %6181 = vmatmul.mubr.bf16.gmra.mxu0 %v6146
    %v6182 = vpop.f32.mrf.mxu0
    %v6183 = vadd.f32 0.0, %v6182
    %v6184 = vpop.f32.mrf.mxu0
    %v6185 = vpop.f32.mrf.mxu0
    %v6186 = vpop.f32.mrf.mxu0
    %6187 = vdwg.mxu0
    %v6188 = vadd.f32 %v6128, %v6183
    %v6189 = vld [vmem:[%s6129 + $0x4] sm:$0xf]
    %v6191 = vrot.slane %v6189, 2
    %v6193 = vmax.f32 %v6189, %v6191
    %v6194 = vpack.c.bf16 %v6193, %v6193
    %s6195 = scalar_lea.vmem %s5, 40
    %v6196 = vld [vmem:[%s6195] sm:$0xf]
    %v6197 = vld [vmem:[%s6195 + $0x4] sm:$0xf]
    %v6200 = vunpack.c.l.b16 %v6196
    %v6201 = vunpack.c.l.b16 %v6197
    %v6202 = vpack.c.b16 %v6201, %v6200
    %v6205 = vsel %vm5887, %v6194, 0
    %6207 = vmatprep.subr.bf16.mxu0 0
    %6208 = vmatpush1.bf16.msra.mxu0 0
    %6209 = vmatprep.subr.bf16.mxu0 0
    %6210 = vmatpush1.bf16.msra.mxu0 0
    %6211 = vmatprep.subr.bf16.mxu0 0
    %6212 = vmatpush1.bf16.msra.mxu0 0
    %6213 = vmatprep.subr.bf16.mxu0 0
    %6214 = vmatpush1.bf16.msra.mxu0 0
    %6215 = vmatprep.subr.bf16.mxu0 0
    %6216 = vmatpush1.bf16.msra.mxu0 0
    %6217 = vmatprep.subr.bf16.mxu0 0
    %6218 = vmatpush1.bf16.msra.mxu0 0
    %6219 = vmatprep.subr.bf16.mxu0 0
    %6220 = vmatpush1.bf16.msra.mxu0 0
    %6221 = vmatprep.subr.bf16.mxu0 0
    %6222 = vmatpush1.bf16.msra.mxu0 %v6202
    %6223 = vmatprep.subr.bf16.mxu0 0
    %6224 = vmatpush2.bf16.msra.mxu0 0
    %6225 = vmatprep.subr.bf16.mxu0 0
    %6226 = vmatpush2.bf16.msra.mxu0 0
    %6227 = vmatprep.subr.bf16.mxu0 0
    %6228 = vmatpush2.bf16.msra.mxu0 0
    %6229 = vmatprep.subr.bf16.mxu0 0
    %6230 = vmatpush2.bf16.msra.mxu0 0
    %6231 = vmatprep.subr.bf16.mxu0 0
    %6232 = vmatpush2.bf16.msra.mxu0 0
    %6233 = vmatprep.subr.bf16.mxu0 0
    %6234 = vmatpush2.bf16.msra.mxu0 0
    %6235 = vmatprep.subr.bf16.mxu0 0
    %6236 = vmatpush2.bf16.msra.mxu0 0
    %6237 = vmatprep.subr.bf16.mxu0 0
    %6238 = vmatpush2.bf16.msra.mxu0 0
    %6239 = vmatprep.mubr.bf16.mxu0 0
    %6240 = vmatmul.mubr.bf16.gmra.mxu0 %v6205
    %v6241 = vpop.f32.mrf.mxu0
    %v6242 = vadd.f32 0.0, %v6241
    %v6243 = vpop.f32.mrf.mxu0
    %v6244 = vpop.f32.mrf.mxu0
    %v6245 = vpop.f32.mrf.mxu0
    %6246 = vdwg.mxu0
    %v6247 = vadd.f32 %v6188, %v6242
    %v6248 = vld [vmem:[%s6129 + $0x8] sm:$0xf]
    %v6250 = vrot.slane %v6248, 2
    %v6252 = vmax.f32 %v6248, %v6250
    %v6253 = vpack.c.bf16 %v6252, %v6252
    %s6254 = scalar_lea.vmem %s5, 48
    %v6255 = vld [vmem:[%s6254] sm:$0xf]
    %v6256 = vld [vmem:[%s6254 + $0x4] sm:$0xf]
    %v6259 = vunpack.c.l.b16 %v6255
    %v6260 = vunpack.c.l.b16 %v6256
    %v6261 = vpack.c.b16 %v6260, %v6259
    %v6264 = vsel %vm5887, %v6253, 0
    %6266 = vmatprep.subr.bf16.mxu0 0
    %6267 = vmatpush1.bf16.msra.mxu0 0
    %6268 = vmatprep.subr.bf16.mxu0 0
    %6269 = vmatpush1.bf16.msra.mxu0 0
    %6270 = vmatprep.subr.bf16.mxu0 0
    %6271 = vmatpush1.bf16.msra.mxu0 0
    %6272 = vmatprep.subr.bf16.mxu0 0
    %6273 = vmatpush1.bf16.msra.mxu0 0
    %6274 = vmatprep.subr.bf16.mxu0 0
    %6275 = vmatpush1.bf16.msra.mxu0 0
    %6276 = vmatprep.subr.bf16.mxu0 0
    %6277 = vmatpush1.bf16.msra.mxu0 0
    %6278 = vmatprep.subr.bf16.mxu0 0
    %6279 = vmatpush1.bf16.msra.mxu0 0
    %6280 = vmatprep.subr.bf16.mxu0 0
    %6281 = vmatpush1.bf16.msra.mxu0 %v6261
    %6282 = vmatprep.subr.bf16.mxu0 0
    %6283 = vmatpush2.bf16.msra.mxu0 0
    %6284 = vmatprep.subr.bf16.mxu0 0
    %6285 = vmatpush2.bf16.msra.mxu0 0
    %6286 = vmatprep.subr.bf16.mxu0 0
    %6287 = vmatpush2.bf16.msra.mxu0 0
    %6288 = vmatprep.subr.bf16.mxu0 0
    %6289 = vmatpush2.bf16.msra.mxu0 0
    %6290 = vmatprep.subr.bf16.mxu0 0
    %6291 = vmatpush2.bf16.msra.mxu0 0
    %6292 = vmatprep.subr.bf16.mxu0 0
    %6293 = vmatpush2.bf16.msra.mxu0 0
    %6294 = vmatprep.subr.bf16.mxu0 0
    %6295 = vmatpush2.bf16.msra.mxu0 0
    %6296 = vmatprep.subr.bf16.mxu0 0
    %6297 = vmatpush2.bf16.msra.mxu0 0
    %6298 = vmatprep.mubr.bf16.mxu0 0
    %6299 = vmatmul.mubr.bf16.gmra.mxu0 %v6264
    %v6300 = vpop.f32.mrf.mxu0
    %v6301 = vadd.f32 0.0, %v6300
    %v6302 = vpop.f32.mrf.mxu0
    %v6303 = vpop.f32.mrf.mxu0
    %v6304 = vpop.f32.mrf.mxu0
    %6305 = vdwg.mxu0
    %v6306 = vadd.f32 %v6247, %v6301
    %v6307 = vld [vmem:[%s6129 + $0xc] sm:$0xf]
    %v6309 = vrot.slane %v6307, 2
    %v6311 = vmax.f32 %v6307, %v6309
    %v6312 = vpack.c.bf16 %v6311, %v6311
    %s6313 = scalar_lea.vmem %s5, 56
    %v6314 = vld [vmem:[%s6313] sm:$0xf]
    %v6315 = vld [vmem:[%s6313 + $0x4] sm:$0xf]
    %v6318 = vunpack.c.l.b16 %v6314
    %v6319 = vunpack.c.l.b16 %v6315
    %v6320 = vpack.c.b16 %v6319, %v6318
    %v6323 = vsel %vm5887, %v6312, 0
    %6325 = vmatprep.subr.bf16.mxu0 0
    %6326 = vmatpush1.bf16.msra.mxu0 0
    %6327 = vmatprep.subr.bf16.mxu0 0
    %6328 = vmatpush1.bf16.msra.mxu0 0
    %6329 = vmatprep.subr.bf16.mxu0 0
    %6330 = vmatpush1.bf16.msra.mxu0 0
    %6331 = vmatprep.subr.bf16.mxu0 0
    %6332 = vmatpush1.bf16.msra.mxu0 0
    %6333 = vmatprep.subr.bf16.mxu0 0
    %6334 = vmatpush1.bf16.msra.mxu0 0
    %6335 = vmatprep.subr.bf16.mxu0 0
    %6336 = vmatpush1.bf16.msra.mxu0 0
    %6337 = vmatprep.subr.bf16.mxu0 0
    %6338 = vmatpush1.bf16.msra.mxu0 0
    %6339 = vmatprep.subr.bf16.mxu0 0
    %6340 = vmatpush1.bf16.msra.mxu0 %v6320
    %6341 = vmatprep.subr.bf16.mxu0 0
    %6342 = vmatpush2.bf16.msra.mxu0 0
    %6343 = vmatprep.subr.bf16.mxu0 0
    %6344 = vmatpush2.bf16.msra.mxu0 0
    %6345 = vmatprep.subr.bf16.mxu0 0
    %6346 = vmatpush2.bf16.msra.mxu0 0
    %6347 = vmatprep.subr.bf16.mxu0 0
    %6348 = vmatpush2.bf16.msra.mxu0 0
    %6349 = vmatprep.subr.bf16.mxu0 0
    %6350 = vmatpush2.bf16.msra.mxu0 0
    %6351 = vmatprep.subr.bf16.mxu0 0
    %6352 = vmatpush2.bf16.msra.mxu0 0
    %6353 = vmatprep.subr.bf16.mxu0 0
    %6354 = vmatpush2.bf16.msra.mxu0 0
    %6355 = vmatprep.subr.bf16.mxu0 0
    %6356 = vmatpush2.bf16.msra.mxu0 0
    %6357 = vmatprep.mubr.bf16.mxu0 0
    %6358 = vmatmul.mubr.bf16.gmra.mxu0 %v6323
    %v6359 = vpop.f32.mrf.mxu0
    %v6360 = vadd.f32 0.0, %v6359
    %v6361 = vpop.f32.mrf.mxu0
    %v6362 = vpop.f32.mrf.mxu0
    %v6363 = vpop.f32.mrf.mxu0
    %6364 = vdwg.mxu0
    %v6365 = vadd.f32 %v6306, %v6360
    %s6366 = scalar_lea.vmem [#allocation3], 32
    %v6367 = vld [vmem:[%s6366] sm:$0xf]
    %v6369 = vrot.slane %v6367, 2
    %v6371 = vmax.f32 %v6367, %v6369
    %v6372 = vpack.c.bf16 %v6371, %v6371
    %s6373 = scalar_lea.vmem %s5, 64
    %v6374 = vld [vmem:[%s6373] sm:$0xf]
    %v6375 = vld [vmem:[%s6373 + $0x4] sm:$0xf]
    %v6378 = vunpack.c.l.b16 %v6374
    %v6379 = vunpack.c.l.b16 %v6375
    %v6380 = vpack.c.b16 %v6379, %v6378
    %v6383 = vsel %vm5887, %v6372, 0
    %6385 = vmatprep.subr.bf16.mxu0 0
    %6386 = vmatpush1.bf16.msra.mxu0 0
    %6387 = vmatprep.subr.bf16.mxu0 0
    %6388 = vmatpush1.bf16.msra.mxu0 0
    %6389 = vmatprep.subr.bf16.mxu0 0
    %6390 = vmatpush1.bf16.msra.mxu0 0
    %6391 = vmatprep.subr.bf16.mxu0 0
    %6392 = vmatpush1.bf16.msra.mxu0 0
    %6393 = vmatprep.subr.bf16.mxu0 0
    %6394 = vmatpush1.bf16.msra.mxu0 0
    %6395 = vmatprep.subr.bf16.mxu0 0
    %6396 = vmatpush1.bf16.msra.mxu0 0
    %6397 = vmatprep.subr.bf16.mxu0 0
    %6398 = vmatpush1.bf16.msra.mxu0 0
    %6399 = vmatprep.subr.bf16.mxu0 0
    %6400 = vmatpush1.bf16.msra.mxu0 %v6380
    %6401 = vmatprep.subr.bf16.mxu0 0
    %6402 = vmatpush2.bf16.msra.mxu0 0
    %6403 = vmatprep.subr.bf16.mxu0 0
    %6404 = vmatpush2.bf16.msra.mxu0 0
    %6405 = vmatprep.subr.bf16.mxu0 0
    %6406 = vmatpush2.bf16.msra.mxu0 0
    %6407 = vmatprep.subr.bf16.mxu0 0
    %6408 = vmatpush2.bf16.msra.mxu0 0
    %6409 = vmatprep.subr.bf16.mxu0 0
    %6410 = vmatpush2.bf16.msra.mxu0 0
    %6411 = vmatprep.subr.bf16.mxu0 0
    %6412 = vmatpush2.bf16.msra.mxu0 0
    %6413 = vmatprep.subr.bf16.mxu0 0
    %6414 = vmatpush2.bf16.msra.mxu0 0
    %6415 = vmatprep.subr.bf16.mxu0 0
    %6416 = vmatpush2.bf16.msra.mxu0 0
    %6417 = vmatprep.mubr.bf16.mxu0 0
    %6418 = vmatmul.mubr.bf16.gmra.mxu0 %v6383
    %v6419 = vpop.f32.mrf.mxu0
    %v6420 = vadd.f32 0.0, %v6419
    %v6421 = vpop.f32.mrf.mxu0
    %v6422 = vpop.f32.mrf.mxu0
    %v6423 = vpop.f32.mrf.mxu0
    %6424 = vdwg.mxu0
    %v6425 = vadd.f32 %v6365, %v6420
    %v6426 = vld [vmem:[%s6366 + $0x4] sm:$0xf]
    %v6428 = vrot.slane %v6426, 2
    %v6430 = vmax.f32 %v6426, %v6428
    %v6431 = vpack.c.bf16 %v6430, %v6430
    %s6432 = scalar_lea.vmem %s5, 72
    %v6433 = vld [vmem:[%s6432] sm:$0xf]
    %v6434 = vld [vmem:[%s6432 + $0x4] sm:$0xf]
    %v6437 = vunpack.c.l.b16 %v6433
    %v6438 = vunpack.c.l.b16 %v6434
    %v6439 = vpack.c.b16 %v6438, %v6437
    %v6442 = vsel %vm5887, %v6431, 0
    %6444 = vmatprep.subr.bf16.mxu0 0
    %6445 = vmatpush1.bf16.msra.mxu0 0
    %6446 = vmatprep.subr.bf16.mxu0 0
    %6447 = vmatpush1.bf16.msra.mxu0 0
    %6448 = vmatprep.subr.bf16.mxu0 0
    %6449 = vmatpush1.bf16.msra.mxu0 0
    %6450 = vmatprep.subr.bf16.mxu0 0
    %6451 = vmatpush1.bf16.msra.mxu0 0
    %6452 = vmatprep.subr.bf16.mxu0 0
    %6453 = vmatpush1.bf16.msra.mxu0 0
    %6454 = vmatprep.subr.bf16.mxu0 0
    %6455 = vmatpush1.bf16.msra.mxu0 0
    %6456 = vmatprep.subr.bf16.mxu0 0
    %6457 = vmatpush1.bf16.msra.mxu0 0
    %6458 = vmatprep.subr.bf16.mxu0 0
    %6459 = vmatpush1.bf16.msra.mxu0 %v6439
    %6460 = vmatprep.subr.bf16.mxu0 0
    %6461 = vmatpush2.bf16.msra.mxu0 0
    %6462 = vmatprep.subr.bf16.mxu0 0
    %6463 = vmatpush2.bf16.msra.mxu0 0
    %6464 = vmatprep.subr.bf16.mxu0 0
    %6465 = vmatpush2.bf16.msra.mxu0 0
    %6466 = vmatprep.subr.bf16.mxu0 0
    %6467 = vmatpush2.bf16.msra.mxu0 0
    %6468 = vmatprep.subr.bf16.mxu0 0
    %6469 = vmatpush2.bf16.msra.mxu0 0
    %6470 = vmatprep.subr.bf16.mxu0 0
    %6471 = vmatpush2.bf16.msra.mxu0 0
    %6472 = vmatprep.subr.bf16.mxu0 0
    %6473 = vmatpush2.bf16.msra.mxu0 0
    %6474 = vmatprep.subr.bf16.mxu0 0
    %6475 = vmatpush2.bf16.msra.mxu0 0
    %6476 = vmatprep.mubr.bf16.mxu0 0
    %6477 = vmatmul.mubr.bf16.gmra.mxu0 %v6442
    %v6478 = vpop.f32.mrf.mxu0
    %v6479 = vadd.f32 0.0, %v6478
    %v6480 = vpop.f32.mrf.mxu0
    %v6481 = vpop.f32.mrf.mxu0
    %v6482 = vpop.f32.mrf.mxu0
    %6483 = vdwg.mxu0
    %v6484 = vadd.f32 %v6425, %v6479
    %v6485 = vld [vmem:[%s6366 + $0x8] sm:$0xf]
    %v6487 = vrot.slane %v6485, 2
    %v6489 = vmax.f32 %v6485, %v6487
    %v6490 = vpack.c.bf16 %v6489, %v6489
    %s6491 = scalar_lea.vmem %s5, 80
    %v6492 = vld [vmem:[%s6491] sm:$0xf]
    %v6493 = vld [vmem:[%s6491 + $0x4] sm:$0xf]
    %v6496 = vunpack.c.l.b16 %v6492
    %v6497 = vunpack.c.l.b16 %v6493
    %v6498 = vpack.c.b16 %v6497, %v6496
    %v6501 = vsel %vm5887, %v6490, 0
    %6503 = vmatprep.subr.bf16.mxu0 0
    %6504 = vmatpush1.bf16.msra.mxu0 0
    %6505 = vmatprep.subr.bf16.mxu0 0
    %6506 = vmatpush1.bf16.msra.mxu0 0
    %6507 = vmatprep.subr.bf16.mxu0 0
    %6508 = vmatpush1.bf16.msra.mxu0 0
    %6509 = vmatprep.subr.bf16.mxu0 0
    %6510 = vmatpush1.bf16.msra.mxu0 0
    %6511 = vmatprep.subr.bf16.mxu0 0
    %6512 = vmatpush1.bf16.msra.mxu0 0
    %6513 = vmatprep.subr.bf16.mxu0 0
    %6514 = vmatpush1.bf16.msra.mxu0 0
    %6515 = vmatprep.subr.bf16.mxu0 0
    %6516 = vmatpush1.bf16.msra.mxu0 0
    %6517 = vmatprep.subr.bf16.mxu0 0
    %6518 = vmatpush1.bf16.msra.mxu0 %v6498
    %6519 = vmatprep.subr.bf16.mxu0 0
    %6520 = vmatpush2.bf16.msra.mxu0 0
    %6521 = vmatprep.subr.bf16.mxu0 0
    %6522 = vmatpush2.bf16.msra.mxu0 0
    %6523 = vmatprep.subr.bf16.mxu0 0
    %6524 = vmatpush2.bf16.msra.mxu0 0
    %6525 = vmatprep.subr.bf16.mxu0 0
    %6526 = vmatpush2.bf16.msra.mxu0 0
    %6527 = vmatprep.subr.bf16.mxu0 0
    %6528 = vmatpush2.bf16.msra.mxu0 0
    %6529 = vmatprep.subr.bf16.mxu0 0
    %6530 = vmatpush2.bf16.msra.mxu0 0
    %6531 = vmatprep.subr.bf16.mxu0 0
    %6532 = vmatpush2.bf16.msra.mxu0 0
    %6533 = vmatprep.subr.bf16.mxu0 0
    %6534 = vmatpush2.bf16.msra.mxu0 0
    %6535 = vmatprep.mubr.bf16.mxu0 0
    %6536 = vmatmul.mubr.bf16.gmra.mxu0 %v6501
    %v6537 = vpop.f32.mrf.mxu0
    %v6538 = vadd.f32 0.0, %v6537
    %v6539 = vpop.f32.mrf.mxu0
    %v6540 = vpop.f32.mrf.mxu0
    %v6541 = vpop.f32.mrf.mxu0
    %6542 = vdwg.mxu0
    %v6543 = vadd.f32 %v6484, %v6538
    %v6544 = vld [vmem:[%s6366 + $0xc] sm:$0xf]
    %v6546 = vrot.slane %v6544, 2
    %v6548 = vmax.f32 %v6544, %v6546
    %v6549 = vpack.c.bf16 %v6548, %v6548
    %s6550 = scalar_lea.vmem %s5, 88
    %v6551 = vld [vmem:[%s6550] sm:$0xf]
    %v6552 = vld [vmem:[%s6550 + $0x4] sm:$0xf]
    %v6555 = vunpack.c.l.b16 %v6551
    %v6556 = vunpack.c.l.b16 %v6552
    %v6557 = vpack.c.b16 %v6556, %v6555
    %v6560 = vsel %vm5887, %v6549, 0
    %6562 = vmatprep.subr.bf16.mxu0 0
    %6563 = vmatpush1.bf16.msra.mxu0 0
    %6564 = vmatprep.subr.bf16.mxu0 0
    %6565 = vmatpush1.bf16.msra.mxu0 0
    %6566 = vmatprep.subr.bf16.mxu0 0
    %6567 = vmatpush1.bf16.msra.mxu0 0
    %6568 = vmatprep.subr.bf16.mxu0 0
    %6569 = vmatpush1.bf16.msra.mxu0 0
    %6570 = vmatprep.subr.bf16.mxu0 0
    %6571 = vmatpush1.bf16.msra.mxu0 0
    %6572 = vmatprep.subr.bf16.mxu0 0
    %6573 = vmatpush1.bf16.msra.mxu0 0
    %6574 = vmatprep.subr.bf16.mxu0 0
    %6575 = vmatpush1.bf16.msra.mxu0 0
    %6576 = vmatprep.subr.bf16.mxu0 0
    %6577 = vmatpush1.bf16.msra.mxu0 %v6557
    %6578 = vmatprep.subr.bf16.mxu0 0
    %6579 = vmatpush2.bf16.msra.mxu0 0
    %6580 = vmatprep.subr.bf16.mxu0 0
    %6581 = vmatpush2.bf16.msra.mxu0 0
    %6582 = vmatprep.subr.bf16.mxu0 0
    %6583 = vmatpush2.bf16.msra.mxu0 0
    %6584 = vmatprep.subr.bf16.mxu0 0
    %6585 = vmatpush2.bf16.msra.mxu0 0
    %6586 = vmatprep.subr.bf16.mxu0 0
    %6587 = vmatpush2.bf16.msra.mxu0 0
    %6588 = vmatprep.subr.bf16.mxu0 0
    %6589 = vmatpush2.bf16.msra.mxu0 0
    %6590 = vmatprep.subr.bf16.mxu0 0
    %6591 = vmatpush2.bf16.msra.mxu0 0
    %6592 = vmatprep.subr.bf16.mxu0 0
    %6593 = vmatpush2.bf16.msra.mxu0 0
    %6594 = vmatprep.mubr.bf16.mxu0 0
    %6595 = vmatmul.mubr.bf16.gmra.mxu0 %v6560
    %v6596 = vpop.f32.mrf.mxu0
    %v6597 = vadd.f32 0.0, %v6596
    %v6598 = vpop.f32.mrf.mxu0
    %v6599 = vpop.f32.mrf.mxu0
    %v6600 = vpop.f32.mrf.mxu0
    %6601 = vdwg.mxu0
    %v6602 = vadd.f32 %v6543, %v6597
    %s6603 = scalar_lea.vmem [#allocation3], 48
    %v6604 = vld [vmem:[%s6603] sm:$0xf]
    %v6606 = vrot.slane %v6604, 2
    %v6608 = vmax.f32 %v6604, %v6606
    %v6609 = vpack.c.bf16 %v6608, %v6608
    %s6610 = scalar_lea.vmem %s5, 96
    %v6611 = vld [vmem:[%s6610] sm:$0xf]
    %v6612 = vld [vmem:[%s6610 + $0x4] sm:$0xf]
    %v6615 = vunpack.c.l.b16 %v6611
    %v6616 = vunpack.c.l.b16 %v6612
    %v6617 = vpack.c.b16 %v6616, %v6615
    %v6620 = vsel %vm5887, %v6609, 0
    %6622 = vmatprep.subr.bf16.mxu0 0
    %6623 = vmatpush1.bf16.msra.mxu0 0
    %6624 = vmatprep.subr.bf16.mxu0 0
    %6625 = vmatpush1.bf16.msra.mxu0 0
    %6626 = vmatprep.subr.bf16.mxu0 0
    %6627 = vmatpush1.bf16.msra.mxu0 0
    %6628 = vmatprep.subr.bf16.mxu0 0
    %6629 = vmatpush1.bf16.msra.mxu0 0
    %6630 = vmatprep.subr.bf16.mxu0 0
    %6631 = vmatpush1.bf16.msra.mxu0 0
    %6632 = vmatprep.subr.bf16.mxu0 0
    %6633 = vmatpush1.bf16.msra.mxu0 0
    %6634 = vmatprep.subr.bf16.mxu0 0
    %6635 = vmatpush1.bf16.msra.mxu0 0
    %6636 = vmatprep.subr.bf16.mxu0 0
    %6637 = vmatpush1.bf16.msra.mxu0 %v6617
    %6638 = vmatprep.subr.bf16.mxu0 0
    %6639 = vmatpush2.bf16.msra.mxu0 0
    %6640 = vmatprep.subr.bf16.mxu0 0
    %6641 = vmatpush2.bf16.msra.mxu0 0
    %6642 = vmatprep.subr.bf16.mxu0 0
    %6643 = vmatpush2.bf16.msra.mxu0 0
    %6644 = vmatprep.subr.bf16.mxu0 0
    %6645 = vmatpush2.bf16.msra.mxu0 0
    %6646 = vmatprep.subr.bf16.mxu0 0
    %6647 = vmatpush2.bf16.msra.mxu0 0
    %6648 = vmatprep.subr.bf16.mxu0 0
    %6649 = vmatpush2.bf16.msra.mxu0 0
    %6650 = vmatprep.subr.bf16.mxu0 0
    %6651 = vmatpush2.bf16.msra.mxu0 0
    %6652 = vmatprep.subr.bf16.mxu0 0
    %6653 = vmatpush2.bf16.msra.mxu0 0
    %6654 = vmatprep.mubr.bf16.mxu0 0
    %6655 = vmatmul.mubr.bf16.gmra.mxu0 %v6620
    %v6656 = vpop.f32.mrf.mxu0
    %v6657 = vadd.f32 0.0, %v6656
    %v6658 = vpop.f32.mrf.mxu0
    %v6659 = vpop.f32.mrf.mxu0
    %v6660 = vpop.f32.mrf.mxu0
    %6661 = vdwg.mxu0
    %v6662 = vadd.f32 %v6602, %v6657
    %v6663 = vld [vmem:[%s6603 + $0x4] sm:$0xf]
    %v6665 = vrot.slane %v6663, 2
    %v6667 = vmax.f32 %v6663, %v6665
    %v6668 = vpack.c.bf16 %v6667, %v6667
    %s6669 = scalar_lea.vmem %s5, 104
    %v6670 = vld [vmem:[%s6669] sm:$0xf]
    %v6671 = vld [vmem:[%s6669 + $0x4] sm:$0xf]
    %v6674 = vunpack.c.l.b16 %v6670
    %v6675 = vunpack.c.l.b16 %v6671
    %v6676 = vpack.c.b16 %v6675, %v6674
    %v6679 = vsel %vm5887, %v6668, 0
    %6681 = vmatprep.subr.bf16.mxu0 0
    %6682 = vmatpush1.bf16.msra.mxu0 0
    %6683 = vmatprep.subr.bf16.mxu0 0
    %6684 = vmatpush1.bf16.msra.mxu0 0
    %6685 = vmatprep.subr.bf16.mxu0 0
    %6686 = vmatpush1.bf16.msra.mxu0 0
    %6687 = vmatprep.subr.bf16.mxu0 0
    %6688 = vmatpush1.bf16.msra.mxu0 0
    %6689 = vmatprep.subr.bf16.mxu0 0
    %6690 = vmatpush1.bf16.msra.mxu0 0
    %6691 = vmatprep.subr.bf16.mxu0 0
    %6692 = vmatpush1.bf16.msra.mxu0 0
    %6693 = vmatprep.subr.bf16.mxu0 0
    %6694 = vmatpush1.bf16.msra.mxu0 0
    %6695 = vmatprep.subr.bf16.mxu0 0
    %6696 = vmatpush1.bf16.msra.mxu0 %v6676
    %6697 = vmatprep.subr.bf16.mxu0 0
    %6698 = vmatpush2.bf16.msra.mxu0 0
    %6699 = vmatprep.subr.bf16.mxu0 0
    %6700 = vmatpush2.bf16.msra.mxu0 0
    %6701 = vmatprep.subr.bf16.mxu0 0
    %6702 = vmatpush2.bf16.msra.mxu0 0
    %6703 = vmatprep.subr.bf16.mxu0 0
    %6704 = vmatpush2.bf16.msra.mxu0 0
    %6705 = vmatprep.subr.bf16.mxu0 0
    %6706 = vmatpush2.bf16.msra.mxu0 0
    %6707 = vmatprep.subr.bf16.mxu0 0
    %6708 = vmatpush2.bf16.msra.mxu0 0
    %6709 = vmatprep.subr.bf16.mxu0 0
    %6710 = vmatpush2.bf16.msra.mxu0 0
    %6711 = vmatprep.subr.bf16.mxu0 0
    %6712 = vmatpush2.bf16.msra.mxu0 0
    %6713 = vmatprep.mubr.bf16.mxu0 0
    %6714 = vmatmul.mubr.bf16.gmra.mxu0 %v6679
    %v6715 = vpop.f32.mrf.mxu0
    %v6716 = vadd.f32 0.0, %v6715
    %v6717 = vpop.f32.mrf.mxu0
    %v6718 = vpop.f32.mrf.mxu0
    %v6719 = vpop.f32.mrf.mxu0
    %6720 = vdwg.mxu0
    %v6721 = vadd.f32 %v6662, %v6716
    %v6722 = vld [vmem:[%s6603 + $0x8] sm:$0xf]
    %v6724 = vrot.slane %v6722, 2
    %v6726 = vmax.f32 %v6722, %v6724
    %v6727 = vpack.c.bf16 %v6726, %v6726
    %s6728 = scalar_lea.vmem %s5, 112
    %v6729 = vld [vmem:[%s6728] sm:$0xf]
    %v6730 = vld [vmem:[%s6728 + $0x4] sm:$0xf]
    %v6733 = vunpack.c.l.b16 %v6729
    %v6734 = vunpack.c.l.b16 %v6730
    %v6735 = vpack.c.b16 %v6734, %v6733
    %v6738 = vsel %vm5887, %v6727, 0
    %6740 = vmatprep.subr.bf16.mxu0 0
    %6741 = vmatpush1.bf16.msra.mxu0 0
    %6742 = vmatprep.subr.bf16.mxu0 0
    %6743 = vmatpush1.bf16.msra.mxu0 0
    %6744 = vmatprep.subr.bf16.mxu0 0
    %6745 = vmatpush1.bf16.msra.mxu0 0
    %6746 = vmatprep.subr.bf16.mxu0 0
    %6747 = vmatpush1.bf16.msra.mxu0 0
    %6748 = vmatprep.subr.bf16.mxu0 0
    %6749 = vmatpush1.bf16.msra.mxu0 0
    %6750 = vmatprep.subr.bf16.mxu0 0
    %6751 = vmatpush1.bf16.msra.mxu0 0
    %6752 = vmatprep.subr.bf16.mxu0 0
    %6753 = vmatpush1.bf16.msra.mxu0 0
    %6754 = vmatprep.subr.bf16.mxu0 0
    %6755 = vmatpush1.bf16.msra.mxu0 %v6735
    %6756 = vmatprep.subr.bf16.mxu0 0
    %6757 = vmatpush2.bf16.msra.mxu0 0
    %6758 = vmatprep.subr.bf16.mxu0 0
    %6759 = vmatpush2.bf16.msra.mxu0 0
    %6760 = vmatprep.subr.bf16.mxu0 0
    %6761 = vmatpush2.bf16.msra.mxu0 0
    %6762 = vmatprep.subr.bf16.mxu0 0
    %6763 = vmatpush2.bf16.msra.mxu0 0
    %6764 = vmatprep.subr.bf16.mxu0 0
    %6765 = vmatpush2.bf16.msra.mxu0 0
    %6766 = vmatprep.subr.bf16.mxu0 0
    %6767 = vmatpush2.bf16.msra.mxu0 0
    %6768 = vmatprep.subr.bf16.mxu0 0
    %6769 = vmatpush2.bf16.msra.mxu0 0
    %6770 = vmatprep.subr.bf16.mxu0 0
    %6771 = vmatpush2.bf16.msra.mxu0 0
    %6772 = vmatprep.mubr.bf16.mxu0 0
    %6773 = vmatmul.mubr.bf16.gmra.mxu0 %v6738
    %v6774 = vpop.f32.mrf.mxu0
    %v6775 = vadd.f32 0.0, %v6774
    %v6776 = vpop.f32.mrf.mxu0
    %v6777 = vpop.f32.mrf.mxu0
    %v6778 = vpop.f32.mrf.mxu0
    %6779 = vdwg.mxu0
    %v6780 = vadd.f32 %v6721, %v6775
    %v6781 = vld [vmem:[%s6603 + $0xc] sm:$0xf]
    %v6783 = vrot.slane %v6781, 2
    %v6785 = vmax.f32 %v6781, %v6783
    %v6786 = vpack.c.bf16 %v6785, %v6785
    %s6787 = scalar_lea.vmem %s5, 120
    %v6788 = vld [vmem:[%s6787] sm:$0xf]
    %v6789 = vld [vmem:[%s6787 + $0x4] sm:$0xf]
    %v6792 = vunpack.c.l.b16 %v6788
    %v6793 = vunpack.c.l.b16 %v6789
    %v6794 = vpack.c.b16 %v6793, %v6792
    %v6797 = vsel %vm5887, %v6786, 0
    %6799 = vmatprep.subr.bf16.mxu0 0
    %6800 = vmatpush1.bf16.msra.mxu0 0
    %6801 = vmatprep.subr.bf16.mxu0 0
    %6802 = vmatpush1.bf16.msra.mxu0 0
    %6803 = vmatprep.subr.bf16.mxu0 0
    %6804 = vmatpush1.bf16.msra.mxu0 0
    %6805 = vmatprep.subr.bf16.mxu0 0
    %6806 = vmatpush1.bf16.msra.mxu0 0
    %6807 = vmatprep.subr.bf16.mxu0 0
    %6808 = vmatpush1.bf16.msra.mxu0 0
    %6809 = vmatprep.subr.bf16.mxu0 0
    %6810 = vmatpush1.bf16.msra.mxu0 0
    %6811 = vmatprep.subr.bf16.mxu0 0
    %6812 = vmatpush1.bf16.msra.mxu0 0
    %6813 = vmatprep.subr.bf16.mxu0 0
    %6814 = vmatpush1.bf16.msra.mxu0 %v6794
    %6815 = vmatprep.subr.bf16.mxu0 0
    %6816 = vmatpush2.bf16.msra.mxu0 0
    %6817 = vmatprep.subr.bf16.mxu0 0
    %6818 = vmatpush2.bf16.msra.mxu0 0
    %6819 = vmatprep.subr.bf16.mxu0 0
    %6820 = vmatpush2.bf16.msra.mxu0 0
    %6821 = vmatprep.subr.bf16.mxu0 0
    %6822 = vmatpush2.bf16.msra.mxu0 0
    %6823 = vmatprep.subr.bf16.mxu0 0
    %6824 = vmatpush2.bf16.msra.mxu0 0
    %6825 = vmatprep.subr.bf16.mxu0 0
    %6826 = vmatpush2.bf16.msra.mxu0 0
    %6827 = vmatprep.subr.bf16.mxu0 0
    %6828 = vmatpush2.bf16.msra.mxu0 0
    %6829 = vmatprep.subr.bf16.mxu0 0
    %6830 = vmatpush2.bf16.msra.mxu0 0
    %6831 = vmatprep.mubr.bf16.mxu0 0
    %6832 = vmatmul.mubr.bf16.gmra.mxu0 %v6797
    %v6833 = vpop.f32.mrf.mxu0
    %v6834 = vadd.f32 0.0, %v6833
    %v6835 = vpop.f32.mrf.mxu0
    %v6836 = vpop.f32.mrf.mxu0
    %v6837 = vpop.f32.mrf.mxu0
    %6838 = vdwg.mxu0
    %v6839 = vadd.f32 %v6780, %v6834
    %v6840 = vld [vmem:[%s6] sm:$0x1]
    %v6842 = vlaneseq
    %v6843 = vshrl.u32 %v6842, 7
    %v6844 = vsub.s32 0, %v6843
    %v6845 = vrot.slane %v6840, %v6844
    %v6847 = vadd.f32 %v6839, %v6845
    %v6848 = vmax.f32 %v6847, 0.0
    %v6849 = vpack.c.bf16 %v6848, %v6848
    %v6850 = vld [vmem:[%s7] sm:$0xf]
    %v6851 = vld [vmem:[%s7 + $0x4] sm:$0xf]
    %v6852 = vld [vmem:[%s7 + $0x8] sm:$0xf]
    %v6853 = vld [vmem:[%s7 + $0xc] sm:$0xf]
    %v6854 = vld [vmem:[%s7 + $0x10] sm:$0xf]
    %v6855 = vld [vmem:[%s7 + $0x14] sm:$0xf]
    %v6856 = vld [vmem:[%s7 + $0x18] sm:$0xf]
    %v6857 = vld [vmem:[%s7 + $0x1c] sm:$0xf]
    %v6858 = vld [vmem:[%s7 + $0x20] sm:$0xf]
    %v6859 = vld [vmem:[%s7 + $0x24] sm:$0xf]
    %v6860 = vld [vmem:[%s7 + $0x28] sm:$0xf]
    %v6861 = vld [vmem:[%s7 + $0x2c] sm:$0xf]
    %v6862 = vld [vmem:[%s7 + $0x30] sm:$0xf]
    %v6863 = vld [vmem:[%s7 + $0x34] sm:$0xf]
    %v6864 = vld [vmem:[%s7 + $0x38] sm:$0xf]
    %v6865 = vld [vmem:[%s8] sm:$0x1]
    %v6867 = vlaneseq
    %v6868 = vshrl.u32 %v6867, 7
    %v6869 = vsub.s32 0, %v6868
    %v6870 = vrot.slane %v6865, %v6869
    %v6887 = vunpack.c.l.b16 %v6850
    %v6888 = vunpack.c.l.b16 %v6851
    %v6889 = vunpack.c.l.b16 %v6852
    %v6890 = vunpack.c.l.b16 %v6853
    %v6891 = vunpack.c.l.b16 %v6854
    %v6892 = vunpack.c.l.b16 %v6855
    %v6893 = vunpack.c.l.b16 %v6856
    %v6894 = vunpack.c.l.b16 %v6857
    %v6895 = vunpack.c.l.b16 %v6858
    %v6896 = vunpack.c.l.b16 %v6859
    %v6897 = vunpack.c.l.b16 %v6860
    %v6898 = vunpack.c.l.b16 %v6861
    %v6899 = vunpack.c.l.b16 %v6862
    %v6900 = vunpack.c.l.b16 %v6863
    %v6901 = vunpack.c.l.b16 %v6864
    %v6902 = vpack.c.b16 %v6888, %v6887
    %v6903 = vpack.c.b16 %v6890, %v6889
    %v6904 = vpack.c.b16 %v6892, %v6891
    %v6905 = vpack.c.b16 %v6894, %v6893
    %v6906 = vpack.c.b16 %v6896, %v6895
    %v6907 = vpack.c.b16 %v6898, %v6897
    %v6908 = vpack.c.b16 %v6900, %v6899
    %v6909 = vpack.c.b16 %v6901, %v6901
    %vm6917 = vcmask 982016
    %v6919 = vsel %vm6917, %v6849, 0
    %v6922 = vsel %vm236, %v6909, 0
    %6924 = vmatprep.subr.bf16.mxu0 0
    %6925 = vmatpush1.bf16.msra.mxu0 %v6922
    %6926 = vmatprep.subr.bf16.mxu0 0
    %6927 = vmatpush1.bf16.msra.mxu0 %v6908
    %6928 = vmatprep.subr.bf16.mxu0 0
    %6929 = vmatpush1.bf16.msra.mxu0 %v6907
    %6930 = vmatprep.subr.bf16.mxu0 0
    %6931 = vmatpush1.bf16.msra.mxu0 %v6906
    %6932 = vmatprep.subr.bf16.mxu0 0
    %6933 = vmatpush1.bf16.msra.mxu0 %v6905
    %6934 = vmatprep.subr.bf16.mxu0 0
    %6935 = vmatpush1.bf16.msra.mxu0 %v6904
    %6936 = vmatprep.subr.bf16.mxu0 0
    %6937 = vmatpush1.bf16.msra.mxu0 %v6903
    %6938 = vmatprep.subr.bf16.mxu0 0
    %6939 = vmatpush1.bf16.msra.mxu0 %v6902
    %6940 = vmatprep.subr.bf16.mxu0 0
    %6941 = vmatpush2.bf16.msra.mxu0 0
    %6942 = vmatprep.subr.bf16.mxu0 0
    %6943 = vmatpush2.bf16.msra.mxu0 0
    %6944 = vmatprep.subr.bf16.mxu0 0
    %6945 = vmatpush2.bf16.msra.mxu0 0
    %6946 = vmatprep.subr.bf16.mxu0 0
    %6947 = vmatpush2.bf16.msra.mxu0 0
    %6948 = vmatprep.subr.bf16.mxu0 0
    %6949 = vmatpush2.bf16.msra.mxu0 0
    %6950 = vmatprep.subr.bf16.mxu0 0
    %6951 = vmatpush2.bf16.msra.mxu0 0
    %6952 = vmatprep.subr.bf16.mxu0 0
    %6953 = vmatpush2.bf16.msra.mxu0 0
    %6954 = vmatprep.subr.bf16.mxu0 0
    %6955 = vmatpush2.bf16.msra.mxu0 0
    %6956 = vmatprep.mubr.bf16.mxu0 0
    %6957 = vmatmul.mubr.bf16.gmra.mxu0 %v6919
    %v6958 = vpop.f32.mrf.mxu0
    %v6959 = vadd.f32 %v6870, %v6958
    %v6960 = vpop.f32.mrf.mxu0
    %v6961 = vpop.f32.mrf.mxu0
    %v6962 = vpop.f32.mrf.mxu0
    %6963 = vdwg.mxu0
    %v6964 = vmax.f32 %v6959, 0.0
    %v6965 = vpack.c.bf16 %v6964, %v6964
    %v6966 = vld [vmem:[%s9] sm:$0xf]
    %v6967 = vld [vmem:[%s9 + $0x4] sm:$0xf]
    %v6968 = vld [vmem:[%s9 + $0x8] sm:$0xf]
    %v6969 = vld [vmem:[%s9 + $0xc] sm:$0xf]
    %v6970 = vld [vmem:[%s9 + $0x10] sm:$0xf]
    %v6971 = vld [vmem:[%s9 + $0x14] sm:$0xf]
    %v6972 = vld [vmem:[%s9 + $0x18] sm:$0xf]
    %v6973 = vld [vmem:[%s9 + $0x1c] sm:$0xf]
    %v6974 = vld [vmem:[%s9 + $0x20] sm:$0xf]
    %v6975 = vld [vmem:[%s9 + $0x24] sm:$0xf]
    %v6976 = vld [vmem:[%s9 + $0x28] sm:$0x3]
    %v6977 = vld [vmem:[%s10] sm:$0x1]
    %v6979 = vlaneseq
    %v6980 = vshrl.u32 %v6979, 7
    %v6981 = vsub.s32 0, %v6980
    %v6982 = vrot.slane %v6977, %v6981
    %v6995 = vunpack.c.l.b16 %v6966
    %v6996 = vunpack.c.l.b16 %v6967
    %v6997 = vunpack.c.l.b16 %v6968
    %v6998 = vunpack.c.l.b16 %v6969
    %v6999 = vunpack.c.l.b16 %v6970
    %v7000 = vunpack.c.l.b16 %v6971
    %v7001 = vunpack.c.l.b16 %v6972
    %v7002 = vunpack.c.l.b16 %v6973
    %v7003 = vunpack.c.l.b16 %v6974
    %v7004 = vunpack.c.l.b16 %v6975
    %v7005 = vunpack.c.l.b16 %v6976
    %v7006 = vpack.c.b16 %v6996, %v6995
    %v7007 = vpack.c.b16 %v6998, %v6997
    %v7008 = vpack.c.b16 %v7000, %v6999
    %v7009 = vpack.c.b16 %v7002, %v7001
    %v7010 = vpack.c.b16 %v7004, %v7003
    %v7011 = vpack.c.b16 %v7005, %v7005
    %vm7017 = vcmask 687104
    %v7019 = vsel %vm7017, %v6965, 0
    %vm7021 = vcmask 1041408
    %v7023 = vsel %vm7021, %v7011, 0
    %7025 = vmatprep.subr.bf16.mxu0 0
    %7026 = vmatpush1.bf16.msra.mxu0 0
    %7027 = vmatprep.subr.bf16.mxu0 0
    %7028 = vmatpush1.bf16.msra.mxu0 0
    %7029 = vmatprep.subr.bf16.mxu0 0
    %7030 = vmatpush1.bf16.msra.mxu0 %v7023
    %7031 = vmatprep.subr.bf16.mxu0 0
    %7032 = vmatpush1.bf16.msra.mxu0 %v7010
    %7033 = vmatprep.subr.bf16.mxu0 0
    %7034 = vmatpush1.bf16.msra.mxu0 %v7009
    %7035 = vmatprep.subr.bf16.mxu0 0
    %7036 = vmatpush1.bf16.msra.mxu0 %v7008
    %7037 = vmatprep.subr.bf16.mxu0 0
    %7038 = vmatpush1.bf16.msra.mxu0 %v7007
    %7039 = vmatprep.subr.bf16.mxu0 0
    %7040 = vmatpush1.bf16.msra.mxu0 %v7006
    %7041 = vmatprep.subr.bf16.mxu0 0
    %7042 = vmatpush2.bf16.msra.mxu0 0
    %7043 = vmatprep.subr.bf16.mxu0 0
    %7044 = vmatpush2.bf16.msra.mxu0 0
    %7045 = vmatprep.subr.bf16.mxu0 0
    %7046 = vmatpush2.bf16.msra.mxu0 0
    %7047 = vmatprep.subr.bf16.mxu0 0
    %7048 = vmatpush2.bf16.msra.mxu0 0
    %7049 = vmatprep.subr.bf16.mxu0 0
    %7050 = vmatpush2.bf16.msra.mxu0 0
    %7051 = vmatprep.subr.bf16.mxu0 0
    %7052 = vmatpush2.bf16.msra.mxu0 0
    %7053 = vmatprep.subr.bf16.mxu0 0
    %7054 = vmatpush2.bf16.msra.mxu0 0
    %7055 = vmatprep.subr.bf16.mxu0 0
    %7056 = vmatpush2.bf16.msra.mxu0 0
    %7057 = vmatprep.mubr.bf16.mxu0 0
    %7058 = vmatmul.mubr.bf16.gmra.mxu0 %v7019
    %v7059 = vpop.f32.mrf.mxu0
    %v7060 = vadd.f32 %v6982, %v7059
    %v7061 = vpop.f32.mrf.mxu0
    %v7062 = vpop.f32.mrf.mxu0
    %v7063 = vpop.f32.mrf.mxu0
    %7064 = vdwg.mxu0
    %v7065 = vmax.f32 %v7060, 0.0
    %vm7066 = vcmask 74752
    %7067 = vst.msk [vmem:[#allocation4] sm:$0x3] %vm7066, %v7065
    // Predicated region
    $region46: #{lenet_forward.1} parent=1 // pred_check
      _
    $region47: #{lenet_forward.1} parent=1 // pred_check_branch
      %7069 = sbr.rel (0) target = $region49
    $region48: #{lenet_forward.1} parent=1 // pred_region
      %s7071 = ssub.s32 32, 32
      %7072 = vsyncadd [#allocation5], %s7071
      %s7074 = sshll.u32 [#allocation4], 4
      %s7075 = int_to_ptr.vmem [resolvable:$true] %s7074
      %7077 = dma.vmem_to_hbm [thread:$0]  %s7075, 32, %s11, [#allocation5]
    $region49: #{lenet_forward.1} parent=1 // pred_fallthru
      _
    // Predicated region
    $region50: #{lenet_forward.1} parent=1 // pred_check
      _
    $region51: #{lenet_forward.1} parent=1 // pred_check_branch
      %7079 = sbr.rel (0) target = $region53
    $region52: #{lenet_forward.1} parent=1 // pred_region
      %7080 = dma.done [#allocation5], 32
    $region53: #{lenet_forward.1} parent=1 // pred_fallthru
      _
    %7081 = vsyncpa [#allocation5], 1

</llo_original>
